<compile_context>
chip_gen: v6e
topology: v6e:2x2x1
jax: 0.10.0
libtpu: 0.0.40
codegen_flags: <defaults>
</compile_context>

<pallas_src>
import functools

import jax
import jax.numpy as jnp
from jax.experimental import pallas as pl
from jax.experimental.pallas import tpu as pltpu

EPS = 1e-5                       # nn.BatchNorm2d default eps
LANE = 128                       # lane width; output-channel axis padded to this
VMEM_LIMIT = 48 * 1024 * 1024    # <= v7x 64 MiB physical; safe on v5e/v6e too
VMEM_BUDGET = 24 * 1024 * 1024   # working-set budget used to size the batch block


def _round_up(x, m):
    return (x + m - 1) // m * m


def _pad_last(a, target):
    pad = target - a.shape[-1]
    if pad == 0:
        return a
    return jnp.pad(a, [(0, 0)] * (a.ndim - 1) + [(0, pad)])


def _choose_batch_block(n, h, w, cp, act_bytes, budget=VMEM_BUDGET):
    """Largest divisor of n whose K2 working set fits the VMEM budget."""
    hw = h * w
    per_img = 2 * 2 * hw * cp * act_bytes           # y1 in + y2 out, double-buffered
    per_img += (h + 2) * (w + 2) * cp * act_bytes   # zero-padded scratch
    per_img += 9 * hw * cp * act_bytes              # K-folded window matrix
    per_img += 2 * hw * cp * 4                      # f32 matmul result + epilogue temps
    b = max(1, min(n, budget // per_img))
    while n % b:
        b -= 1
    return int(b)


# ----------------------------- Pallas kernels -----------------------------

def conv3x3_stats_kernel(xpad_ref, w_ref, b_ref, y_ref, mom_ref, win_ref):
    """3x3 conv (pad=1) as one K-folded MXU matmul + bias; emits per-block BN moments.

    xpad_ref: (B, H+2, W+2, Cin) spatially pre-padded input (compute dtype)
    w_ref   : (9*Cin, Cp)        K-folded weight (rows: tap-major, cin-minor)
    b_ref   : (1, Cp)            bias (f32)
    y_ref   : (B, H*W, Cp)       conv output, pre-BN (activation dtype)
    mom_ref : (1, 2, Cp)         [sum, sum_sq] over this block's B*H*W rows (f32)
    win_ref : (B*H*W, 9*Cin)     VMEM scratch for the folded window matrix
    """
    bb, hp2, wp2, cin = xpad_ref.shape
    h, w = hp2 - 2, wp2 - 2

    # Build the folded window matrix once, then one matmul with K = 9*Cin
    # (no per-tap f32 accumulator read-modify-write, no per-tap casts).
    for t in range(9):
        kh, kw = divmod(t, 3)
        win_ref[:, t * cin:(t + 1) * cin] = (
            xpad_ref[:, kh:kh + h, kw:kw + w, :].reshape(bb * h * w, cin))

    acc = jnp.dot(win_ref[...], w_ref[...],
                  preferred_element_type=jnp.float32) + b_ref[...]

    y_ref[...] = acc.reshape(y_ref.shape).astype(y_ref.dtype)
    mom_ref[0, 0:1, :] = jnp.sum(acc, axis=0, keepdims=True)
    mom_ref[0, 1:2, :] = jnp.sum(acc * acc, axis=0, keepdims=True)


def bn_relu_conv3x3_stats_kernel(y1_ref, sc_ref, sh_ref, w_ref, b_ref,
                                 y2_ref, mom_ref, zpad_ref, win_ref):
    """BN1 affine + ReLU + 3x3 conv2 (pad=1, K-folded matmul) + bias; BN2 moments.

    The normalized activation z1 only ever lives in the zero-padded VMEM scratch
    (compute dtype); it never round-trips HBM.
    """
    bb, hp2, wp2, cp = zpad_ref.shape
    h, w = hp2 - 2, wp2 - 2

    # BN1 affine (scale/shift pre-folded from global batch stats) + ReLU, in f32.
    z = jnp.maximum(y1_ref[...].astype(jnp.float32) * sc_ref[...] + sh_ref[...], 0.0)

    # Re-zero only the 1-pixel border stripes each step (scratch persists across grid
    # steps and is per-core, so program_id==0 gating would be wrong on multicore chips).
    row0 = jnp.zeros((bb, 1, wp2, cp), zpad_ref.dtype)
    col0 = jnp.zeros((bb, hp2, 1, cp), zpad_ref.dtype)
    zpad_ref[:, 0:1, :, :] = row0
    zpad_ref[:, h + 1:h + 2, :, :] = row0
    zpad_ref[:, :, 0:1, :] = col0
    zpad_ref[:, :, w + 1:w + 2, :] = col0
    zpad_ref[:, 1:h + 1, 1:w + 1, :] = z.reshape(bb, h, w, cp).astype(zpad_ref.dtype)

    # K-folded window matrix (B*HW, 9*Cp); lane-aligned 128-wide column stores.
    for t in range(9):
        kh, kw = divmod(t, 3)
        win_ref[:, t * cp:(t + 1) * cp] = (
            zpad_ref[:, kh:kh + h, kw:kw + w, :].reshape(bb * h * w, cp))

    acc = jnp.dot(win_ref[...], w_ref[...],
                  preferred_element_type=jnp.float32) + b_ref[...]

    y2_ref[...] = acc.reshape(y2_ref.shape).astype(y2_ref.dtype)
    mom_ref[0, 0:1, :] = jnp.sum(acc, axis=0, keepdims=True)
    mom_ref[0, 1:2, :] = jnp.sum(acc * acc, axis=0, keepdims=True)


def bn_downsample_add_relu_kernel(y2_ref, sc_ref, sh_ref, x_ref, wd_ref, bd_ref, o_ref):
    """BN2 affine + 1x1-conv downsample matmul + residual add + ReLU."""
    bb, hw, cin = x_ref.shape
    hbn = y2_ref[...].astype(jnp.float32) * sc_ref[...] + sh_ref[...]
    ds = jnp.dot(x_ref[...].reshape(bb * hw, cin), wd_ref[...],
                 preferred_element_type=jnp.float32) + bd_ref[...]
    o_ref[...] = jnp.maximum(hbn + ds.reshape(hbn.shape), 0.0).astype(o_ref.dtype)


# ------------------------------- JAX wrapper -------------------------------

def _fold_bn(moments, m_total, gamma_p, beta_p):
    """moments: (2, Cp) [sum, sum_sq] over all N*H*W rows -> per-channel scale/shift."""
    # TODO(synk): E[x^2]-E[x]^2 in f32 can cancel for large-magnitude activations;
    # a Welford / shifted-moment formulation would be safer at production scale.
    mean = moments[0] / m_total
    var = jnp.maximum(moments[1] / m_total - mean * mean, 0.0)   # biased (training BN)
    scale = gamma_p * jax.lax.rsqrt(var + EPS)
    shift = beta_p - mean * scale
    return (scale.reshape(1, -1).astype(jnp.float32),
            shift.reshape(1, -1).astype(jnp.float32))


def basic_block_forward(x_nchw, params, compute_dtype=jnp.bfloat16):
    N, Cin, H, W = x_nchw.shape
    Cout = params["w1"].shape[0]
    Cp = _round_up(Cout, LANE)        # lane-dense, 128-aligned channel axis
    HW = H * W
    M = N * HW
    act_dtype = compute_dtype         # HBM activation dtype (bf16 on the fast path)
    act_bytes = jnp.dtype(act_dtype).itemsize
    B = _choose_batch_block(N, H, W, Cp, act_bytes)
    n_blk = N // B

    cparams = pltpu.CompilerParams(
        dimension_semantics=("parallel",),        # batch-block axis: megacore-shardable
        vmem_limit_bytes=VMEM_LIMIT,
    )

    # ---- host-side layout prep (O(weights) + one 1-pixel spatial pad of x) ----
    x = jnp.transpose(x_nchw, (0, 2, 3, 1)).astype(jnp.float32)            # NHWC
    xpad = jnp.pad(x, ((0, 0), (1, 1), (1, 1), (0, 0))).astype(act_dtype)  # (N,H+2,W+2,Cin)
    xflat = x.reshape(N, HW, Cin).astype(compute_dtype)                    # 1x1 downsample

    # K-folded weights: rows ordered tap-major (kh,kw), input-channel-minor.
    w1m = _pad_last(jnp.transpose(params["w1"], (2, 3, 1, 0)).reshape(9 * Cin, Cout),
                    Cp).astype(compute_dtype)                              # (9*Cin, Cp)
    w2m = jnp.transpose(params["w2"], (2, 3, 1, 0))                        # (3,3,Cout,Cout)
    w2m = jnp.pad(w2m, ((0, 0), (0, 0), (0, Cp - Cout), (0, Cp - Cout)))
    w2m = w2m.reshape(9 * Cp, Cp).astype(compute_dtype)                    # (9*Cp, Cp)
    wdm = _pad_last(jnp.transpose(params["wd"][:, :, 0, 0]), Cp).astype(compute_dtype)

    b1 = _pad_last(params["b1"], Cp).reshape(1, Cp).astype(jnp.float32)
    b2 = _pad_last(params["b2"], Cp).reshape(1, Cp).astype(jnp.float32)
    bd = _pad_last(params["bd"], Cp).reshape(1, Cp).astype(jnp.float32)
    g1 = _pad_last(params["gamma1"], Cp).astype(jnp.float32)
    be1 = _pad_last(params["beta1"], Cp).astype(jnp.float32)
    g2 = _pad_last(params["gamma2"], Cp).astype(jnp.float32)
    be2 = _pad_last(params["beta2"], Cp).astype(jnp.float32)

    vec_spec = pl.BlockSpec((1, Cp), lambda n: (0, 0))
    row_spec = pl.BlockSpec((B, HW, Cp), lambda n: (n, 0, 0))
    mom_spec = pl.BlockSpec((1, 2, Cp), lambda n: (n, 0, 0))

    # ---- K1: conv1 + bias, per-block BN1 moments ----
    y1, mom1 = pl.pallas_call(
        conv3x3_stats_kernel,
        grid=(n_blk,),
        in_specs=[
            pl.BlockSpec((B, H + 2, W + 2, Cin), lambda n: (n, 0, 0, 0)),
            pl.BlockSpec((9 * Cin, Cp), lambda n: (0, 0)),
            vec_spec,
        ],
        out_specs=(row_spec, mom_spec),
        out_shape=(
            jax.ShapeDtypeStruct((N, HW, Cp), act_dtype),
            jax.ShapeDtypeStruct((n_blk, 2, Cp), jnp.float32),
        ),
        scratch_shapes=[pltpu.VMEM((B * HW, 9 * Cin), compute_dtype)],
        compiler_params=cparams,
    )(xpad, w1m, b1)

    scale1, shift1 = _fold_bn(jnp.sum(mom1, axis=0), M, g1, be1)

    # ---- K2: BN1 + ReLU + conv2 + bias, per-block BN2 moments ----
    y2, mom2 = pl.pallas_call(
        bn_relu_conv3x3_stats_kernel,
        grid=(n_blk,),
        in_specs=[
            row_spec,
            vec_spec, vec_spec,
            pl.BlockSpec((9 * Cp, Cp), lambda n: (0, 0)),
            vec_spec,
        ],
        out_specs=(row_spec, mom_spec),
        out_shape=(
            jax.ShapeDtypeStruct((N, HW, Cp), act_dtype),
            jax.ShapeDtypeStruct((n_blk, 2, Cp), jnp.float32),
        ),
        scratch_shapes=[
            pltpu.VMEM((B, H + 2, W + 2, Cp), compute_dtype),
            pltpu.VMEM((B * HW, 9 * Cp), compute_dtype),
        ],
        compiler_params=cparams,
    )(y1, scale1, shift1, w2m, b2)

    scale2, shift2 = _fold_bn(jnp.sum(mom2, axis=0), M, g2, be2)

    # ---- K3: BN2 + downsample + residual add + ReLU ----
    out = pl.pallas_call(
        bn_downsample_add_relu_kernel,
        grid=(n_blk,),
        in_specs=[
            row_spec,
            vec_spec, vec_spec,
            pl.BlockSpec((B, HW, Cin), lambda n: (n, 0, 0)),
            pl.BlockSpec((Cin, Cp), lambda n: (0, 0)),
            vec_spec,
        ],
        out_specs=row_spec,
        out_shape=jax.ShapeDtypeStruct((N, HW, Cp), jnp.float32),
        compiler_params=cparams,
    )(y2, scale2, shift2, xflat, wdm, bd)

    # TODO(synk): the Cout-slice + NHWC->NCHW transpose stays in plain JAX; emitting a
    # lane-dense NCHW layout in-kernel would require Cout-major output tiling.
    out = out[:, :, :Cout].reshape(N, H, W, Cout)
    return jnp.transpose(out, (0, 3, 1, 2))   # back to NCHW


# --------------------- deterministic param init (synthetic) ---------------------

def init_params(key, cin, cout, k=3):
    ks = jax.random.split(key, 6)
    return {
        "w1": jax.random.normal(ks[0], (cout, cin, k, k), jnp.float32) * 0.2,
        "b1": jax.random.normal(ks[1], (cout,), jnp.float32) * 0.1,
        "w2": jax.random.normal(ks[2], (cout, cout, k, k), jnp.float32) * 0.2,
        "b2": jax.random.normal(ks[3], (cout,), jnp.float32) * 0.1,
        "wd": jax.random.normal(ks[4], (cout, cin, 1, 1), jnp.float32) * 0.2,
        "bd": jax.random.normal(ks[5], (cout,), jnp.float32) * 0.1,
        # BatchNorm2d default init: weight=1, bias=0
        "gamma1": jnp.ones((cout,), jnp.float32),
        "beta1": jnp.zeros((cout,), jnp.float32),
        "gamma2": jnp.ones((cout,), jnp.float32),
        "beta2": jnp.zeros((cout,), jnp.float32),
    }


# --------------------- pure-JAX reference (correctness check) ---------------------

def reference_forward(x, params):
    def conv(x, w, b, pad):
        y = jax.lax.conv_general_dilated(
            x, w, (1, 1), [(pad, pad), (pad, pad)],
            dimension_numbers=("NCHW", "OIHW", "NCHW"))
        return y + b[None, :, None, None]

    def bn(y, gamma, beta):
        mean = y.mean(axis=(0, 2, 3), keepdims=True)
        var = jnp.square(y - mean).mean(axis=(0, 2, 3), keepdims=True)
        return gamma[None, :, None, None] * (y - mean) / jnp.sqrt(var + EPS) \
            + beta[None, :, None, None]

    h = jax.nn.relu(bn(conv(x, params["w1"], params["b1"], 1),
                       params["gamma1"], params["beta1"]))
    h = bn(conv(h, params["w2"], params["b2"], 1), params["gamma2"], params["beta2"])
    ds = conv(x, params["wd"], params["bd"], 0)
    return jax.nn.relu(h + ds)


if __name__ == "__main__":
    key = jax.random.PRNGKey(0)
    kx, kp = jax.random.split(key)

    N, Cin, Cout, H, W = 2, 4, 8, 16, 16
    x = jax.random.normal(kx, (N, Cin, H, W), jnp.float32)
    params = init_params(kp, Cin, Cout)

    ref = reference_forward(x, params)

    # f32 compute path (f32 activations / weights): tight check against the reference.
    fwd_f32 = jax.jit(functools.partial(basic_block_forward, compute_dtype=jnp.float32))
    out_f32 = jax.block_until_ready(fwd_f32(x, params))
    assert out_f32.shape == (N, Cout, H, W)
    err_f32 = float(jnp.max(jnp.abs(out_f32 - ref)))
    assert err_f32 < 5e-3, err_f32

    # bf16 path (bf16 HBM activations + bf16 matmuls): looser tolerance.
    fwd_bf16 = jax.jit(functools.partial(basic_block_forward, compute_dtype=jnp.bfloat16))
    out_bf16 = jax.block_until_ready(fwd_bf16(x, params))
    assert out_bf16.shape == (N, Cout, H, W)
    err_max = float(jnp.max(jnp.abs(out_bf16 - ref)))
    err_mean = float(jnp.mean(jnp.abs(out_bf16 - ref)))
    assert err_max < 2e-1 and err_mean < 4e-2, (err_max, err_mean)

    print("KERNEL_OK")
</pallas_src>

<mosaic_0001>
module attributes {stable_mosaic.version = 11 : i64} {
  func.func @conv3x3_stats_kernel(%arg0: i32, %arg1: memref<2x18x18x4xf32, #tpu.memory_space<vmem>>, %arg2: memref<36x128xf32, #tpu.memory_space<vmem>>, %arg3: memref<1x128xf32, #tpu.memory_space<vmem>>, %arg4: memref<2x256x128xf32, #tpu.memory_space<vmem>>, %arg5: memref<1x2x128xf32, #tpu.memory_space<vmem>>, %arg6: memref<512x36xf32, #tpu.memory_space<vmem>>) attributes {dimension_semantics = [#tpu.dimension_semantics<parallel>], iteration_bounds = array<i64: 1>, scalar_prefetch = 0 : i64, scratch_operands = 1 : i64, tpu.core_type = #tpu.core_type<tc>, window_params = [{transform_indices = @transform_0, window_bounds = array<i64: 2, 18, 18, 4>}, {pipeline_mode = #tpu.pipeline_mode<synchronous>, transform_indices = @transform_1, window_bounds = array<i64: 36, 128>}, {pipeline_mode = #tpu.pipeline_mode<synchronous>, transform_indices = @transform_2, window_bounds = array<i64: 1, 128>}, {transform_indices = @transform_3, window_bounds = array<i64: 2, 256, 128>}, {transform_indices = @transform_4, window_bounds = array<i64: 1, 2, 128>}]} {
    %c0 = arith.constant 0 : index
    %c0_0 = arith.constant 0 : index
    %c0_1 = arith.constant 0 : index
    %c0_2 = arith.constant 0 : index
    %0 = vector.load %arg1[%c0, %c0_0, %c0_1, %c0_2] : memref<2x18x18x4xf32, #tpu.memory_space<vmem>>, vector<2x16x16x4xf32>
    %1 = vector.shape_cast %0 : vector<2x16x16x4xf32> to vector<512x4xf32>
    %c0_3 = arith.constant 0 : index
    %c0_4 = arith.constant 0 : index
    %2 = vector.load %arg6[%c0_3, %c0_4] : memref<512x36xf32, #tpu.memory_space<vmem>>, vector<512x4xf32>
    tpu.vector_store %arg6[%c0_3, %c0_4], %1 {strides = array<i32>} : memref<512x36xf32, #tpu.memory_space<vmem>>, vector<512x4xf32>,
    %c0_5 = arith.constant 0 : index
    %c0_6 = arith.constant 0 : index
    %c1 = arith.constant 1 : index
    %c0_7 = arith.constant 0 : index
    %3 = vector.load %arg1[%c0_5, %c0_6, %c1, %c0_7] : memref<2x18x18x4xf32, #tpu.memory_space<vmem>>, vector<2x16x16x4xf32>
    %4 = vector.shape_cast %3 : vector<2x16x16x4xf32> to vector<512x4xf32>
    %c0_8 = arith.constant 0 : index
    %c4 = arith.constant 4 : index
    %5 = vector.load %arg6[%c0_8, %c4] : memref<512x36xf32, #tpu.memory_space<vmem>>, vector<512x4xf32>
    tpu.vector_store %arg6[%c0_8, %c4], %4 {strides = array<i32>} : memref<512x36xf32, #tpu.memory_space<vmem>>, vector<512x4xf32>,
    %c0_9 = arith.constant 0 : index
    %c0_10 = arith.constant 0 : index
    %c2 = arith.constant 2 : index
    %c0_11 = arith.constant 0 : index
    %6 = vector.load %arg1[%c0_9, %c0_10, %c2, %c0_11] : memref<2x18x18x4xf32, #tpu.memory_space<vmem>>, vector<2x16x16x4xf32>
    %7 = vector.shape_cast %6 : vector<2x16x16x4xf32> to vector<512x4xf32>
    %c0_12 = arith.constant 0 : index
    %c8 = arith.constant 8 : index
    %8 = vector.load %arg6[%c0_12, %c8] : memref<512x36xf32, #tpu.memory_space<vmem>>, vector<512x4xf32>
    tpu.vector_store %arg6[%c0_12, %c8], %7 {strides = array<i32>} : memref<512x36xf32, #tpu.memory_space<vmem>>, vector<512x4xf32>,
    %c0_13 = arith.constant 0 : index
    %c1_14 = arith.constant 1 : index
    %c0_15 = arith.constant 0 : index
    %c0_16 = arith.constant 0 : index
    %9 = vector.load %arg1[%c0_13, %c1_14, %c0_15, %c0_16] : memref<2x18x18x4xf32, #tpu.memory_space<vmem>>, vector<2x16x16x4xf32>
    %10 = vector.shape_cast %9 : vector<2x16x16x4xf32> to vector<512x4xf32>
    %c0_17 = arith.constant 0 : index
    %c12 = arith.constant 12 : index
    %11 = vector.load %arg6[%c0_17, %c12] : memref<512x36xf32, #tpu.memory_space<vmem>>, vector<512x4xf32>
    tpu.vector_store %arg6[%c0_17, %c12], %10 {strides = array<i32>} : memref<512x36xf32, #tpu.memory_space<vmem>>, vector<512x4xf32>,
    %c0_18 = arith.constant 0 : index
    %c1_19 = arith.constant 1 : index
    %c1_20 = arith.constant 1 : index
    %c0_21 = arith.constant 0 : index
    %12 = vector.load %arg1[%c0_18, %c1_19, %c1_20, %c0_21] : memref<2x18x18x4xf32, #tpu.memory_space<vmem>>, vector<2x16x16x4xf32>
    %13 = vector.shape_cast %12 : vector<2x16x16x4xf32> to vector<512x4xf32>
    %c0_22 = arith.constant 0 : index
    %c16 = arith.constant 16 : index
    %14 = vector.load %arg6[%c0_22, %c16] : memref<512x36xf32, #tpu.memory_space<vmem>>, vector<512x4xf32>
    tpu.vector_store %arg6[%c0_22, %c16], %13 {strides = array<i32>} : memref<512x36xf32, #tpu.memory_space<vmem>>, vector<512x4xf32>,
    %c0_23 = arith.constant 0 : index
    %c1_24 = arith.constant 1 : index
    %c2_25 = arith.constant 2 : index
    %c0_26 = arith.constant 0 : index
    %15 = vector.load %arg1[%c0_23, %c1_24, %c2_25, %c0_26] : memref<2x18x18x4xf32, #tpu.memory_space<vmem>>, vector<2x16x16x4xf32>
    %16 = vector.shape_cast %15 : vector<2x16x16x4xf32> to vector<512x4xf32>
    %c0_27 = arith.constant 0 : index
    %c20 = arith.constant 20 : index
    %17 = vector.load %arg6[%c0_27, %c20] : memref<512x36xf32, #tpu.memory_space<vmem>>, vector<512x4xf32>
    tpu.vector_store %arg6[%c0_27, %c20], %16 {strides = array<i32>} : memref<512x36xf32, #tpu.memory_space<vmem>>, vector<512x4xf32>,
    %c0_28 = arith.constant 0 : index
    %c2_29 = arith.constant 2 : index
    %c0_30 = arith.constant 0 : index
    %c0_31 = arith.constant 0 : index
    %18 = vector.load %arg1[%c0_28, %c2_29, %c0_30, %c0_31] : memref<2x18x18x4xf32, #tpu.memory_space<vmem>>, vector<2x16x16x4xf32>
    %19 = vector.shape_cast %18 : vector<2x16x16x4xf32> to vector<512x4xf32>
    %c0_32 = arith.constant 0 : index
    %c24 = arith.constant 24 : index
    %20 = vector.load %arg6[%c0_32, %c24] : memref<512x36xf32, #tpu.memory_space<vmem>>, vector<512x4xf32>
    tpu.vector_store %arg6[%c0_32, %c24], %19 {strides = array<i32>} : memref<512x36xf32, #tpu.memory_space<vmem>>, vector<512x4xf32>,
    %c0_33 = arith.constant 0 : index
    %c2_34 = arith.constant 2 : index
    %c1_35 = arith.constant 1 : index
    %c0_36 = arith.constant 0 : index
    %21 = vector.load %arg1[%c0_33, %c2_34, %c1_35, %c0_36] : memref<2x18x18x4xf32, #tpu.memory_space<vmem>>, vector<2x16x16x4xf32>
    %22 = vector.shape_cast %21 : vector<2x16x16x4xf32> to vector<512x4xf32>
    %c0_37 = arith.constant 0 : index
    %c28 = arith.constant 28 : index
    %23 = vector.load %arg6[%c0_37, %c28] : memref<512x36xf32, #tpu.memory_space<vmem>>, vector<512x4xf32>
    tpu.vector_store %arg6[%c0_37, %c28], %22 {strides = array<i32>} : memref<512x36xf32, #tpu.memory_space<vmem>>, vector<512x4xf32>,
    %c0_38 = arith.constant 0 : index
    %c2_39 = arith.constant 2 : index
    %c2_40 = arith.constant 2 : index
    %c0_41 = arith.constant 0 : index
    %24 = vector.load %arg1[%c0_38, %c2_39, %c2_40, %c0_41] : memref<2x18x18x4xf32, #tpu.memory_space<vmem>>, vector<2x16x16x4xf32>
    %25 = vector.shape_cast %24 : vector<2x16x16x4xf32> to vector<512x4xf32>
    %c0_42 = arith.constant 0 : index
    %c32 = arith.constant 32 : index
    %26 = vector.load %arg6[%c0_42, %c32] : memref<512x36xf32, #tpu.memory_space<vmem>>, vector<512x4xf32>
    tpu.vector_store %arg6[%c0_42, %c32], %25 {strides = array<i32>} : memref<512x36xf32, #tpu.memory_space<vmem>>, vector<512x4xf32>,
    %c0_43 = arith.constant 0 : index
    %c0_44 = arith.constant 0 : index
    %27 = vector.load %arg6[%c0_43, %c0_44] : memref<512x36xf32, #tpu.memory_space<vmem>>, vector<512x36xf32>
    %c0_45 = arith.constant 0 : index
    %c0_46 = arith.constant 0 : index
    %28 = vector.load %arg2[%c0_45, %c0_46] : memref<36x128xf32, #tpu.memory_space<vmem>>, vector<36x128xf32>
    %cst = arith.constant dense<0.000000e+00> : vector<512x128xf32>
    %29 = tpu.matmul %27, %28, %cst {dimension_numbers = #tpu.dot_dimension_numbers<[1], [0], [0], [1], [0, 0, 1, 1], [], []>} : vector<512x36xf32>, vector<36x128xf32>, vector<512x128xf32> -> vector<512x128xf32>
    %c0_47 = arith.constant 0 : index
    %c0_48 = arith.constant 0 : index
    %30 = vector.load %arg3[%c0_47, %c0_48] : memref<1x128xf32, #tpu.memory_space<vmem>>, vector<1x128xf32>
    %31 = vector.broadcast %30 : vector<1x128xf32> to vector<512x128xf32>
    %32 = arith.addf %29, %31 : vector<512x128xf32>
    %33 = vector.shape_cast %32 : vector<512x128xf32> to vector<2x256x128xf32>
    %c0_49 = arith.constant 0 : index
    %c0_50 = arith.constant 0 : index
    %c0_51 = arith.constant 0 : index
    %34 = vector.load %arg4[%c0_49, %c0_50, %c0_51] : memref<2x256x128xf32, #tpu.memory_space<vmem>>, vector<2x256x128xf32>
    tpu.vector_store %arg4[%c0_49, %c0_50, %c0_51], %33 {strides = array<i32>} : memref<2x256x128xf32, #tpu.memory_space<vmem>>, vector<2x256x128xf32>,
    %cst_52 = arith.constant dense<0.000000e+00> : vector<128xf32>
    %35 = vector.multi_reduction <add>, %32, %cst_52 [0] : vector<512x128xf32> to vector<128xf32>
    %36 = vector.shape_cast %35 : vector<128xf32> to vector<1x128xf32>
    %c0_53 = arith.constant 0 : index
    %c0_54 = arith.constant 0 : index
    %c0_55 = arith.constant 0 : index
    %37 = vector.load %arg5[%c0_53, %c0_54, %c0_55] : memref<1x2x128xf32, #tpu.memory_space<vmem>>, vector<1x1x128xf32>
    %38 = vector.shape_cast %37 : vector<1x1x128xf32> to vector<1x128xf32>
    %39 = vector.shape_cast %36 : vector<1x128xf32> to vector<1x1x128xf32>
    tpu.vector_store %arg5[%c0_53, %c0_54, %c0_55], %39 {strides = array<i32>} : memref<1x2x128xf32, #tpu.memory_space<vmem>>, vector<1x1x128xf32>,
    %40 = arith.mulf %32, %32 : vector<512x128xf32>
    %cst_56 = arith.constant dense<0.000000e+00> : vector<128xf32>
    %41 = vector.multi_reduction <add>, %40, %cst_56 [0] : vector<512x128xf32> to vector<128xf32>
    %42 = vector.shape_cast %41 : vector<128xf32> to vector<1x128xf32>
    %c0_57 = arith.constant 0 : index
    %c1_58 = arith.constant 1 : index
    %c0_59 = arith.constant 0 : index
    %43 = vector.load %arg5[%c0_57, %c1_58, %c0_59] : memref<1x2x128xf32, #tpu.memory_space<vmem>>, vector<1x1x128xf32>
    %44 = vector.shape_cast %43 : vector<1x1x128xf32> to vector<1x128xf32>
    %45 = vector.shape_cast %42 : vector<1x128xf32> to vector<1x1x128xf32>
    tpu.vector_store %arg5[%c0_57, %c1_58, %c0_59], %45 {strides = array<i32>} : memref<1x2x128xf32, #tpu.memory_space<vmem>>, vector<1x1x128xf32>,
    return
  }
  func.func @transform_0(%arg0: i32) -> (i32, i32, i32, i32) {
    %c0_i32 = arith.constant 0 : i32
    %c0_i32_0 = arith.constant 0 : i32
    %c0_i32_1 = arith.constant 0 : i32
    %c0_i32_2 = arith.constant 0 : i32
    return %arg0, %c0_i32, %c0_i32_0, %c0_i32_1 : i32, i32, i32, i32
  }
  func.func @transform_1(%arg0: i32) -> (i32, i32) {
    %c0_i32 = arith.constant 0 : i32
    %c0_i32_0 = arith.constant 0 : i32
    %c0_i32_1 = arith.constant 0 : i32
    return %c0_i32, %c0_i32_0 : i32, i32
  }
  func.func @transform_2(%arg0: i32) -> (i32, i32) {
    %c0_i32 = arith.constant 0 : i32
    %c0_i32_0 = arith.constant 0 : i32
    %c0_i32_1 = arith.constant 0 : i32
    return %c0_i32, %c0_i32_0 : i32, i32
  }
  func.func @transform_3(%arg0: i32) -> (i32, i32, i32) {
    %c0_i32 = arith.constant 0 : i32
    %c0_i32_0 = arith.constant 0 : i32
    %c0_i32_1 = arith.constant 0 : i32
    return %arg0, %c0_i32, %c0_i32_0 : i32, i32, i32
  }
  func.func @transform_4(%arg0: i32) -> (i32, i32, i32) {
    %c0_i32 = arith.constant 0 : i32
    %c0_i32_0 = arith.constant 0 : i32
    %c0_i32_1 = arith.constant 0 : i32
    return %arg0, %c0_i32, %c0_i32_0 : i32, i32, i32
  }
}

module attributes {stable_mosaic.version = 11 : i64} {
  func.func @bn_downsample_add_relu_kernel(%arg0: i32, %arg1: memref<2x256x128xf32, #tpu.memory_space<vmem>>, %arg2: memref<1x128xf32, #tpu.memory_space<vmem>>, %arg3: memref<1x128xf32, #tpu.memory_space<vmem>>, %arg4: memref<2x256x4xf32, #tpu.memory_space<vmem>>, %arg5: memref<4x128xf32, #tpu.memory_space<vmem>>, %arg6: memref<1x128xf32, #tpu.memory_space<vmem>>, %arg7: memref<2x256x128xf32, #tpu.memory_space<vmem>>) attributes {dimension_semantics = [#tpu.dimension_semantics<parallel>], iteration_bounds = array<i64: 1>, scalar_prefetch = 0 : i64, scratch_operands = 0 : i64, tpu.core_type = #tpu.core_type<tc>, window_params = [{transform_indices = @transform_0, window_bounds = array<i64: 2, 256, 128>}, {pipeline_mode = #tpu.pipeline_mode<synchronous>, transform_indices = @transform_1, window_bounds = array<i64: 1, 128>}, {pipeline_mode = #tpu.pipeline_mode<synchronous>, transform_indices = @transform_2, window_bounds = array<i64: 1, 128>}, {transform_indices = @transform_3, window_bounds = array<i64: 2, 256, 4>}, {pipeline_mode = #tpu.pipeline_mode<synchronous>, transform_indices = @transform_4, window_bounds = array<i64: 4, 128>}, {pipeline_mode = #tpu.pipeline_mode<synchronous>, transform_indices = @transform_5, window_bounds = array<i64: 1, 128>}, {transform_indices = @transform_6, window_bounds = array<i64: 2, 256, 128>}]} {
    %c0 = arith.constant 0 : index
    %c0_0 = arith.constant 0 : index
    %c0_1 = arith.constant 0 : index
    %0 = vector.load %arg1[%c0, %c0_0, %c0_1] : memref<2x256x128xf32, #tpu.memory_space<vmem>>, vector<2x256x128xf32>
    %c0_2 = arith.constant 0 : index
    %c0_3 = arith.constant 0 : index
    %1 = vector.load %arg2[%c0_2, %c0_3] : memref<1x128xf32, #tpu.memory_space<vmem>>, vector<1x128xf32>
    %2 = vector.shape_cast %1 : vector<1x128xf32> to vector<1x1x128xf32>
    %3 = vector.broadcast %2 : vector<1x1x128xf32> to vector<2x256x128xf32>
    %4 = arith.mulf %0, %3 : vector<2x256x128xf32>
    %c0_4 = arith.constant 0 : index
    %c0_5 = arith.constant 0 : index
    %5 = vector.load %arg3[%c0_4, %c0_5] : memref<1x128xf32, #tpu.memory_space<vmem>>, vector<1x128xf32>
    %6 = vector.shape_cast %5 : vector<1x128xf32> to vector<1x1x128xf32>
    %7 = vector.broadcast %6 : vector<1x1x128xf32> to vector<2x256x128xf32>
    %8 = arith.addf %4, %7 : vector<2x256x128xf32>
    %c0_6 = arith.constant 0 : index
    %c0_7 = arith.constant 0 : index
    %c0_8 = arith.constant 0 : index
    %9 = vector.load %arg4[%c0_6, %c0_7, %c0_8] : memref<2x256x4xf32, #tpu.memory_space<vmem>>, vector<2x256x4xf32>
    %10 = vector.shape_cast %9 : vector<2x256x4xf32> to vector<512x4xf32>
    %c0_9 = arith.constant 0 : index
    %c0_10 = arith.constant 0 : index
    %11 = vector.load %arg5[%c0_9, %c0_10] : memref<4x128xf32, #tpu.memory_space<vmem>>, vector<4x128xf32>
    %cst = arith.constant dense<0.000000e+00> : vector<512x128xf32>
    %12 = tpu.matmul %10, %11, %cst {dimension_numbers = #tpu.dot_dimension_numbers<[1], [0], [0], [1], [0, 0, 1, 1], [], []>} : vector<512x4xf32>, vector<4x128xf32>, vector<512x128xf32> -> vector<512x128xf32>
    %c0_11 = arith.constant 0 : index
    %c0_12 = arith.constant 0 : index
    %13 = vector.load %arg6[%c0_11, %c0_12] : memref<1x128xf32, #tpu.memory_space<vmem>>, vector<1x128xf32>
    %14 = vector.broadcast %13 : vector<1x128xf32> to vector<512x128xf32>
    %15 = arith.addf %12, %14 : vector<512x128xf32>
    %16 = vector.shape_cast %15 : vector<512x128xf32> to vector<2x256x128xf32>
    %17 = arith.addf %8, %16 : vector<2x256x128xf32>
    %cst_13 = arith.constant 0.000000e+00 : f32
    %18 = vector.broadcast %cst_13 : f32 to vector<2x256x128xf32>
    %19 = arith.maximumf %17, %18 : vector<2x256x128xf32>
    %c0_14 = arith.constant 0 : index
    %c0_15 = arith.constant 0 : index
    %c0_16 = arith.constant 0 : index
    %20 = vector.load %arg7[%c0_14, %c0_15, %c0_16] : memref<2x256x128xf32, #tpu.memory_space<vmem>>, vector<2x256x128xf32>
    tpu.vector_store %arg7[%c0_14, %c0_15, %c0_16], %19 {strides = array<i32>} : memref<2x256x128xf32, #tpu.memory_space<vmem>>, vector<2x256x128xf32>,
    return
  }
  func.func @transform_0(%arg0: i32) -> (i32, i32, i32) {
    %c0_i32 = arith.constant 0 : i32
    %c0_i32_0 = arith.constant 0 : i32
    %c0_i32_1 = arith.constant 0 : i32
    return %arg0, %c0_i32, %c0_i32_0 : i32, i32, i32
  }
  func.func @transform_1(%arg0: i32) -> (i32, i32) {
    %c0_i32 = arith.constant 0 : i32
    %c0_i32_0 = arith.constant 0 : i32
    %c0_i32_1 = arith.constant 0 : i32
    return %c0_i32, %c0_i32_0 : i32, i32
  }
  func.func @transform_2(%arg0: i32) -> (i32, i32) {
    %c0_i32 = arith.constant 0 : i32
    %c0_i32_0 = arith.constant 0 : i32
    %c0_i32_1 = arith.constant 0 : i32
    return %c0_i32, %c0_i32_0 : i32, i32
  }
  func.func @transform_3(%arg0: i32) -> (i32, i32, i32) {
    %c0_i32 = arith.constant 0 : i32
    %c0_i32_0 = arith.constant 0 : i32
    %c0_i32_1 = arith.constant 0 : i32
    return %arg0, %c0_i32, %c0_i32_0 : i32, i32, i32
  }
  func.func @transform_4(%arg0: i32) -> (i32, i32) {
    %c0_i32 = arith.constant 0 : i32
    %c0_i32_0 = arith.constant 0 : i32
    %c0_i32_1 = arith.constant 0 : i32
    return %c0_i32, %c0_i32_0 : i32, i32
  }
  func.func @transform_5(%arg0: i32) -> (i32, i32) {
    %c0_i32 = arith.constant 0 : i32
    %c0_i32_0 = arith.constant 0 : i32
    %c0_i32_1 = arith.constant 0 : i32
    return %c0_i32, %c0_i32_0 : i32, i32
  }
  func.func @transform_6(%arg0: i32) -> (i32, i32, i32) {
    %c0_i32 = arith.constant 0 : i32
    %c0_i32_0 = arith.constant 0 : i32
    %c0_i32_1 = arith.constant 0 : i32
    return %arg0, %c0_i32, %c0_i32_0 : i32, i32, i32
  }
}

module attributes {stable_mosaic.version = 11 : i64} {
  func.func @bn_relu_conv3x3_stats_kernel(%arg0: i32, %arg1: memref<2x256x128xf32, #tpu.memory_space<vmem>>, %arg2: memref<1x128xf32, #tpu.memory_space<vmem>>, %arg3: memref<1x128xf32, #tpu.memory_space<vmem>>, %arg4: memref<1152x128xf32, #tpu.memory_space<vmem>>, %arg5: memref<1x128xf32, #tpu.memory_space<vmem>>, %arg6: memref<2x256x128xf32, #tpu.memory_space<vmem>>, %arg7: memref<1x2x128xf32, #tpu.memory_space<vmem>>, %arg8: memref<2x18x18x128xf32, #tpu.memory_space<vmem>>, %arg9: memref<512x1152xf32, #tpu.memory_space<vmem>>) attributes {dimension_semantics = [#tpu.dimension_semantics<parallel>], iteration_bounds = array<i64: 1>, scalar_prefetch = 0 : i64, scratch_operands = 2 : i64, tpu.core_type = #tpu.core_type<tc>, window_params = [{transform_indices = @transform_0, window_bounds = array<i64: 2, 256, 128>}, {pipeline_mode = #tpu.pipeline_mode<synchronous>, transform_indices = @transform_1, window_bounds = array<i64: 1, 128>}, {pipeline_mode = #tpu.pipeline_mode<synchronous>, transform_indices = @transform_2, window_bounds = array<i64: 1, 128>}, {pipeline_mode = #tpu.pipeline_mode<synchronous>, transform_indices = @transform_3, window_bounds = array<i64: 1152, 128>}, {pipeline_mode = #tpu.pipeline_mode<synchronous>, transform_indices = @transform_4, window_bounds = array<i64: 1, 128>}, {transform_indices = @transform_5, window_bounds = array<i64: 2, 256, 128>}, {transform_indices = @transform_6, window_bounds = array<i64: 1, 2, 128>}]} {
    %c0 = arith.constant 0 : index
    %c0_0 = arith.constant 0 : index
    %c0_1 = arith.constant 0 : index
    %0 = vector.load %arg1[%c0, %c0_0, %c0_1] : memref<2x256x128xf32, #tpu.memory_space<vmem>>, vector<2x256x128xf32>
    %c0_2 = arith.constant 0 : index
    %c0_3 = arith.constant 0 : index
    %1 = vector.load %arg2[%c0_2, %c0_3] : memref<1x128xf32, #tpu.memory_space<vmem>>, vector<1x128xf32>
    %2 = vector.shape_cast %1 : vector<1x128xf32> to vector<1x1x128xf32>
    %3 = vector.broadcast %2 : vector<1x1x128xf32> to vector<2x256x128xf32>
    %4 = arith.mulf %0, %3 : vector<2x256x128xf32>
    %c0_4 = arith.constant 0 : index
    %c0_5 = arith.constant 0 : index
    %5 = vector.load %arg3[%c0_4, %c0_5] : memref<1x128xf32, #tpu.memory_space<vmem>>, vector<1x128xf32>
    %6 = vector.shape_cast %5 : vector<1x128xf32> to vector<1x1x128xf32>
    %7 = vector.broadcast %6 : vector<1x1x128xf32> to vector<2x256x128xf32>
    %8 = arith.addf %4, %7 : vector<2x256x128xf32>
    %cst = arith.constant 0.000000e+00 : f32
    %9 = vector.broadcast %cst : f32 to vector<2x256x128xf32>
    %10 = arith.maximumf %8, %9 : vector<2x256x128xf32>
    %cst_6 = arith.constant 0.000000e+00 : f32
    %11 = vector.broadcast %cst_6 : f32 to vector<2x1x18x128xf32>
    %cst_7 = arith.constant 0.000000e+00 : f32
    %12 = vector.broadcast %cst_7 : f32 to vector<2x18x1x128xf32>
    %c0_8 = arith.constant 0 : index
    %c0_9 = arith.constant 0 : index
    %c0_10 = arith.constant 0 : index
    %c0_11 = arith.constant 0 : index
    %13 = vector.load %arg8[%c0_8, %c0_9, %c0_10, %c0_11] : memref<2x18x18x128xf32, #tpu.memory_space<vmem>>, vector<2x1x18x128xf32>
    tpu.vector_store %arg8[%c0_8, %c0_9, %c0_10, %c0_11], %11 {strides = array<i32>} : memref<2x18x18x128xf32, #tpu.memory_space<vmem>>, vector<2x1x18x128xf32>,
    %c0_12 = arith.constant 0 : index
    %c17 = arith.constant 17 : index
    %c0_13 = arith.constant 0 : index
    %c0_14 = arith.constant 0 : index
    %14 = vector.load %arg8[%c0_12, %c17, %c0_13, %c0_14] : memref<2x18x18x128xf32, #tpu.memory_space<vmem>>, vector<2x1x18x128xf32>
    tpu.vector_store %arg8[%c0_12, %c17, %c0_13, %c0_14], %11 {strides = array<i32>} : memref<2x18x18x128xf32, #tpu.memory_space<vmem>>, vector<2x1x18x128xf32>,
    %c0_15 = arith.constant 0 : index
    %c0_16 = arith.constant 0 : index
    %c0_17 = arith.constant 0 : index
    %c0_18 = arith.constant 0 : index
    %15 = vector.load %arg8[%c0_15, %c0_16, %c0_17, %c0_18] : memref<2x18x18x128xf32, #tpu.memory_space<vmem>>, vector<2x18x1x128xf32>
    tpu.vector_store %arg8[%c0_15, %c0_16, %c0_17, %c0_18], %12 {strides = array<i32>} : memref<2x18x18x128xf32, #tpu.memory_space<vmem>>, vector<2x18x1x128xf32>,
    %c0_19 = arith.constant 0 : index
    %c0_20 = arith.constant 0 : index
    %c17_21 = arith.constant 17 : index
    %c0_22 = arith.constant 0 : index
    %16 = vector.load %arg8[%c0_19, %c0_20, %c17_21, %c0_22] : memref<2x18x18x128xf32, #tpu.memory_space<vmem>>, vector<2x18x1x128xf32>
    tpu.vector_store %arg8[%c0_19, %c0_20, %c17_21, %c0_22], %12 {strides = array<i32>} : memref<2x18x18x128xf32, #tpu.memory_space<vmem>>, vector<2x18x1x128xf32>,
    %17 = vector.shape_cast %10 : vector<2x256x128xf32> to vector<2x16x16x128xf32>
    %c0_23 = arith.constant 0 : index
    %c1 = arith.constant 1 : index
    %c1_24 = arith.constant 1 : index
    %c0_25 = arith.constant 0 : index
    %18 = vector.load %arg8[%c0_23, %c1, %c1_24, %c0_25] : memref<2x18x18x128xf32, #tpu.memory_space<vmem>>, vector<2x16x16x128xf32>
    tpu.vector_store %arg8[%c0_23, %c1, %c1_24, %c0_25], %17 {strides = array<i32>} : memref<2x18x18x128xf32, #tpu.memory_space<vmem>>, vector<2x16x16x128xf32>,
    %c0_26 = arith.constant 0 : index
    %c0_27 = arith.constant 0 : index
    %c0_28 = arith.constant 0 : index
    %c0_29 = arith.constant 0 : index
    %19 = vector.load %arg8[%c0_26, %c0_27, %c0_28, %c0_29] : memref<2x18x18x128xf32, #tpu.memory_space<vmem>>, vector<2x16x16x128xf32>
    %20 = vector.shape_cast %19 : vector<2x16x16x128xf32> to vector<512x128xf32>
    %c0_30 = arith.constant 0 : index
    %c0_31 = arith.constant 0 : index
    %21 = vector.load %arg9[%c0_30, %c0_31] : memref<512x1152xf32, #tpu.memory_space<vmem>>, vector<512x128xf32>
    tpu.vector_store %arg9[%c0_30, %c0_31], %20 {strides = array<i32>} : memref<512x1152xf32, #tpu.memory_space<vmem>>, vector<512x128xf32>,
    %c0_32 = arith.constant 0 : index
    %c0_33 = arith.constant 0 : index
    %c1_34 = arith.constant 1 : index
    %c0_35 = arith.constant 0 : index
    %22 = vector.load %arg8[%c0_32, %c0_33, %c1_34, %c0_35] : memref<2x18x18x128xf32, #tpu.memory_space<vmem>>, vector<2x16x16x128xf32>
    %23 = vector.shape_cast %22 : vector<2x16x16x128xf32> to vector<512x128xf32>
    %c0_36 = arith.constant 0 : index
    %c128 = arith.constant 128 : index
    %24 = vector.load %arg9[%c0_36, %c128] : memref<512x1152xf32, #tpu.memory_space<vmem>>, vector<512x128xf32>
    tpu.vector_store %arg9[%c0_36, %c128], %23 {strides = array<i32>} : memref<512x1152xf32, #tpu.memory_space<vmem>>, vector<512x128xf32>,
    %c0_37 = arith.constant 0 : index
    %c0_38 = arith.constant 0 : index
    %c2 = arith.constant 2 : index
    %c0_39 = arith.constant 0 : index
    %25 = vector.load %arg8[%c0_37, %c0_38, %c2, %c0_39] : memref<2x18x18x128xf32, #tpu.memory_space<vmem>>, vector<2x16x16x128xf32>
    %26 = vector.shape_cast %25 : vector<2x16x16x128xf32> to vector<512x128xf32>
    %c0_40 = arith.constant 0 : index
    %c256 = arith.constant 256 : index
    %27 = vector.load %arg9[%c0_40, %c256] : memref<512x1152xf32, #tpu.memory_space<vmem>>, vector<512x128xf32>
    tpu.vector_store %arg9[%c0_40, %c256], %26 {strides = array<i32>} : memref<512x1152xf32, #tpu.memory_space<vmem>>, vector<512x128xf32>,
    %c0_41 = arith.constant 0 : index
    %c1_42 = arith.constant 1 : index
    %c0_43 = arith.constant 0 : index
    %c0_44 = arith.constant 0 : index
    %28 = vector.load %arg8[%c0_41, %c1_42, %c0_43, %c0_44] : memref<2x18x18x128xf32, #tpu.memory_space<vmem>>, vector<2x16x16x128xf32>
    %29 = vector.shape_cast %28 : vector<2x16x16x128xf32> to vector<512x128xf32>
    %c0_45 = arith.constant 0 : index
    %c384 = arith.constant 384 : index
    %30 = vector.load %arg9[%c0_45, %c384] : memref<512x1152xf32, #tpu.memory_space<vmem>>, vector<512x128xf32>
    tpu.vector_store %arg9[%c0_45, %c384], %29 {strides = array<i32>} : memref<512x1152xf32, #tpu.memory_space<vmem>>, vector<512x128xf32>,
    %c0_46 = arith.constant 0 : index
    %c1_47 = arith.constant 1 : index
    %c1_48 = arith.constant 1 : index
    %c0_49 = arith.constant 0 : index
    %31 = vector.load %arg8[%c0_46, %c1_47, %c1_48, %c0_49] : memref<2x18x18x128xf32, #tpu.memory_space<vmem>>, vector<2x16x16x128xf32>
    %32 = vector.shape_cast %31 : vector<2x16x16x128xf32> to vector<512x128xf32>
    %c0_50 = arith.constant 0 : index
    %c512 = arith.constant 512 : index
    %33 = vector.load %arg9[%c0_50, %c512] : memref<512x1152xf32, #tpu.memory_space<vmem>>, vector<512x128xf32>
    tpu.vector_store %arg9[%c0_50, %c512], %32 {strides = array<i32>} : memref<512x1152xf32, #tpu.memory_space<vmem>>, vector<512x128xf32>,
    %c0_51 = arith.constant 0 : index
    %c1_52 = arith.constant 1 : index
    %c2_53 = arith.constant 2 : index
    %c0_54 = arith.constant 0 : index
    %34 = vector.load %arg8[%c0_51, %c1_52, %c2_53, %c0_54] : memref<2x18x18x128xf32, #tpu.memory_space<vmem>>, vector<2x16x16x128xf32>
    %35 = vector.shape_cast %34 : vector<2x16x16x128xf32> to vector<512x128xf32>
    %c0_55 = arith.constant 0 : index
    %c640 = arith.constant 640 : index
    %36 = vector.load %arg9[%c0_55, %c640] : memref<512x1152xf32, #tpu.memory_space<vmem>>, vector<512x128xf32>
    tpu.vector_store %arg9[%c0_55, %c640], %35 {strides = array<i32>} : memref<512x1152xf32, #tpu.memory_space<vmem>>, vector<512x128xf32>,
    %c0_56 = arith.constant 0 : index
    %c2_57 = arith.constant 2 : index
    %c0_58 = arith.constant 0 : index
    %c0_59 = arith.constant 0 : index
    %37 = vector.load %arg8[%c0_56, %c2_57, %c0_58, %c0_59] : memref<2x18x18x128xf32, #tpu.memory_space<vmem>>, vector<2x16x16x128xf32>
    %38 = vector.shape_cast %37 : vector<2x16x16x128xf32> to vector<512x128xf32>
    %c0_60 = arith.constant 0 : index
    %c768 = arith.constant 768 : index
    %39 = vector.load %arg9[%c0_60, %c768] : memref<512x1152xf32, #tpu.memory_space<vmem>>, vector<512x128xf32>
    tpu.vector_store %arg9[%c0_60, %c768], %38 {strides = array<i32>} : memref<512x1152xf32, #tpu.memory_space<vmem>>, vector<512x128xf32>,
    %c0_61 = arith.constant 0 : index
    %c2_62 = arith.constant 2 : index
    %c1_63 = arith.constant 1 : index
    %c0_64 = arith.constant 0 : index
    %40 = vector.load %arg8[%c0_61, %c2_62, %c1_63, %c0_64] : memref<2x18x18x128xf32, #tpu.memory_space<vmem>>, vector<2x16x16x128xf32>
    %41 = vector.shape_cast %40 : vector<2x16x16x128xf32> to vector<512x128xf32>
    %c0_65 = arith.constant 0 : index
    %c896 = arith.constant 896 : index
    %42 = vector.load %arg9[%c0_65, %c896] : memref<512x1152xf32, #tpu.memory_space<vmem>>, vector<512x128xf32>
    tpu.vector_store %arg9[%c0_65, %c896], %41 {strides = array<i32>} : memref<512x1152xf32, #tpu.memory_space<vmem>>, vector<512x128xf32>,
    %c0_66 = arith.constant 0 : index
    %c2_67 = arith.constant 2 : index
    %c2_68 = arith.constant 2 : index
    %c0_69 = arith.constant 0 : index
    %43 = vector.load %arg8[%c0_66, %c2_67, %c2_68, %c0_69] : memref<2x18x18x128xf32, #tpu.memory_space<vmem>>, vector<2x16x16x128xf32>
    %44 = vector.shape_cast %43 : vector<2x16x16x128xf32> to vector<512x128xf32>
    %c0_70 = arith.constant 0 : index
    %c1024 = arith.constant 1024 : index
    %45 = vector.load %arg9[%c0_70, %c1024] : memref<512x1152xf32, #tpu.memory_space<vmem>>, vector<512x128xf32>
    tpu.vector_store %arg9[%c0_70, %c1024], %44 {strides = array<i32>} : memref<512x1152xf32, #tpu.memory_space<vmem>>, vector<512x128xf32>,
    %c0_71 = arith.constant 0 : index
    %c0_72 = arith.constant 0 : index
    %46 = vector.load %arg9[%c0_71, %c0_72] : memref<512x1152xf32, #tpu.memory_space<vmem>>, vector<512x1152xf32>
    %c0_73 = arith.constant 0 : index
    %c0_74 = arith.constant 0 : index
    %47 = vector.load %arg4[%c0_73, %c0_74] : memref<1152x128xf32, #tpu.memory_space<vmem>>, vector<1152x128xf32>
    %cst_75 = arith.constant dense<0.000000e+00> : vector<512x128xf32>
    %48 = tpu.matmul %46, %47, %cst_75 {dimension_numbers = #tpu.dot_dimension_numbers<[1], [0], [0], [1], [0, 0, 1, 1], [], []>} : vector<512x1152xf32>, vector<1152x128xf32>, vector<512x128xf32> -> vector<512x128xf32>
    %c0_76 = arith.constant 0 : index
    %c0_77 = arith.constant 0 : index
    %49 = vector.load %arg5[%c0_76, %c0_77] : memref<1x128xf32, #tpu.memory_space<vmem>>, vector<1x128xf32>
    %50 = vector.broadcast %49 : vector<1x128xf32> to vector<512x128xf32>
    %51 = arith.addf %48, %50 : vector<512x128xf32>
    %52 = vector.shape_cast %51 : vector<512x128xf32> to vector<2x256x128xf32>
    %c0_78 = arith.constant 0 : index
    %c0_79 = arith.constant 0 : index
    %c0_80 = arith.constant 0 : index
    %53 = vector.load %arg6[%c0_78, %c0_79, %c0_80] : memref<2x256x128xf32, #tpu.memory_space<vmem>>, vector<2x256x128xf32>
    tpu.vector_store %arg6[%c0_78, %c0_79, %c0_80], %52 {strides = array<i32>} : memref<2x256x128xf32, #tpu.memory_space<vmem>>, vector<2x256x128xf32>,
    %cst_81 = arith.constant dense<0.000000e+00> : vector<128xf32>
    %54 = vector.multi_reduction <add>, %51, %cst_81 [0] : vector<512x128xf32> to vector<128xf32>
    %55 = vector.shape_cast %54 : vector<128xf32> to vector<1x128xf32>
    %c0_82 = arith.constant 0 : index
    %c0_83 = arith.constant 0 : index
    %c0_84 = arith.constant 0 : index
    %56 = vector.load %arg7[%c0_82, %c0_83, %c0_84] : memref<1x2x128xf32, #tpu.memory_space<vmem>>, vector<1x1x128xf32>
    %57 = vector.shape_cast %56 : vector<1x1x128xf32> to vector<1x128xf32>
    %58 = vector.shape_cast %55 : vector<1x128xf32> to vector<1x1x128xf32>
    tpu.vector_store %arg7[%c0_82, %c0_83, %c0_84], %58 {strides = array<i32>} : memref<1x2x128xf32, #tpu.memory_space<vmem>>, vector<1x1x128xf32>,
    %59 = arith.mulf %51, %51 : vector<512x128xf32>
    %cst_85 = arith.constant dense<0.000000e+00> : vector<128xf32>
    %60 = vector.multi_reduction <add>, %59, %cst_85 [0] : vector<512x128xf32> to vector<128xf32>
    %61 = vector.shape_cast %60 : vector<128xf32> to vector<1x128xf32>
    %c0_86 = arith.constant 0 : index
    %c1_87 = arith.constant 1 : index
    %c0_88 = arith.constant 0 : index
    %62 = vector.load %arg7[%c0_86, %c1_87, %c0_88] : memref<1x2x128xf32, #tpu.memory_space<vmem>>, vector<1x1x128xf32>
    %63 = vector.shape_cast %62 : vector<1x1x128xf32> to vector<1x128xf32>
    %64 = vector.shape_cast %61 : vector<1x128xf32> to vector<1x1x128xf32>
    tpu.vector_store %arg7[%c0_86, %c1_87, %c0_88], %64 {strides = array<i32>} : memref<1x2x128xf32, #tpu.memory_space<vmem>>, vector<1x1x128xf32>,
    return
  }
  func.func @transform_0(%arg0: i32) -> (i32, i32, i32) {
    %c0_i32 = arith.constant 0 : i32
    %c0_i32_0 = arith.constant 0 : i32
    %c0_i32_1 = arith.constant 0 : i32
    return %arg0, %c0_i32, %c0_i32_0 : i32, i32, i32
  }
  func.func @transform_1(%arg0: i32) -> (i32, i32) {
    %c0_i32 = arith.constant 0 : i32
    %c0_i32_0 = arith.constant 0 : i32
    %c0_i32_1 = arith.constant 0 : i32
    return %c0_i32, %c0_i32_0 : i32, i32
  }
  func.func @transform_2(%arg0: i32) -> (i32, i32) {
    %c0_i32 = arith.constant 0 : i32
    %c0_i32_0 = arith.constant 0 : i32
    %c0_i32_1 = arith.constant 0 : i32
    return %c0_i32, %c0_i32_0 : i32, i32
  }
  func.func @transform_3(%arg0: i32) -> (i32, i32) {
    %c0_i32 = arith.constant 0 : i32
    %c0_i32_0 = arith.constant 0 : i32
    %c0_i32_1 = arith.constant 0 : i32
    return %c0_i32, %c0_i32_0 : i32, i32
  }
  func.func @transform_4(%arg0: i32) -> (i32, i32) {
    %c0_i32 = arith.constant 0 : i32
    %c0_i32_0 = arith.constant 0 : i32
    %c0_i32_1 = arith.constant 0 : i32
    return %c0_i32, %c0_i32_0 : i32, i32
  }
  func.func @transform_5(%arg0: i32) -> (i32, i32, i32) {
    %c0_i32 = arith.constant 0 : i32
    %c0_i32_0 = arith.constant 0 : i32
    %c0_i32_1 = arith.constant 0 : i32
    return %arg0, %c0_i32, %c0_i32_0 : i32, i32, i32
  }
  func.func @transform_6(%arg0: i32) -> (i32, i32, i32) {
    %c0_i32 = arith.constant 0 : i32
    %c0_i32_0 = arith.constant 0 : i32
    %c0_i32_1 = arith.constant 0 : i32
    return %arg0, %c0_i32, %c0_i32_0 : i32, i32, i32
  }
}

</mosaic_0001>

<llo_original>
// kernel: basic_block_forward.5
$region0: #{basic_block_forward.5}
  #allocation0 [shape = 'u32[]', space=smem, size = 0x4, offset = 0x4, fixed_abs, tag = 'smem constant byte address 0x4 - core index']
  #allocation1 [shape = 'u32[144,128]{1,0:T(1,128)}', space=vmem, size = 0x12000, scoped, tag = 'internal scratch']
  %s0 = inlined_call_operand.vmem [shape: f32[2,256,128], index: 0, kind: input, shape index: {}]
  %s1 = inlined_call_operand.vmem [shape: f32[1,128], index: 1, kind: input, shape index: {}]
  %s2 = inlined_call_operand.vmem [shape: f32[1,128], index: 2, kind: input, shape index: {}]
  %s3 = inlined_call_operand.vmem [shape: f32[2,256,4], index: 3, kind: input, shape index: {}]
  %s4 = inlined_call_operand.vmem [shape: f32[4,128], index: 4, kind: input, shape index: {}]
  %s5 = inlined_call_operand.vmem [shape: f32[1,128], index: 5, kind: input, shape index: {}]
  %s6 = inlined_call_operand.vmem [shape: f32[2,256,128], index: 6, kind: output, shape index: {}]
  %s7 = sld [smem:[#allocation0]]
  $region34: #{basic_block_forward.5} parent=0
    _
  %s9 = ssub.s32 1, %s7
  %s10 = scalar_select 0, %s9, %s7
  // Predicated region
  $region2: #{basic_block_forward.5} parent=0 // pred_check
    _
  $region3: #{basic_block_forward.5} parent=0 // pred_check_branch
    %12 = sbr.rel (0) target = $region5
  $region4: #{basic_block_forward.5} parent=0 // pred_region
    _
  $region5: #{basic_block_forward.5} parent=0 // pred_fallthru
    _
  // Predicated region
  $region6: #{basic_block_forward.5} parent=0 // pred_check
    _
  $region7: #{basic_block_forward.5} parent=0 // pred_check_branch
    %14 = sbr.rel (0) target = $region9
  $region8: #{basic_block_forward.5} parent=0 // pred_region
    _
  $region9: #{basic_block_forward.5} parent=0 // pred_fallthru
    _
  // Predicated region
  $region10: #{basic_block_forward.5} parent=0 // pred_check
    _
  $region11: #{basic_block_forward.5} parent=0 // pred_check_branch
    %16 = sbr.rel (0) target = $region13
  $region12: #{basic_block_forward.5} parent=0 // pred_region
    _
  $region13: #{basic_block_forward.5} parent=0 // pred_fallthru
    _
  // Predicated region
  $region14: #{basic_block_forward.5} parent=0 // pred_check
    _
  $region15: #{basic_block_forward.5} parent=0 // pred_check_branch
    %18 = sbr.rel (0) target = $region17
  $region16: #{basic_block_forward.5} parent=0 // pred_region
    _
  $region17: #{basic_block_forward.5} parent=0 // pred_fallthru
    _
  // Predicated region
  $region18: #{basic_block_forward.5} parent=0 // pred_check
    _
  $region19: #{basic_block_forward.5} parent=0 // pred_check_branch
    %20 = sbr.rel (0) target = $region21
  $region20: #{basic_block_forward.5} parent=0 // pred_region
    _
  $region21: #{basic_block_forward.5} parent=0 // pred_fallthru
    _
  // Predicated region
  $region22: #{basic_block_forward.5} parent=0 // pred_check
    _
  $region23: #{basic_block_forward.5} parent=0 // pred_check_branch
    %22 = sbr.rel (0) target = $region25
  $region24: #{basic_block_forward.5} parent=0 // pred_region
    _
  $region25: #{basic_block_forward.5} parent=0 // pred_fallthru
    _
  %v23 = vld [vmem:[%s0] sm:$0xff]
  %v24 = vld [vmem:[%s0 + $0x8] sm:$0xff]
  %v25 = vld [vmem:[%s0 + $0x10] sm:$0xff]
  %v26 = vld [vmem:[%s0 + $0x18] sm:$0xff]
  %v27 = vld [vmem:[%s0 + $0x20] sm:$0xff]
  %v28 = vld [vmem:[%s0 + $0x28] sm:$0xff]
  %v29 = vld [vmem:[%s0 + $0x30] sm:$0xff]
  %v30 = vld [vmem:[%s0 + $0x38] sm:$0xff]
  %v31 = vld [vmem:[%s0 + $0x40] sm:$0xff]
  %v32 = vld [vmem:[%s0 + $0x48] sm:$0xff]
  %v33 = vld [vmem:[%s0 + $0x50] sm:$0xff]
  %v34 = vld [vmem:[%s0 + $0x58] sm:$0xff]
  %v35 = vld [vmem:[%s0 + $0x60] sm:$0xff]
  %v36 = vld [vmem:[%s0 + $0x68] sm:$0xff]
  %v37 = vld [vmem:[%s0 + $0x70] sm:$0xff]
  %v38 = vld [vmem:[%s0 + $0x78] sm:$0xff]
  %v39 = vld [vmem:[%s0 + $0x80] sm:$0xff]
  %v40 = vld [vmem:[%s0 + $0x88] sm:$0xff]
  %v41 = vld [vmem:[%s0 + $0x90] sm:$0xff]
  %v42 = vld [vmem:[%s0 + $0x98] sm:$0xff]
  %v43 = vld [vmem:[%s0 + $0xa0] sm:$0xff]
  %v44 = vld [vmem:[%s0 + $0xa8] sm:$0xff]
  %v45 = vld [vmem:[%s0 + $0xb0] sm:$0xff]
  %v46 = vld [vmem:[%s0 + $0xb8] sm:$0xff]
  %v47 = vld [vmem:[%s0 + $0xc0] sm:$0xff]
  %v48 = vld [vmem:[%s0 + $0xc8] sm:$0xff]
  %v49 = vld [vmem:[%s0 + $0xd0] sm:$0xff]
  %v50 = vld [vmem:[%s0 + $0xd8] sm:$0xff]
  %v51 = vld [vmem:[%s0 + $0xe0] sm:$0xff]
  %v52 = vld [vmem:[%s0 + $0xe8] sm:$0xff]
  %v53 = vld [vmem:[%s0 + $0xf0] sm:$0xff]
  %v54 = vld [vmem:[%s0 + $0xf8] sm:$0xff]
  %v55 = vld [vmem:[%s0 + $0x100] sm:$0xff]
  %v56 = vld [vmem:[%s0 + $0x108] sm:$0xff]
  %v57 = vld [vmem:[%s0 + $0x110] sm:$0xff]
  %v58 = vld [vmem:[%s0 + $0x118] sm:$0xff]
  %v59 = vld [vmem:[%s0 + $0x120] sm:$0xff]
  %v60 = vld [vmem:[%s0 + $0x128] sm:$0xff]
  %v61 = vld [vmem:[%s0 + $0x130] sm:$0xff]
  %v62 = vld [vmem:[%s0 + $0x138] sm:$0xff]
  %v63 = vld [vmem:[%s0 + $0x140] sm:$0xff]
  %v64 = vld [vmem:[%s0 + $0x148] sm:$0xff]
  %v65 = vld [vmem:[%s0 + $0x150] sm:$0xff]
  %v66 = vld [vmem:[%s0 + $0x158] sm:$0xff]
  %v67 = vld [vmem:[%s0 + $0x160] sm:$0xff]
  %v68 = vld [vmem:[%s0 + $0x168] sm:$0xff]
  %v69 = vld [vmem:[%s0 + $0x170] sm:$0xff]
  %v70 = vld [vmem:[%s0 + $0x178] sm:$0xff]
  %v71 = vld [vmem:[%s0 + $0x180] sm:$0xff]
  %v72 = vld [vmem:[%s0 + $0x188] sm:$0xff]
  %v73 = vld [vmem:[%s0 + $0x190] sm:$0xff]
  %v74 = vld [vmem:[%s0 + $0x198] sm:$0xff]
  %v75 = vld [vmem:[%s0 + $0x1a0] sm:$0xff]
  %v76 = vld [vmem:[%s0 + $0x1a8] sm:$0xff]
  %v77 = vld [vmem:[%s0 + $0x1b0] sm:$0xff]
  %v78 = vld [vmem:[%s0 + $0x1b8] sm:$0xff]
  %v79 = vld [vmem:[%s0 + $0x1c0] sm:$0xff]
  %v80 = vld [vmem:[%s0 + $0x1c8] sm:$0xff]
  %v81 = vld [vmem:[%s0 + $0x1d0] sm:$0xff]
  %v82 = vld [vmem:[%s0 + $0x1d8] sm:$0xff]
  %v83 = vld [vmem:[%s0 + $0x1e0] sm:$0xff]
  %v84 = vld [vmem:[%s0 + $0x1e8] sm:$0xff]
  %v85 = vld [vmem:[%s0 + $0x1f0] sm:$0xff]
  %v86 = vld [vmem:[%s0 + $0x1f8] sm:$0xff]
  %v87 = vld [vmem:[%s1] sm:$0x1]
  %v89 = vlaneseq
  %v90 = vshrl.u32 %v89, 7
  %v91 = vsub.s32 0, %v90
  %v92 = vrot.slane %v87, %v91
  %v94 = vmul.f32 %v23, %v92
  %v95 = vmul.f32 %v24, %v92
  %v96 = vmul.f32 %v25, %v92
  %v97 = vmul.f32 %v26, %v92
  %v98 = vmul.f32 %v27, %v92
  %v99 = vmul.f32 %v28, %v92
  %v100 = vmul.f32 %v29, %v92
  %v101 = vmul.f32 %v30, %v92
  %v102 = vmul.f32 %v31, %v92
  %v103 = vmul.f32 %v32, %v92
  %v104 = vmul.f32 %v33, %v92
  %v105 = vmul.f32 %v34, %v92
  %v106 = vmul.f32 %v35, %v92
  %v107 = vmul.f32 %v36, %v92
  %v108 = vmul.f32 %v37, %v92
  %v109 = vmul.f32 %v38, %v92
  %v110 = vmul.f32 %v39, %v92
  %v111 = vmul.f32 %v40, %v92
  %v112 = vmul.f32 %v41, %v92
  %v113 = vmul.f32 %v42, %v92
  %v114 = vmul.f32 %v43, %v92
  %v115 = vmul.f32 %v44, %v92
  %v116 = vmul.f32 %v45, %v92
  %v117 = vmul.f32 %v46, %v92
  %v118 = vmul.f32 %v47, %v92
  %v119 = vmul.f32 %v48, %v92
  %v120 = vmul.f32 %v49, %v92
  %v121 = vmul.f32 %v50, %v92
  %v122 = vmul.f32 %v51, %v92
  %v123 = vmul.f32 %v52, %v92
  %v124 = vmul.f32 %v53, %v92
  %v125 = vmul.f32 %v54, %v92
  %v126 = vmul.f32 %v55, %v92
  %v127 = vmul.f32 %v56, %v92
  %v128 = vmul.f32 %v57, %v92
  %v129 = vmul.f32 %v58, %v92
  %v130 = vmul.f32 %v59, %v92
  %v131 = vmul.f32 %v60, %v92
  %v132 = vmul.f32 %v61, %v92
  %v133 = vmul.f32 %v62, %v92
  %v134 = vmul.f32 %v63, %v92
  %v135 = vmul.f32 %v64, %v92
  %v136 = vmul.f32 %v65, %v92
  %v137 = vmul.f32 %v66, %v92
  %v138 = vmul.f32 %v67, %v92
  %v139 = vmul.f32 %v68, %v92
  %v140 = vmul.f32 %v69, %v92
  %v141 = vmul.f32 %v70, %v92
  %v142 = vmul.f32 %v71, %v92
  %v143 = vmul.f32 %v72, %v92
  %v144 = vmul.f32 %v73, %v92
  %v145 = vmul.f32 %v74, %v92
  %v146 = vmul.f32 %v75, %v92
  %v147 = vmul.f32 %v76, %v92
  %v148 = vmul.f32 %v77, %v92
  %v149 = vmul.f32 %v78, %v92
  %v150 = vmul.f32 %v79, %v92
  %v151 = vmul.f32 %v80, %v92
  %v152 = vmul.f32 %v81, %v92
  %v153 = vmul.f32 %v82, %v92
  %v154 = vmul.f32 %v83, %v92
  %v155 = vmul.f32 %v84, %v92
  %v156 = vmul.f32 %v85, %v92
  %v157 = vmul.f32 %v86, %v92
  %v158 = vld [vmem:[%s2] sm:$0x1]
  %v160 = vlaneseq
  %v161 = vshrl.u32 %v160, 7
  %v162 = vsub.s32 0, %v161
  %v163 = vrot.slane %v158, %v162
  %v165 = vadd.f32 %v94, %v163
  %v166 = vadd.f32 %v95, %v163
  %v167 = vadd.f32 %v96, %v163
  %v168 = vadd.f32 %v97, %v163
  %v169 = vadd.f32 %v98, %v163
  %v170 = vadd.f32 %v99, %v163
  %v171 = vadd.f32 %v100, %v163
  %v172 = vadd.f32 %v101, %v163
  %v173 = vadd.f32 %v102, %v163
  %v174 = vadd.f32 %v103, %v163
  %v175 = vadd.f32 %v104, %v163
  %v176 = vadd.f32 %v105, %v163
  %v177 = vadd.f32 %v106, %v163
  %v178 = vadd.f32 %v107, %v163
  %v179 = vadd.f32 %v108, %v163
  %v180 = vadd.f32 %v109, %v163
  %v181 = vadd.f32 %v110, %v163
  %v182 = vadd.f32 %v111, %v163
  %v183 = vadd.f32 %v112, %v163
  %v184 = vadd.f32 %v113, %v163
  %v185 = vadd.f32 %v114, %v163
  %v186 = vadd.f32 %v115, %v163
  %v187 = vadd.f32 %v116, %v163
  %v188 = vadd.f32 %v117, %v163
  %v189 = vadd.f32 %v118, %v163
  %v190 = vadd.f32 %v119, %v163
  %v191 = vadd.f32 %v120, %v163
  %v192 = vadd.f32 %v121, %v163
  %v193 = vadd.f32 %v122, %v163
  %v194 = vadd.f32 %v123, %v163
  %v195 = vadd.f32 %v124, %v163
  %v196 = vadd.f32 %v125, %v163
  %v197 = vadd.f32 %v126, %v163
  %v198 = vadd.f32 %v127, %v163
  %v199 = vadd.f32 %v128, %v163
  %v200 = vadd.f32 %v129, %v163
  %v201 = vadd.f32 %v130, %v163
  %v202 = vadd.f32 %v131, %v163
  %v203 = vadd.f32 %v132, %v163
  %v204 = vadd.f32 %v133, %v163
  %v205 = vadd.f32 %v134, %v163
  %v206 = vadd.f32 %v135, %v163
  %v207 = vadd.f32 %v136, %v163
  %v208 = vadd.f32 %v137, %v163
  %v209 = vadd.f32 %v138, %v163
  %v210 = vadd.f32 %v139, %v163
  %v211 = vadd.f32 %v140, %v163
  %v212 = vadd.f32 %v141, %v163
  %v213 = vadd.f32 %v142, %v163
  %v214 = vadd.f32 %v143, %v163
  %v215 = vadd.f32 %v144, %v163
  %v216 = vadd.f32 %v145, %v163
  %v217 = vadd.f32 %v146, %v163
  %v218 = vadd.f32 %v147, %v163
  %v219 = vadd.f32 %v148, %v163
  %v220 = vadd.f32 %v149, %v163
  %v221 = vadd.f32 %v150, %v163
  %v222 = vadd.f32 %v151, %v163
  %v223 = vadd.f32 %v152, %v163
  %v224 = vadd.f32 %v153, %v163
  %v225 = vadd.f32 %v154, %v163
  %v226 = vadd.f32 %v155, %v163
  %v227 = vadd.f32 %v156, %v163
  %v228 = vadd.f32 %v157, %v163
  %v229 = vld [vmem:[%s3] sm:$0xff]
  %v230 = vld [vmem:[%s3 + $0x8] sm:$0xff]
  %v231 = vld [vmem:[%s3 + $0x10] sm:$0xff]
  %v232 = vld [vmem:[%s3 + $0x18] sm:$0xff]
  %v233 = vld [vmem:[%s3 + $0x20] sm:$0xff]
  %v234 = vld [vmem:[%s3 + $0x28] sm:$0xff]
  %v235 = vld [vmem:[%s3 + $0x30] sm:$0xff]
  %v236 = vld [vmem:[%s3 + $0x38] sm:$0xff]
  %v237 = vld [vmem:[%s3 + $0x40] sm:$0xff]
  %v238 = vld [vmem:[%s3 + $0x48] sm:$0xff]
  %v239 = vld [vmem:[%s3 + $0x50] sm:$0xff]
  %v240 = vld [vmem:[%s3 + $0x58] sm:$0xff]
  %v241 = vld [vmem:[%s3 + $0x60] sm:$0xff]
  %v242 = vld [vmem:[%s3 + $0x68] sm:$0xff]
  %v243 = vld [vmem:[%s3 + $0x70] sm:$0xff]
  %v244 = vld [vmem:[%s3 + $0x78] sm:$0xff]
  %v245 = vld [vmem:[%s3 + $0x80] sm:$0xff]
  %v246 = vld [vmem:[%s3 + $0x88] sm:$0xff]
  %v247 = vld [vmem:[%s3 + $0x90] sm:$0xff]
  %v248 = vld [vmem:[%s3 + $0x98] sm:$0xff]
  %v249 = vld [vmem:[%s3 + $0xa0] sm:$0xff]
  %v250 = vld [vmem:[%s3 + $0xa8] sm:$0xff]
  %v251 = vld [vmem:[%s3 + $0xb0] sm:$0xff]
  %v252 = vld [vmem:[%s3 + $0xb8] sm:$0xff]
  %v253 = vld [vmem:[%s3 + $0xc0] sm:$0xff]
  %v254 = vld [vmem:[%s3 + $0xc8] sm:$0xff]
  %v255 = vld [vmem:[%s3 + $0xd0] sm:$0xff]
  %v256 = vld [vmem:[%s3 + $0xd8] sm:$0xff]
  %v257 = vld [vmem:[%s3 + $0xe0] sm:$0xff]
  %v258 = vld [vmem:[%s3 + $0xe8] sm:$0xff]
  %v259 = vld [vmem:[%s3 + $0xf0] sm:$0xff]
  %v260 = vld [vmem:[%s3 + $0xf8] sm:$0xff]
  %v261 = vld [vmem:[%s3 + $0x100] sm:$0xff]
  %v262 = vld [vmem:[%s3 + $0x108] sm:$0xff]
  %v263 = vld [vmem:[%s3 + $0x110] sm:$0xff]
  %v264 = vld [vmem:[%s3 + $0x118] sm:$0xff]
  %v265 = vld [vmem:[%s3 + $0x120] sm:$0xff]
  %v266 = vld [vmem:[%s3 + $0x128] sm:$0xff]
  %v267 = vld [vmem:[%s3 + $0x130] sm:$0xff]
  %v268 = vld [vmem:[%s3 + $0x138] sm:$0xff]
  %v269 = vld [vmem:[%s3 + $0x140] sm:$0xff]
  %v270 = vld [vmem:[%s3 + $0x148] sm:$0xff]
  %v271 = vld [vmem:[%s3 + $0x150] sm:$0xff]
  %v272 = vld [vmem:[%s3 + $0x158] sm:$0xff]
  %v273 = vld [vmem:[%s3 + $0x160] sm:$0xff]
  %v274 = vld [vmem:[%s3 + $0x168] sm:$0xff]
  %v275 = vld [vmem:[%s3 + $0x170] sm:$0xff]
  %v276 = vld [vmem:[%s3 + $0x178] sm:$0xff]
  %v277 = vld [vmem:[%s3 + $0x180] sm:$0xff]
  %v278 = vld [vmem:[%s3 + $0x188] sm:$0xff]
  %v279 = vld [vmem:[%s3 + $0x190] sm:$0xff]
  %v280 = vld [vmem:[%s3 + $0x198] sm:$0xff]
  %v281 = vld [vmem:[%s3 + $0x1a0] sm:$0xff]
  %v282 = vld [vmem:[%s3 + $0x1a8] sm:$0xff]
  %v283 = vld [vmem:[%s3 + $0x1b0] sm:$0xff]
  %v284 = vld [vmem:[%s3 + $0x1b8] sm:$0xff]
  %v285 = vld [vmem:[%s3 + $0x1c0] sm:$0xff]
  %v286 = vld [vmem:[%s3 + $0x1c8] sm:$0xff]
  %v287 = vld [vmem:[%s3 + $0x1d0] sm:$0xff]
  %v288 = vld [vmem:[%s3 + $0x1d8] sm:$0xff]
  %v289 = vld [vmem:[%s3 + $0x1e0] sm:$0xff]
  %v290 = vld [vmem:[%s3 + $0x1e8] sm:$0xff]
  %v291 = vld [vmem:[%s3 + $0x1f0] sm:$0xff]
  %v292 = vld [vmem:[%s3 + $0x1f8] sm:$0xff]
  %v293 = vld [vmem:[%s4] sm:$0xf]
  %v294 = vld [vmem:[%s5] sm:$0x1]
  %v296 = vlaneseq
  %v297 = vshrl.u32 %v296, 7
  %v298 = vsub.s32 0, %v297
  %v299 = vrot.slane %v294, %v298
  %vm301 = vcmask 31744
  %v303 = vsel %vm301, %v229, 0
  %v306 = vsel %vm301, %v230, 0
  %v309 = vsel %vm301, %v231, 0
  %v312 = vsel %vm301, %v232, 0
  %v315 = vsel %vm301, %v233, 0
  %v318 = vsel %vm301, %v234, 0
  %v321 = vsel %vm301, %v235, 0
  %v324 = vsel %vm301, %v236, 0
  %v327 = vsel %vm301, %v237, 0
  %v330 = vsel %vm301, %v238, 0
  %v333 = vsel %vm301, %v239, 0
  %v336 = vsel %vm301, %v240, 0
  %v339 = vsel %vm301, %v241, 0
  %v342 = vsel %vm301, %v242, 0
  %v345 = vsel %vm301, %v243, 0
  %v348 = vsel %vm301, %v244, 0
  %v351 = vsel %vm301, %v245, 0
  %v354 = vsel %vm301, %v246, 0
  %v357 = vsel %vm301, %v247, 0
  %v360 = vsel %vm301, %v248, 0
  %v363 = vsel %vm301, %v249, 0
  %v366 = vsel %vm301, %v250, 0
  %v369 = vsel %vm301, %v251, 0
  %v372 = vsel %vm301, %v252, 0
  %v375 = vsel %vm301, %v253, 0
  %v378 = vsel %vm301, %v254, 0
  %v381 = vsel %vm301, %v255, 0
  %v384 = vsel %vm301, %v256, 0
  %v387 = vsel %vm301, %v257, 0
  %v390 = vsel %vm301, %v258, 0
  %v393 = vsel %vm301, %v259, 0
  %v396 = vsel %vm301, %v260, 0
  %v399 = vsel %vm301, %v261, 0
  %v402 = vsel %vm301, %v262, 0
  %v405 = vsel %vm301, %v263, 0
  %v408 = vsel %vm301, %v264, 0
  %v411 = vsel %vm301, %v265, 0
  %v414 = vsel %vm301, %v266, 0
  %v417 = vsel %vm301, %v267, 0
  %v420 = vsel %vm301, %v268, 0
  %v423 = vsel %vm301, %v269, 0
  %v426 = vsel %vm301, %v270, 0
  %v429 = vsel %vm301, %v271, 0
  %v432 = vsel %vm301, %v272, 0
  %v435 = vsel %vm301, %v273, 0
  %v438 = vsel %vm301, %v274, 0
  %v441 = vsel %vm301, %v275, 0
  %v444 = vsel %vm301, %v276, 0
  %v447 = vsel %vm301, %v277, 0
  %v450 = vsel %vm301, %v278, 0
  %v453 = vsel %vm301, %v279, 0
  %v456 = vsel %vm301, %v280, 0
  %v459 = vsel %vm301, %v281, 0
  %v462 = vsel %vm301, %v282, 0
  %v465 = vsel %vm301, %v283, 0
  %v468 = vsel %vm301, %v284, 0
  %v471 = vsel %vm301, %v285, 0
  %v474 = vsel %vm301, %v286, 0
  %v477 = vsel %vm301, %v287, 0
  %v480 = vsel %vm301, %v288, 0
  %v483 = vsel %vm301, %v289, 0
  %v486 = vsel %vm301, %v290, 0
  %v489 = vsel %vm301, %v291, 0
  %v492 = vsel %vm301, %v292, 0
  %vm494 = vcmask 1043456
  %v496 = vsel %vm494, %v293, 0
  %498 = vmatprep.subr.mxu0 0.0
  %499 = vmatpush1.msra.mxu0 0.0
  %500 = vmatprep.subr.mxu0 0.0
  %501 = vmatpush1.msra.mxu0 0.0
  %502 = vmatprep.subr.mxu0 0.0
  %503 = vmatpush1.msra.mxu0 0.0
  %504 = vmatprep.subr.mxu0 0.0
  %505 = vmatpush1.msra.mxu0 0.0
  %506 = vmatprep.subr.mxu0 0.0
  %507 = vmatpush1.msra.mxu0 0.0
  %508 = vmatprep.subr.mxu0 0.0
  %509 = vmatpush1.msra.mxu0 0.0
  %510 = vmatprep.subr.mxu0 0.0
  %511 = vmatpush1.msra.mxu0 0.0
  %512 = vmatprep.subr.mxu0 0.0
  %513 = vmatpush1.msra.mxu0 0.0
  %514 = vmatprep.subr.mxu0 0.0
  %515 = vmatpush1.msra.mxu0 0.0
  %516 = vmatprep.subr.mxu0 0.0
  %517 = vmatpush1.msra.mxu0 0.0
  %518 = vmatprep.subr.mxu0 0.0
  %519 = vmatpush1.msra.mxu0 0.0
  %520 = vmatprep.subr.mxu0 0.0
  %521 = vmatpush1.msra.mxu0 0.0
  %522 = vmatprep.subr.mxu0 0.0
  %523 = vmatpush1.msra.mxu0 0.0
  %524 = vmatprep.subr.mxu0 0.0
  %525 = vmatpush1.msra.mxu0 0.0
  %526 = vmatprep.subr.mxu0 0.0
  %527 = vmatpush1.msra.mxu0 0.0
  %528 = vmatprep.subr.mxu0 0.0
  %529 = vmatpush1.msra.mxu0 %v496
  %530 = vmatprep.subr.mxu0 0.0
  %531 = vmatpush2.msra.mxu0 0.0
  %532 = vmatprep.subr.mxu0 0.0
  %533 = vmatpush2.msra.mxu0 0.0
  %534 = vmatprep.subr.mxu0 0.0
  %535 = vmatpush2.msra.mxu0 0.0
  %536 = vmatprep.subr.mxu0 0.0
  %537 = vmatpush2.msra.mxu0 0.0
  %538 = vmatprep.subr.mxu0 0.0
  %539 = vmatpush2.msra.mxu0 0.0
  %540 = vmatprep.subr.mxu0 0.0
  %541 = vmatpush2.msra.mxu0 0.0
  %542 = vmatprep.subr.mxu0 0.0
  %543 = vmatpush2.msra.mxu0 0.0
  %544 = vmatprep.subr.mxu0 0.0
  %545 = vmatpush2.msra.mxu0 0.0
  %546 = vmatprep.subr.mxu0 0.0
  %547 = vmatpush2.msra.mxu0 0.0
  %548 = vmatprep.subr.mxu0 0.0
  %549 = vmatpush2.msra.mxu0 0.0
  %550 = vmatprep.subr.mxu0 0.0
  %551 = vmatpush2.msra.mxu0 0.0
  %552 = vmatprep.subr.mxu0 0.0
  %553 = vmatpush2.msra.mxu0 0.0
  %554 = vmatprep.subr.mxu0 0.0
  %555 = vmatpush2.msra.mxu0 0.0
  %556 = vmatprep.subr.mxu0 0.0
  %557 = vmatpush2.msra.mxu0 0.0
  %558 = vmatprep.subr.mxu0 0.0
  %559 = vmatpush2.msra.mxu0 0.0
  %560 = vmatprep.subr.mxu0 0.0
  %561 = vmatpush2.msra.mxu0 0.0
  %562 = vmatprep.mubr.f32.mxu0 0.0
  %563 = vmatmul.mubr.f32.gmra.mxu0 %v303
  %v564 = vpop.f32.mrf.mxu0
  %v565 = vadd.f32 %v299, %v564
  %v566 = vpop.f32.mrf.mxu0
  %567 = vmatprep.mubr.f32.mxu0 0.0
  %568 = vmatmul.mubr.f32.gmra.mxu0 %v306
  %v569 = vpop.f32.mrf.mxu0
  %v570 = vadd.f32 %v299, %v569
  %v571 = vpop.f32.mrf.mxu0
  %572 = vmatprep.mubr.f32.mxu0 0.0
  %573 = vmatmul.mubr.f32.gmra.mxu0 %v309
  %v574 = vpop.f32.mrf.mxu0
  %v575 = vadd.f32 %v299, %v574
  %v576 = vpop.f32.mrf.mxu0
  %577 = vmatprep.mubr.f32.mxu0 0.0
  %578 = vmatmul.mubr.f32.gmra.mxu0 %v312
  %v579 = vpop.f32.mrf.mxu0
  %v580 = vadd.f32 %v299, %v579
  %v581 = vpop.f32.mrf.mxu0
  %582 = vmatprep.mubr.f32.mxu0 0.0
  %583 = vmatmul.mubr.f32.gmra.mxu0 %v315
  %v584 = vpop.f32.mrf.mxu0
  %v585 = vadd.f32 %v299, %v584
  %v586 = vpop.f32.mrf.mxu0
  %587 = vmatprep.mubr.f32.mxu0 0.0
  %588 = vmatmul.mubr.f32.gmra.mxu0 %v318
  %v589 = vpop.f32.mrf.mxu0
  %v590 = vadd.f32 %v299, %v589
  %v591 = vpop.f32.mrf.mxu0
  %592 = vmatprep.mubr.f32.mxu0 0.0
  %593 = vmatmul.mubr.f32.gmra.mxu0 %v321
  %v594 = vpop.f32.mrf.mxu0
  %v595 = vadd.f32 %v299, %v594
  %v596 = vpop.f32.mrf.mxu0
  %597 = vmatprep.mubr.f32.mxu0 0.0
  %598 = vmatmul.mubr.f32.gmra.mxu0 %v324
  %v599 = vpop.f32.mrf.mxu0
  %v600 = vadd.f32 %v299, %v599
  %v601 = vpop.f32.mrf.mxu0
  %602 = vmatprep.mubr.f32.mxu0 0.0
  %603 = vmatmul.mubr.f32.gmra.mxu0 %v327
  %v604 = vpop.f32.mrf.mxu0
  %v605 = vadd.f32 %v299, %v604
  %v606 = vpop.f32.mrf.mxu0
  %607 = vmatprep.mubr.f32.mxu0 0.0
  %608 = vmatmul.mubr.f32.gmra.mxu0 %v330
  %v609 = vpop.f32.mrf.mxu0
  %v610 = vadd.f32 %v299, %v609
  %v611 = vpop.f32.mrf.mxu0
  %612 = vmatprep.mubr.f32.mxu0 0.0
  %613 = vmatmul.mubr.f32.gmra.mxu0 %v333
  %v614 = vpop.f32.mrf.mxu0
  %v615 = vadd.f32 %v299, %v614
  %v616 = vpop.f32.mrf.mxu0
  %617 = vmatprep.mubr.f32.mxu0 0.0
  %618 = vmatmul.mubr.f32.gmra.mxu0 %v336
  %v619 = vpop.f32.mrf.mxu0
  %v620 = vadd.f32 %v299, %v619
  %v621 = vpop.f32.mrf.mxu0
  %622 = vmatprep.mubr.f32.mxu0 0.0
  %623 = vmatmul.mubr.f32.gmra.mxu0 %v339
  %v624 = vpop.f32.mrf.mxu0
  %v625 = vadd.f32 %v299, %v624
  %v626 = vpop.f32.mrf.mxu0
  %627 = vmatprep.mubr.f32.mxu0 0.0
  %628 = vmatmul.mubr.f32.gmra.mxu0 %v342
  %v629 = vpop.f32.mrf.mxu0
  %v630 = vadd.f32 %v299, %v629
  %v631 = vpop.f32.mrf.mxu0
  %632 = vmatprep.mubr.f32.mxu0 0.0
  %633 = vmatmul.mubr.f32.gmra.mxu0 %v345
  %v634 = vpop.f32.mrf.mxu0
  %v635 = vadd.f32 %v299, %v634
  %v636 = vpop.f32.mrf.mxu0
  %637 = vmatprep.mubr.f32.mxu0 0.0
  %638 = vmatmul.mubr.f32.gmra.mxu0 %v348
  %v639 = vpop.f32.mrf.mxu0
  %v640 = vadd.f32 %v299, %v639
  %v641 = vpop.f32.mrf.mxu0
  %642 = vmatprep.mubr.f32.mxu0 0.0
  %643 = vmatmul.mubr.f32.gmra.mxu0 %v351
  %v644 = vpop.f32.mrf.mxu0
  %v645 = vadd.f32 %v299, %v644
  %v646 = vpop.f32.mrf.mxu0
  %647 = vmatprep.mubr.f32.mxu0 0.0
  %648 = vmatmul.mubr.f32.gmra.mxu0 %v354
  %v649 = vpop.f32.mrf.mxu0
  %v650 = vadd.f32 %v299, %v649
  %v651 = vpop.f32.mrf.mxu0
  %652 = vmatprep.mubr.f32.mxu0 0.0
  %653 = vmatmul.mubr.f32.gmra.mxu0 %v357
  %v654 = vpop.f32.mrf.mxu0
  %v655 = vadd.f32 %v299, %v654
  %v656 = vpop.f32.mrf.mxu0
  %657 = vmatprep.mubr.f32.mxu0 0.0
  %658 = vmatmul.mubr.f32.gmra.mxu0 %v360
  %v659 = vpop.f32.mrf.mxu0
  %v660 = vadd.f32 %v299, %v659
  %v661 = vpop.f32.mrf.mxu0
  %662 = vmatprep.mubr.f32.mxu0 0.0
  %663 = vmatmul.mubr.f32.gmra.mxu0 %v363
  %v664 = vpop.f32.mrf.mxu0
  %v665 = vadd.f32 %v299, %v664
  %v666 = vpop.f32.mrf.mxu0
  %667 = vmatprep.mubr.f32.mxu0 0.0
  %668 = vmatmul.mubr.f32.gmra.mxu0 %v366
  %v669 = vpop.f32.mrf.mxu0
  %v670 = vadd.f32 %v299, %v669
  %v671 = vpop.f32.mrf.mxu0
  %672 = vmatprep.mubr.f32.mxu0 0.0
  %673 = vmatmul.mubr.f32.gmra.mxu0 %v369
  %v674 = vpop.f32.mrf.mxu0
  %v675 = vadd.f32 %v299, %v674
  %v676 = vpop.f32.mrf.mxu0
  %677 = vmatprep.mubr.f32.mxu0 0.0
  %678 = vmatmul.mubr.f32.gmra.mxu0 %v372
  %v679 = vpop.f32.mrf.mxu0
  %v680 = vadd.f32 %v299, %v679
  %v681 = vpop.f32.mrf.mxu0
  %682 = vmatprep.mubr.f32.mxu0 0.0
  %683 = vmatmul.mubr.f32.gmra.mxu0 %v375
  %v684 = vpop.f32.mrf.mxu0
  %v685 = vadd.f32 %v299, %v684
  %v686 = vpop.f32.mrf.mxu0
  %687 = vmatprep.mubr.f32.mxu0 0.0
  %688 = vmatmul.mubr.f32.gmra.mxu0 %v378
  %v689 = vpop.f32.mrf.mxu0
  %v690 = vadd.f32 %v299, %v689
  %v691 = vpop.f32.mrf.mxu0
  %692 = vmatprep.mubr.f32.mxu0 0.0
  %693 = vmatmul.mubr.f32.gmra.mxu0 %v381
  %v694 = vpop.f32.mrf.mxu0
  %v695 = vadd.f32 %v299, %v694
  %v696 = vpop.f32.mrf.mxu0
  %697 = vmatprep.mubr.f32.mxu0 0.0
  %698 = vmatmul.mubr.f32.gmra.mxu0 %v384
  %v699 = vpop.f32.mrf.mxu0
  %v700 = vadd.f32 %v299, %v699
  %v701 = vpop.f32.mrf.mxu0
  %702 = vmatprep.mubr.f32.mxu0 0.0
  %703 = vmatmul.mubr.f32.gmra.mxu0 %v387
  %v704 = vpop.f32.mrf.mxu0
  %v705 = vadd.f32 %v299, %v704
  %v706 = vpop.f32.mrf.mxu0
  %707 = vmatprep.mubr.f32.mxu0 0.0
  %708 = vmatmul.mubr.f32.gmra.mxu0 %v390
  %v709 = vpop.f32.mrf.mxu0
  %v710 = vadd.f32 %v299, %v709
  %v711 = vpop.f32.mrf.mxu0
  %712 = vmatprep.mubr.f32.mxu0 0.0
  %713 = vmatmul.mubr.f32.gmra.mxu0 %v393
  %v714 = vpop.f32.mrf.mxu0
  %v715 = vadd.f32 %v299, %v714
  %v716 = vpop.f32.mrf.mxu0
  %717 = vmatprep.mubr.f32.mxu0 0.0
  %718 = vmatmul.mubr.f32.gmra.mxu0 %v396
  %v719 = vpop.f32.mrf.mxu0
  %v720 = vadd.f32 %v299, %v719
  %v721 = vpop.f32.mrf.mxu0
  %722 = vmatprep.mubr.f32.mxu0 0.0
  %723 = vmatmul.mubr.f32.gmra.mxu0 %v399
  %v724 = vpop.f32.mrf.mxu0
  %v725 = vadd.f32 %v299, %v724
  %v726 = vpop.f32.mrf.mxu0
  %727 = vmatprep.mubr.f32.mxu0 0.0
  %728 = vmatmul.mubr.f32.gmra.mxu0 %v402
  %v729 = vpop.f32.mrf.mxu0
  %v730 = vadd.f32 %v299, %v729
  %v731 = vpop.f32.mrf.mxu0
  %732 = vmatprep.mubr.f32.mxu0 0.0
  %733 = vmatmul.mubr.f32.gmra.mxu0 %v405
  %v734 = vpop.f32.mrf.mxu0
  %v735 = vadd.f32 %v299, %v734
  %v736 = vpop.f32.mrf.mxu0
  %737 = vmatprep.mubr.f32.mxu0 0.0
  %738 = vmatmul.mubr.f32.gmra.mxu0 %v408
  %v739 = vpop.f32.mrf.mxu0
  %v740 = vadd.f32 %v299, %v739
  %v741 = vpop.f32.mrf.mxu0
  %742 = vmatprep.mubr.f32.mxu0 0.0
  %743 = vmatmul.mubr.f32.gmra.mxu0 %v411
  %v744 = vpop.f32.mrf.mxu0
  %v745 = vadd.f32 %v299, %v744
  %v746 = vpop.f32.mrf.mxu0
  %747 = vmatprep.mubr.f32.mxu0 0.0
  %748 = vmatmul.mubr.f32.gmra.mxu0 %v414
  %v749 = vpop.f32.mrf.mxu0
  %v750 = vadd.f32 %v299, %v749
  %v751 = vpop.f32.mrf.mxu0
  %752 = vmatprep.mubr.f32.mxu0 0.0
  %753 = vmatmul.mubr.f32.gmra.mxu0 %v417
  %v754 = vpop.f32.mrf.mxu0
  %v755 = vadd.f32 %v299, %v754
  %v756 = vpop.f32.mrf.mxu0
  %757 = vmatprep.mubr.f32.mxu0 0.0
  %758 = vmatmul.mubr.f32.gmra.mxu0 %v420
  %v759 = vpop.f32.mrf.mxu0
  %v760 = vadd.f32 %v299, %v759
  %v761 = vpop.f32.mrf.mxu0
  %762 = vmatprep.mubr.f32.mxu0 0.0
  %763 = vmatmul.mubr.f32.gmra.mxu0 %v423
  %v764 = vpop.f32.mrf.mxu0
  %v765 = vadd.f32 %v299, %v764
  %v766 = vpop.f32.mrf.mxu0
  %767 = vmatprep.mubr.f32.mxu0 0.0
  %768 = vmatmul.mubr.f32.gmra.mxu0 %v426
  %v769 = vpop.f32.mrf.mxu0
  %v770 = vadd.f32 %v299, %v769
  %v771 = vpop.f32.mrf.mxu0
  %772 = vmatprep.mubr.f32.mxu0 0.0
  %773 = vmatmul.mubr.f32.gmra.mxu0 %v429
  %v774 = vpop.f32.mrf.mxu0
  %v775 = vadd.f32 %v299, %v774
  %v776 = vpop.f32.mrf.mxu0
  %777 = vmatprep.mubr.f32.mxu0 0.0
  %778 = vmatmul.mubr.f32.gmra.mxu0 %v432
  %v779 = vpop.f32.mrf.mxu0
  %v780 = vadd.f32 %v299, %v779
  %v781 = vpop.f32.mrf.mxu0
  %782 = vmatprep.mubr.f32.mxu0 0.0
  %783 = vmatmul.mubr.f32.gmra.mxu0 %v435
  %v784 = vpop.f32.mrf.mxu0
  %v785 = vadd.f32 %v299, %v784
  %v786 = vpop.f32.mrf.mxu0
  %787 = vmatprep.mubr.f32.mxu0 0.0
  %788 = vmatmul.mubr.f32.gmra.mxu0 %v438
  %v789 = vpop.f32.mrf.mxu0
  %v790 = vadd.f32 %v299, %v789
  %v791 = vpop.f32.mrf.mxu0
  %792 = vmatprep.mubr.f32.mxu0 0.0
  %793 = vmatmul.mubr.f32.gmra.mxu0 %v441
  %v794 = vpop.f32.mrf.mxu0
  %v795 = vadd.f32 %v299, %v794
  %v796 = vpop.f32.mrf.mxu0
  %797 = vmatprep.mubr.f32.mxu0 0.0
  %798 = vmatmul.mubr.f32.gmra.mxu0 %v444
  %v799 = vpop.f32.mrf.mxu0
  %v800 = vadd.f32 %v299, %v799
  %v801 = vpop.f32.mrf.mxu0
  %802 = vmatprep.mubr.f32.mxu0 0.0
  %803 = vmatmul.mubr.f32.gmra.mxu0 %v447
  %v804 = vpop.f32.mrf.mxu0
  %v805 = vadd.f32 %v299, %v804
  %v806 = vpop.f32.mrf.mxu0
  %807 = vmatprep.mubr.f32.mxu0 0.0
  %808 = vmatmul.mubr.f32.gmra.mxu0 %v450
  %v809 = vpop.f32.mrf.mxu0
  %v810 = vadd.f32 %v299, %v809
  %v811 = vpop.f32.mrf.mxu0
  %812 = vmatprep.mubr.f32.mxu0 0.0
  %813 = vmatmul.mubr.f32.gmra.mxu0 %v453
  %v814 = vpop.f32.mrf.mxu0
  %v815 = vadd.f32 %v299, %v814
  %v816 = vpop.f32.mrf.mxu0
  %817 = vmatprep.mubr.f32.mxu0 0.0
  %818 = vmatmul.mubr.f32.gmra.mxu0 %v456
  %v819 = vpop.f32.mrf.mxu0
  %v820 = vadd.f32 %v299, %v819
  %v821 = vpop.f32.mrf.mxu0
  %822 = vmatprep.mubr.f32.mxu0 0.0
  %823 = vmatmul.mubr.f32.gmra.mxu0 %v459
  %v824 = vpop.f32.mrf.mxu0
  %v825 = vadd.f32 %v299, %v824
  %v826 = vpop.f32.mrf.mxu0
  %827 = vmatprep.mubr.f32.mxu0 0.0
  %828 = vmatmul.mubr.f32.gmra.mxu0 %v462
  %v829 = vpop.f32.mrf.mxu0
  %v830 = vadd.f32 %v299, %v829
  %v831 = vpop.f32.mrf.mxu0
  %832 = vmatprep.mubr.f32.mxu0 0.0
  %833 = vmatmul.mubr.f32.gmra.mxu0 %v465
  %v834 = vpop.f32.mrf.mxu0
  %v835 = vadd.f32 %v299, %v834
  %v836 = vpop.f32.mrf.mxu0
  %837 = vmatprep.mubr.f32.mxu0 0.0
  %838 = vmatmul.mubr.f32.gmra.mxu0 %v468
  %v839 = vpop.f32.mrf.mxu0
  %v840 = vadd.f32 %v299, %v839
  %v841 = vpop.f32.mrf.mxu0
  %842 = vmatprep.mubr.f32.mxu0 0.0
  %843 = vmatmul.mubr.f32.gmra.mxu0 %v471
  %v844 = vpop.f32.mrf.mxu0
  %v845 = vadd.f32 %v299, %v844
  %v846 = vpop.f32.mrf.mxu0
  %847 = vmatprep.mubr.f32.mxu0 0.0
  %848 = vmatmul.mubr.f32.gmra.mxu0 %v474
  %v849 = vpop.f32.mrf.mxu0
  %v850 = vadd.f32 %v299, %v849
  %v851 = vpop.f32.mrf.mxu0
  %852 = vmatprep.mubr.f32.mxu0 0.0
  %853 = vmatmul.mubr.f32.gmra.mxu0 %v477
  %v854 = vpop.f32.mrf.mxu0
  %v855 = vadd.f32 %v299, %v854
  %v856 = vpop.f32.mrf.mxu0
  %857 = vmatprep.mubr.f32.mxu0 0.0
  %858 = vmatmul.mubr.f32.gmra.mxu0 %v480
  %v859 = vpop.f32.mrf.mxu0
  %v860 = vadd.f32 %v299, %v859
  %v861 = vpop.f32.mrf.mxu0
  %862 = vmatprep.mubr.f32.mxu0 0.0
  %863 = vmatmul.mubr.f32.gmra.mxu0 %v483
  %v864 = vpop.f32.mrf.mxu0
  %v865 = vadd.f32 %v299, %v864
  %v866 = vpop.f32.mrf.mxu0
  %867 = vmatprep.mubr.f32.mxu0 0.0
  %868 = vmatmul.mubr.f32.gmra.mxu0 %v486
  %v869 = vpop.f32.mrf.mxu0
  %v870 = vadd.f32 %v299, %v869
  %v871 = vpop.f32.mrf.mxu0
  %872 = vmatprep.mubr.f32.mxu0 0.0
  %873 = vmatmul.mubr.f32.gmra.mxu0 %v489
  %v874 = vpop.f32.mrf.mxu0
  %v875 = vadd.f32 %v299, %v874
  %v876 = vpop.f32.mrf.mxu0
  %877 = vmatprep.mubr.f32.mxu0 0.0
  %878 = vmatmul.mubr.f32.gmra.mxu0 %v492
  %v879 = vpop.f32.mrf.mxu0
  %v880 = vadd.f32 %v299, %v879
  %v881 = vpop.f32.mrf.mxu0
  %882 = vdwg.mxu0
  %v883 = vadd.f32 %v165, %v565
  %v884 = vadd.f32 %v166, %v570
  %v885 = vadd.f32 %v167, %v575
  %v886 = vadd.f32 %v168, %v580
  %v887 = vadd.f32 %v169, %v585
  %v888 = vadd.f32 %v170, %v590
  %v889 = vadd.f32 %v171, %v595
  %v890 = vadd.f32 %v172, %v600
  %v891 = vadd.f32 %v173, %v605
  %v892 = vadd.f32 %v174, %v610
  %v893 = vadd.f32 %v175, %v615
  %v894 = vadd.f32 %v176, %v620
  %v895 = vadd.f32 %v177, %v625
  %v896 = vadd.f32 %v178, %v630
  %v897 = vadd.f32 %v179, %v635
  %v898 = vadd.f32 %v180, %v640
  %v899 = vadd.f32 %v181, %v645
  %v900 = vadd.f32 %v182, %v650
  %v901 = vadd.f32 %v183, %v655
  %v902 = vadd.f32 %v184, %v660
  %v903 = vadd.f32 %v185, %v665
  %v904 = vadd.f32 %v186, %v670
  %v905 = vadd.f32 %v187, %v675
  %v906 = vadd.f32 %v188, %v680
  %v907 = vadd.f32 %v189, %v685
  %v908 = vadd.f32 %v190, %v690
  %v909 = vadd.f32 %v191, %v695
  %v910 = vadd.f32 %v192, %v700
  %v911 = vadd.f32 %v193, %v705
  %v912 = vadd.f32 %v194, %v710
  %v913 = vadd.f32 %v195, %v715
  %v914 = vadd.f32 %v196, %v720
  %v915 = vadd.f32 %v197, %v725
  %v916 = vadd.f32 %v198, %v730
  %v917 = vadd.f32 %v199, %v735
  %v918 = vadd.f32 %v200, %v740
  %v919 = vadd.f32 %v201, %v745
  %v920 = vadd.f32 %v202, %v750
  %v921 = vadd.f32 %v203, %v755
  %v922 = vadd.f32 %v204, %v760
  %v923 = vadd.f32 %v205, %v765
  %v924 = vadd.f32 %v206, %v770
  %v925 = vadd.f32 %v207, %v775
  %v926 = vadd.f32 %v208, %v780
  %v927 = vadd.f32 %v209, %v785
  %v928 = vadd.f32 %v210, %v790
  %v929 = vadd.f32 %v211, %v795
  %v930 = vadd.f32 %v212, %v800
  %v931 = vadd.f32 %v213, %v805
  %v932 = vadd.f32 %v214, %v810
  %v933 = vadd.f32 %v215, %v815
  %v934 = vadd.f32 %v216, %v820
  %v935 = vadd.f32 %v217, %v825
  %v936 = vadd.f32 %v218, %v830
  %v937 = vadd.f32 %v219, %v835
  %v938 = vadd.f32 %v220, %v840
  %v939 = vadd.f32 %v221, %v845
  %v940 = vadd.f32 %v222, %v850
  %v941 = vadd.f32 %v223, %v855
  %v942 = vadd.f32 %v224, %v860
  %v943 = vadd.f32 %v225, %v865
  %v944 = vadd.f32 %v226, %v870
  %v945 = vadd.f32 %v227, %v875
  %v946 = vadd.f32 %v228, %v880
  %v947 = vmax.f32 %v883, 0.0
  %v948 = vmax.f32 %v884, 0.0
  %v949 = vmax.f32 %v885, 0.0
  %v950 = vmax.f32 %v886, 0.0
  %v951 = vmax.f32 %v887, 0.0
  %v952 = vmax.f32 %v888, 0.0
  %v953 = vmax.f32 %v889, 0.0
  %v954 = vmax.f32 %v890, 0.0
  %v955 = vmax.f32 %v891, 0.0
  %v956 = vmax.f32 %v892, 0.0
  %v957 = vmax.f32 %v893, 0.0
  %v958 = vmax.f32 %v894, 0.0
  %v959 = vmax.f32 %v895, 0.0
  %v960 = vmax.f32 %v896, 0.0
  %v961 = vmax.f32 %v897, 0.0
  %v962 = vmax.f32 %v898, 0.0
  %v963 = vmax.f32 %v899, 0.0
  %v964 = vmax.f32 %v900, 0.0
  %v965 = vmax.f32 %v901, 0.0
  %v966 = vmax.f32 %v902, 0.0
  %v967 = vmax.f32 %v903, 0.0
  %v968 = vmax.f32 %v904, 0.0
  %v969 = vmax.f32 %v905, 0.0
  %v970 = vmax.f32 %v906, 0.0
  %v971 = vmax.f32 %v907, 0.0
  %v972 = vmax.f32 %v908, 0.0
  %v973 = vmax.f32 %v909, 0.0
  %v974 = vmax.f32 %v910, 0.0
  %v975 = vmax.f32 %v911, 0.0
  %v976 = vmax.f32 %v912, 0.0
  %v977 = vmax.f32 %v913, 0.0
  %v978 = vmax.f32 %v914, 0.0
  %v979 = vmax.f32 %v915, 0.0
  %v980 = vmax.f32 %v916, 0.0
  %v981 = vmax.f32 %v917, 0.0
  %v982 = vmax.f32 %v918, 0.0
  %v983 = vmax.f32 %v919, 0.0
  %v984 = vmax.f32 %v920, 0.0
  %v985 = vmax.f32 %v921, 0.0
  %v986 = vmax.f32 %v922, 0.0
  %v987 = vmax.f32 %v923, 0.0
  %v988 = vmax.f32 %v924, 0.0
  %v989 = vmax.f32 %v925, 0.0
  %v990 = vmax.f32 %v926, 0.0
  %v991 = vmax.f32 %v927, 0.0
  %v992 = vmax.f32 %v928, 0.0
  %v993 = vmax.f32 %v929, 0.0
  %v994 = vmax.f32 %v930, 0.0
  %v995 = vmax.f32 %v931, 0.0
  %v996 = vmax.f32 %v932, 0.0
  %v997 = vmax.f32 %v933, 0.0
  %v998 = vmax.f32 %v934, 0.0
  %v999 = vmax.f32 %v935, 0.0
  %v1000 = vmax.f32 %v936, 0.0
  %v1001 = vmax.f32 %v937, 0.0
  %v1002 = vmax.f32 %v938, 0.0
  %v1003 = vmax.f32 %v939, 0.0
  %v1004 = vmax.f32 %v940, 0.0
  %v1005 = vmax.f32 %v941, 0.0
  %v1006 = vmax.f32 %v942, 0.0
  %v1007 = vmax.f32 %v943, 0.0
  %v1008 = vmax.f32 %v944, 0.0
  %v1009 = vmax.f32 %v945, 0.0
  %v1010 = vmax.f32 %v946, 0.0
  %1011 = vst [vmem:[%s6] sm:$0xff] %v947
  %1012 = vst [vmem:[%s6 + $0x8] sm:$0xff] %v948
  %1013 = vst [vmem:[%s6 + $0x10] sm:$0xff] %v949
  %1014 = vst [vmem:[%s6 + $0x18] sm:$0xff] %v950
  %1015 = vst [vmem:[%s6 + $0x20] sm:$0xff] %v951
  %1016 = vst [vmem:[%s6 + $0x28] sm:$0xff] %v952
  %1017 = vst [vmem:[%s6 + $0x30] sm:$0xff] %v953
  %1018 = vst [vmem:[%s6 + $0x38] sm:$0xff] %v954
  %1019 = vst [vmem:[%s6 + $0x40] sm:$0xff] %v955
  %1020 = vst [vmem:[%s6 + $0x48] sm:$0xff] %v956
  %1021 = vst [vmem:[%s6 + $0x50] sm:$0xff] %v957
  %1022 = vst [vmem:[%s6 + $0x58] sm:$0xff] %v958
  %1023 = vst [vmem:[%s6 + $0x60] sm:$0xff] %v959
  %1024 = vst [vmem:[%s6 + $0x68] sm:$0xff] %v960
  %1025 = vst [vmem:[%s6 + $0x70] sm:$0xff] %v961
  %1026 = vst [vmem:[%s6 + $0x78] sm:$0xff] %v962
  %1027 = vst [vmem:[%s6 + $0x80] sm:$0xff] %v963
  %1028 = vst [vmem:[%s6 + $0x88] sm:$0xff] %v964
  %1029 = vst [vmem:[%s6 + $0x90] sm:$0xff] %v965
  %1030 = vst [vmem:[%s6 + $0x98] sm:$0xff] %v966
  %1031 = vst [vmem:[%s6 + $0xa0] sm:$0xff] %v967
  %1032 = vst [vmem:[%s6 + $0xa8] sm:$0xff] %v968
  %1033 = vst [vmem:[%s6 + $0xb0] sm:$0xff] %v969
  %1034 = vst [vmem:[%s6 + $0xb8] sm:$0xff] %v970
  %1035 = vst [vmem:[%s6 + $0xc0] sm:$0xff] %v971
  %1036 = vst [vmem:[%s6 + $0xc8] sm:$0xff] %v972
  %1037 = vst [vmem:[%s6 + $0xd0] sm:$0xff] %v973
  %1038 = vst [vmem:[%s6 + $0xd8] sm:$0xff] %v974
  %1039 = vst [vmem:[%s6 + $0xe0] sm:$0xff] %v975
  %1040 = vst [vmem:[%s6 + $0xe8] sm:$0xff] %v976
  %1041 = vst [vmem:[%s6 + $0xf0] sm:$0xff] %v977
  %1042 = vst [vmem:[%s6 + $0xf8] sm:$0xff] %v978
  %1043 = vst [vmem:[%s6 + $0x100] sm:$0xff] %v979
  %1044 = vst [vmem:[%s6 + $0x108] sm:$0xff] %v980
  %1045 = vst [vmem:[%s6 + $0x110] sm:$0xff] %v981
  %1046 = vst [vmem:[%s6 + $0x118] sm:$0xff] %v982
  %1047 = vst [vmem:[%s6 + $0x120] sm:$0xff] %v983
  %1048 = vst [vmem:[%s6 + $0x128] sm:$0xff] %v984
  %1049 = vst [vmem:[%s6 + $0x130] sm:$0xff] %v985
  %1050 = vst [vmem:[%s6 + $0x138] sm:$0xff] %v986
  %1051 = vst [vmem:[%s6 + $0x140] sm:$0xff] %v987
  %1052 = vst [vmem:[%s6 + $0x148] sm:$0xff] %v988
  %1053 = vst [vmem:[%s6 + $0x150] sm:$0xff] %v989
  %1054 = vst [vmem:[%s6 + $0x158] sm:$0xff] %v990
  %1055 = vst [vmem:[%s6 + $0x160] sm:$0xff] %v991
  %1056 = vst [vmem:[%s6 + $0x168] sm:$0xff] %v992
  %1057 = vst [vmem:[%s6 + $0x170] sm:$0xff] %v993
  %1058 = vst [vmem:[%s6 + $0x178] sm:$0xff] %v994
  %1059 = vst [vmem:[%s6 + $0x180] sm:$0xff] %v995
  %1060 = vst [vmem:[%s6 + $0x188] sm:$0xff] %v996
  %1061 = vst [vmem:[%s6 + $0x190] sm:$0xff] %v997
  %1062 = vst [vmem:[%s6 + $0x198] sm:$0xff] %v998
  %1063 = vst [vmem:[%s6 + $0x1a0] sm:$0xff] %v999
  %1064 = vst [vmem:[%s6 + $0x1a8] sm:$0xff] %v1000
  %1065 = vst [vmem:[%s6 + $0x1b0] sm:$0xff] %v1001
  %1066 = vst [vmem:[%s6 + $0x1b8] sm:$0xff] %v1002
  %1067 = vst [vmem:[%s6 + $0x1c0] sm:$0xff] %v1003
  %1068 = vst [vmem:[%s6 + $0x1c8] sm:$0xff] %v1004
  %1069 = vst [vmem:[%s6 + $0x1d0] sm:$0xff] %v1005
  %1070 = vst [vmem:[%s6 + $0x1d8] sm:$0xff] %v1006
  %1071 = vst [vmem:[%s6 + $0x1e0] sm:$0xff] %v1007
  %1072 = vst [vmem:[%s6 + $0x1e8] sm:$0xff] %v1008
  %1073 = vst [vmem:[%s6 + $0x1f0] sm:$0xff] %v1009
  %1074 = vst [vmem:[%s6 + $0x1f8] sm:$0xff] %v1010
  // Predicated region
  $region26: #{basic_block_forward.5} parent=0 // pred_check
    _
  $region27: #{basic_block_forward.5} parent=0 // pred_check_branch
    %1076 = sbr.rel (0) target = $region29
  $region28: #{basic_block_forward.5} parent=0 // pred_region
    _
  $region29: #{basic_block_forward.5} parent=0 // pred_fallthru
    _
  // Predicated region
  $region30: #{basic_block_forward.5} parent=0 // pred_check
    _
  $region31: #{basic_block_forward.5} parent=0 // pred_check_branch
    %1078 = sbr.rel (0) target = $region33
  $region32: #{basic_block_forward.5} parent=0 // pred_region
    _
  $region33: #{basic_block_forward.5} parent=0 // pred_fallthru
    _

// kernel: basic_block_forward.3
$region0: #{basic_block_forward.3}
  #allocation0 [shape = 'u32[]', space=smem, size = 0x4, offset = 0x4, fixed_abs, tag = 'smem constant byte address 0x4 - core index']
  #allocation1 [shape = 'u32[144,128]{1,0:T(1,128)}', space=vmem, size = 0x12000, scoped, tag = 'internal scratch']
  #allocation2 [shape = 'f32[512,36]{1,0:T(8,128)}', space=vmem, size = 0x40000, scoped, tag = 'scratch operand']
  %s0 = inlined_call_operand.vmem [shape: f32[2,18,18,4], index: 0, kind: input, shape index: {}]
  %s1 = inlined_call_operand.vmem [shape: f32[36,128], index: 1, kind: input, shape index: {}]
  %s2 = inlined_call_operand.vmem [shape: f32[1,128], index: 2, kind: input, shape index: {}]
  %s3 = inlined_call_operand.vmem [shape: f32[2,256,128], index: 3, kind: output, shape index: {0}]
  %s4 = inlined_call_operand.vmem [shape: f32[1,2,128], index: 4, kind: output, shape index: {1}]
  %5 = xla_tuple %s3, %s4
  %s6 = sld [smem:[#allocation0]]
  $region30: #{basic_block_forward.3} parent=0
    _
  %s8 = ssub.s32 1, %s6
  %s9 = scalar_select 0, %s8, %s6
  // Predicated region
  $region2: #{basic_block_forward.3} parent=0 // pred_check
    _
  $region3: #{basic_block_forward.3} parent=0 // pred_check_branch
    %11 = sbr.rel (0) target = $region5
  $region4: #{basic_block_forward.3} parent=0 // pred_region
    _
  $region5: #{basic_block_forward.3} parent=0 // pred_fallthru
    _
  // Predicated region
  $region6: #{basic_block_forward.3} parent=0 // pred_check
    _
  $region7: #{basic_block_forward.3} parent=0 // pred_check_branch
    %13 = sbr.rel (0) target = $region9
  $region8: #{basic_block_forward.3} parent=0 // pred_region
    _
  $region9: #{basic_block_forward.3} parent=0 // pred_fallthru
    _
  // Predicated region
  $region10: #{basic_block_forward.3} parent=0 // pred_check
    _
  $region11: #{basic_block_forward.3} parent=0 // pred_check_branch
    %15 = sbr.rel (0) target = $region13
  $region12: #{basic_block_forward.3} parent=0 // pred_region
    _
  $region13: #{basic_block_forward.3} parent=0 // pred_fallthru
    _
  %v16 = vld [vmem:[%s0] sm:$0xff]
  %v17 = vld [vmem:[%s0 + $0x8] sm:$0xff]
  %v18 = vld [vmem:[%s0 + $0x18] sm:$0xff]
  %v19 = vld [vmem:[%s0 + $0x20] sm:$0xff]
  %v20 = vld [vmem:[%s0 + $0x30] sm:$0xff]
  %v21 = vld [vmem:[%s0 + $0x38] sm:$0xff]
  %v22 = vld [vmem:[%s0 + $0x48] sm:$0xff]
  %v23 = vld [vmem:[%s0 + $0x50] sm:$0xff]
  %v24 = vld [vmem:[%s0 + $0x60] sm:$0xff]
  %v25 = vld [vmem:[%s0 + $0x68] sm:$0xff]
  %v26 = vld [vmem:[%s0 + $0x78] sm:$0xff]
  %v27 = vld [vmem:[%s0 + $0x80] sm:$0xff]
  %v28 = vld [vmem:[%s0 + $0x90] sm:$0xff]
  %v29 = vld [vmem:[%s0 + $0x98] sm:$0xff]
  %v30 = vld [vmem:[%s0 + $0xa8] sm:$0xff]
  %v31 = vld [vmem:[%s0 + $0xb0] sm:$0xff]
  %v32 = vld [vmem:[%s0 + $0xc0] sm:$0xff]
  %v33 = vld [vmem:[%s0 + $0xc8] sm:$0xff]
  %v34 = vld [vmem:[%s0 + $0xd8] sm:$0xff]
  %v35 = vld [vmem:[%s0 + $0xe0] sm:$0xff]
  %v36 = vld [vmem:[%s0 + $0xf0] sm:$0xff]
  %v37 = vld [vmem:[%s0 + $0xf8] sm:$0xff]
  %v38 = vld [vmem:[%s0 + $0x108] sm:$0xff]
  %v39 = vld [vmem:[%s0 + $0x110] sm:$0xff]
  %v40 = vld [vmem:[%s0 + $0x120] sm:$0xff]
  %v41 = vld [vmem:[%s0 + $0x128] sm:$0xff]
  %v42 = vld [vmem:[%s0 + $0x138] sm:$0xff]
  %v43 = vld [vmem:[%s0 + $0x140] sm:$0xff]
  %v44 = vld [vmem:[%s0 + $0x150] sm:$0xff]
  %v45 = vld [vmem:[%s0 + $0x158] sm:$0xff]
  %v46 = vld [vmem:[%s0 + $0x168] sm:$0xff]
  %v47 = vld [vmem:[%s0 + $0x170] sm:$0xff]
  %v48 = vld [vmem:[%s0 + $0x1b0] sm:$0xff]
  %v49 = vld [vmem:[%s0 + $0x1b8] sm:$0xff]
  %v50 = vld [vmem:[%s0 + $0x1c8] sm:$0xff]
  %v51 = vld [vmem:[%s0 + $0x1d0] sm:$0xff]
  %v52 = vld [vmem:[%s0 + $0x1e0] sm:$0xff]
  %v53 = vld [vmem:[%s0 + $0x1e8] sm:$0xff]
  %v54 = vld [vmem:[%s0 + $0x1f8] sm:$0xff]
  %v55 = vld [vmem:[%s0 + $0x200] sm:$0xff]
  %v56 = vld [vmem:[%s0 + $0x210] sm:$0xff]
  %v57 = vld [vmem:[%s0 + $0x218] sm:$0xff]
  %v58 = vld [vmem:[%s0 + $0x228] sm:$0xff]
  %v59 = vld [vmem:[%s0 + $0x230] sm:$0xff]
  %v60 = vld [vmem:[%s0 + $0x240] sm:$0xff]
  %v61 = vld [vmem:[%s0 + $0x248] sm:$0xff]
  %v62 = vld [vmem:[%s0 + $0x258] sm:$0xff]
  %v63 = vld [vmem:[%s0 + $0x260] sm:$0xff]
  %v64 = vld [vmem:[%s0 + $0x270] sm:$0xff]
  %v65 = vld [vmem:[%s0 + $0x278] sm:$0xff]
  %v66 = vld [vmem:[%s0 + $0x288] sm:$0xff]
  %v67 = vld [vmem:[%s0 + $0x290] sm:$0xff]
  %v68 = vld [vmem:[%s0 + $0x2a0] sm:$0xff]
  %v69 = vld [vmem:[%s0 + $0x2a8] sm:$0xff]
  %v70 = vld [vmem:[%s0 + $0x2b8] sm:$0xff]
  %v71 = vld [vmem:[%s0 + $0x2c0] sm:$0xff]
  %v72 = vld [vmem:[%s0 + $0x2d0] sm:$0xff]
  %v73 = vld [vmem:[%s0 + $0x2d8] sm:$0xff]
  %v74 = vld [vmem:[%s0 + $0x2e8] sm:$0xff]
  %v75 = vld [vmem:[%s0 + $0x2f0] sm:$0xff]
  %v76 = vld [vmem:[%s0 + $0x300] sm:$0xff]
  %v77 = vld [vmem:[%s0 + $0x308] sm:$0xff]
  %v78 = vld [vmem:[%s0 + $0x318] sm:$0xff]
  %v79 = vld [vmem:[%s0 + $0x320] sm:$0xff]
  %vm80 = vcmask 31744
  %81 = vst.msk [vmem:[#allocation2] sm:$0xff] %vm80, %v16
  %82 = vst.msk [vmem:[#allocation2 + $0x8] sm:$0xff] %vm80, %v17
  %83 = vst.msk [vmem:[#allocation2 + $0x10] sm:$0xff] %vm80, %v18
  %84 = vst.msk [vmem:[#allocation2 + $0x18] sm:$0xff] %vm80, %v19
  %85 = vst.msk [vmem:[#allocation2 + $0x20] sm:$0xff] %vm80, %v20
  %86 = vst.msk [vmem:[#allocation2 + $0x28] sm:$0xff] %vm80, %v21
  %87 = vst.msk [vmem:[#allocation2 + $0x30] sm:$0xff] %vm80, %v22
  %88 = vst.msk [vmem:[#allocation2 + $0x38] sm:$0xff] %vm80, %v23
  %89 = vst.msk [vmem:[#allocation2 + $0x40] sm:$0xff] %vm80, %v24
  %90 = vst.msk [vmem:[#allocation2 + $0x48] sm:$0xff] %vm80, %v25
  %91 = vst.msk [vmem:[#allocation2 + $0x50] sm:$0xff] %vm80, %v26
  %92 = vst.msk [vmem:[#allocation2 + $0x58] sm:$0xff] %vm80, %v27
  %93 = vst.msk [vmem:[#allocation2 + $0x60] sm:$0xff] %vm80, %v28
  %94 = vst.msk [vmem:[#allocation2 + $0x68] sm:$0xff] %vm80, %v29
  %95 = vst.msk [vmem:[#allocation2 + $0x70] sm:$0xff] %vm80, %v30
  %96 = vst.msk [vmem:[#allocation2 + $0x78] sm:$0xff] %vm80, %v31
  %97 = vst.msk [vmem:[#allocation2 + $0x80] sm:$0xff] %vm80, %v32
  %98 = vst.msk [vmem:[#allocation2 + $0x88] sm:$0xff] %vm80, %v33
  %99 = vst.msk [vmem:[#allocation2 + $0x90] sm:$0xff] %vm80, %v34
  %100 = vst.msk [vmem:[#allocation2 + $0x98] sm:$0xff] %vm80, %v35
  %101 = vst.msk [vmem:[#allocation2 + $0xa0] sm:$0xff] %vm80, %v36
  %102 = vst.msk [vmem:[#allocation2 + $0xa8] sm:$0xff] %vm80, %v37
  %103 = vst.msk [vmem:[#allocation2 + $0xb0] sm:$0xff] %vm80, %v38
  %104 = vst.msk [vmem:[#allocation2 + $0xb8] sm:$0xff] %vm80, %v39
  %105 = vst.msk [vmem:[#allocation2 + $0xc0] sm:$0xff] %vm80, %v40
  %106 = vst.msk [vmem:[#allocation2 + $0xc8] sm:$0xff] %vm80, %v41
  %107 = vst.msk [vmem:[#allocation2 + $0xd0] sm:$0xff] %vm80, %v42
  %108 = vst.msk [vmem:[#allocation2 + $0xd8] sm:$0xff] %vm80, %v43
  %109 = vst.msk [vmem:[#allocation2 + $0xe0] sm:$0xff] %vm80, %v44
  %110 = vst.msk [vmem:[#allocation2 + $0xe8] sm:$0xff] %vm80, %v45
  %111 = vst.msk [vmem:[#allocation2 + $0xf0] sm:$0xff] %vm80, %v46
  %112 = vst.msk [vmem:[#allocation2 + $0xf8] sm:$0xff] %vm80, %v47
  %113 = vst.msk [vmem:[#allocation2 + $0x100] sm:$0xff] %vm80, %v48
  %114 = vst.msk [vmem:[#allocation2 + $0x108] sm:$0xff] %vm80, %v49
  %115 = vst.msk [vmem:[#allocation2 + $0x110] sm:$0xff] %vm80, %v50
  %116 = vst.msk [vmem:[#allocation2 + $0x118] sm:$0xff] %vm80, %v51
  %117 = vst.msk [vmem:[#allocation2 + $0x120] sm:$0xff] %vm80, %v52
  %118 = vst.msk [vmem:[#allocation2 + $0x128] sm:$0xff] %vm80, %v53
  %119 = vst.msk [vmem:[#allocation2 + $0x130] sm:$0xff] %vm80, %v54
  %120 = vst.msk [vmem:[#allocation2 + $0x138] sm:$0xff] %vm80, %v55
  %121 = vst.msk [vmem:[#allocation2 + $0x140] sm:$0xff] %vm80, %v56
  %122 = vst.msk [vmem:[#allocation2 + $0x148] sm:$0xff] %vm80, %v57
  %123 = vst.msk [vmem:[#allocation2 + $0x150] sm:$0xff] %vm80, %v58
  %124 = vst.msk [vmem:[#allocation2 + $0x158] sm:$0xff] %vm80, %v59
  %125 = vst.msk [vmem:[#allocation2 + $0x160] sm:$0xff] %vm80, %v60
  %126 = vst.msk [vmem:[#allocation2 + $0x168] sm:$0xff] %vm80, %v61
  %127 = vst.msk [vmem:[#allocation2 + $0x170] sm:$0xff] %vm80, %v62
  %128 = vst.msk [vmem:[#allocation2 + $0x178] sm:$0xff] %vm80, %v63
  %129 = vst.msk [vmem:[#allocation2 + $0x180] sm:$0xff] %vm80, %v64
  %130 = vst.msk [vmem:[#allocation2 + $0x188] sm:$0xff] %vm80, %v65
  %131 = vst.msk [vmem:[#allocation2 + $0x190] sm:$0xff] %vm80, %v66
  %132 = vst.msk [vmem:[#allocation2 + $0x198] sm:$0xff] %vm80, %v67
  %133 = vst.msk [vmem:[#allocation2 + $0x1a0] sm:$0xff] %vm80, %v68
  %134 = vst.msk [vmem:[#allocation2 + $0x1a8] sm:$0xff] %vm80, %v69
  %135 = vst.msk [vmem:[#allocation2 + $0x1b0] sm:$0xff] %vm80, %v70
  %136 = vst.msk [vmem:[#allocation2 + $0x1b8] sm:$0xff] %vm80, %v71
  %137 = vst.msk [vmem:[#allocation2 + $0x1c0] sm:$0xff] %vm80, %v72
  %138 = vst.msk [vmem:[#allocation2 + $0x1c8] sm:$0xff] %vm80, %v73
  %139 = vst.msk [vmem:[#allocation2 + $0x1d0] sm:$0xff] %vm80, %v74
  %140 = vst.msk [vmem:[#allocation2 + $0x1d8] sm:$0xff] %vm80, %v75
  %141 = vst.msk [vmem:[#allocation2 + $0x1e0] sm:$0xff] %vm80, %v76
  %142 = vst.msk [vmem:[#allocation2 + $0x1e8] sm:$0xff] %vm80, %v77
  %143 = vst.msk [vmem:[#allocation2 + $0x1f0] sm:$0xff] %vm80, %v78
  %144 = vst.msk [vmem:[#allocation2 + $0x1f8] sm:$0xff] %vm80, %v79
  %v145 = vld [vmem:[%s0 + $0x1] sm:$0xff]
  %v146 = vld [vmem:[%s0 + $0x9] sm:$0xff]
  %v147 = vld [vmem:[%s0 + $0x19] sm:$0xff]
  %v148 = vld [vmem:[%s0 + $0x21] sm:$0xff]
  %v149 = vld [vmem:[%s0 + $0x31] sm:$0xff]
  %v150 = vld [vmem:[%s0 + $0x39] sm:$0xff]
  %v151 = vld [vmem:[%s0 + $0x49] sm:$0xff]
  %v152 = vld [vmem:[%s0 + $0x51] sm:$0xff]
  %v153 = vld [vmem:[%s0 + $0x61] sm:$0xff]
  %v154 = vld [vmem:[%s0 + $0x69] sm:$0xff]
  %v155 = vld [vmem:[%s0 + $0x79] sm:$0xff]
  %v156 = vld [vmem:[%s0 + $0x81] sm:$0xff]
  %v157 = vld [vmem:[%s0 + $0x91] sm:$0xff]
  %v158 = vld [vmem:[%s0 + $0x99] sm:$0xff]
  %v159 = vld [vmem:[%s0 + $0xa9] sm:$0xff]
  %v160 = vld [vmem:[%s0 + $0xb1] sm:$0xff]
  %v161 = vld [vmem:[%s0 + $0xc1] sm:$0xff]
  %v162 = vld [vmem:[%s0 + $0xc9] sm:$0xff]
  %v163 = vld [vmem:[%s0 + $0xd9] sm:$0xff]
  %v164 = vld [vmem:[%s0 + $0xe1] sm:$0xff]
  %v165 = vld [vmem:[%s0 + $0xf1] sm:$0xff]
  %v166 = vld [vmem:[%s0 + $0xf9] sm:$0xff]
  %v167 = vld [vmem:[%s0 + $0x109] sm:$0xff]
  %v168 = vld [vmem:[%s0 + $0x111] sm:$0xff]
  %v169 = vld [vmem:[%s0 + $0x121] sm:$0xff]
  %v170 = vld [vmem:[%s0 + $0x129] sm:$0xff]
  %v171 = vld [vmem:[%s0 + $0x139] sm:$0xff]
  %v172 = vld [vmem:[%s0 + $0x141] sm:$0xff]
  %v173 = vld [vmem:[%s0 + $0x151] sm:$0xff]
  %v174 = vld [vmem:[%s0 + $0x159] sm:$0xff]
  %v175 = vld [vmem:[%s0 + $0x169] sm:$0xff]
  %v176 = vld [vmem:[%s0 + $0x171] sm:$0xff]
  %v177 = vld [vmem:[%s0 + $0x1b1] sm:$0xff]
  %v178 = vld [vmem:[%s0 + $0x1b9] sm:$0xff]
  %v179 = vld [vmem:[%s0 + $0x1c9] sm:$0xff]
  %v180 = vld [vmem:[%s0 + $0x1d1] sm:$0xff]
  %v181 = vld [vmem:[%s0 + $0x1e1] sm:$0xff]
  %v182 = vld [vmem:[%s0 + $0x1e9] sm:$0xff]
  %v183 = vld [vmem:[%s0 + $0x1f9] sm:$0xff]
  %v184 = vld [vmem:[%s0 + $0x201] sm:$0xff]
  %v185 = vld [vmem:[%s0 + $0x211] sm:$0xff]
  %v186 = vld [vmem:[%s0 + $0x219] sm:$0xff]
  %v187 = vld [vmem:[%s0 + $0x229] sm:$0xff]
  %v188 = vld [vmem:[%s0 + $0x231] sm:$0xff]
  %v189 = vld [vmem:[%s0 + $0x241] sm:$0xff]
  %v190 = vld [vmem:[%s0 + $0x249] sm:$0xff]
  %v191 = vld [vmem:[%s0 + $0x259] sm:$0xff]
  %v192 = vld [vmem:[%s0 + $0x261] sm:$0xff]
  %v193 = vld [vmem:[%s0 + $0x271] sm:$0xff]
  %v194 = vld [vmem:[%s0 + $0x279] sm:$0xff]
  %v195 = vld [vmem:[%s0 + $0x289] sm:$0xff]
  %v196 = vld [vmem:[%s0 + $0x291] sm:$0xff]
  %v197 = vld [vmem:[%s0 + $0x2a1] sm:$0xff]
  %v198 = vld [vmem:[%s0 + $0x2a9] sm:$0xff]
  %v199 = vld [vmem:[%s0 + $0x2b9] sm:$0xff]
  %v200 = vld [vmem:[%s0 + $0x2c1] sm:$0xff]
  %v201 = vld [vmem:[%s0 + $0x2d1] sm:$0xff]
  %v202 = vld [vmem:[%s0 + $0x2d9] sm:$0xff]
  %v203 = vld [vmem:[%s0 + $0x2e9] sm:$0xff]
  %v204 = vld [vmem:[%s0 + $0x2f1] sm:$0xff]
  %v205 = vld [vmem:[%s0 + $0x301] sm:$0xff]
  %v206 = vld [vmem:[%s0 + $0x309] sm:$0xff]
  %v207 = vld [vmem:[%s0 + $0x319] sm:$0xff]
  %v208 = vld [vmem:[%s0 + $0x321] sm:$0xff]
  %273 = vrot.lane.b32.xlu0 %v145, 4
  %v274 = vpop.permute.xlu0 %273
  %275 = vrot.lane.b32.xlu0 %v146, 4
  %v276 = vpop.permute.xlu0 %275
  %277 = vrot.lane.b32.xlu0 %v147, 4
  %v278 = vpop.permute.xlu0 %277
  %279 = vrot.lane.b32.xlu0 %v148, 4
  %v280 = vpop.permute.xlu0 %279
  %281 = vrot.lane.b32.xlu0 %v149, 4
  %v282 = vpop.permute.xlu0 %281
  %283 = vrot.lane.b32.xlu0 %v150, 4
  %v284 = vpop.permute.xlu0 %283
  %285 = vrot.lane.b32.xlu0 %v151, 4
  %v286 = vpop.permute.xlu0 %285
  %287 = vrot.lane.b32.xlu0 %v152, 4
  %v288 = vpop.permute.xlu0 %287
  %289 = vrot.lane.b32.xlu0 %v153, 4
  %v290 = vpop.permute.xlu0 %289
  %291 = vrot.lane.b32.xlu0 %v154, 4
  %v292 = vpop.permute.xlu0 %291
  %293 = vrot.lane.b32.xlu0 %v155, 4
  %v294 = vpop.permute.xlu0 %293
  %295 = vrot.lane.b32.xlu0 %v156, 4
  %v296 = vpop.permute.xlu0 %295
  %297 = vrot.lane.b32.xlu0 %v157, 4
  %v298 = vpop.permute.xlu0 %297
  %299 = vrot.lane.b32.xlu0 %v158, 4
  %v300 = vpop.permute.xlu0 %299
  %301 = vrot.lane.b32.xlu0 %v159, 4
  %v302 = vpop.permute.xlu0 %301
  %303 = vrot.lane.b32.xlu0 %v160, 4
  %v304 = vpop.permute.xlu0 %303
  %305 = vrot.lane.b32.xlu0 %v161, 4
  %v306 = vpop.permute.xlu0 %305
  %307 = vrot.lane.b32.xlu0 %v162, 4
  %v308 = vpop.permute.xlu0 %307
  %309 = vrot.lane.b32.xlu0 %v163, 4
  %v310 = vpop.permute.xlu0 %309
  %311 = vrot.lane.b32.xlu0 %v164, 4
  %v312 = vpop.permute.xlu0 %311
  %313 = vrot.lane.b32.xlu0 %v165, 4
  %v314 = vpop.permute.xlu0 %313
  %315 = vrot.lane.b32.xlu0 %v166, 4
  %v316 = vpop.permute.xlu0 %315
  %317 = vrot.lane.b32.xlu0 %v167, 4
  %v318 = vpop.permute.xlu0 %317
  %319 = vrot.lane.b32.xlu0 %v168, 4
  %v320 = vpop.permute.xlu0 %319
  %321 = vrot.lane.b32.xlu0 %v169, 4
  %v322 = vpop.permute.xlu0 %321
  %323 = vrot.lane.b32.xlu0 %v170, 4
  %v324 = vpop.permute.xlu0 %323
  %325 = vrot.lane.b32.xlu0 %v171, 4
  %v326 = vpop.permute.xlu0 %325
  %327 = vrot.lane.b32.xlu0 %v172, 4
  %v328 = vpop.permute.xlu0 %327
  %329 = vrot.lane.b32.xlu0 %v173, 4
  %v330 = vpop.permute.xlu0 %329
  %331 = vrot.lane.b32.xlu0 %v174, 4
  %v332 = vpop.permute.xlu0 %331
  %333 = vrot.lane.b32.xlu0 %v175, 4
  %v334 = vpop.permute.xlu0 %333
  %335 = vrot.lane.b32.xlu0 %v176, 4
  %v336 = vpop.permute.xlu0 %335
  %337 = vrot.lane.b32.xlu0 %v177, 4
  %v338 = vpop.permute.xlu0 %337
  %339 = vrot.lane.b32.xlu0 %v178, 4
  %v340 = vpop.permute.xlu0 %339
  %341 = vrot.lane.b32.xlu0 %v179, 4
  %v342 = vpop.permute.xlu0 %341
  %343 = vrot.lane.b32.xlu0 %v180, 4
  %v344 = vpop.permute.xlu0 %343
  %345 = vrot.lane.b32.xlu0 %v181, 4
  %v346 = vpop.permute.xlu0 %345
  %347 = vrot.lane.b32.xlu0 %v182, 4
  %v348 = vpop.permute.xlu0 %347
  %349 = vrot.lane.b32.xlu0 %v183, 4
  %v350 = vpop.permute.xlu0 %349
  %351 = vrot.lane.b32.xlu0 %v184, 4
  %v352 = vpop.permute.xlu0 %351
  %353 = vrot.lane.b32.xlu0 %v185, 4
  %v354 = vpop.permute.xlu0 %353
  %355 = vrot.lane.b32.xlu0 %v186, 4
  %v356 = vpop.permute.xlu0 %355
  %357 = vrot.lane.b32.xlu0 %v187, 4
  %v358 = vpop.permute.xlu0 %357
  %359 = vrot.lane.b32.xlu0 %v188, 4
  %v360 = vpop.permute.xlu0 %359
  %361 = vrot.lane.b32.xlu0 %v189, 4
  %v362 = vpop.permute.xlu0 %361
  %363 = vrot.lane.b32.xlu0 %v190, 4
  %v364 = vpop.permute.xlu0 %363
  %365 = vrot.lane.b32.xlu0 %v191, 4
  %v366 = vpop.permute.xlu0 %365
  %367 = vrot.lane.b32.xlu0 %v192, 4
  %v368 = vpop.permute.xlu0 %367
  %369 = vrot.lane.b32.xlu0 %v193, 4
  %v370 = vpop.permute.xlu0 %369
  %371 = vrot.lane.b32.xlu0 %v194, 4
  %v372 = vpop.permute.xlu0 %371
  %373 = vrot.lane.b32.xlu0 %v195, 4
  %v374 = vpop.permute.xlu0 %373
  %375 = vrot.lane.b32.xlu0 %v196, 4
  %v376 = vpop.permute.xlu0 %375
  %377 = vrot.lane.b32.xlu0 %v197, 4
  %v378 = vpop.permute.xlu0 %377
  %379 = vrot.lane.b32.xlu0 %v198, 4
  %v380 = vpop.permute.xlu0 %379
  %381 = vrot.lane.b32.xlu0 %v199, 4
  %v382 = vpop.permute.xlu0 %381
  %383 = vrot.lane.b32.xlu0 %v200, 4
  %v384 = vpop.permute.xlu0 %383
  %385 = vrot.lane.b32.xlu0 %v201, 4
  %v386 = vpop.permute.xlu0 %385
  %387 = vrot.lane.b32.xlu0 %v202, 4
  %v388 = vpop.permute.xlu0 %387
  %389 = vrot.lane.b32.xlu0 %v203, 4
  %v390 = vpop.permute.xlu0 %389
  %391 = vrot.lane.b32.xlu0 %v204, 4
  %v392 = vpop.permute.xlu0 %391
  %393 = vrot.lane.b32.xlu0 %v205, 4
  %v394 = vpop.permute.xlu0 %393
  %395 = vrot.lane.b32.xlu0 %v206, 4
  %v396 = vpop.permute.xlu0 %395
  %397 = vrot.lane.b32.xlu0 %v207, 4
  %v398 = vpop.permute.xlu0 %397
  %399 = vrot.lane.b32.xlu0 %v208, 4
  %v400 = vpop.permute.xlu0 %399
  %vm465 = vcmask 64544
  %466 = vst.msk [vmem:[#allocation2] sm:$0xff] %vm465, %v274
  %467 = vst.msk [vmem:[#allocation2 + $0x8] sm:$0xff] %vm465, %v276
  %468 = vst.msk [vmem:[#allocation2 + $0x10] sm:$0xff] %vm465, %v278
  %469 = vst.msk [vmem:[#allocation2 + $0x18] sm:$0xff] %vm465, %v280
  %470 = vst.msk [vmem:[#allocation2 + $0x20] sm:$0xff] %vm465, %v282
  %471 = vst.msk [vmem:[#allocation2 + $0x28] sm:$0xff] %vm465, %v284
  %472 = vst.msk [vmem:[#allocation2 + $0x30] sm:$0xff] %vm465, %v286
  %473 = vst.msk [vmem:[#allocation2 + $0x38] sm:$0xff] %vm465, %v288
  %474 = vst.msk [vmem:[#allocation2 + $0x40] sm:$0xff] %vm465, %v290
  %475 = vst.msk [vmem:[#allocation2 + $0x48] sm:$0xff] %vm465, %v292
  %476 = vst.msk [vmem:[#allocation2 + $0x50] sm:$0xff] %vm465, %v294
  %477 = vst.msk [vmem:[#allocation2 + $0x58] sm:$0xff] %vm465, %v296
  %478 = vst.msk [vmem:[#allocation2 + $0x60] sm:$0xff] %vm465, %v298
  %479 = vst.msk [vmem:[#allocation2 + $0x68] sm:$0xff] %vm465, %v300
  %480 = vst.msk [vmem:[#allocation2 + $0x70] sm:$0xff] %vm465, %v302
  %481 = vst.msk [vmem:[#allocation2 + $0x78] sm:$0xff] %vm465, %v304
  %482 = vst.msk [vmem:[#allocation2 + $0x80] sm:$0xff] %vm465, %v306
  %483 = vst.msk [vmem:[#allocation2 + $0x88] sm:$0xff] %vm465, %v308
  %484 = vst.msk [vmem:[#allocation2 + $0x90] sm:$0xff] %vm465, %v310
  %485 = vst.msk [vmem:[#allocation2 + $0x98] sm:$0xff] %vm465, %v312
  %486 = vst.msk [vmem:[#allocation2 + $0xa0] sm:$0xff] %vm465, %v314
  %487 = vst.msk [vmem:[#allocation2 + $0xa8] sm:$0xff] %vm465, %v316
  %488 = vst.msk [vmem:[#allocation2 + $0xb0] sm:$0xff] %vm465, %v318
  %489 = vst.msk [vmem:[#allocation2 + $0xb8] sm:$0xff] %vm465, %v320
  %490 = vst.msk [vmem:[#allocation2 + $0xc0] sm:$0xff] %vm465, %v322
  %491 = vst.msk [vmem:[#allocation2 + $0xc8] sm:$0xff] %vm465, %v324
  %492 = vst.msk [vmem:[#allocation2 + $0xd0] sm:$0xff] %vm465, %v326
  %493 = vst.msk [vmem:[#allocation2 + $0xd8] sm:$0xff] %vm465, %v328
  %494 = vst.msk [vmem:[#allocation2 + $0xe0] sm:$0xff] %vm465, %v330
  %495 = vst.msk [vmem:[#allocation2 + $0xe8] sm:$0xff] %vm465, %v332
  %496 = vst.msk [vmem:[#allocation2 + $0xf0] sm:$0xff] %vm465, %v334
  %497 = vst.msk [vmem:[#allocation2 + $0xf8] sm:$0xff] %vm465, %v336
  %498 = vst.msk [vmem:[#allocation2 + $0x100] sm:$0xff] %vm465, %v338
  %499 = vst.msk [vmem:[#allocation2 + $0x108] sm:$0xff] %vm465, %v340
  %500 = vst.msk [vmem:[#allocation2 + $0x110] sm:$0xff] %vm465, %v342
  %501 = vst.msk [vmem:[#allocation2 + $0x118] sm:$0xff] %vm465, %v344
  %502 = vst.msk [vmem:[#allocation2 + $0x120] sm:$0xff] %vm465, %v346
  %503 = vst.msk [vmem:[#allocation2 + $0x128] sm:$0xff] %vm465, %v348
  %504 = vst.msk [vmem:[#allocation2 + $0x130] sm:$0xff] %vm465, %v350
  %505 = vst.msk [vmem:[#allocation2 + $0x138] sm:$0xff] %vm465, %v352
  %506 = vst.msk [vmem:[#allocation2 + $0x140] sm:$0xff] %vm465, %v354
  %507 = vst.msk [vmem:[#allocation2 + $0x148] sm:$0xff] %vm465, %v356
  %508 = vst.msk [vmem:[#allocation2 + $0x150] sm:$0xff] %vm465, %v358
  %509 = vst.msk [vmem:[#allocation2 + $0x158] sm:$0xff] %vm465, %v360
  %510 = vst.msk [vmem:[#allocation2 + $0x160] sm:$0xff] %vm465, %v362
  %511 = vst.msk [vmem:[#allocation2 + $0x168] sm:$0xff] %vm465, %v364
  %512 = vst.msk [vmem:[#allocation2 + $0x170] sm:$0xff] %vm465, %v366
  %513 = vst.msk [vmem:[#allocation2 + $0x178] sm:$0xff] %vm465, %v368
  %514 = vst.msk [vmem:[#allocation2 + $0x180] sm:$0xff] %vm465, %v370
  %515 = vst.msk [vmem:[#allocation2 + $0x188] sm:$0xff] %vm465, %v372
  %516 = vst.msk [vmem:[#allocation2 + $0x190] sm:$0xff] %vm465, %v374
  %517 = vst.msk [vmem:[#allocation2 + $0x198] sm:$0xff] %vm465, %v376
  %518 = vst.msk [vmem:[#allocation2 + $0x1a0] sm:$0xff] %vm465, %v378
  %519 = vst.msk [vmem:[#allocation2 + $0x1a8] sm:$0xff] %vm465, %v380
  %520 = vst.msk [vmem:[#allocation2 + $0x1b0] sm:$0xff] %vm465, %v382
  %521 = vst.msk [vmem:[#allocation2 + $0x1b8] sm:$0xff] %vm465, %v384
  %522 = vst.msk [vmem:[#allocation2 + $0x1c0] sm:$0xff] %vm465, %v386
  %523 = vst.msk [vmem:[#allocation2 + $0x1c8] sm:$0xff] %vm465, %v388
  %524 = vst.msk [vmem:[#allocation2 + $0x1d0] sm:$0xff] %vm465, %v390
  %525 = vst.msk [vmem:[#allocation2 + $0x1d8] sm:$0xff] %vm465, %v392
  %526 = vst.msk [vmem:[#allocation2 + $0x1e0] sm:$0xff] %vm465, %v394
  %527 = vst.msk [vmem:[#allocation2 + $0x1e8] sm:$0xff] %vm465, %v396
  %528 = vst.msk [vmem:[#allocation2 + $0x1f0] sm:$0xff] %vm465, %v398
  %529 = vst.msk [vmem:[#allocation2 + $0x1f8] sm:$0xff] %vm465, %v400
  %v530 = vld [vmem:[%s0 + $0x2] sm:$0xff]
  %v531 = vld [vmem:[%s0 + $0xa] sm:$0xff]
  %v532 = vld [vmem:[%s0 + $0x1a] sm:$0xff]
  %v533 = vld [vmem:[%s0 + $0x22] sm:$0xff]
  %v534 = vld [vmem:[%s0 + $0x32] sm:$0xff]
  %v535 = vld [vmem:[%s0 + $0x3a] sm:$0xff]
  %v536 = vld [vmem:[%s0 + $0x4a] sm:$0xff]
  %v537 = vld [vmem:[%s0 + $0x52] sm:$0xff]
  %v538 = vld [vmem:[%s0 + $0x62] sm:$0xff]
  %v539 = vld [vmem:[%s0 + $0x6a] sm:$0xff]
  %v540 = vld [vmem:[%s0 + $0x7a] sm:$0xff]
  %v541 = vld [vmem:[%s0 + $0x82] sm:$0xff]
  %v542 = vld [vmem:[%s0 + $0x92] sm:$0xff]
  %v543 = vld [vmem:[%s0 + $0x9a] sm:$0xff]
  %v544 = vld [vmem:[%s0 + $0xaa] sm:$0xff]
  %v545 = vld [vmem:[%s0 + $0xb2] sm:$0xff]
  %v546 = vld [vmem:[%s0 + $0xc2] sm:$0xff]
  %v547 = vld [vmem:[%s0 + $0xca] sm:$0xff]
  %v548 = vld [vmem:[%s0 + $0xda] sm:$0xff]
  %v549 = vld [vmem:[%s0 + $0xe2] sm:$0xff]
  %v550 = vld [vmem:[%s0 + $0xf2] sm:$0xff]
  %v551 = vld [vmem:[%s0 + $0xfa] sm:$0xff]
  %v552 = vld [vmem:[%s0 + $0x10a] sm:$0xff]
  %v553 = vld [vmem:[%s0 + $0x112] sm:$0xff]
  %v554 = vld [vmem:[%s0 + $0x122] sm:$0xff]
  %v555 = vld [vmem:[%s0 + $0x12a] sm:$0xff]
  %v556 = vld [vmem:[%s0 + $0x13a] sm:$0xff]
  %v557 = vld [vmem:[%s0 + $0x142] sm:$0xff]
  %v558 = vld [vmem:[%s0 + $0x152] sm:$0xff]
  %v559 = vld [vmem:[%s0 + $0x15a] sm:$0xff]
  %v560 = vld [vmem:[%s0 + $0x16a] sm:$0xff]
  %v561 = vld [vmem:[%s0 + $0x172] sm:$0xff]
  %v562 = vld [vmem:[%s0 + $0x1b2] sm:$0xff]
  %v563 = vld [vmem:[%s0 + $0x1ba] sm:$0xff]
  %v564 = vld [vmem:[%s0 + $0x1ca] sm:$0xff]
  %v565 = vld [vmem:[%s0 + $0x1d2] sm:$0xff]
  %v566 = vld [vmem:[%s0 + $0x1e2] sm:$0xff]
  %v567 = vld [vmem:[%s0 + $0x1ea] sm:$0xff]
  %v568 = vld [vmem:[%s0 + $0x1fa] sm:$0xff]
  %v569 = vld [vmem:[%s0 + $0x202] sm:$0xff]
  %v570 = vld [vmem:[%s0 + $0x212] sm:$0xff]
  %v571 = vld [vmem:[%s0 + $0x21a] sm:$0xff]
  %v572 = vld [vmem:[%s0 + $0x22a] sm:$0xff]
  %v573 = vld [vmem:[%s0 + $0x232] sm:$0xff]
  %v574 = vld [vmem:[%s0 + $0x242] sm:$0xff]
  %v575 = vld [vmem:[%s0 + $0x24a] sm:$0xff]
  %v576 = vld [vmem:[%s0 + $0x25a] sm:$0xff]
  %v577 = vld [vmem:[%s0 + $0x262] sm:$0xff]
  %v578 = vld [vmem:[%s0 + $0x272] sm:$0xff]
  %v579 = vld [vmem:[%s0 + $0x27a] sm:$0xff]
  %v580 = vld [vmem:[%s0 + $0x28a] sm:$0xff]
  %v581 = vld [vmem:[%s0 + $0x292] sm:$0xff]
  %v582 = vld [vmem:[%s0 + $0x2a2] sm:$0xff]
  %v583 = vld [vmem:[%s0 + $0x2aa] sm:$0xff]
  %v584 = vld [vmem:[%s0 + $0x2ba] sm:$0xff]
  %v585 = vld [vmem:[%s0 + $0x2c2] sm:$0xff]
  %v586 = vld [vmem:[%s0 + $0x2d2] sm:$0xff]
  %v587 = vld [vmem:[%s0 + $0x2da] sm:$0xff]
  %v588 = vld [vmem:[%s0 + $0x2ea] sm:$0xff]
  %v589 = vld [vmem:[%s0 + $0x2f2] sm:$0xff]
  %v590 = vld [vmem:[%s0 + $0x302] sm:$0xff]
  %v591 = vld [vmem:[%s0 + $0x30a] sm:$0xff]
  %v592 = vld [vmem:[%s0 + $0x31a] sm:$0xff]
  %v593 = vld [vmem:[%s0 + $0x322] sm:$0xff]
  %658 = vrot.lane.b32.xlu0 %v530, 8
  %v659 = vpop.permute.xlu0 %658
  %660 = vrot.lane.b32.xlu0 %v531, 8
  %v661 = vpop.permute.xlu0 %660
  %662 = vrot.lane.b32.xlu0 %v532, 8
  %v663 = vpop.permute.xlu0 %662
  %664 = vrot.lane.b32.xlu0 %v533, 8
  %v665 = vpop.permute.xlu0 %664
  %666 = vrot.lane.b32.xlu0 %v534, 8
  %v667 = vpop.permute.xlu0 %666
  %668 = vrot.lane.b32.xlu0 %v535, 8
  %v669 = vpop.permute.xlu0 %668
  %670 = vrot.lane.b32.xlu0 %v536, 8
  %v671 = vpop.permute.xlu0 %670
  %672 = vrot.lane.b32.xlu0 %v537, 8
  %v673 = vpop.permute.xlu0 %672
  %674 = vrot.lane.b32.xlu0 %v538, 8
  %v675 = vpop.permute.xlu0 %674
  %676 = vrot.lane.b32.xlu0 %v539, 8
  %v677 = vpop.permute.xlu0 %676
  %678 = vrot.lane.b32.xlu0 %v540, 8
  %v679 = vpop.permute.xlu0 %678
  %680 = vrot.lane.b32.xlu0 %v541, 8
  %v681 = vpop.permute.xlu0 %680
  %682 = vrot.lane.b32.xlu0 %v542, 8
  %v683 = vpop.permute.xlu0 %682
  %684 = vrot.lane.b32.xlu0 %v543, 8
  %v685 = vpop.permute.xlu0 %684
  %686 = vrot.lane.b32.xlu0 %v544, 8
  %v687 = vpop.permute.xlu0 %686
  %688 = vrot.lane.b32.xlu0 %v545, 8
  %v689 = vpop.permute.xlu0 %688
  %690 = vrot.lane.b32.xlu0 %v546, 8
  %v691 = vpop.permute.xlu0 %690
  %692 = vrot.lane.b32.xlu0 %v547, 8
  %v693 = vpop.permute.xlu0 %692
  %694 = vrot.lane.b32.xlu0 %v548, 8
  %v695 = vpop.permute.xlu0 %694
  %696 = vrot.lane.b32.xlu0 %v549, 8
  %v697 = vpop.permute.xlu0 %696
  %698 = vrot.lane.b32.xlu0 %v550, 8
  %v699 = vpop.permute.xlu0 %698
  %700 = vrot.lane.b32.xlu0 %v551, 8
  %v701 = vpop.permute.xlu0 %700
  %702 = vrot.lane.b32.xlu0 %v552, 8
  %v703 = vpop.permute.xlu0 %702
  %704 = vrot.lane.b32.xlu0 %v553, 8
  %v705 = vpop.permute.xlu0 %704
  %706 = vrot.lane.b32.xlu0 %v554, 8
  %v707 = vpop.permute.xlu0 %706
  %708 = vrot.lane.b32.xlu0 %v555, 8
  %v709 = vpop.permute.xlu0 %708
  %710 = vrot.lane.b32.xlu0 %v556, 8
  %v711 = vpop.permute.xlu0 %710
  %712 = vrot.lane.b32.xlu0 %v557, 8
  %v713 = vpop.permute.xlu0 %712
  %714 = vrot.lane.b32.xlu0 %v558, 8
  %v715 = vpop.permute.xlu0 %714
  %716 = vrot.lane.b32.xlu0 %v559, 8
  %v717 = vpop.permute.xlu0 %716
  %718 = vrot.lane.b32.xlu0 %v560, 8
  %v719 = vpop.permute.xlu0 %718
  %720 = vrot.lane.b32.xlu0 %v561, 8
  %v721 = vpop.permute.xlu0 %720
  %722 = vrot.lane.b32.xlu0 %v562, 8
  %v723 = vpop.permute.xlu0 %722
  %724 = vrot.lane.b32.xlu0 %v563, 8
  %v725 = vpop.permute.xlu0 %724
  %726 = vrot.lane.b32.xlu0 %v564, 8
  %v727 = vpop.permute.xlu0 %726
  %728 = vrot.lane.b32.xlu0 %v565, 8
  %v729 = vpop.permute.xlu0 %728
  %730 = vrot.lane.b32.xlu0 %v566, 8
  %v731 = vpop.permute.xlu0 %730
  %732 = vrot.lane.b32.xlu0 %v567, 8
  %v733 = vpop.permute.xlu0 %732
  %734 = vrot.lane.b32.xlu0 %v568, 8
  %v735 = vpop.permute.xlu0 %734
  %736 = vrot.lane.b32.xlu0 %v569, 8
  %v737 = vpop.permute.xlu0 %736
  %738 = vrot.lane.b32.xlu0 %v570, 8
  %v739 = vpop.permute.xlu0 %738
  %740 = vrot.lane.b32.xlu0 %v571, 8
  %v741 = vpop.permute.xlu0 %740
  %742 = vrot.lane.b32.xlu0 %v572, 8
  %v743 = vpop.permute.xlu0 %742
  %744 = vrot.lane.b32.xlu0 %v573, 8
  %v745 = vpop.permute.xlu0 %744
  %746 = vrot.lane.b32.xlu0 %v574, 8
  %v747 = vpop.permute.xlu0 %746
  %748 = vrot.lane.b32.xlu0 %v575, 8
  %v749 = vpop.permute.xlu0 %748
  %750 = vrot.lane.b32.xlu0 %v576, 8
  %v751 = vpop.permute.xlu0 %750
  %752 = vrot.lane.b32.xlu0 %v577, 8
  %v753 = vpop.permute.xlu0 %752
  %754 = vrot.lane.b32.xlu0 %v578, 8
  %v755 = vpop.permute.xlu0 %754
  %756 = vrot.lane.b32.xlu0 %v579, 8
  %v757 = vpop.permute.xlu0 %756
  %758 = vrot.lane.b32.xlu0 %v580, 8
  %v759 = vpop.permute.xlu0 %758
  %760 = vrot.lane.b32.xlu0 %v581, 8
  %v761 = vpop.permute.xlu0 %760
  %762 = vrot.lane.b32.xlu0 %v582, 8
  %v763 = vpop.permute.xlu0 %762
  %764 = vrot.lane.b32.xlu0 %v583, 8
  %v765 = vpop.permute.xlu0 %764
  %766 = vrot.lane.b32.xlu0 %v584, 8
  %v767 = vpop.permute.xlu0 %766
  %768 = vrot.lane.b32.xlu0 %v585, 8
  %v769 = vpop.permute.xlu0 %768
  %770 = vrot.lane.b32.xlu0 %v586, 8
  %v771 = vpop.permute.xlu0 %770
  %772 = vrot.lane.b32.xlu0 %v587, 8
  %v773 = vpop.permute.xlu0 %772
  %774 = vrot.lane.b32.xlu0 %v588, 8
  %v775 = vpop.permute.xlu0 %774
  %776 = vrot.lane.b32.xlu0 %v589, 8
  %v777 = vpop.permute.xlu0 %776
  %778 = vrot.lane.b32.xlu0 %v590, 8
  %v779 = vpop.permute.xlu0 %778
  %780 = vrot.lane.b32.xlu0 %v591, 8
  %v781 = vpop.permute.xlu0 %780
  %782 = vrot.lane.b32.xlu0 %v592, 8
  %v783 = vpop.permute.xlu0 %782
  %784 = vrot.lane.b32.xlu0 %v593, 8
  %v785 = vpop.permute.xlu0 %784
  %vm850 = vcmask 97344
  %851 = vst.msk [vmem:[#allocation2] sm:$0xff] %vm850, %v659
  %852 = vst.msk [vmem:[#allocation2 + $0x8] sm:$0xff] %vm850, %v661
  %853 = vst.msk [vmem:[#allocation2 + $0x10] sm:$0xff] %vm850, %v663
  %854 = vst.msk [vmem:[#allocation2 + $0x18] sm:$0xff] %vm850, %v665
  %855 = vst.msk [vmem:[#allocation2 + $0x20] sm:$0xff] %vm850, %v667
  %856 = vst.msk [vmem:[#allocation2 + $0x28] sm:$0xff] %vm850, %v669
  %857 = vst.msk [vmem:[#allocation2 + $0x30] sm:$0xff] %vm850, %v671
  %858 = vst.msk [vmem:[#allocation2 + $0x38] sm:$0xff] %vm850, %v673
  %859 = vst.msk [vmem:[#allocation2 + $0x40] sm:$0xff] %vm850, %v675
  %860 = vst.msk [vmem:[#allocation2 + $0x48] sm:$0xff] %vm850, %v677
  %861 = vst.msk [vmem:[#allocation2 + $0x50] sm:$0xff] %vm850, %v679
  %862 = vst.msk [vmem:[#allocation2 + $0x58] sm:$0xff] %vm850, %v681
  %863 = vst.msk [vmem:[#allocation2 + $0x60] sm:$0xff] %vm850, %v683
  %864 = vst.msk [vmem:[#allocation2 + $0x68] sm:$0xff] %vm850, %v685
  %865 = vst.msk [vmem:[#allocation2 + $0x70] sm:$0xff] %vm850, %v687
  %866 = vst.msk [vmem:[#allocation2 + $0x78] sm:$0xff] %vm850, %v689
  %867 = vst.msk [vmem:[#allocation2 + $0x80] sm:$0xff] %vm850, %v691
  %868 = vst.msk [vmem:[#allocation2 + $0x88] sm:$0xff] %vm850, %v693
  %869 = vst.msk [vmem:[#allocation2 + $0x90] sm:$0xff] %vm850, %v695
  %870 = vst.msk [vmem:[#allocation2 + $0x98] sm:$0xff] %vm850, %v697
  %871 = vst.msk [vmem:[#allocation2 + $0xa0] sm:$0xff] %vm850, %v699
  %872 = vst.msk [vmem:[#allocation2 + $0xa8] sm:$0xff] %vm850, %v701
  %873 = vst.msk [vmem:[#allocation2 + $0xb0] sm:$0xff] %vm850, %v703
  %874 = vst.msk [vmem:[#allocation2 + $0xb8] sm:$0xff] %vm850, %v705
  %875 = vst.msk [vmem:[#allocation2 + $0xc0] sm:$0xff] %vm850, %v707
  %876 = vst.msk [vmem:[#allocation2 + $0xc8] sm:$0xff] %vm850, %v709
  %877 = vst.msk [vmem:[#allocation2 + $0xd0] sm:$0xff] %vm850, %v711
  %878 = vst.msk [vmem:[#allocation2 + $0xd8] sm:$0xff] %vm850, %v713
  %879 = vst.msk [vmem:[#allocation2 + $0xe0] sm:$0xff] %vm850, %v715
  %880 = vst.msk [vmem:[#allocation2 + $0xe8] sm:$0xff] %vm850, %v717
  %881 = vst.msk [vmem:[#allocation2 + $0xf0] sm:$0xff] %vm850, %v719
  %882 = vst.msk [vmem:[#allocation2 + $0xf8] sm:$0xff] %vm850, %v721
  %883 = vst.msk [vmem:[#allocation2 + $0x100] sm:$0xff] %vm850, %v723
  %884 = vst.msk [vmem:[#allocation2 + $0x108] sm:$0xff] %vm850, %v725
  %885 = vst.msk [vmem:[#allocation2 + $0x110] sm:$0xff] %vm850, %v727
  %886 = vst.msk [vmem:[#allocation2 + $0x118] sm:$0xff] %vm850, %v729
  %887 = vst.msk [vmem:[#allocation2 + $0x120] sm:$0xff] %vm850, %v731
  %888 = vst.msk [vmem:[#allocation2 + $0x128] sm:$0xff] %vm850, %v733
  %889 = vst.msk [vmem:[#allocation2 + $0x130] sm:$0xff] %vm850, %v735
  %890 = vst.msk [vmem:[#allocation2 + $0x138] sm:$0xff] %vm850, %v737
  %891 = vst.msk [vmem:[#allocation2 + $0x140] sm:$0xff] %vm850, %v739
  %892 = vst.msk [vmem:[#allocation2 + $0x148] sm:$0xff] %vm850, %v741
  %893 = vst.msk [vmem:[#allocation2 + $0x150] sm:$0xff] %vm850, %v743
  %894 = vst.msk [vmem:[#allocation2 + $0x158] sm:$0xff] %vm850, %v745
  %895 = vst.msk [vmem:[#allocation2 + $0x160] sm:$0xff] %vm850, %v747
  %896 = vst.msk [vmem:[#allocation2 + $0x168] sm:$0xff] %vm850, %v749
  %897 = vst.msk [vmem:[#allocation2 + $0x170] sm:$0xff] %vm850, %v751
  %898 = vst.msk [vmem:[#allocation2 + $0x178] sm:$0xff] %vm850, %v753
  %899 = vst.msk [vmem:[#allocation2 + $0x180] sm:$0xff] %vm850, %v755
  %900 = vst.msk [vmem:[#allocation2 + $0x188] sm:$0xff] %vm850, %v757
  %901 = vst.msk [vmem:[#allocation2 + $0x190] sm:$0xff] %vm850, %v759
  %902 = vst.msk [vmem:[#allocation2 + $0x198] sm:$0xff] %vm850, %v761
  %903 = vst.msk [vmem:[#allocation2 + $0x1a0] sm:$0xff] %vm850, %v763
  %904 = vst.msk [vmem:[#allocation2 + $0x1a8] sm:$0xff] %vm850, %v765
  %905 = vst.msk [vmem:[#allocation2 + $0x1b0] sm:$0xff] %vm850, %v767
  %906 = vst.msk [vmem:[#allocation2 + $0x1b8] sm:$0xff] %vm850, %v769
  %907 = vst.msk [vmem:[#allocation2 + $0x1c0] sm:$0xff] %vm850, %v771
  %908 = vst.msk [vmem:[#allocation2 + $0x1c8] sm:$0xff] %vm850, %v773
  %909 = vst.msk [vmem:[#allocation2 + $0x1d0] sm:$0xff] %vm850, %v775
  %910 = vst.msk [vmem:[#allocation2 + $0x1d8] sm:$0xff] %vm850, %v777
  %911 = vst.msk [vmem:[#allocation2 + $0x1e0] sm:$0xff] %vm850, %v779
  %912 = vst.msk [vmem:[#allocation2 + $0x1e8] sm:$0xff] %vm850, %v781
  %913 = vst.msk [vmem:[#allocation2 + $0x1f0] sm:$0xff] %vm850, %v783
  %914 = vst.msk [vmem:[#allocation2 + $0x1f8] sm:$0xff] %vm850, %v785
  %s915 = scalar_lea.vmem %s0, 24
  %v916 = vld [vmem:[%s915] sm:$0xff]
  %v917 = vld [vmem:[%s915 + $0x8] sm:$0xff]
  %v918 = vld [vmem:[%s915 + $0x18] sm:$0xff]
  %v919 = vld [vmem:[%s915 + $0x20] sm:$0xff]
  %v920 = vld [vmem:[%s915 + $0x30] sm:$0xff]
  %v921 = vld [vmem:[%s915 + $0x38] sm:$0xff]
  %v922 = vld [vmem:[%s915 + $0x48] sm:$0xff]
  %v923 = vld [vmem:[%s915 + $0x50] sm:$0xff]
  %v924 = vld [vmem:[%s915 + $0x60] sm:$0xff]
  %v925 = vld [vmem:[%s915 + $0x68] sm:$0xff]
  %v926 = vld [vmem:[%s915 + $0x78] sm:$0xff]
  %v927 = vld [vmem:[%s915 + $0x80] sm:$0xff]
  %v928 = vld [vmem:[%s915 + $0x90] sm:$0xff]
  %v929 = vld [vmem:[%s915 + $0x98] sm:$0xff]
  %v930 = vld [vmem:[%s915 + $0xa8] sm:$0xff]
  %v931 = vld [vmem:[%s915 + $0xb0] sm:$0xff]
  %v932 = vld [vmem:[%s915 + $0xc0] sm:$0xff]
  %v933 = vld [vmem:[%s915 + $0xc8] sm:$0xff]
  %v934 = vld [vmem:[%s915 + $0xd8] sm:$0xff]
  %v935 = vld [vmem:[%s915 + $0xe0] sm:$0xff]
  %v936 = vld [vmem:[%s915 + $0xf0] sm:$0xff]
  %v937 = vld [vmem:[%s915 + $0xf8] sm:$0xff]
  %v938 = vld [vmem:[%s915 + $0x108] sm:$0xff]
  %v939 = vld [vmem:[%s915 + $0x110] sm:$0xff]
  %v940 = vld [vmem:[%s915 + $0x120] sm:$0xff]
  %v941 = vld [vmem:[%s915 + $0x128] sm:$0xff]
  %v942 = vld [vmem:[%s915 + $0x138] sm:$0xff]
  %v943 = vld [vmem:[%s915 + $0x140] sm:$0xff]
  %v944 = vld [vmem:[%s915 + $0x150] sm:$0xff]
  %v945 = vld [vmem:[%s915 + $0x158] sm:$0xff]
  %v946 = vld [vmem:[%s915 + $0x168] sm:$0xff]
  %v947 = vld [vmem:[%s915 + $0x170] sm:$0xff]
  %v948 = vld [vmem:[%s915 + $0x1b0] sm:$0xff]
  %v949 = vld [vmem:[%s915 + $0x1b8] sm:$0xff]
  %v950 = vld [vmem:[%s915 + $0x1c8] sm:$0xff]
  %v951 = vld [vmem:[%s915 + $0x1d0] sm:$0xff]
  %v952 = vld [vmem:[%s915 + $0x1e0] sm:$0xff]
  %v953 = vld [vmem:[%s915 + $0x1e8] sm:$0xff]
  %v954 = vld [vmem:[%s915 + $0x1f8] sm:$0xff]
  %v955 = vld [vmem:[%s915 + $0x200] sm:$0xff]
  %v956 = vld [vmem:[%s915 + $0x210] sm:$0xff]
  %v957 = vld [vmem:[%s915 + $0x218] sm:$0xff]
  %v958 = vld [vmem:[%s915 + $0x228] sm:$0xff]
  %v959 = vld [vmem:[%s915 + $0x230] sm:$0xff]
  %v960 = vld [vmem:[%s915 + $0x240] sm:$0xff]
  %v961 = vld [vmem:[%s915 + $0x248] sm:$0xff]
  %v962 = vld [vmem:[%s915 + $0x258] sm:$0xff]
  %v963 = vld [vmem:[%s915 + $0x260] sm:$0xff]
  %v964 = vld [vmem:[%s915 + $0x270] sm:$0xff]
  %v965 = vld [vmem:[%s915 + $0x278] sm:$0xff]
  %v966 = vld [vmem:[%s915 + $0x288] sm:$0xff]
  %v967 = vld [vmem:[%s915 + $0x290] sm:$0xff]
  %v968 = vld [vmem:[%s915 + $0x2a0] sm:$0xff]
  %v969 = vld [vmem:[%s915 + $0x2a8] sm:$0xff]
  %v970 = vld [vmem:[%s915 + $0x2b8] sm:$0xff]
  %v971 = vld [vmem:[%s915 + $0x2c0] sm:$0xff]
  %v972 = vld [vmem:[%s915 + $0x2d0] sm:$0xff]
  %v973 = vld [vmem:[%s915 + $0x2d8] sm:$0xff]
  %v974 = vld [vmem:[%s915 + $0x2e8] sm:$0xff]
  %v975 = vld [vmem:[%s915 + $0x2f0] sm:$0xff]
  %v976 = vld [vmem:[%s915 + $0x300] sm:$0xff]
  %v977 = vld [vmem:[%s915 + $0x308] sm:$0xff]
  %v978 = vld [vmem:[%s915 + $0x318] sm:$0xff]
  %v979 = vld [vmem:[%s915 + $0x320] sm:$0xff]
  %1044 = vrot.lane.b32.xlu0 %v916, 12
  %v1045 = vpop.permute.xlu0 %1044
  %1046 = vrot.lane.b32.xlu0 %v917, 12
  %v1047 = vpop.permute.xlu0 %1046
  %1048 = vrot.lane.b32.xlu0 %v918, 12
  %v1049 = vpop.permute.xlu0 %1048
  %1050 = vrot.lane.b32.xlu0 %v919, 12
  %v1051 = vpop.permute.xlu0 %1050
  %1052 = vrot.lane.b32.xlu0 %v920, 12
  %v1053 = vpop.permute.xlu0 %1052
  %1054 = vrot.lane.b32.xlu0 %v921, 12
  %v1055 = vpop.permute.xlu0 %1054
  %1056 = vrot.lane.b32.xlu0 %v922, 12
  %v1057 = vpop.permute.xlu0 %1056
  %1058 = vrot.lane.b32.xlu0 %v923, 12
  %v1059 = vpop.permute.xlu0 %1058
  %1060 = vrot.lane.b32.xlu0 %v924, 12
  %v1061 = vpop.permute.xlu0 %1060
  %1062 = vrot.lane.b32.xlu0 %v925, 12
  %v1063 = vpop.permute.xlu0 %1062
  %1064 = vrot.lane.b32.xlu0 %v926, 12
  %v1065 = vpop.permute.xlu0 %1064
  %1066 = vrot.lane.b32.xlu0 %v927, 12
  %v1067 = vpop.permute.xlu0 %1066
  %1068 = vrot.lane.b32.xlu0 %v928, 12
  %v1069 = vpop.permute.xlu0 %1068
  %1070 = vrot.lane.b32.xlu0 %v929, 12
  %v1071 = vpop.permute.xlu0 %1070
  %1072 = vrot.lane.b32.xlu0 %v930, 12
  %v1073 = vpop.permute.xlu0 %1072
  %1074 = vrot.lane.b32.xlu0 %v931, 12
  %v1075 = vpop.permute.xlu0 %1074
  %1076 = vrot.lane.b32.xlu0 %v932, 12
  %v1077 = vpop.permute.xlu0 %1076
  %1078 = vrot.lane.b32.xlu0 %v933, 12
  %v1079 = vpop.permute.xlu0 %1078
  %1080 = vrot.lane.b32.xlu0 %v934, 12
  %v1081 = vpop.permute.xlu0 %1080
  %1082 = vrot.lane.b32.xlu0 %v935, 12
  %v1083 = vpop.permute.xlu0 %1082
  %1084 = vrot.lane.b32.xlu0 %v936, 12
  %v1085 = vpop.permute.xlu0 %1084
  %1086 = vrot.lane.b32.xlu0 %v937, 12
  %v1087 = vpop.permute.xlu0 %1086
  %1088 = vrot.lane.b32.xlu0 %v938, 12
  %v1089 = vpop.permute.xlu0 %1088
  %1090 = vrot.lane.b32.xlu0 %v939, 12
  %v1091 = vpop.permute.xlu0 %1090
  %1092 = vrot.lane.b32.xlu0 %v940, 12
  %v1093 = vpop.permute.xlu0 %1092
  %1094 = vrot.lane.b32.xlu0 %v941, 12
  %v1095 = vpop.permute.xlu0 %1094
  %1096 = vrot.lane.b32.xlu0 %v942, 12
  %v1097 = vpop.permute.xlu0 %1096
  %1098 = vrot.lane.b32.xlu0 %v943, 12
  %v1099 = vpop.permute.xlu0 %1098
  %1100 = vrot.lane.b32.xlu0 %v944, 12
  %v1101 = vpop.permute.xlu0 %1100
  %1102 = vrot.lane.b32.xlu0 %v945, 12
  %v1103 = vpop.permute.xlu0 %1102
  %1104 = vrot.lane.b32.xlu0 %v946, 12
  %v1105 = vpop.permute.xlu0 %1104
  %1106 = vrot.lane.b32.xlu0 %v947, 12
  %v1107 = vpop.permute.xlu0 %1106
  %1108 = vrot.lane.b32.xlu0 %v948, 12
  %v1109 = vpop.permute.xlu0 %1108
  %1110 = vrot.lane.b32.xlu0 %v949, 12
  %v1111 = vpop.permute.xlu0 %1110
  %1112 = vrot.lane.b32.xlu0 %v950, 12
  %v1113 = vpop.permute.xlu0 %1112
  %1114 = vrot.lane.b32.xlu0 %v951, 12
  %v1115 = vpop.permute.xlu0 %1114
  %1116 = vrot.lane.b32.xlu0 %v952, 12
  %v1117 = vpop.permute.xlu0 %1116
  %1118 = vrot.lane.b32.xlu0 %v953, 12
  %v1119 = vpop.permute.xlu0 %1118
  %1120 = vrot.lane.b32.xlu0 %v954, 12
  %v1121 = vpop.permute.xlu0 %1120
  %1122 = vrot.lane.b32.xlu0 %v955, 12
  %v1123 = vpop.permute.xlu0 %1122
  %1124 = vrot.lane.b32.xlu0 %v956, 12
  %v1125 = vpop.permute.xlu0 %1124
  %1126 = vrot.lane.b32.xlu0 %v957, 12
  %v1127 = vpop.permute.xlu0 %1126
  %1128 = vrot.lane.b32.xlu0 %v958, 12
  %v1129 = vpop.permute.xlu0 %1128
  %1130 = vrot.lane.b32.xlu0 %v959, 12
  %v1131 = vpop.permute.xlu0 %1130
  %1132 = vrot.lane.b32.xlu0 %v960, 12
  %v1133 = vpop.permute.xlu0 %1132
  %1134 = vrot.lane.b32.xlu0 %v961, 12
  %v1135 = vpop.permute.xlu0 %1134
  %1136 = vrot.lane.b32.xlu0 %v962, 12
  %v1137 = vpop.permute.xlu0 %1136
  %1138 = vrot.lane.b32.xlu0 %v963, 12
  %v1139 = vpop.permute.xlu0 %1138
  %1140 = vrot.lane.b32.xlu0 %v964, 12
  %v1141 = vpop.permute.xlu0 %1140
  %1142 = vrot.lane.b32.xlu0 %v965, 12
  %v1143 = vpop.permute.xlu0 %1142
  %1144 = vrot.lane.b32.xlu0 %v966, 12
  %v1145 = vpop.permute.xlu0 %1144
  %1146 = vrot.lane.b32.xlu0 %v967, 12
  %v1147 = vpop.permute.xlu0 %1146
  %1148 = vrot.lane.b32.xlu0 %v968, 12
  %v1149 = vpop.permute.xlu0 %1148
  %1150 = vrot.lane.b32.xlu0 %v969, 12
  %v1151 = vpop.permute.xlu0 %1150
  %1152 = vrot.lane.b32.xlu0 %v970, 12
  %v1153 = vpop.permute.xlu0 %1152
  %1154 = vrot.lane.b32.xlu0 %v971, 12
  %v1155 = vpop.permute.xlu0 %1154
  %1156 = vrot.lane.b32.xlu0 %v972, 12
  %v1157 = vpop.permute.xlu0 %1156
  %1158 = vrot.lane.b32.xlu0 %v973, 12
  %v1159 = vpop.permute.xlu0 %1158
  %1160 = vrot.lane.b32.xlu0 %v974, 12
  %v1161 = vpop.permute.xlu0 %1160
  %1162 = vrot.lane.b32.xlu0 %v975, 12
  %v1163 = vpop.permute.xlu0 %1162
  %1164 = vrot.lane.b32.xlu0 %v976, 12
  %v1165 = vpop.permute.xlu0 %1164
  %1166 = vrot.lane.b32.xlu0 %v977, 12
  %v1167 = vpop.permute.xlu0 %1166
  %1168 = vrot.lane.b32.xlu0 %v978, 12
  %v1169 = vpop.permute.xlu0 %1168
  %1170 = vrot.lane.b32.xlu0 %v979, 12
  %v1171 = vpop.permute.xlu0 %1170
  %vm1236 = vcmask 130144
  %1237 = vst.msk [vmem:[#allocation2] sm:$0xff] %vm1236, %v1045
  %1238 = vst.msk [vmem:[#allocation2 + $0x8] sm:$0xff] %vm1236, %v1047
  %1239 = vst.msk [vmem:[#allocation2 + $0x10] sm:$0xff] %vm1236, %v1049
  %1240 = vst.msk [vmem:[#allocation2 + $0x18] sm:$0xff] %vm1236, %v1051
  %1241 = vst.msk [vmem:[#allocation2 + $0x20] sm:$0xff] %vm1236, %v1053
  %1242 = vst.msk [vmem:[#allocation2 + $0x28] sm:$0xff] %vm1236, %v1055
  %1243 = vst.msk [vmem:[#allocation2 + $0x30] sm:$0xff] %vm1236, %v1057
  %1244 = vst.msk [vmem:[#allocation2 + $0x38] sm:$0xff] %vm1236, %v1059
  %1245 = vst.msk [vmem:[#allocation2 + $0x40] sm:$0xff] %vm1236, %v1061
  %1246 = vst.msk [vmem:[#allocation2 + $0x48] sm:$0xff] %vm1236, %v1063
  %1247 = vst.msk [vmem:[#allocation2 + $0x50] sm:$0xff] %vm1236, %v1065
  %1248 = vst.msk [vmem:[#allocation2 + $0x58] sm:$0xff] %vm1236, %v1067
  %1249 = vst.msk [vmem:[#allocation2 + $0x60] sm:$0xff] %vm1236, %v1069
  %1250 = vst.msk [vmem:[#allocation2 + $0x68] sm:$0xff] %vm1236, %v1071
  %1251 = vst.msk [vmem:[#allocation2 + $0x70] sm:$0xff] %vm1236, %v1073
  %1252 = vst.msk [vmem:[#allocation2 + $0x78] sm:$0xff] %vm1236, %v1075
  %1253 = vst.msk [vmem:[#allocation2 + $0x80] sm:$0xff] %vm1236, %v1077
  %1254 = vst.msk [vmem:[#allocation2 + $0x88] sm:$0xff] %vm1236, %v1079
  %1255 = vst.msk [vmem:[#allocation2 + $0x90] sm:$0xff] %vm1236, %v1081
  %1256 = vst.msk [vmem:[#allocation2 + $0x98] sm:$0xff] %vm1236, %v1083
  %1257 = vst.msk [vmem:[#allocation2 + $0xa0] sm:$0xff] %vm1236, %v1085
  %1258 = vst.msk [vmem:[#allocation2 + $0xa8] sm:$0xff] %vm1236, %v1087
  %1259 = vst.msk [vmem:[#allocation2 + $0xb0] sm:$0xff] %vm1236, %v1089
  %1260 = vst.msk [vmem:[#allocation2 + $0xb8] sm:$0xff] %vm1236, %v1091
  %1261 = vst.msk [vmem:[#allocation2 + $0xc0] sm:$0xff] %vm1236, %v1093
  %1262 = vst.msk [vmem:[#allocation2 + $0xc8] sm:$0xff] %vm1236, %v1095
  %1263 = vst.msk [vmem:[#allocation2 + $0xd0] sm:$0xff] %vm1236, %v1097
  %1264 = vst.msk [vmem:[#allocation2 + $0xd8] sm:$0xff] %vm1236, %v1099
  %1265 = vst.msk [vmem:[#allocation2 + $0xe0] sm:$0xff] %vm1236, %v1101
  %1266 = vst.msk [vmem:[#allocation2 + $0xe8] sm:$0xff] %vm1236, %v1103
  %1267 = vst.msk [vmem:[#allocation2 + $0xf0] sm:$0xff] %vm1236, %v1105
  %1268 = vst.msk [vmem:[#allocation2 + $0xf8] sm:$0xff] %vm1236, %v1107
  %1269 = vst.msk [vmem:[#allocation2 + $0x100] sm:$0xff] %vm1236, %v1109
  %1270 = vst.msk [vmem:[#allocation2 + $0x108] sm:$0xff] %vm1236, %v1111
  %1271 = vst.msk [vmem:[#allocation2 + $0x110] sm:$0xff] %vm1236, %v1113
  %1272 = vst.msk [vmem:[#allocation2 + $0x118] sm:$0xff] %vm1236, %v1115
  %1273 = vst.msk [vmem:[#allocation2 + $0x120] sm:$0xff] %vm1236, %v1117
  %1274 = vst.msk [vmem:[#allocation2 + $0x128] sm:$0xff] %vm1236, %v1119
  %1275 = vst.msk [vmem:[#allocation2 + $0x130] sm:$0xff] %vm1236, %v1121
  %1276 = vst.msk [vmem:[#allocation2 + $0x138] sm:$0xff] %vm1236, %v1123
  %1277 = vst.msk [vmem:[#allocation2 + $0x140] sm:$0xff] %vm1236, %v1125
  %1278 = vst.msk [vmem:[#allocation2 + $0x148] sm:$0xff] %vm1236, %v1127
  %1279 = vst.msk [vmem:[#allocation2 + $0x150] sm:$0xff] %vm1236, %v1129
  %1280 = vst.msk [vmem:[#allocation2 + $0x158] sm:$0xff] %vm1236, %v1131
  %1281 = vst.msk [vmem:[#allocation2 + $0x160] sm:$0xff] %vm1236, %v1133
  %1282 = vst.msk [vmem:[#allocation2 + $0x168] sm:$0xff] %vm1236, %v1135
  %1283 = vst.msk [vmem:[#allocation2 + $0x170] sm:$0xff] %vm1236, %v1137
  %1284 = vst.msk [vmem:[#allocation2 + $0x178] sm:$0xff] %vm1236, %v1139
  %1285 = vst.msk [vmem:[#allocation2 + $0x180] sm:$0xff] %vm1236, %v1141
  %1286 = vst.msk [vmem:[#allocation2 + $0x188] sm:$0xff] %vm1236, %v1143
  %1287 = vst.msk [vmem:[#allocation2 + $0x190] sm:$0xff] %vm1236, %v1145
  %1288 = vst.msk [vmem:[#allocation2 + $0x198] sm:$0xff] %vm1236, %v1147
  %1289 = vst.msk [vmem:[#allocation2 + $0x1a0] sm:$0xff] %vm1236, %v1149
  %1290 = vst.msk [vmem:[#allocation2 + $0x1a8] sm:$0xff] %vm1236, %v1151
  %1291 = vst.msk [vmem:[#allocation2 + $0x1b0] sm:$0xff] %vm1236, %v1153
  %1292 = vst.msk [vmem:[#allocation2 + $0x1b8] sm:$0xff] %vm1236, %v1155
  %1293 = vst.msk [vmem:[#allocation2 + $0x1c0] sm:$0xff] %vm1236, %v1157
  %1294 = vst.msk [vmem:[#allocation2 + $0x1c8] sm:$0xff] %vm1236, %v1159
  %1295 = vst.msk [vmem:[#allocation2 + $0x1d0] sm:$0xff] %vm1236, %v1161
  %1296 = vst.msk [vmem:[#allocation2 + $0x1d8] sm:$0xff] %vm1236, %v1163
  %1297 = vst.msk [vmem:[#allocation2 + $0x1e0] sm:$0xff] %vm1236, %v1165
  %1298 = vst.msk [vmem:[#allocation2 + $0x1e8] sm:$0xff] %vm1236, %v1167
  %1299 = vst.msk [vmem:[#allocation2 + $0x1f0] sm:$0xff] %vm1236, %v1169
  %1300 = vst.msk [vmem:[#allocation2 + $0x1f8] sm:$0xff] %vm1236, %v1171
  %v1301 = vld [vmem:[%s915 + $0x1] sm:$0xff]
  %v1302 = vld [vmem:[%s915 + $0x9] sm:$0xff]
  %v1303 = vld [vmem:[%s915 + $0x19] sm:$0xff]
  %v1304 = vld [vmem:[%s915 + $0x21] sm:$0xff]
  %v1305 = vld [vmem:[%s915 + $0x31] sm:$0xff]
  %v1306 = vld [vmem:[%s915 + $0x39] sm:$0xff]
  %v1307 = vld [vmem:[%s915 + $0x49] sm:$0xff]
  %v1308 = vld [vmem:[%s915 + $0x51] sm:$0xff]
  %v1309 = vld [vmem:[%s915 + $0x61] sm:$0xff]
  %v1310 = vld [vmem:[%s915 + $0x69] sm:$0xff]
  %v1311 = vld [vmem:[%s915 + $0x79] sm:$0xff]
  %v1312 = vld [vmem:[%s915 + $0x81] sm:$0xff]
  %v1313 = vld [vmem:[%s915 + $0x91] sm:$0xff]
  %v1314 = vld [vmem:[%s915 + $0x99] sm:$0xff]
  %v1315 = vld [vmem:[%s915 + $0xa9] sm:$0xff]
  %v1316 = vld [vmem:[%s915 + $0xb1] sm:$0xff]
  %v1317 = vld [vmem:[%s915 + $0xc1] sm:$0xff]
  %v1318 = vld [vmem:[%s915 + $0xc9] sm:$0xff]
  %v1319 = vld [vmem:[%s915 + $0xd9] sm:$0xff]
  %v1320 = vld [vmem:[%s915 + $0xe1] sm:$0xff]
  %v1321 = vld [vmem:[%s915 + $0xf1] sm:$0xff]
  %v1322 = vld [vmem:[%s915 + $0xf9] sm:$0xff]
  %v1323 = vld [vmem:[%s915 + $0x109] sm:$0xff]
  %v1324 = vld [vmem:[%s915 + $0x111] sm:$0xff]
  %v1325 = vld [vmem:[%s915 + $0x121] sm:$0xff]
  %v1326 = vld [vmem:[%s915 + $0x129] sm:$0xff]
  %v1327 = vld [vmem:[%s915 + $0x139] sm:$0xff]
  %v1328 = vld [vmem:[%s915 + $0x141] sm:$0xff]
  %v1329 = vld [vmem:[%s915 + $0x151] sm:$0xff]
  %v1330 = vld [vmem:[%s915 + $0x159] sm:$0xff]
  %v1331 = vld [vmem:[%s915 + $0x169] sm:$0xff]
  %v1332 = vld [vmem:[%s915 + $0x171] sm:$0xff]
  %v1333 = vld [vmem:[%s915 + $0x1b1] sm:$0xff]
  %v1334 = vld [vmem:[%s915 + $0x1b9] sm:$0xff]
  %v1335 = vld [vmem:[%s915 + $0x1c9] sm:$0xff]
  %v1336 = vld [vmem:[%s915 + $0x1d1] sm:$0xff]
  %v1337 = vld [vmem:[%s915 + $0x1e1] sm:$0xff]
  %v1338 = vld [vmem:[%s915 + $0x1e9] sm:$0xff]
  %v1339 = vld [vmem:[%s915 + $0x1f9] sm:$0xff]
  %v1340 = vld [vmem:[%s915 + $0x201] sm:$0xff]
  %v1341 = vld [vmem:[%s915 + $0x211] sm:$0xff]
  %v1342 = vld [vmem:[%s915 + $0x219] sm:$0xff]
  %v1343 = vld [vmem:[%s915 + $0x229] sm:$0xff]
  %v1344 = vld [vmem:[%s915 + $0x231] sm:$0xff]
  %v1345 = vld [vmem:[%s915 + $0x241] sm:$0xff]
  %v1346 = vld [vmem:[%s915 + $0x249] sm:$0xff]
  %v1347 = vld [vmem:[%s915 + $0x259] sm:$0xff]
  %v1348 = vld [vmem:[%s915 + $0x261] sm:$0xff]
  %v1349 = vld [vmem:[%s915 + $0x271] sm:$0xff]
  %v1350 = vld [vmem:[%s915 + $0x279] sm:$0xff]
  %v1351 = vld [vmem:[%s915 + $0x289] sm:$0xff]
  %v1352 = vld [vmem:[%s915 + $0x291] sm:$0xff]
  %v1353 = vld [vmem:[%s915 + $0x2a1] sm:$0xff]
  %v1354 = vld [vmem:[%s915 + $0x2a9] sm:$0xff]
  %v1355 = vld [vmem:[%s915 + $0x2b9] sm:$0xff]
  %v1356 = vld [vmem:[%s915 + $0x2c1] sm:$0xff]
  %v1357 = vld [vmem:[%s915 + $0x2d1] sm:$0xff]
  %v1358 = vld [vmem:[%s915 + $0x2d9] sm:$0xff]
  %v1359 = vld [vmem:[%s915 + $0x2e9] sm:$0xff]
  %v1360 = vld [vmem:[%s915 + $0x2f1] sm:$0xff]
  %v1361 = vld [vmem:[%s915 + $0x301] sm:$0xff]
  %v1362 = vld [vmem:[%s915 + $0x309] sm:$0xff]
  %v1363 = vld [vmem:[%s915 + $0x319] sm:$0xff]
  %v1364 = vld [vmem:[%s915 + $0x321] sm:$0xff]
  %1429 = vrot.lane.b32.xlu0 %v1301, 16
  %v1430 = vpop.permute.xlu0 %1429
  %1431 = vrot.lane.b32.xlu0 %v1302, 16
  %v1432 = vpop.permute.xlu0 %1431
  %1433 = vrot.lane.b32.xlu0 %v1303, 16
  %v1434 = vpop.permute.xlu0 %1433
  %1435 = vrot.lane.b32.xlu0 %v1304, 16
  %v1436 = vpop.permute.xlu0 %1435
  %1437 = vrot.lane.b32.xlu0 %v1305, 16
  %v1438 = vpop.permute.xlu0 %1437
  %1439 = vrot.lane.b32.xlu0 %v1306, 16
  %v1440 = vpop.permute.xlu0 %1439
  %1441 = vrot.lane.b32.xlu0 %v1307, 16
  %v1442 = vpop.permute.xlu0 %1441
  %1443 = vrot.lane.b32.xlu0 %v1308, 16
  %v1444 = vpop.permute.xlu0 %1443
  %1445 = vrot.lane.b32.xlu0 %v1309, 16
  %v1446 = vpop.permute.xlu0 %1445
  %1447 = vrot.lane.b32.xlu0 %v1310, 16
  %v1448 = vpop.permute.xlu0 %1447
  %1449 = vrot.lane.b32.xlu0 %v1311, 16
  %v1450 = vpop.permute.xlu0 %1449
  %1451 = vrot.lane.b32.xlu0 %v1312, 16
  %v1452 = vpop.permute.xlu0 %1451
  %1453 = vrot.lane.b32.xlu0 %v1313, 16
  %v1454 = vpop.permute.xlu0 %1453
  %1455 = vrot.lane.b32.xlu0 %v1314, 16
  %v1456 = vpop.permute.xlu0 %1455
  %1457 = vrot.lane.b32.xlu0 %v1315, 16
  %v1458 = vpop.permute.xlu0 %1457
  %1459 = vrot.lane.b32.xlu0 %v1316, 16
  %v1460 = vpop.permute.xlu0 %1459
  %1461 = vrot.lane.b32.xlu0 %v1317, 16
  %v1462 = vpop.permute.xlu0 %1461
  %1463 = vrot.lane.b32.xlu0 %v1318, 16
  %v1464 = vpop.permute.xlu0 %1463
  %1465 = vrot.lane.b32.xlu0 %v1319, 16
  %v1466 = vpop.permute.xlu0 %1465
  %1467 = vrot.lane.b32.xlu0 %v1320, 16
  %v1468 = vpop.permute.xlu0 %1467
  %1469 = vrot.lane.b32.xlu0 %v1321, 16
  %v1470 = vpop.permute.xlu0 %1469
  %1471 = vrot.lane.b32.xlu0 %v1322, 16
  %v1472 = vpop.permute.xlu0 %1471
  %1473 = vrot.lane.b32.xlu0 %v1323, 16
  %v1474 = vpop.permute.xlu0 %1473
  %1475 = vrot.lane.b32.xlu0 %v1324, 16
  %v1476 = vpop.permute.xlu0 %1475
  %1477 = vrot.lane.b32.xlu0 %v1325, 16
  %v1478 = vpop.permute.xlu0 %1477
  %1479 = vrot.lane.b32.xlu0 %v1326, 16
  %v1480 = vpop.permute.xlu0 %1479
  %1481 = vrot.lane.b32.xlu0 %v1327, 16
  %v1482 = vpop.permute.xlu0 %1481
  %1483 = vrot.lane.b32.xlu0 %v1328, 16
  %v1484 = vpop.permute.xlu0 %1483
  %1485 = vrot.lane.b32.xlu0 %v1329, 16
  %v1486 = vpop.permute.xlu0 %1485
  %1487 = vrot.lane.b32.xlu0 %v1330, 16
  %v1488 = vpop.permute.xlu0 %1487
  %1489 = vrot.lane.b32.xlu0 %v1331, 16
  %v1490 = vpop.permute.xlu0 %1489
  %1491 = vrot.lane.b32.xlu0 %v1332, 16
  %v1492 = vpop.permute.xlu0 %1491
  %1493 = vrot.lane.b32.xlu0 %v1333, 16
  %v1494 = vpop.permute.xlu0 %1493
  %1495 = vrot.lane.b32.xlu0 %v1334, 16
  %v1496 = vpop.permute.xlu0 %1495
  %1497 = vrot.lane.b32.xlu0 %v1335, 16
  %v1498 = vpop.permute.xlu0 %1497
  %1499 = vrot.lane.b32.xlu0 %v1336, 16
  %v1500 = vpop.permute.xlu0 %1499
  %1501 = vrot.lane.b32.xlu0 %v1337, 16
  %v1502 = vpop.permute.xlu0 %1501
  %1503 = vrot.lane.b32.xlu0 %v1338, 16
  %v1504 = vpop.permute.xlu0 %1503
  %1505 = vrot.lane.b32.xlu0 %v1339, 16
  %v1506 = vpop.permute.xlu0 %1505
  %1507 = vrot.lane.b32.xlu0 %v1340, 16
  %v1508 = vpop.permute.xlu0 %1507
  %1509 = vrot.lane.b32.xlu0 %v1341, 16
  %v1510 = vpop.permute.xlu0 %1509
  %1511 = vrot.lane.b32.xlu0 %v1342, 16
  %v1512 = vpop.permute.xlu0 %1511
  %1513 = vrot.lane.b32.xlu0 %v1343, 16
  %v1514 = vpop.permute.xlu0 %1513
  %1515 = vrot.lane.b32.xlu0 %v1344, 16
  %v1516 = vpop.permute.xlu0 %1515
  %1517 = vrot.lane.b32.xlu0 %v1345, 16
  %v1518 = vpop.permute.xlu0 %1517
  %1519 = vrot.lane.b32.xlu0 %v1346, 16
  %v1520 = vpop.permute.xlu0 %1519
  %1521 = vrot.lane.b32.xlu0 %v1347, 16
  %v1522 = vpop.permute.xlu0 %1521
  %1523 = vrot.lane.b32.xlu0 %v1348, 16
  %v1524 = vpop.permute.xlu0 %1523
  %1525 = vrot.lane.b32.xlu0 %v1349, 16
  %v1526 = vpop.permute.xlu0 %1525
  %1527 = vrot.lane.b32.xlu0 %v1350, 16
  %v1528 = vpop.permute.xlu0 %1527
  %1529 = vrot.lane.b32.xlu0 %v1351, 16
  %v1530 = vpop.permute.xlu0 %1529
  %1531 = vrot.lane.b32.xlu0 %v1352, 16
  %v1532 = vpop.permute.xlu0 %1531
  %1533 = vrot.lane.b32.xlu0 %v1353, 16
  %v1534 = vpop.permute.xlu0 %1533
  %1535 = vrot.lane.b32.xlu0 %v1354, 16
  %v1536 = vpop.permute.xlu0 %1535
  %1537 = vrot.lane.b32.xlu0 %v1355, 16
  %v1538 = vpop.permute.xlu0 %1537
  %1539 = vrot.lane.b32.xlu0 %v1356, 16
  %v1540 = vpop.permute.xlu0 %1539
  %1541 = vrot.lane.b32.xlu0 %v1357, 16
  %v1542 = vpop.permute.xlu0 %1541
  %1543 = vrot.lane.b32.xlu0 %v1358, 16
  %v1544 = vpop.permute.xlu0 %1543
  %1545 = vrot.lane.b32.xlu0 %v1359, 16
  %v1546 = vpop.permute.xlu0 %1545
  %1547 = vrot.lane.b32.xlu0 %v1360, 16
  %v1548 = vpop.permute.xlu0 %1547
  %1549 = vrot.lane.b32.xlu0 %v1361, 16
  %v1550 = vpop.permute.xlu0 %1549
  %1551 = vrot.lane.b32.xlu0 %v1362, 16
  %v1552 = vpop.permute.xlu0 %1551
  %1553 = vrot.lane.b32.xlu0 %v1363, 16
  %v1554 = vpop.permute.xlu0 %1553
  %1555 = vrot.lane.b32.xlu0 %v1364, 16
  %v1556 = vpop.permute.xlu0 %1555
  %vm1621 = vcmask 162944
  %1622 = vst.msk [vmem:[#allocation2] sm:$0xff] %vm1621, %v1430
  %1623 = vst.msk [vmem:[#allocation2 + $0x8] sm:$0xff] %vm1621, %v1432
  %1624 = vst.msk [vmem:[#allocation2 + $0x10] sm:$0xff] %vm1621, %v1434
  %1625 = vst.msk [vmem:[#allocation2 + $0x18] sm:$0xff] %vm1621, %v1436
  %1626 = vst.msk [vmem:[#allocation2 + $0x20] sm:$0xff] %vm1621, %v1438
  %1627 = vst.msk [vmem:[#allocation2 + $0x28] sm:$0xff] %vm1621, %v1440
  %1628 = vst.msk [vmem:[#allocation2 + $0x30] sm:$0xff] %vm1621, %v1442
  %1629 = vst.msk [vmem:[#allocation2 + $0x38] sm:$0xff] %vm1621, %v1444
  %1630 = vst.msk [vmem:[#allocation2 + $0x40] sm:$0xff] %vm1621, %v1446
  %1631 = vst.msk [vmem:[#allocation2 + $0x48] sm:$0xff] %vm1621, %v1448
  %1632 = vst.msk [vmem:[#allocation2 + $0x50] sm:$0xff] %vm1621, %v1450
  %1633 = vst.msk [vmem:[#allocation2 + $0x58] sm:$0xff] %vm1621, %v1452
  %1634 = vst.msk [vmem:[#allocation2 + $0x60] sm:$0xff] %vm1621, %v1454
  %1635 = vst.msk [vmem:[#allocation2 + $0x68] sm:$0xff] %vm1621, %v1456
  %1636 = vst.msk [vmem:[#allocation2 + $0x70] sm:$0xff] %vm1621, %v1458
  %1637 = vst.msk [vmem:[#allocation2 + $0x78] sm:$0xff] %vm1621, %v1460
  %1638 = vst.msk [vmem:[#allocation2 + $0x80] sm:$0xff] %vm1621, %v1462
  %1639 = vst.msk [vmem:[#allocation2 + $0x88] sm:$0xff] %vm1621, %v1464
  %1640 = vst.msk [vmem:[#allocation2 + $0x90] sm:$0xff] %vm1621, %v1466
  %1641 = vst.msk [vmem:[#allocation2 + $0x98] sm:$0xff] %vm1621, %v1468
  %1642 = vst.msk [vmem:[#allocation2 + $0xa0] sm:$0xff] %vm1621, %v1470
  %1643 = vst.msk [vmem:[#allocation2 + $0xa8] sm:$0xff] %vm1621, %v1472
  %1644 = vst.msk [vmem:[#allocation2 + $0xb0] sm:$0xff] %vm1621, %v1474
  %1645 = vst.msk [vmem:[#allocation2 + $0xb8] sm:$0xff] %vm1621, %v1476
  %1646 = vst.msk [vmem:[#allocation2 + $0xc0] sm:$0xff] %vm1621, %v1478
  %1647 = vst.msk [vmem:[#allocation2 + $0xc8] sm:$0xff] %vm1621, %v1480
  %1648 = vst.msk [vmem:[#allocation2 + $0xd0] sm:$0xff] %vm1621, %v1482
  %1649 = vst.msk [vmem:[#allocation2 + $0xd8] sm:$0xff] %vm1621, %v1484
  %1650 = vst.msk [vmem:[#allocation2 + $0xe0] sm:$0xff] %vm1621, %v1486
  %1651 = vst.msk [vmem:[#allocation2 + $0xe8] sm:$0xff] %vm1621, %v1488
  %1652 = vst.msk [vmem:[#allocation2 + $0xf0] sm:$0xff] %vm1621, %v1490
  %1653 = vst.msk [vmem:[#allocation2 + $0xf8] sm:$0xff] %vm1621, %v1492
  %1654 = vst.msk [vmem:[#allocation2 + $0x100] sm:$0xff] %vm1621, %v1494
  %1655 = vst.msk [vmem:[#allocation2 + $0x108] sm:$0xff] %vm1621, %v1496
  %1656 = vst.msk [vmem:[#allocation2 + $0x110] sm:$0xff] %vm1621, %v1498
  %1657 = vst.msk [vmem:[#allocation2 + $0x118] sm:$0xff] %vm1621, %v1500
  %1658 = vst.msk [vmem:[#allocation2 + $0x120] sm:$0xff] %vm1621, %v1502
  %1659 = vst.msk [vmem:[#allocation2 + $0x128] sm:$0xff] %vm1621, %v1504
  %1660 = vst.msk [vmem:[#allocation2 + $0x130] sm:$0xff] %vm1621, %v1506
  %1661 = vst.msk [vmem:[#allocation2 + $0x138] sm:$0xff] %vm1621, %v1508
  %1662 = vst.msk [vmem:[#allocation2 + $0x140] sm:$0xff] %vm1621, %v1510
  %1663 = vst.msk [vmem:[#allocation2 + $0x148] sm:$0xff] %vm1621, %v1512
  %1664 = vst.msk [vmem:[#allocation2 + $0x150] sm:$0xff] %vm1621, %v1514
  %1665 = vst.msk [vmem:[#allocation2 + $0x158] sm:$0xff] %vm1621, %v1516
  %1666 = vst.msk [vmem:[#allocation2 + $0x160] sm:$0xff] %vm1621, %v1518
  %1667 = vst.msk [vmem:[#allocation2 + $0x168] sm:$0xff] %vm1621, %v1520
  %1668 = vst.msk [vmem:[#allocation2 + $0x170] sm:$0xff] %vm1621, %v1522
  %1669 = vst.msk [vmem:[#allocation2 + $0x178] sm:$0xff] %vm1621, %v1524
  %1670 = vst.msk [vmem:[#allocation2 + $0x180] sm:$0xff] %vm1621, %v1526
  %1671 = vst.msk [vmem:[#allocation2 + $0x188] sm:$0xff] %vm1621, %v1528
  %1672 = vst.msk [vmem:[#allocation2 + $0x190] sm:$0xff] %vm1621, %v1530
  %1673 = vst.msk [vmem:[#allocation2 + $0x198] sm:$0xff] %vm1621, %v1532
  %1674 = vst.msk [vmem:[#allocation2 + $0x1a0] sm:$0xff] %vm1621, %v1534
  %1675 = vst.msk [vmem:[#allocation2 + $0x1a8] sm:$0xff] %vm1621, %v1536
  %1676 = vst.msk [vmem:[#allocation2 + $0x1b0] sm:$0xff] %vm1621, %v1538
  %1677 = vst.msk [vmem:[#allocation2 + $0x1b8] sm:$0xff] %vm1621, %v1540
  %1678 = vst.msk [vmem:[#allocation2 + $0x1c0] sm:$0xff] %vm1621, %v1542
  %1679 = vst.msk [vmem:[#allocation2 + $0x1c8] sm:$0xff] %vm1621, %v1544
  %1680 = vst.msk [vmem:[#allocation2 + $0x1d0] sm:$0xff] %vm1621, %v1546
  %1681 = vst.msk [vmem:[#allocation2 + $0x1d8] sm:$0xff] %vm1621, %v1548
  %1682 = vst.msk [vmem:[#allocation2 + $0x1e0] sm:$0xff] %vm1621, %v1550
  %1683 = vst.msk [vmem:[#allocation2 + $0x1e8] sm:$0xff] %vm1621, %v1552
  %1684 = vst.msk [vmem:[#allocation2 + $0x1f0] sm:$0xff] %vm1621, %v1554
  %1685 = vst.msk [vmem:[#allocation2 + $0x1f8] sm:$0xff] %vm1621, %v1556
  %v1686 = vld [vmem:[%s915 + $0x2] sm:$0xff]
  %v1687 = vld [vmem:[%s915 + $0xa] sm:$0xff]
  %v1688 = vld [vmem:[%s915 + $0x1a] sm:$0xff]
  %v1689 = vld [vmem:[%s915 + $0x22] sm:$0xff]
  %v1690 = vld [vmem:[%s915 + $0x32] sm:$0xff]
  %v1691 = vld [vmem:[%s915 + $0x3a] sm:$0xff]
  %v1692 = vld [vmem:[%s915 + $0x4a] sm:$0xff]
  %v1693 = vld [vmem:[%s915 + $0x52] sm:$0xff]
  %v1694 = vld [vmem:[%s915 + $0x62] sm:$0xff]
  %v1695 = vld [vmem:[%s915 + $0x6a] sm:$0xff]
  %v1696 = vld [vmem:[%s915 + $0x7a] sm:$0xff]
  %v1697 = vld [vmem:[%s915 + $0x82] sm:$0xff]
  %v1698 = vld [vmem:[%s915 + $0x92] sm:$0xff]
  %v1699 = vld [vmem:[%s915 + $0x9a] sm:$0xff]
  %v1700 = vld [vmem:[%s915 + $0xaa] sm:$0xff]
  %v1701 = vld [vmem:[%s915 + $0xb2] sm:$0xff]
  %v1702 = vld [vmem:[%s915 + $0xc2] sm:$0xff]
  %v1703 = vld [vmem:[%s915 + $0xca] sm:$0xff]
  %v1704 = vld [vmem:[%s915 + $0xda] sm:$0xff]
  %v1705 = vld [vmem:[%s915 + $0xe2] sm:$0xff]
  %v1706 = vld [vmem:[%s915 + $0xf2] sm:$0xff]
  %v1707 = vld [vmem:[%s915 + $0xfa] sm:$0xff]
  %v1708 = vld [vmem:[%s915 + $0x10a] sm:$0xff]
  %v1709 = vld [vmem:[%s915 + $0x112] sm:$0xff]
  %v1710 = vld [vmem:[%s915 + $0x122] sm:$0xff]
  %v1711 = vld [vmem:[%s915 + $0x12a] sm:$0xff]
  %v1712 = vld [vmem:[%s915 + $0x13a] sm:$0xff]
  %v1713 = vld [vmem:[%s915 + $0x142] sm:$0xff]
  %v1714 = vld [vmem:[%s915 + $0x152] sm:$0xff]
  %v1715 = vld [vmem:[%s915 + $0x15a] sm:$0xff]
  %v1716 = vld [vmem:[%s915 + $0x16a] sm:$0xff]
  %v1717 = vld [vmem:[%s915 + $0x172] sm:$0xff]
  %v1718 = vld [vmem:[%s915 + $0x1b2] sm:$0xff]
  %v1719 = vld [vmem:[%s915 + $0x1ba] sm:$0xff]
  %v1720 = vld [vmem:[%s915 + $0x1ca] sm:$0xff]
  %v1721 = vld [vmem:[%s915 + $0x1d2] sm:$0xff]
  %v1722 = vld [vmem:[%s915 + $0x1e2] sm:$0xff]
  %v1723 = vld [vmem:[%s915 + $0x1ea] sm:$0xff]
  %v1724 = vld [vmem:[%s915 + $0x1fa] sm:$0xff]
  %v1725 = vld [vmem:[%s915 + $0x202] sm:$0xff]
  %v1726 = vld [vmem:[%s915 + $0x212] sm:$0xff]
  %v1727 = vld [vmem:[%s915 + $0x21a] sm:$0xff]
  %v1728 = vld [vmem:[%s915 + $0x22a] sm:$0xff]
  %v1729 = vld [vmem:[%s915 + $0x232] sm:$0xff]
  %v1730 = vld [vmem:[%s915 + $0x242] sm:$0xff]
  %v1731 = vld [vmem:[%s915 + $0x24a] sm:$0xff]
  %v1732 = vld [vmem:[%s915 + $0x25a] sm:$0xff]
  %v1733 = vld [vmem:[%s915 + $0x262] sm:$0xff]
  %v1734 = vld [vmem:[%s915 + $0x272] sm:$0xff]
  %v1735 = vld [vmem:[%s915 + $0x27a] sm:$0xff]
  %v1736 = vld [vmem:[%s915 + $0x28a] sm:$0xff]
  %v1737 = vld [vmem:[%s915 + $0x292] sm:$0xff]
  %v1738 = vld [vmem:[%s915 + $0x2a2] sm:$0xff]
  %v1739 = vld [vmem:[%s915 + $0x2aa] sm:$0xff]
  %v1740 = vld [vmem:[%s915 + $0x2ba] sm:$0xff]
  %v1741 = vld [vmem:[%s915 + $0x2c2] sm:$0xff]
  %v1742 = vld [vmem:[%s915 + $0x2d2] sm:$0xff]
  %v1743 = vld [vmem:[%s915 + $0x2da] sm:$0xff]
  %v1744 = vld [vmem:[%s915 + $0x2ea] sm:$0xff]
  %v1745 = vld [vmem:[%s915 + $0x2f2] sm:$0xff]
  %v1746 = vld [vmem:[%s915 + $0x302] sm:$0xff]
  %v1747 = vld [vmem:[%s915 + $0x30a] sm:$0xff]
  %v1748 = vld [vmem:[%s915 + $0x31a] sm:$0xff]
  %v1749 = vld [vmem:[%s915 + $0x322] sm:$0xff]
  %1814 = vrot.lane.b32.xlu0 %v1686, 20
  %v1815 = vpop.permute.xlu0 %1814
  %1816 = vrot.lane.b32.xlu0 %v1687, 20
  %v1817 = vpop.permute.xlu0 %1816
  %1818 = vrot.lane.b32.xlu0 %v1688, 20
  %v1819 = vpop.permute.xlu0 %1818
  %1820 = vrot.lane.b32.xlu0 %v1689, 20
  %v1821 = vpop.permute.xlu0 %1820
  %1822 = vrot.lane.b32.xlu0 %v1690, 20
  %v1823 = vpop.permute.xlu0 %1822
  %1824 = vrot.lane.b32.xlu0 %v1691, 20
  %v1825 = vpop.permute.xlu0 %1824
  %1826 = vrot.lane.b32.xlu0 %v1692, 20
  %v1827 = vpop.permute.xlu0 %1826
  %1828 = vrot.lane.b32.xlu0 %v1693, 20
  %v1829 = vpop.permute.xlu0 %1828
  %1830 = vrot.lane.b32.xlu0 %v1694, 20
  %v1831 = vpop.permute.xlu0 %1830
  %1832 = vrot.lane.b32.xlu0 %v1695, 20
  %v1833 = vpop.permute.xlu0 %1832
  %1834 = vrot.lane.b32.xlu0 %v1696, 20
  %v1835 = vpop.permute.xlu0 %1834
  %1836 = vrot.lane.b32.xlu0 %v1697, 20
  %v1837 = vpop.permute.xlu0 %1836
  %1838 = vrot.lane.b32.xlu0 %v1698, 20
  %v1839 = vpop.permute.xlu0 %1838
  %1840 = vrot.lane.b32.xlu0 %v1699, 20
  %v1841 = vpop.permute.xlu0 %1840
  %1842 = vrot.lane.b32.xlu0 %v1700, 20
  %v1843 = vpop.permute.xlu0 %1842
  %1844 = vrot.lane.b32.xlu0 %v1701, 20
  %v1845 = vpop.permute.xlu0 %1844
  %1846 = vrot.lane.b32.xlu0 %v1702, 20
  %v1847 = vpop.permute.xlu0 %1846
  %1848 = vrot.lane.b32.xlu0 %v1703, 20
  %v1849 = vpop.permute.xlu0 %1848
  %1850 = vrot.lane.b32.xlu0 %v1704, 20
  %v1851 = vpop.permute.xlu0 %1850
  %1852 = vrot.lane.b32.xlu0 %v1705, 20
  %v1853 = vpop.permute.xlu0 %1852
  %1854 = vrot.lane.b32.xlu0 %v1706, 20
  %v1855 = vpop.permute.xlu0 %1854
  %1856 = vrot.lane.b32.xlu0 %v1707, 20
  %v1857 = vpop.permute.xlu0 %1856
  %1858 = vrot.lane.b32.xlu0 %v1708, 20
  %v1859 = vpop.permute.xlu0 %1858
  %1860 = vrot.lane.b32.xlu0 %v1709, 20
  %v1861 = vpop.permute.xlu0 %1860
  %1862 = vrot.lane.b32.xlu0 %v1710, 20
  %v1863 = vpop.permute.xlu0 %1862
  %1864 = vrot.lane.b32.xlu0 %v1711, 20
  %v1865 = vpop.permute.xlu0 %1864
  %1866 = vrot.lane.b32.xlu0 %v1712, 20
  %v1867 = vpop.permute.xlu0 %1866
  %1868 = vrot.lane.b32.xlu0 %v1713, 20
  %v1869 = vpop.permute.xlu0 %1868
  %1870 = vrot.lane.b32.xlu0 %v1714, 20
  %v1871 = vpop.permute.xlu0 %1870
  %1872 = vrot.lane.b32.xlu0 %v1715, 20
  %v1873 = vpop.permute.xlu0 %1872
  %1874 = vrot.lane.b32.xlu0 %v1716, 20
  %v1875 = vpop.permute.xlu0 %1874
  %1876 = vrot.lane.b32.xlu0 %v1717, 20
  %v1877 = vpop.permute.xlu0 %1876
  %1878 = vrot.lane.b32.xlu0 %v1718, 20
  %v1879 = vpop.permute.xlu0 %1878
  %1880 = vrot.lane.b32.xlu0 %v1719, 20
  %v1881 = vpop.permute.xlu0 %1880
  %1882 = vrot.lane.b32.xlu0 %v1720, 20
  %v1883 = vpop.permute.xlu0 %1882
  %1884 = vrot.lane.b32.xlu0 %v1721, 20
  %v1885 = vpop.permute.xlu0 %1884
  %1886 = vrot.lane.b32.xlu0 %v1722, 20
  %v1887 = vpop.permute.xlu0 %1886
  %1888 = vrot.lane.b32.xlu0 %v1723, 20
  %v1889 = vpop.permute.xlu0 %1888
  %1890 = vrot.lane.b32.xlu0 %v1724, 20
  %v1891 = vpop.permute.xlu0 %1890
  %1892 = vrot.lane.b32.xlu0 %v1725, 20
  %v1893 = vpop.permute.xlu0 %1892
  %1894 = vrot.lane.b32.xlu0 %v1726, 20
  %v1895 = vpop.permute.xlu0 %1894
  %1896 = vrot.lane.b32.xlu0 %v1727, 20
  %v1897 = vpop.permute.xlu0 %1896
  %1898 = vrot.lane.b32.xlu0 %v1728, 20
  %v1899 = vpop.permute.xlu0 %1898
  %1900 = vrot.lane.b32.xlu0 %v1729, 20
  %v1901 = vpop.permute.xlu0 %1900
  %1902 = vrot.lane.b32.xlu0 %v1730, 20
  %v1903 = vpop.permute.xlu0 %1902
  %1904 = vrot.lane.b32.xlu0 %v1731, 20
  %v1905 = vpop.permute.xlu0 %1904
  %1906 = vrot.lane.b32.xlu0 %v1732, 20
  %v1907 = vpop.permute.xlu0 %1906
  %1908 = vrot.lane.b32.xlu0 %v1733, 20
  %v1909 = vpop.permute.xlu0 %1908
  %1910 = vrot.lane.b32.xlu0 %v1734, 20
  %v1911 = vpop.permute.xlu0 %1910
  %1912 = vrot.lane.b32.xlu0 %v1735, 20
  %v1913 = vpop.permute.xlu0 %1912
  %1914 = vrot.lane.b32.xlu0 %v1736, 20
  %v1915 = vpop.permute.xlu0 %1914
  %1916 = vrot.lane.b32.xlu0 %v1737, 20
  %v1917 = vpop.permute.xlu0 %1916
  %1918 = vrot.lane.b32.xlu0 %v1738, 20
  %v1919 = vpop.permute.xlu0 %1918
  %1920 = vrot.lane.b32.xlu0 %v1739, 20
  %v1921 = vpop.permute.xlu0 %1920
  %1922 = vrot.lane.b32.xlu0 %v1740, 20
  %v1923 = vpop.permute.xlu0 %1922
  %1924 = vrot.lane.b32.xlu0 %v1741, 20
  %v1925 = vpop.permute.xlu0 %1924
  %1926 = vrot.lane.b32.xlu0 %v1742, 20
  %v1927 = vpop.permute.xlu0 %1926
  %1928 = vrot.lane.b32.xlu0 %v1743, 20
  %v1929 = vpop.permute.xlu0 %1928
  %1930 = vrot.lane.b32.xlu0 %v1744, 20
  %v1931 = vpop.permute.xlu0 %1930
  %1932 = vrot.lane.b32.xlu0 %v1745, 20
  %v1933 = vpop.permute.xlu0 %1932
  %1934 = vrot.lane.b32.xlu0 %v1746, 20
  %v1935 = vpop.permute.xlu0 %1934
  %1936 = vrot.lane.b32.xlu0 %v1747, 20
  %v1937 = vpop.permute.xlu0 %1936
  %1938 = vrot.lane.b32.xlu0 %v1748, 20
  %v1939 = vpop.permute.xlu0 %1938
  %1940 = vrot.lane.b32.xlu0 %v1749, 20
  %v1941 = vpop.permute.xlu0 %1940
  %vm2006 = vcmask 195744
  %2007 = vst.msk [vmem:[#allocation2] sm:$0xff] %vm2006, %v1815
  %2008 = vst.msk [vmem:[#allocation2 + $0x8] sm:$0xff] %vm2006, %v1817
  %2009 = vst.msk [vmem:[#allocation2 + $0x10] sm:$0xff] %vm2006, %v1819
  %2010 = vst.msk [vmem:[#allocation2 + $0x18] sm:$0xff] %vm2006, %v1821
  %2011 = vst.msk [vmem:[#allocation2 + $0x20] sm:$0xff] %vm2006, %v1823
  %2012 = vst.msk [vmem:[#allocation2 + $0x28] sm:$0xff] %vm2006, %v1825
  %2013 = vst.msk [vmem:[#allocation2 + $0x30] sm:$0xff] %vm2006, %v1827
  %2014 = vst.msk [vmem:[#allocation2 + $0x38] sm:$0xff] %vm2006, %v1829
  %2015 = vst.msk [vmem:[#allocation2 + $0x40] sm:$0xff] %vm2006, %v1831
  %2016 = vst.msk [vmem:[#allocation2 + $0x48] sm:$0xff] %vm2006, %v1833
  %2017 = vst.msk [vmem:[#allocation2 + $0x50] sm:$0xff] %vm2006, %v1835
  %2018 = vst.msk [vmem:[#allocation2 + $0x58] sm:$0xff] %vm2006, %v1837
  %2019 = vst.msk [vmem:[#allocation2 + $0x60] sm:$0xff] %vm2006, %v1839
  %2020 = vst.msk [vmem:[#allocation2 + $0x68] sm:$0xff] %vm2006, %v1841
  %2021 = vst.msk [vmem:[#allocation2 + $0x70] sm:$0xff] %vm2006, %v1843
  %2022 = vst.msk [vmem:[#allocation2 + $0x78] sm:$0xff] %vm2006, %v1845
  %2023 = vst.msk [vmem:[#allocation2 + $0x80] sm:$0xff] %vm2006, %v1847
  %2024 = vst.msk [vmem:[#allocation2 + $0x88] sm:$0xff] %vm2006, %v1849
  %2025 = vst.msk [vmem:[#allocation2 + $0x90] sm:$0xff] %vm2006, %v1851
  %2026 = vst.msk [vmem:[#allocation2 + $0x98] sm:$0xff] %vm2006, %v1853
  %2027 = vst.msk [vmem:[#allocation2 + $0xa0] sm:$0xff] %vm2006, %v1855
  %2028 = vst.msk [vmem:[#allocation2 + $0xa8] sm:$0xff] %vm2006, %v1857
  %2029 = vst.msk [vmem:[#allocation2 + $0xb0] sm:$0xff] %vm2006, %v1859
  %2030 = vst.msk [vmem:[#allocation2 + $0xb8] sm:$0xff] %vm2006, %v1861
  %2031 = vst.msk [vmem:[#allocation2 + $0xc0] sm:$0xff] %vm2006, %v1863
  %2032 = vst.msk [vmem:[#allocation2 + $0xc8] sm:$0xff] %vm2006, %v1865
  %2033 = vst.msk [vmem:[#allocation2 + $0xd0] sm:$0xff] %vm2006, %v1867
  %2034 = vst.msk [vmem:[#allocation2 + $0xd8] sm:$0xff] %vm2006, %v1869
  %2035 = vst.msk [vmem:[#allocation2 + $0xe0] sm:$0xff] %vm2006, %v1871
  %2036 = vst.msk [vmem:[#allocation2 + $0xe8] sm:$0xff] %vm2006, %v1873
  %2037 = vst.msk [vmem:[#allocation2 + $0xf0] sm:$0xff] %vm2006, %v1875
  %2038 = vst.msk [vmem:[#allocation2 + $0xf8] sm:$0xff] %vm2006, %v1877
  %2039 = vst.msk [vmem:[#allocation2 + $0x100] sm:$0xff] %vm2006, %v1879
  %2040 = vst.msk [vmem:[#allocation2 + $0x108] sm:$0xff] %vm2006, %v1881
  %2041 = vst.msk [vmem:[#allocation2 + $0x110] sm:$0xff] %vm2006, %v1883
  %2042 = vst.msk [vmem:[#allocation2 + $0x118] sm:$0xff] %vm2006, %v1885
  %2043 = vst.msk [vmem:[#allocation2 + $0x120] sm:$0xff] %vm2006, %v1887
  %2044 = vst.msk [vmem:[#allocation2 + $0x128] sm:$0xff] %vm2006, %v1889
  %2045 = vst.msk [vmem:[#allocation2 + $0x130] sm:$0xff] %vm2006, %v1891
  %2046 = vst.msk [vmem:[#allocation2 + $0x138] sm:$0xff] %vm2006, %v1893
  %2047 = vst.msk [vmem:[#allocation2 + $0x140] sm:$0xff] %vm2006, %v1895
  %2048 = vst.msk [vmem:[#allocation2 + $0x148] sm:$0xff] %vm2006, %v1897
  %2049 = vst.msk [vmem:[#allocation2 + $0x150] sm:$0xff] %vm2006, %v1899
  %2050 = vst.msk [vmem:[#allocation2 + $0x158] sm:$0xff] %vm2006, %v1901
  %2051 = vst.msk [vmem:[#allocation2 + $0x160] sm:$0xff] %vm2006, %v1903
  %2052 = vst.msk [vmem:[#allocation2 + $0x168] sm:$0xff] %vm2006, %v1905
  %2053 = vst.msk [vmem:[#allocation2 + $0x170] sm:$0xff] %vm2006, %v1907
  %2054 = vst.msk [vmem:[#allocation2 + $0x178] sm:$0xff] %vm2006, %v1909
  %2055 = vst.msk [vmem:[#allocation2 + $0x180] sm:$0xff] %vm2006, %v1911
  %2056 = vst.msk [vmem:[#allocation2 + $0x188] sm:$0xff] %vm2006, %v1913
  %2057 = vst.msk [vmem:[#allocation2 + $0x190] sm:$0xff] %vm2006, %v1915
  %2058 = vst.msk [vmem:[#allocation2 + $0x198] sm:$0xff] %vm2006, %v1917
  %2059 = vst.msk [vmem:[#allocation2 + $0x1a0] sm:$0xff] %vm2006, %v1919
  %2060 = vst.msk [vmem:[#allocation2 + $0x1a8] sm:$0xff] %vm2006, %v1921
  %2061 = vst.msk [vmem:[#allocation2 + $0x1b0] sm:$0xff] %vm2006, %v1923
  %2062 = vst.msk [vmem:[#allocation2 + $0x1b8] sm:$0xff] %vm2006, %v1925
  %2063 = vst.msk [vmem:[#allocation2 + $0x1c0] sm:$0xff] %vm2006, %v1927
  %2064 = vst.msk [vmem:[#allocation2 + $0x1c8] sm:$0xff] %vm2006, %v1929
  %2065 = vst.msk [vmem:[#allocation2 + $0x1d0] sm:$0xff] %vm2006, %v1931
  %2066 = vst.msk [vmem:[#allocation2 + $0x1d8] sm:$0xff] %vm2006, %v1933
  %2067 = vst.msk [vmem:[#allocation2 + $0x1e0] sm:$0xff] %vm2006, %v1935
  %2068 = vst.msk [vmem:[#allocation2 + $0x1e8] sm:$0xff] %vm2006, %v1937
  %2069 = vst.msk [vmem:[#allocation2 + $0x1f0] sm:$0xff] %vm2006, %v1939
  %2070 = vst.msk [vmem:[#allocation2 + $0x1f8] sm:$0xff] %vm2006, %v1941
  %s2071 = scalar_lea.vmem %s0, 48
  %v2072 = vld [vmem:[%s2071] sm:$0xff]
  %v2073 = vld [vmem:[%s2071 + $0x8] sm:$0xff]
  %v2074 = vld [vmem:[%s2071 + $0x18] sm:$0xff]
  %v2075 = vld [vmem:[%s2071 + $0x20] sm:$0xff]
  %v2076 = vld [vmem:[%s2071 + $0x30] sm:$0xff]
  %v2077 = vld [vmem:[%s2071 + $0x38] sm:$0xff]
  %v2078 = vld [vmem:[%s2071 + $0x48] sm:$0xff]
  %v2079 = vld [vmem:[%s2071 + $0x50] sm:$0xff]
  %v2080 = vld [vmem:[%s2071 + $0x60] sm:$0xff]
  %v2081 = vld [vmem:[%s2071 + $0x68] sm:$0xff]
  %v2082 = vld [vmem:[%s2071 + $0x78] sm:$0xff]
  %v2083 = vld [vmem:[%s2071 + $0x80] sm:$0xff]
  %v2084 = vld [vmem:[%s2071 + $0x90] sm:$0xff]
  %v2085 = vld [vmem:[%s2071 + $0x98] sm:$0xff]
  %v2086 = vld [vmem:[%s2071 + $0xa8] sm:$0xff]
  %v2087 = vld [vmem:[%s2071 + $0xb0] sm:$0xff]
  %v2088 = vld [vmem:[%s2071 + $0xc0] sm:$0xff]
  %v2089 = vld [vmem:[%s2071 + $0xc8] sm:$0xff]
  %v2090 = vld [vmem:[%s2071 + $0xd8] sm:$0xff]
  %v2091 = vld [vmem:[%s2071 + $0xe0] sm:$0xff]
  %v2092 = vld [vmem:[%s2071 + $0xf0] sm:$0xff]
  %v2093 = vld [vmem:[%s2071 + $0xf8] sm:$0xff]
  %v2094 = vld [vmem:[%s2071 + $0x108] sm:$0xff]
  %v2095 = vld [vmem:[%s2071 + $0x110] sm:$0xff]
  %v2096 = vld [vmem:[%s2071 + $0x120] sm:$0xff]
  %v2097 = vld [vmem:[%s2071 + $0x128] sm:$0xff]
  %v2098 = vld [vmem:[%s2071 + $0x138] sm:$0xff]
  %v2099 = vld [vmem:[%s2071 + $0x140] sm:$0xff]
  %v2100 = vld [vmem:[%s2071 + $0x150] sm:$0xff]
  %v2101 = vld [vmem:[%s2071 + $0x158] sm:$0xff]
  %v2102 = vld [vmem:[%s2071 + $0x168] sm:$0xff]
  %v2103 = vld [vmem:[%s2071 + $0x170] sm:$0xff]
  %v2104 = vld [vmem:[%s2071 + $0x1b0] sm:$0xff]
  %v2105 = vld [vmem:[%s2071 + $0x1b8] sm:$0xff]
  %v2106 = vld [vmem:[%s2071 + $0x1c8] sm:$0xff]
  %v2107 = vld [vmem:[%s2071 + $0x1d0] sm:$0xff]
  %v2108 = vld [vmem:[%s2071 + $0x1e0] sm:$0xff]
  %v2109 = vld [vmem:[%s2071 + $0x1e8] sm:$0xff]
  %v2110 = vld [vmem:[%s2071 + $0x1f8] sm:$0xff]
  %v2111 = vld [vmem:[%s2071 + $0x200] sm:$0xff]
  %v2112 = vld [vmem:[%s2071 + $0x210] sm:$0xff]
  %v2113 = vld [vmem:[%s2071 + $0x218] sm:$0xff]
  %v2114 = vld [vmem:[%s2071 + $0x228] sm:$0xff]
  %v2115 = vld [vmem:[%s2071 + $0x230] sm:$0xff]
  %v2116 = vld [vmem:[%s2071 + $0x240] sm:$0xff]
  %v2117 = vld [vmem:[%s2071 + $0x248] sm:$0xff]
  %v2118 = vld [vmem:[%s2071 + $0x258] sm:$0xff]
  %v2119 = vld [vmem:[%s2071 + $0x260] sm:$0xff]
  %v2120 = vld [vmem:[%s2071 + $0x270] sm:$0xff]
  %v2121 = vld [vmem:[%s2071 + $0x278] sm:$0xff]
  %v2122 = vld [vmem:[%s2071 + $0x288] sm:$0xff]
  %v2123 = vld [vmem:[%s2071 + $0x290] sm:$0xff]
  %v2124 = vld [vmem:[%s2071 + $0x2a0] sm:$0xff]
  %v2125 = vld [vmem:[%s2071 + $0x2a8] sm:$0xff]
  %v2126 = vld [vmem:[%s2071 + $0x2b8] sm:$0xff]
  %v2127 = vld [vmem:[%s2071 + $0x2c0] sm:$0xff]
  %v2128 = vld [vmem:[%s2071 + $0x2d0] sm:$0xff]
  %v2129 = vld [vmem:[%s2071 + $0x2d8] sm:$0xff]
  %v2130 = vld [vmem:[%s2071 + $0x2e8] sm:$0xff]
  %v2131 = vld [vmem:[%s2071 + $0x2f0] sm:$0xff]
  %v2132 = vld [vmem:[%s2071 + $0x300] sm:$0xff]
  %v2133 = vld [vmem:[%s2071 + $0x308] sm:$0xff]
  %v2134 = vld [vmem:[%s2071 + $0x318] sm:$0xff]
  %v2135 = vld [vmem:[%s2071 + $0x320] sm:$0xff]
  %2200 = vrot.lane.b32.xlu0 %v2072, 24
  %v2201 = vpop.permute.xlu0 %2200
  %2202 = vrot.lane.b32.xlu0 %v2073, 24
  %v2203 = vpop.permute.xlu0 %2202
  %2204 = vrot.lane.b32.xlu0 %v2074, 24
  %v2205 = vpop.permute.xlu0 %2204
  %2206 = vrot.lane.b32.xlu0 %v2075, 24
  %v2207 = vpop.permute.xlu0 %2206
  %2208 = vrot.lane.b32.xlu0 %v2076, 24
  %v2209 = vpop.permute.xlu0 %2208
  %2210 = vrot.lane.b32.xlu0 %v2077, 24
  %v2211 = vpop.permute.xlu0 %2210
  %2212 = vrot.lane.b32.xlu0 %v2078, 24
  %v2213 = vpop.permute.xlu0 %2212
  %2214 = vrot.lane.b32.xlu0 %v2079, 24
  %v2215 = vpop.permute.xlu0 %2214
  %2216 = vrot.lane.b32.xlu0 %v2080, 24
  %v2217 = vpop.permute.xlu0 %2216
  %2218 = vrot.lane.b32.xlu0 %v2081, 24
  %v2219 = vpop.permute.xlu0 %2218
  %2220 = vrot.lane.b32.xlu0 %v2082, 24
  %v2221 = vpop.permute.xlu0 %2220
  %2222 = vrot.lane.b32.xlu0 %v2083, 24
  %v2223 = vpop.permute.xlu0 %2222
  %2224 = vrot.lane.b32.xlu0 %v2084, 24
  %v2225 = vpop.permute.xlu0 %2224
  %2226 = vrot.lane.b32.xlu0 %v2085, 24
  %v2227 = vpop.permute.xlu0 %2226
  %2228 = vrot.lane.b32.xlu0 %v2086, 24
  %v2229 = vpop.permute.xlu0 %2228
  %2230 = vrot.lane.b32.xlu0 %v2087, 24
  %v2231 = vpop.permute.xlu0 %2230
  %2232 = vrot.lane.b32.xlu0 %v2088, 24
  %v2233 = vpop.permute.xlu0 %2232
  %2234 = vrot.lane.b32.xlu0 %v2089, 24
  %v2235 = vpop.permute.xlu0 %2234
  %2236 = vrot.lane.b32.xlu0 %v2090, 24
  %v2237 = vpop.permute.xlu0 %2236
  %2238 = vrot.lane.b32.xlu0 %v2091, 24
  %v2239 = vpop.permute.xlu0 %2238
  %2240 = vrot.lane.b32.xlu0 %v2092, 24
  %v2241 = vpop.permute.xlu0 %2240
  %2242 = vrot.lane.b32.xlu0 %v2093, 24
  %v2243 = vpop.permute.xlu0 %2242
  %2244 = vrot.lane.b32.xlu0 %v2094, 24
  %v2245 = vpop.permute.xlu0 %2244
  %2246 = vrot.lane.b32.xlu0 %v2095, 24
  %v2247 = vpop.permute.xlu0 %2246
  %2248 = vrot.lane.b32.xlu0 %v2096, 24
  %v2249 = vpop.permute.xlu0 %2248
  %2250 = vrot.lane.b32.xlu0 %v2097, 24
  %v2251 = vpop.permute.xlu0 %2250
  %2252 = vrot.lane.b32.xlu0 %v2098, 24
  %v2253 = vpop.permute.xlu0 %2252
  %2254 = vrot.lane.b32.xlu0 %v2099, 24
  %v2255 = vpop.permute.xlu0 %2254
  %2256 = vrot.lane.b32.xlu0 %v2100, 24
  %v2257 = vpop.permute.xlu0 %2256
  %2258 = vrot.lane.b32.xlu0 %v2101, 24
  %v2259 = vpop.permute.xlu0 %2258
  %2260 = vrot.lane.b32.xlu0 %v2102, 24
  %v2261 = vpop.permute.xlu0 %2260
  %2262 = vrot.lane.b32.xlu0 %v2103, 24
  %v2263 = vpop.permute.xlu0 %2262
  %2264 = vrot.lane.b32.xlu0 %v2104, 24
  %v2265 = vpop.permute.xlu0 %2264
  %2266 = vrot.lane.b32.xlu0 %v2105, 24
  %v2267 = vpop.permute.xlu0 %2266
  %2268 = vrot.lane.b32.xlu0 %v2106, 24
  %v2269 = vpop.permute.xlu0 %2268
  %2270 = vrot.lane.b32.xlu0 %v2107, 24
  %v2271 = vpop.permute.xlu0 %2270
  %2272 = vrot.lane.b32.xlu0 %v2108, 24
  %v2273 = vpop.permute.xlu0 %2272
  %2274 = vrot.lane.b32.xlu0 %v2109, 24
  %v2275 = vpop.permute.xlu0 %2274
  %2276 = vrot.lane.b32.xlu0 %v2110, 24
  %v2277 = vpop.permute.xlu0 %2276
  %2278 = vrot.lane.b32.xlu0 %v2111, 24
  %v2279 = vpop.permute.xlu0 %2278
  %2280 = vrot.lane.b32.xlu0 %v2112, 24
  %v2281 = vpop.permute.xlu0 %2280
  %2282 = vrot.lane.b32.xlu0 %v2113, 24
  %v2283 = vpop.permute.xlu0 %2282
  %2284 = vrot.lane.b32.xlu0 %v2114, 24
  %v2285 = vpop.permute.xlu0 %2284
  %2286 = vrot.lane.b32.xlu0 %v2115, 24
  %v2287 = vpop.permute.xlu0 %2286
  %2288 = vrot.lane.b32.xlu0 %v2116, 24
  %v2289 = vpop.permute.xlu0 %2288
  %2290 = vrot.lane.b32.xlu0 %v2117, 24
  %v2291 = vpop.permute.xlu0 %2290
  %2292 = vrot.lane.b32.xlu0 %v2118, 24
  %v2293 = vpop.permute.xlu0 %2292
  %2294 = vrot.lane.b32.xlu0 %v2119, 24
  %v2295 = vpop.permute.xlu0 %2294
  %2296 = vrot.lane.b32.xlu0 %v2120, 24
  %v2297 = vpop.permute.xlu0 %2296
  %2298 = vrot.lane.b32.xlu0 %v2121, 24
  %v2299 = vpop.permute.xlu0 %2298
  %2300 = vrot.lane.b32.xlu0 %v2122, 24
  %v2301 = vpop.permute.xlu0 %2300
  %2302 = vrot.lane.b32.xlu0 %v2123, 24
  %v2303 = vpop.permute.xlu0 %2302
  %2304 = vrot.lane.b32.xlu0 %v2124, 24
  %v2305 = vpop.permute.xlu0 %2304
  %2306 = vrot.lane.b32.xlu0 %v2125, 24
  %v2307 = vpop.permute.xlu0 %2306
  %2308 = vrot.lane.b32.xlu0 %v2126, 24
  %v2309 = vpop.permute.xlu0 %2308
  %2310 = vrot.lane.b32.xlu0 %v2127, 24
  %v2311 = vpop.permute.xlu0 %2310
  %2312 = vrot.lane.b32.xlu0 %v2128, 24
  %v2313 = vpop.permute.xlu0 %2312
  %2314 = vrot.lane.b32.xlu0 %v2129, 24
  %v2315 = vpop.permute.xlu0 %2314
  %2316 = vrot.lane.b32.xlu0 %v2130, 24
  %v2317 = vpop.permute.xlu0 %2316
  %2318 = vrot.lane.b32.xlu0 %v2131, 24
  %v2319 = vpop.permute.xlu0 %2318
  %2320 = vrot.lane.b32.xlu0 %v2132, 24
  %v2321 = vpop.permute.xlu0 %2320
  %2322 = vrot.lane.b32.xlu0 %v2133, 24
  %v2323 = vpop.permute.xlu0 %2322
  %2324 = vrot.lane.b32.xlu0 %v2134, 24
  %v2325 = vpop.permute.xlu0 %2324
  %2326 = vrot.lane.b32.xlu0 %v2135, 24
  %v2327 = vpop.permute.xlu0 %2326
  %vm2392 = vcmask 228544
  %2393 = vst.msk [vmem:[#allocation2] sm:$0xff] %vm2392, %v2201
  %2394 = vst.msk [vmem:[#allocation2 + $0x8] sm:$0xff] %vm2392, %v2203
  %2395 = vst.msk [vmem:[#allocation2 + $0x10] sm:$0xff] %vm2392, %v2205
  %2396 = vst.msk [vmem:[#allocation2 + $0x18] sm:$0xff] %vm2392, %v2207
  %2397 = vst.msk [vmem:[#allocation2 + $0x20] sm:$0xff] %vm2392, %v2209
  %2398 = vst.msk [vmem:[#allocation2 + $0x28] sm:$0xff] %vm2392, %v2211
  %2399 = vst.msk [vmem:[#allocation2 + $0x30] sm:$0xff] %vm2392, %v2213
  %2400 = vst.msk [vmem:[#allocation2 + $0x38] sm:$0xff] %vm2392, %v2215
  %2401 = vst.msk [vmem:[#allocation2 + $0x40] sm:$0xff] %vm2392, %v2217
  %2402 = vst.msk [vmem:[#allocation2 + $0x48] sm:$0xff] %vm2392, %v2219
  %2403 = vst.msk [vmem:[#allocation2 + $0x50] sm:$0xff] %vm2392, %v2221
  %2404 = vst.msk [vmem:[#allocation2 + $0x58] sm:$0xff] %vm2392, %v2223
  %2405 = vst.msk [vmem:[#allocation2 + $0x60] sm:$0xff] %vm2392, %v2225
  %2406 = vst.msk [vmem:[#allocation2 + $0x68] sm:$0xff] %vm2392, %v2227
  %2407 = vst.msk [vmem:[#allocation2 + $0x70] sm:$0xff] %vm2392, %v2229
  %2408 = vst.msk [vmem:[#allocation2 + $0x78] sm:$0xff] %vm2392, %v2231
  %2409 = vst.msk [vmem:[#allocation2 + $0x80] sm:$0xff] %vm2392, %v2233
  %2410 = vst.msk [vmem:[#allocation2 + $0x88] sm:$0xff] %vm2392, %v2235
  %2411 = vst.msk [vmem:[#allocation2 + $0x90] sm:$0xff] %vm2392, %v2237
  %2412 = vst.msk [vmem:[#allocation2 + $0x98] sm:$0xff] %vm2392, %v2239
  %2413 = vst.msk [vmem:[#allocation2 + $0xa0] sm:$0xff] %vm2392, %v2241
  %2414 = vst.msk [vmem:[#allocation2 + $0xa8] sm:$0xff] %vm2392, %v2243
  %2415 = vst.msk [vmem:[#allocation2 + $0xb0] sm:$0xff] %vm2392, %v2245
  %2416 = vst.msk [vmem:[#allocation2 + $0xb8] sm:$0xff] %vm2392, %v2247
  %2417 = vst.msk [vmem:[#allocation2 + $0xc0] sm:$0xff] %vm2392, %v2249
  %2418 = vst.msk [vmem:[#allocation2 + $0xc8] sm:$0xff] %vm2392, %v2251
  %2419 = vst.msk [vmem:[#allocation2 + $0xd0] sm:$0xff] %vm2392, %v2253
  %2420 = vst.msk [vmem:[#allocation2 + $0xd8] sm:$0xff] %vm2392, %v2255
  %2421 = vst.msk [vmem:[#allocation2 + $0xe0] sm:$0xff] %vm2392, %v2257
  %2422 = vst.msk [vmem:[#allocation2 + $0xe8] sm:$0xff] %vm2392, %v2259
  %2423 = vst.msk [vmem:[#allocation2 + $0xf0] sm:$0xff] %vm2392, %v2261
  %2424 = vst.msk [vmem:[#allocation2 + $0xf8] sm:$0xff] %vm2392, %v2263
  %2425 = vst.msk [vmem:[#allocation2 + $0x100] sm:$0xff] %vm2392, %v2265
  %2426 = vst.msk [vmem:[#allocation2 + $0x108] sm:$0xff] %vm2392, %v2267
  %2427 = vst.msk [vmem:[#allocation2 + $0x110] sm:$0xff] %vm2392, %v2269
  %2428 = vst.msk [vmem:[#allocation2 + $0x118] sm:$0xff] %vm2392, %v2271
  %2429 = vst.msk [vmem:[#allocation2 + $0x120] sm:$0xff] %vm2392, %v2273
  %2430 = vst.msk [vmem:[#allocation2 + $0x128] sm:$0xff] %vm2392, %v2275
  %2431 = vst.msk [vmem:[#allocation2 + $0x130] sm:$0xff] %vm2392, %v2277
  %2432 = vst.msk [vmem:[#allocation2 + $0x138] sm:$0xff] %vm2392, %v2279
  %2433 = vst.msk [vmem:[#allocation2 + $0x140] sm:$0xff] %vm2392, %v2281
  %2434 = vst.msk [vmem:[#allocation2 + $0x148] sm:$0xff] %vm2392, %v2283
  %2435 = vst.msk [vmem:[#allocation2 + $0x150] sm:$0xff] %vm2392, %v2285
  %2436 = vst.msk [vmem:[#allocation2 + $0x158] sm:$0xff] %vm2392, %v2287
  %2437 = vst.msk [vmem:[#allocation2 + $0x160] sm:$0xff] %vm2392, %v2289
  %2438 = vst.msk [vmem:[#allocation2 + $0x168] sm:$0xff] %vm2392, %v2291
  %2439 = vst.msk [vmem:[#allocation2 + $0x170] sm:$0xff] %vm2392, %v2293
  %2440 = vst.msk [vmem:[#allocation2 + $0x178] sm:$0xff] %vm2392, %v2295
  %2441 = vst.msk [vmem:[#allocation2 + $0x180] sm:$0xff] %vm2392, %v2297
  %2442 = vst.msk [vmem:[#allocation2 + $0x188] sm:$0xff] %vm2392, %v2299
  %2443 = vst.msk [vmem:[#allocation2 + $0x190] sm:$0xff] %vm2392, %v2301
  %2444 = vst.msk [vmem:[#allocation2 + $0x198] sm:$0xff] %vm2392, %v2303
  %2445 = vst.msk [vmem:[#allocation2 + $0x1a0] sm:$0xff] %vm2392, %v2305
  %2446 = vst.msk [vmem:[#allocation2 + $0x1a8] sm:$0xff] %vm2392, %v2307
  %2447 = vst.msk [vmem:[#allocation2 + $0x1b0] sm:$0xff] %vm2392, %v2309
  %2448 = vst.msk [vmem:[#allocation2 + $0x1b8] sm:$0xff] %vm2392, %v2311
  %2449 = vst.msk [vmem:[#allocation2 + $0x1c0] sm:$0xff] %vm2392, %v2313
  %2450 = vst.msk [vmem:[#allocation2 + $0x1c8] sm:$0xff] %vm2392, %v2315
  %2451 = vst.msk [vmem:[#allocation2 + $0x1d0] sm:$0xff] %vm2392, %v2317
  %2452 = vst.msk [vmem:[#allocation2 + $0x1d8] sm:$0xff] %vm2392, %v2319
  %2453 = vst.msk [vmem:[#allocation2 + $0x1e0] sm:$0xff] %vm2392, %v2321
  %2454 = vst.msk [vmem:[#allocation2 + $0x1e8] sm:$0xff] %vm2392, %v2323
  %2455 = vst.msk [vmem:[#allocation2 + $0x1f0] sm:$0xff] %vm2392, %v2325
  %2456 = vst.msk [vmem:[#allocation2 + $0x1f8] sm:$0xff] %vm2392, %v2327
  %v2457 = vld [vmem:[%s2071 + $0x1] sm:$0xff]
  %v2458 = vld [vmem:[%s2071 + $0x9] sm:$0xff]
  %v2459 = vld [vmem:[%s2071 + $0x19] sm:$0xff]
  %v2460 = vld [vmem:[%s2071 + $0x21] sm:$0xff]
  %v2461 = vld [vmem:[%s2071 + $0x31] sm:$0xff]
  %v2462 = vld [vmem:[%s2071 + $0x39] sm:$0xff]
  %v2463 = vld [vmem:[%s2071 + $0x49] sm:$0xff]
  %v2464 = vld [vmem:[%s2071 + $0x51] sm:$0xff]
  %v2465 = vld [vmem:[%s2071 + $0x61] sm:$0xff]
  %v2466 = vld [vmem:[%s2071 + $0x69] sm:$0xff]
  %v2467 = vld [vmem:[%s2071 + $0x79] sm:$0xff]
  %v2468 = vld [vmem:[%s2071 + $0x81] sm:$0xff]
  %v2469 = vld [vmem:[%s2071 + $0x91] sm:$0xff]
  %v2470 = vld [vmem:[%s2071 + $0x99] sm:$0xff]
  %v2471 = vld [vmem:[%s2071 + $0xa9] sm:$0xff]
  %v2472 = vld [vmem:[%s2071 + $0xb1] sm:$0xff]
  %v2473 = vld [vmem:[%s2071 + $0xc1] sm:$0xff]
  %v2474 = vld [vmem:[%s2071 + $0xc9] sm:$0xff]
  %v2475 = vld [vmem:[%s2071 + $0xd9] sm:$0xff]
  %v2476 = vld [vmem:[%s2071 + $0xe1] sm:$0xff]
  %v2477 = vld [vmem:[%s2071 + $0xf1] sm:$0xff]
  %v2478 = vld [vmem:[%s2071 + $0xf9] sm:$0xff]
  %v2479 = vld [vmem:[%s2071 + $0x109] sm:$0xff]
  %v2480 = vld [vmem:[%s2071 + $0x111] sm:$0xff]
  %v2481 = vld [vmem:[%s2071 + $0x121] sm:$0xff]
  %v2482 = vld [vmem:[%s2071 + $0x129] sm:$0xff]
  %v2483 = vld [vmem:[%s2071 + $0x139] sm:$0xff]
  %v2484 = vld [vmem:[%s2071 + $0x141] sm:$0xff]
  %v2485 = vld [vmem:[%s2071 + $0x151] sm:$0xff]
  %v2486 = vld [vmem:[%s2071 + $0x159] sm:$0xff]
  %v2487 = vld [vmem:[%s2071 + $0x169] sm:$0xff]
  %v2488 = vld [vmem:[%s2071 + $0x171] sm:$0xff]
  %v2489 = vld [vmem:[%s2071 + $0x1b1] sm:$0xff]
  %v2490 = vld [vmem:[%s2071 + $0x1b9] sm:$0xff]
  %v2491 = vld [vmem:[%s2071 + $0x1c9] sm:$0xff]
  %v2492 = vld [vmem:[%s2071 + $0x1d1] sm:$0xff]
  %v2493 = vld [vmem:[%s2071 + $0x1e1] sm:$0xff]
  %v2494 = vld [vmem:[%s2071 + $0x1e9] sm:$0xff]
  %v2495 = vld [vmem:[%s2071 + $0x1f9] sm:$0xff]
  %v2496 = vld [vmem:[%s2071 + $0x201] sm:$0xff]
  %v2497 = vld [vmem:[%s2071 + $0x211] sm:$0xff]
  %v2498 = vld [vmem:[%s2071 + $0x219] sm:$0xff]
  %v2499 = vld [vmem:[%s2071 + $0x229] sm:$0xff]
  %v2500 = vld [vmem:[%s2071 + $0x231] sm:$0xff]
  %v2501 = vld [vmem:[%s2071 + $0x241] sm:$0xff]
  %v2502 = vld [vmem:[%s2071 + $0x249] sm:$0xff]
  %v2503 = vld [vmem:[%s2071 + $0x259] sm:$0xff]
  %v2504 = vld [vmem:[%s2071 + $0x261] sm:$0xff]
  %v2505 = vld [vmem:[%s2071 + $0x271] sm:$0xff]
  %v2506 = vld [vmem:[%s2071 + $0x279] sm:$0xff]
  %v2507 = vld [vmem:[%s2071 + $0x289] sm:$0xff]
  %v2508 = vld [vmem:[%s2071 + $0x291] sm:$0xff]
  %v2509 = vld [vmem:[%s2071 + $0x2a1] sm:$0xff]
  %v2510 = vld [vmem:[%s2071 + $0x2a9] sm:$0xff]
  %v2511 = vld [vmem:[%s2071 + $0x2b9] sm:$0xff]
  %v2512 = vld [vmem:[%s2071 + $0x2c1] sm:$0xff]
  %v2513 = vld [vmem:[%s2071 + $0x2d1] sm:$0xff]
  %v2514 = vld [vmem:[%s2071 + $0x2d9] sm:$0xff]
  %v2515 = vld [vmem:[%s2071 + $0x2e9] sm:$0xff]
  %v2516 = vld [vmem:[%s2071 + $0x2f1] sm:$0xff]
  %v2517 = vld [vmem:[%s2071 + $0x301] sm:$0xff]
  %v2518 = vld [vmem:[%s2071 + $0x309] sm:$0xff]
  %v2519 = vld [vmem:[%s2071 + $0x319] sm:$0xff]
  %v2520 = vld [vmem:[%s2071 + $0x321] sm:$0xff]
  %2585 = vrot.lane.b32.xlu0 %v2457, 28
  %v2586 = vpop.permute.xlu0 %2585
  %2587 = vrot.lane.b32.xlu0 %v2458, 28
  %v2588 = vpop.permute.xlu0 %2587
  %2589 = vrot.lane.b32.xlu0 %v2459, 28
  %v2590 = vpop.permute.xlu0 %2589
  %2591 = vrot.lane.b32.xlu0 %v2460, 28
  %v2592 = vpop.permute.xlu0 %2591
  %2593 = vrot.lane.b32.xlu0 %v2461, 28
  %v2594 = vpop.permute.xlu0 %2593
  %2595 = vrot.lane.b32.xlu0 %v2462, 28
  %v2596 = vpop.permute.xlu0 %2595
  %2597 = vrot.lane.b32.xlu0 %v2463, 28
  %v2598 = vpop.permute.xlu0 %2597
  %2599 = vrot.lane.b32.xlu0 %v2464, 28
  %v2600 = vpop.permute.xlu0 %2599
  %2601 = vrot.lane.b32.xlu0 %v2465, 28
  %v2602 = vpop.permute.xlu0 %2601
  %2603 = vrot.lane.b32.xlu0 %v2466, 28
  %v2604 = vpop.permute.xlu0 %2603
  %2605 = vrot.lane.b32.xlu0 %v2467, 28
  %v2606 = vpop.permute.xlu0 %2605
  %2607 = vrot.lane.b32.xlu0 %v2468, 28
  %v2608 = vpop.permute.xlu0 %2607
  %2609 = vrot.lane.b32.xlu0 %v2469, 28
  %v2610 = vpop.permute.xlu0 %2609
  %2611 = vrot.lane.b32.xlu0 %v2470, 28
  %v2612 = vpop.permute.xlu0 %2611
  %2613 = vrot.lane.b32.xlu0 %v2471, 28
  %v2614 = vpop.permute.xlu0 %2613
  %2615 = vrot.lane.b32.xlu0 %v2472, 28
  %v2616 = vpop.permute.xlu0 %2615
  %2617 = vrot.lane.b32.xlu0 %v2473, 28
  %v2618 = vpop.permute.xlu0 %2617
  %2619 = vrot.lane.b32.xlu0 %v2474, 28
  %v2620 = vpop.permute.xlu0 %2619
  %2621 = vrot.lane.b32.xlu0 %v2475, 28
  %v2622 = vpop.permute.xlu0 %2621
  %2623 = vrot.lane.b32.xlu0 %v2476, 28
  %v2624 = vpop.permute.xlu0 %2623
  %2625 = vrot.lane.b32.xlu0 %v2477, 28
  %v2626 = vpop.permute.xlu0 %2625
  %2627 = vrot.lane.b32.xlu0 %v2478, 28
  %v2628 = vpop.permute.xlu0 %2627
  %2629 = vrot.lane.b32.xlu0 %v2479, 28
  %v2630 = vpop.permute.xlu0 %2629
  %2631 = vrot.lane.b32.xlu0 %v2480, 28
  %v2632 = vpop.permute.xlu0 %2631
  %2633 = vrot.lane.b32.xlu0 %v2481, 28
  %v2634 = vpop.permute.xlu0 %2633
  %2635 = vrot.lane.b32.xlu0 %v2482, 28
  %v2636 = vpop.permute.xlu0 %2635
  %2637 = vrot.lane.b32.xlu0 %v2483, 28
  %v2638 = vpop.permute.xlu0 %2637
  %2639 = vrot.lane.b32.xlu0 %v2484, 28
  %v2640 = vpop.permute.xlu0 %2639
  %2641 = vrot.lane.b32.xlu0 %v2485, 28
  %v2642 = vpop.permute.xlu0 %2641
  %2643 = vrot.lane.b32.xlu0 %v2486, 28
  %v2644 = vpop.permute.xlu0 %2643
  %2645 = vrot.lane.b32.xlu0 %v2487, 28
  %v2646 = vpop.permute.xlu0 %2645
  %2647 = vrot.lane.b32.xlu0 %v2488, 28
  %v2648 = vpop.permute.xlu0 %2647
  %2649 = vrot.lane.b32.xlu0 %v2489, 28
  %v2650 = vpop.permute.xlu0 %2649
  %2651 = vrot.lane.b32.xlu0 %v2490, 28
  %v2652 = vpop.permute.xlu0 %2651
  %2653 = vrot.lane.b32.xlu0 %v2491, 28
  %v2654 = vpop.permute.xlu0 %2653
  %2655 = vrot.lane.b32.xlu0 %v2492, 28
  %v2656 = vpop.permute.xlu0 %2655
  %2657 = vrot.lane.b32.xlu0 %v2493, 28
  %v2658 = vpop.permute.xlu0 %2657
  %2659 = vrot.lane.b32.xlu0 %v2494, 28
  %v2660 = vpop.permute.xlu0 %2659
  %2661 = vrot.lane.b32.xlu0 %v2495, 28
  %v2662 = vpop.permute.xlu0 %2661
  %2663 = vrot.lane.b32.xlu0 %v2496, 28
  %v2664 = vpop.permute.xlu0 %2663
  %2665 = vrot.lane.b32.xlu0 %v2497, 28
  %v2666 = vpop.permute.xlu0 %2665
  %2667 = vrot.lane.b32.xlu0 %v2498, 28
  %v2668 = vpop.permute.xlu0 %2667
  %2669 = vrot.lane.b32.xlu0 %v2499, 28
  %v2670 = vpop.permute.xlu0 %2669
  %2671 = vrot.lane.b32.xlu0 %v2500, 28
  %v2672 = vpop.permute.xlu0 %2671
  %2673 = vrot.lane.b32.xlu0 %v2501, 28
  %v2674 = vpop.permute.xlu0 %2673
  %2675 = vrot.lane.b32.xlu0 %v2502, 28
  %v2676 = vpop.permute.xlu0 %2675
  %2677 = vrot.lane.b32.xlu0 %v2503, 28
  %v2678 = vpop.permute.xlu0 %2677
  %2679 = vrot.lane.b32.xlu0 %v2504, 28
  %v2680 = vpop.permute.xlu0 %2679
  %2681 = vrot.lane.b32.xlu0 %v2505, 28
  %v2682 = vpop.permute.xlu0 %2681
  %2683 = vrot.lane.b32.xlu0 %v2506, 28
  %v2684 = vpop.permute.xlu0 %2683
  %2685 = vrot.lane.b32.xlu0 %v2507, 28
  %v2686 = vpop.permute.xlu0 %2685
  %2687 = vrot.lane.b32.xlu0 %v2508, 28
  %v2688 = vpop.permute.xlu0 %2687
  %2689 = vrot.lane.b32.xlu0 %v2509, 28
  %v2690 = vpop.permute.xlu0 %2689
  %2691 = vrot.lane.b32.xlu0 %v2510, 28
  %v2692 = vpop.permute.xlu0 %2691
  %2693 = vrot.lane.b32.xlu0 %v2511, 28
  %v2694 = vpop.permute.xlu0 %2693
  %2695 = vrot.lane.b32.xlu0 %v2512, 28
  %v2696 = vpop.permute.xlu0 %2695
  %2697 = vrot.lane.b32.xlu0 %v2513, 28
  %v2698 = vpop.permute.xlu0 %2697
  %2699 = vrot.lane.b32.xlu0 %v2514, 28
  %v2700 = vpop.permute.xlu0 %2699
  %2701 = vrot.lane.b32.xlu0 %v2515, 28
  %v2702 = vpop.permute.xlu0 %2701
  %2703 = vrot.lane.b32.xlu0 %v2516, 28
  %v2704 = vpop.permute.xlu0 %2703
  %2705 = vrot.lane.b32.xlu0 %v2517, 28
  %v2706 = vpop.permute.xlu0 %2705
  %2707 = vrot.lane.b32.xlu0 %v2518, 28
  %v2708 = vpop.permute.xlu0 %2707
  %2709 = vrot.lane.b32.xlu0 %v2519, 28
  %v2710 = vpop.permute.xlu0 %2709
  %2711 = vrot.lane.b32.xlu0 %v2520, 28
  %v2712 = vpop.permute.xlu0 %2711
  %vm2777 = vcmask 261344
  %2778 = vst.msk [vmem:[#allocation2] sm:$0xff] %vm2777, %v2586
  %2779 = vst.msk [vmem:[#allocation2 + $0x8] sm:$0xff] %vm2777, %v2588
  %2780 = vst.msk [vmem:[#allocation2 + $0x10] sm:$0xff] %vm2777, %v2590
  %2781 = vst.msk [vmem:[#allocation2 + $0x18] sm:$0xff] %vm2777, %v2592
  %2782 = vst.msk [vmem:[#allocation2 + $0x20] sm:$0xff] %vm2777, %v2594
  %2783 = vst.msk [vmem:[#allocation2 + $0x28] sm:$0xff] %vm2777, %v2596
  %2784 = vst.msk [vmem:[#allocation2 + $0x30] sm:$0xff] %vm2777, %v2598
  %2785 = vst.msk [vmem:[#allocation2 + $0x38] sm:$0xff] %vm2777, %v2600
  %2786 = vst.msk [vmem:[#allocation2 + $0x40] sm:$0xff] %vm2777, %v2602
  %2787 = vst.msk [vmem:[#allocation2 + $0x48] sm:$0xff] %vm2777, %v2604
  %2788 = vst.msk [vmem:[#allocation2 + $0x50] sm:$0xff] %vm2777, %v2606
  %2789 = vst.msk [vmem:[#allocation2 + $0x58] sm:$0xff] %vm2777, %v2608
  %2790 = vst.msk [vmem:[#allocation2 + $0x60] sm:$0xff] %vm2777, %v2610
  %2791 = vst.msk [vmem:[#allocation2 + $0x68] sm:$0xff] %vm2777, %v2612
  %2792 = vst.msk [vmem:[#allocation2 + $0x70] sm:$0xff] %vm2777, %v2614
  %2793 = vst.msk [vmem:[#allocation2 + $0x78] sm:$0xff] %vm2777, %v2616
  %2794 = vst.msk [vmem:[#allocation2 + $0x80] sm:$0xff] %vm2777, %v2618
  %2795 = vst.msk [vmem:[#allocation2 + $0x88] sm:$0xff] %vm2777, %v2620
  %2796 = vst.msk [vmem:[#allocation2 + $0x90] sm:$0xff] %vm2777, %v2622
  %2797 = vst.msk [vmem:[#allocation2 + $0x98] sm:$0xff] %vm2777, %v2624
  %2798 = vst.msk [vmem:[#allocation2 + $0xa0] sm:$0xff] %vm2777, %v2626
  %2799 = vst.msk [vmem:[#allocation2 + $0xa8] sm:$0xff] %vm2777, %v2628
  %2800 = vst.msk [vmem:[#allocation2 + $0xb0] sm:$0xff] %vm2777, %v2630
  %2801 = vst.msk [vmem:[#allocation2 + $0xb8] sm:$0xff] %vm2777, %v2632
  %2802 = vst.msk [vmem:[#allocation2 + $0xc0] sm:$0xff] %vm2777, %v2634
  %2803 = vst.msk [vmem:[#allocation2 + $0xc8] sm:$0xff] %vm2777, %v2636
  %2804 = vst.msk [vmem:[#allocation2 + $0xd0] sm:$0xff] %vm2777, %v2638
  %2805 = vst.msk [vmem:[#allocation2 + $0xd8] sm:$0xff] %vm2777, %v2640
  %2806 = vst.msk [vmem:[#allocation2 + $0xe0] sm:$0xff] %vm2777, %v2642
  %2807 = vst.msk [vmem:[#allocation2 + $0xe8] sm:$0xff] %vm2777, %v2644
  %2808 = vst.msk [vmem:[#allocation2 + $0xf0] sm:$0xff] %vm2777, %v2646
  %2809 = vst.msk [vmem:[#allocation2 + $0xf8] sm:$0xff] %vm2777, %v2648
  %2810 = vst.msk [vmem:[#allocation2 + $0x100] sm:$0xff] %vm2777, %v2650
  %2811 = vst.msk [vmem:[#allocation2 + $0x108] sm:$0xff] %vm2777, %v2652
  %2812 = vst.msk [vmem:[#allocation2 + $0x110] sm:$0xff] %vm2777, %v2654
  %2813 = vst.msk [vmem:[#allocation2 + $0x118] sm:$0xff] %vm2777, %v2656
  %2814 = vst.msk [vmem:[#allocation2 + $0x120] sm:$0xff] %vm2777, %v2658
  %2815 = vst.msk [vmem:[#allocation2 + $0x128] sm:$0xff] %vm2777, %v2660
  %2816 = vst.msk [vmem:[#allocation2 + $0x130] sm:$0xff] %vm2777, %v2662
  %2817 = vst.msk [vmem:[#allocation2 + $0x138] sm:$0xff] %vm2777, %v2664
  %2818 = vst.msk [vmem:[#allocation2 + $0x140] sm:$0xff] %vm2777, %v2666
  %2819 = vst.msk [vmem:[#allocation2 + $0x148] sm:$0xff] %vm2777, %v2668
  %2820 = vst.msk [vmem:[#allocation2 + $0x150] sm:$0xff] %vm2777, %v2670
  %2821 = vst.msk [vmem:[#allocation2 + $0x158] sm:$0xff] %vm2777, %v2672
  %2822 = vst.msk [vmem:[#allocation2 + $0x160] sm:$0xff] %vm2777, %v2674
  %2823 = vst.msk [vmem:[#allocation2 + $0x168] sm:$0xff] %vm2777, %v2676
  %2824 = vst.msk [vmem:[#allocation2 + $0x170] sm:$0xff] %vm2777, %v2678
  %2825 = vst.msk [vmem:[#allocation2 + $0x178] sm:$0xff] %vm2777, %v2680
  %2826 = vst.msk [vmem:[#allocation2 + $0x180] sm:$0xff] %vm2777, %v2682
  %2827 = vst.msk [vmem:[#allocation2 + $0x188] sm:$0xff] %vm2777, %v2684
  %2828 = vst.msk [vmem:[#allocation2 + $0x190] sm:$0xff] %vm2777, %v2686
  %2829 = vst.msk [vmem:[#allocation2 + $0x198] sm:$0xff] %vm2777, %v2688
  %2830 = vst.msk [vmem:[#allocation2 + $0x1a0] sm:$0xff] %vm2777, %v2690
  %2831 = vst.msk [vmem:[#allocation2 + $0x1a8] sm:$0xff] %vm2777, %v2692
  %2832 = vst.msk [vmem:[#allocation2 + $0x1b0] sm:$0xff] %vm2777, %v2694
  %2833 = vst.msk [vmem:[#allocation2 + $0x1b8] sm:$0xff] %vm2777, %v2696
  %2834 = vst.msk [vmem:[#allocation2 + $0x1c0] sm:$0xff] %vm2777, %v2698
  %2835 = vst.msk [vmem:[#allocation2 + $0x1c8] sm:$0xff] %vm2777, %v2700
  %2836 = vst.msk [vmem:[#allocation2 + $0x1d0] sm:$0xff] %vm2777, %v2702
  %2837 = vst.msk [vmem:[#allocation2 + $0x1d8] sm:$0xff] %vm2777, %v2704
  %2838 = vst.msk [vmem:[#allocation2 + $0x1e0] sm:$0xff] %vm2777, %v2706
  %2839 = vst.msk [vmem:[#allocation2 + $0x1e8] sm:$0xff] %vm2777, %v2708
  %2840 = vst.msk [vmem:[#allocation2 + $0x1f0] sm:$0xff] %vm2777, %v2710
  %2841 = vst.msk [vmem:[#allocation2 + $0x1f8] sm:$0xff] %vm2777, %v2712
  %v2842 = vld [vmem:[%s2071 + $0x2] sm:$0xff]
  %v2843 = vld [vmem:[%s2071 + $0xa] sm:$0xff]
  %v2844 = vld [vmem:[%s2071 + $0x1a] sm:$0xff]
  %v2845 = vld [vmem:[%s2071 + $0x22] sm:$0xff]
  %v2846 = vld [vmem:[%s2071 + $0x32] sm:$0xff]
  %v2847 = vld [vmem:[%s2071 + $0x3a] sm:$0xff]
  %v2848 = vld [vmem:[%s2071 + $0x4a] sm:$0xff]
  %v2849 = vld [vmem:[%s2071 + $0x52] sm:$0xff]
  %v2850 = vld [vmem:[%s2071 + $0x62] sm:$0xff]
  %v2851 = vld [vmem:[%s2071 + $0x6a] sm:$0xff]
  %v2852 = vld [vmem:[%s2071 + $0x7a] sm:$0xff]
  %v2853 = vld [vmem:[%s2071 + $0x82] sm:$0xff]
  %v2854 = vld [vmem:[%s2071 + $0x92] sm:$0xff]
  %v2855 = vld [vmem:[%s2071 + $0x9a] sm:$0xff]
  %v2856 = vld [vmem:[%s2071 + $0xaa] sm:$0xff]
  %v2857 = vld [vmem:[%s2071 + $0xb2] sm:$0xff]
  %v2858 = vld [vmem:[%s2071 + $0xc2] sm:$0xff]
  %v2859 = vld [vmem:[%s2071 + $0xca] sm:$0xff]
  %v2860 = vld [vmem:[%s2071 + $0xda] sm:$0xff]
  %v2861 = vld [vmem:[%s2071 + $0xe2] sm:$0xff]
  %v2862 = vld [vmem:[%s2071 + $0xf2] sm:$0xff]
  %v2863 = vld [vmem:[%s2071 + $0xfa] sm:$0xff]
  %v2864 = vld [vmem:[%s2071 + $0x10a] sm:$0xff]
  %v2865 = vld [vmem:[%s2071 + $0x112] sm:$0xff]
  %v2866 = vld [vmem:[%s2071 + $0x122] sm:$0xff]
  %v2867 = vld [vmem:[%s2071 + $0x12a] sm:$0xff]
  %v2868 = vld [vmem:[%s2071 + $0x13a] sm:$0xff]
  %v2869 = vld [vmem:[%s2071 + $0x142] sm:$0xff]
  %v2870 = vld [vmem:[%s2071 + $0x152] sm:$0xff]
  %v2871 = vld [vmem:[%s2071 + $0x15a] sm:$0xff]
  %v2872 = vld [vmem:[%s2071 + $0x16a] sm:$0xff]
  %v2873 = vld [vmem:[%s2071 + $0x172] sm:$0xff]
  %v2874 = vld [vmem:[%s2071 + $0x1b2] sm:$0xff]
  %v2875 = vld [vmem:[%s2071 + $0x1ba] sm:$0xff]
  %v2876 = vld [vmem:[%s2071 + $0x1ca] sm:$0xff]
  %v2877 = vld [vmem:[%s2071 + $0x1d2] sm:$0xff]
  %v2878 = vld [vmem:[%s2071 + $0x1e2] sm:$0xff]
  %v2879 = vld [vmem:[%s2071 + $0x1ea] sm:$0xff]
  %v2880 = vld [vmem:[%s2071 + $0x1fa] sm:$0xff]
  %v2881 = vld [vmem:[%s2071 + $0x202] sm:$0xff]
  %v2882 = vld [vmem:[%s2071 + $0x212] sm:$0xff]
  %v2883 = vld [vmem:[%s2071 + $0x21a] sm:$0xff]
  %v2884 = vld [vmem:[%s2071 + $0x22a] sm:$0xff]
  %v2885 = vld [vmem:[%s2071 + $0x232] sm:$0xff]
  %v2886 = vld [vmem:[%s2071 + $0x242] sm:$0xff]
  %v2887 = vld [vmem:[%s2071 + $0x24a] sm:$0xff]
  %v2888 = vld [vmem:[%s2071 + $0x25a] sm:$0xff]
  %v2889 = vld [vmem:[%s2071 + $0x262] sm:$0xff]
  %v2890 = vld [vmem:[%s2071 + $0x272] sm:$0xff]
  %v2891 = vld [vmem:[%s2071 + $0x27a] sm:$0xff]
  %v2892 = vld [vmem:[%s2071 + $0x28a] sm:$0xff]
  %v2893 = vld [vmem:[%s2071 + $0x292] sm:$0xff]
  %v2894 = vld [vmem:[%s2071 + $0x2a2] sm:$0xff]
  %v2895 = vld [vmem:[%s2071 + $0x2aa] sm:$0xff]
  %v2896 = vld [vmem:[%s2071 + $0x2ba] sm:$0xff]
  %v2897 = vld [vmem:[%s2071 + $0x2c2] sm:$0xff]
  %v2898 = vld [vmem:[%s2071 + $0x2d2] sm:$0xff]
  %v2899 = vld [vmem:[%s2071 + $0x2da] sm:$0xff]
  %v2900 = vld [vmem:[%s2071 + $0x2ea] sm:$0xff]
  %v2901 = vld [vmem:[%s2071 + $0x2f2] sm:$0xff]
  %v2902 = vld [vmem:[%s2071 + $0x302] sm:$0xff]
  %v2903 = vld [vmem:[%s2071 + $0x30a] sm:$0xff]
  %v2904 = vld [vmem:[%s2071 + $0x31a] sm:$0xff]
  %v2905 = vld [vmem:[%s2071 + $0x322] sm:$0xff]
  %2970 = vrot.lane.b32.xlu0 %v2842, 32
  %v2971 = vpop.permute.xlu0 %2970
  %2972 = vrot.lane.b32.xlu0 %v2843, 32
  %v2973 = vpop.permute.xlu0 %2972
  %2974 = vrot.lane.b32.xlu0 %v2844, 32
  %v2975 = vpop.permute.xlu0 %2974
  %2976 = vrot.lane.b32.xlu0 %v2845, 32
  %v2977 = vpop.permute.xlu0 %2976
  %2978 = vrot.lane.b32.xlu0 %v2846, 32
  %v2979 = vpop.permute.xlu0 %2978
  %2980 = vrot.lane.b32.xlu0 %v2847, 32
  %v2981 = vpop.permute.xlu0 %2980
  %2982 = vrot.lane.b32.xlu0 %v2848, 32
  %v2983 = vpop.permute.xlu0 %2982
  %2984 = vrot.lane.b32.xlu0 %v2849, 32
  %v2985 = vpop.permute.xlu0 %2984
  %2986 = vrot.lane.b32.xlu0 %v2850, 32
  %v2987 = vpop.permute.xlu0 %2986
  %2988 = vrot.lane.b32.xlu0 %v2851, 32
  %v2989 = vpop.permute.xlu0 %2988
  %2990 = vrot.lane.b32.xlu0 %v2852, 32
  %v2991 = vpop.permute.xlu0 %2990
  %2992 = vrot.lane.b32.xlu0 %v2853, 32
  %v2993 = vpop.permute.xlu0 %2992
  %2994 = vrot.lane.b32.xlu0 %v2854, 32
  %v2995 = vpop.permute.xlu0 %2994
  %2996 = vrot.lane.b32.xlu0 %v2855, 32
  %v2997 = vpop.permute.xlu0 %2996
  %2998 = vrot.lane.b32.xlu0 %v2856, 32
  %v2999 = vpop.permute.xlu0 %2998
  %3000 = vrot.lane.b32.xlu0 %v2857, 32
  %v3001 = vpop.permute.xlu0 %3000
  %3002 = vrot.lane.b32.xlu0 %v2858, 32
  %v3003 = vpop.permute.xlu0 %3002
  %3004 = vrot.lane.b32.xlu0 %v2859, 32
  %v3005 = vpop.permute.xlu0 %3004
  %3006 = vrot.lane.b32.xlu0 %v2860, 32
  %v3007 = vpop.permute.xlu0 %3006
  %3008 = vrot.lane.b32.xlu0 %v2861, 32
  %v3009 = vpop.permute.xlu0 %3008
  %3010 = vrot.lane.b32.xlu0 %v2862, 32
  %v3011 = vpop.permute.xlu0 %3010
  %3012 = vrot.lane.b32.xlu0 %v2863, 32
  %v3013 = vpop.permute.xlu0 %3012
  %3014 = vrot.lane.b32.xlu0 %v2864, 32
  %v3015 = vpop.permute.xlu0 %3014
  %3016 = vrot.lane.b32.xlu0 %v2865, 32
  %v3017 = vpop.permute.xlu0 %3016
  %3018 = vrot.lane.b32.xlu0 %v2866, 32
  %v3019 = vpop.permute.xlu0 %3018
  %3020 = vrot.lane.b32.xlu0 %v2867, 32
  %v3021 = vpop.permute.xlu0 %3020
  %3022 = vrot.lane.b32.xlu0 %v2868, 32
  %v3023 = vpop.permute.xlu0 %3022
  %3024 = vrot.lane.b32.xlu0 %v2869, 32
  %v3025 = vpop.permute.xlu0 %3024
  %3026 = vrot.lane.b32.xlu0 %v2870, 32
  %v3027 = vpop.permute.xlu0 %3026
  %3028 = vrot.lane.b32.xlu0 %v2871, 32
  %v3029 = vpop.permute.xlu0 %3028
  %3030 = vrot.lane.b32.xlu0 %v2872, 32
  %v3031 = vpop.permute.xlu0 %3030
  %3032 = vrot.lane.b32.xlu0 %v2873, 32
  %v3033 = vpop.permute.xlu0 %3032
  %3034 = vrot.lane.b32.xlu0 %v2874, 32
  %v3035 = vpop.permute.xlu0 %3034
  %3036 = vrot.lane.b32.xlu0 %v2875, 32
  %v3037 = vpop.permute.xlu0 %3036
  %3038 = vrot.lane.b32.xlu0 %v2876, 32
  %v3039 = vpop.permute.xlu0 %3038
  %3040 = vrot.lane.b32.xlu0 %v2877, 32
  %v3041 = vpop.permute.xlu0 %3040
  %3042 = vrot.lane.b32.xlu0 %v2878, 32
  %v3043 = vpop.permute.xlu0 %3042
  %3044 = vrot.lane.b32.xlu0 %v2879, 32
  %v3045 = vpop.permute.xlu0 %3044
  %3046 = vrot.lane.b32.xlu0 %v2880, 32
  %v3047 = vpop.permute.xlu0 %3046
  %3048 = vrot.lane.b32.xlu0 %v2881, 32
  %v3049 = vpop.permute.xlu0 %3048
  %3050 = vrot.lane.b32.xlu0 %v2882, 32
  %v3051 = vpop.permute.xlu0 %3050
  %3052 = vrot.lane.b32.xlu0 %v2883, 32
  %v3053 = vpop.permute.xlu0 %3052
  %3054 = vrot.lane.b32.xlu0 %v2884, 32
  %v3055 = vpop.permute.xlu0 %3054
  %3056 = vrot.lane.b32.xlu0 %v2885, 32
  %v3057 = vpop.permute.xlu0 %3056
  %3058 = vrot.lane.b32.xlu0 %v2886, 32
  %v3059 = vpop.permute.xlu0 %3058
  %3060 = vrot.lane.b32.xlu0 %v2887, 32
  %v3061 = vpop.permute.xlu0 %3060
  %3062 = vrot.lane.b32.xlu0 %v2888, 32
  %v3063 = vpop.permute.xlu0 %3062
  %3064 = vrot.lane.b32.xlu0 %v2889, 32
  %v3065 = vpop.permute.xlu0 %3064
  %3066 = vrot.lane.b32.xlu0 %v2890, 32
  %v3067 = vpop.permute.xlu0 %3066
  %3068 = vrot.lane.b32.xlu0 %v2891, 32
  %v3069 = vpop.permute.xlu0 %3068
  %3070 = vrot.lane.b32.xlu0 %v2892, 32
  %v3071 = vpop.permute.xlu0 %3070
  %3072 = vrot.lane.b32.xlu0 %v2893, 32
  %v3073 = vpop.permute.xlu0 %3072
  %3074 = vrot.lane.b32.xlu0 %v2894, 32
  %v3075 = vpop.permute.xlu0 %3074
  %3076 = vrot.lane.b32.xlu0 %v2895, 32
  %v3077 = vpop.permute.xlu0 %3076
  %3078 = vrot.lane.b32.xlu0 %v2896, 32
  %v3079 = vpop.permute.xlu0 %3078
  %3080 = vrot.lane.b32.xlu0 %v2897, 32
  %v3081 = vpop.permute.xlu0 %3080
  %3082 = vrot.lane.b32.xlu0 %v2898, 32
  %v3083 = vpop.permute.xlu0 %3082
  %3084 = vrot.lane.b32.xlu0 %v2899, 32
  %v3085 = vpop.permute.xlu0 %3084
  %3086 = vrot.lane.b32.xlu0 %v2900, 32
  %v3087 = vpop.permute.xlu0 %3086
  %3088 = vrot.lane.b32.xlu0 %v2901, 32
  %v3089 = vpop.permute.xlu0 %3088
  %3090 = vrot.lane.b32.xlu0 %v2902, 32
  %v3091 = vpop.permute.xlu0 %3090
  %3092 = vrot.lane.b32.xlu0 %v2903, 32
  %v3093 = vpop.permute.xlu0 %3092
  %3094 = vrot.lane.b32.xlu0 %v2904, 32
  %v3095 = vpop.permute.xlu0 %3094
  %3096 = vrot.lane.b32.xlu0 %v2905, 32
  %v3097 = vpop.permute.xlu0 %3096
  %vm3162 = vcmask 294144
  %3163 = vst.msk [vmem:[#allocation2] sm:$0xff] %vm3162, %v2971
  %3164 = vst.msk [vmem:[#allocation2 + $0x8] sm:$0xff] %vm3162, %v2973
  %3165 = vst.msk [vmem:[#allocation2 + $0x10] sm:$0xff] %vm3162, %v2975
  %3166 = vst.msk [vmem:[#allocation2 + $0x18] sm:$0xff] %vm3162, %v2977
  %3167 = vst.msk [vmem:[#allocation2 + $0x20] sm:$0xff] %vm3162, %v2979
  %3168 = vst.msk [vmem:[#allocation2 + $0x28] sm:$0xff] %vm3162, %v2981
  %3169 = vst.msk [vmem:[#allocation2 + $0x30] sm:$0xff] %vm3162, %v2983
  %3170 = vst.msk [vmem:[#allocation2 + $0x38] sm:$0xff] %vm3162, %v2985
  %3171 = vst.msk [vmem:[#allocation2 + $0x40] sm:$0xff] %vm3162, %v2987
  %3172 = vst.msk [vmem:[#allocation2 + $0x48] sm:$0xff] %vm3162, %v2989
  %3173 = vst.msk [vmem:[#allocation2 + $0x50] sm:$0xff] %vm3162, %v2991
  %3174 = vst.msk [vmem:[#allocation2 + $0x58] sm:$0xff] %vm3162, %v2993
  %3175 = vst.msk [vmem:[#allocation2 + $0x60] sm:$0xff] %vm3162, %v2995
  %3176 = vst.msk [vmem:[#allocation2 + $0x68] sm:$0xff] %vm3162, %v2997
  %3177 = vst.msk [vmem:[#allocation2 + $0x70] sm:$0xff] %vm3162, %v2999
  %3178 = vst.msk [vmem:[#allocation2 + $0x78] sm:$0xff] %vm3162, %v3001
  %3179 = vst.msk [vmem:[#allocation2 + $0x80] sm:$0xff] %vm3162, %v3003
  %3180 = vst.msk [vmem:[#allocation2 + $0x88] sm:$0xff] %vm3162, %v3005
  %3181 = vst.msk [vmem:[#allocation2 + $0x90] sm:$0xff] %vm3162, %v3007
  %3182 = vst.msk [vmem:[#allocation2 + $0x98] sm:$0xff] %vm3162, %v3009
  %3183 = vst.msk [vmem:[#allocation2 + $0xa0] sm:$0xff] %vm3162, %v3011
  %3184 = vst.msk [vmem:[#allocation2 + $0xa8] sm:$0xff] %vm3162, %v3013
  %3185 = vst.msk [vmem:[#allocation2 + $0xb0] sm:$0xff] %vm3162, %v3015
  %3186 = vst.msk [vmem:[#allocation2 + $0xb8] sm:$0xff] %vm3162, %v3017
  %3187 = vst.msk [vmem:[#allocation2 + $0xc0] sm:$0xff] %vm3162, %v3019
  %3188 = vst.msk [vmem:[#allocation2 + $0xc8] sm:$0xff] %vm3162, %v3021
  %3189 = vst.msk [vmem:[#allocation2 + $0xd0] sm:$0xff] %vm3162, %v3023
  %3190 = vst.msk [vmem:[#allocation2 + $0xd8] sm:$0xff] %vm3162, %v3025
  %3191 = vst.msk [vmem:[#allocation2 + $0xe0] sm:$0xff] %vm3162, %v3027
  %3192 = vst.msk [vmem:[#allocation2 + $0xe8] sm:$0xff] %vm3162, %v3029
  %3193 = vst.msk [vmem:[#allocation2 + $0xf0] sm:$0xff] %vm3162, %v3031
  %3194 = vst.msk [vmem:[#allocation2 + $0xf8] sm:$0xff] %vm3162, %v3033
  %3195 = vst.msk [vmem:[#allocation2 + $0x100] sm:$0xff] %vm3162, %v3035
  %3196 = vst.msk [vmem:[#allocation2 + $0x108] sm:$0xff] %vm3162, %v3037
  %3197 = vst.msk [vmem:[#allocation2 + $0x110] sm:$0xff] %vm3162, %v3039
  %3198 = vst.msk [vmem:[#allocation2 + $0x118] sm:$0xff] %vm3162, %v3041
  %3199 = vst.msk [vmem:[#allocation2 + $0x120] sm:$0xff] %vm3162, %v3043
  %3200 = vst.msk [vmem:[#allocation2 + $0x128] sm:$0xff] %vm3162, %v3045
  %3201 = vst.msk [vmem:[#allocation2 + $0x130] sm:$0xff] %vm3162, %v3047
  %3202 = vst.msk [vmem:[#allocation2 + $0x138] sm:$0xff] %vm3162, %v3049
  %3203 = vst.msk [vmem:[#allocation2 + $0x140] sm:$0xff] %vm3162, %v3051
  %3204 = vst.msk [vmem:[#allocation2 + $0x148] sm:$0xff] %vm3162, %v3053
  %3205 = vst.msk [vmem:[#allocation2 + $0x150] sm:$0xff] %vm3162, %v3055
  %3206 = vst.msk [vmem:[#allocation2 + $0x158] sm:$0xff] %vm3162, %v3057
  %3207 = vst.msk [vmem:[#allocation2 + $0x160] sm:$0xff] %vm3162, %v3059
  %3208 = vst.msk [vmem:[#allocation2 + $0x168] sm:$0xff] %vm3162, %v3061
  %3209 = vst.msk [vmem:[#allocation2 + $0x170] sm:$0xff] %vm3162, %v3063
  %3210 = vst.msk [vmem:[#allocation2 + $0x178] sm:$0xff] %vm3162, %v3065
  %3211 = vst.msk [vmem:[#allocation2 + $0x180] sm:$0xff] %vm3162, %v3067
  %3212 = vst.msk [vmem:[#allocation2 + $0x188] sm:$0xff] %vm3162, %v3069
  %3213 = vst.msk [vmem:[#allocation2 + $0x190] sm:$0xff] %vm3162, %v3071
  %3214 = vst.msk [vmem:[#allocation2 + $0x198] sm:$0xff] %vm3162, %v3073
  %3215 = vst.msk [vmem:[#allocation2 + $0x1a0] sm:$0xff] %vm3162, %v3075
  %3216 = vst.msk [vmem:[#allocation2 + $0x1a8] sm:$0xff] %vm3162, %v3077
  %3217 = vst.msk [vmem:[#allocation2 + $0x1b0] sm:$0xff] %vm3162, %v3079
  %3218 = vst.msk [vmem:[#allocation2 + $0x1b8] sm:$0xff] %vm3162, %v3081
  %3219 = vst.msk [vmem:[#allocation2 + $0x1c0] sm:$0xff] %vm3162, %v3083
  %3220 = vst.msk [vmem:[#allocation2 + $0x1c8] sm:$0xff] %vm3162, %v3085
  %3221 = vst.msk [vmem:[#allocation2 + $0x1d0] sm:$0xff] %vm3162, %v3087
  %3222 = vst.msk [vmem:[#allocation2 + $0x1d8] sm:$0xff] %vm3162, %v3089
  %3223 = vst.msk [vmem:[#allocation2 + $0x1e0] sm:$0xff] %vm3162, %v3091
  %3224 = vst.msk [vmem:[#allocation2 + $0x1e8] sm:$0xff] %vm3162, %v3093
  %3225 = vst.msk [vmem:[#allocation2 + $0x1f0] sm:$0xff] %vm3162, %v3095
  %3226 = vst.msk [vmem:[#allocation2 + $0x1f8] sm:$0xff] %vm3162, %v3097
  %v3227 = vld [vmem:[#allocation2] sm:$0xff]
  %v3228 = vld [vmem:[#allocation2 + $0x8] sm:$0xff]
  %v3229 = vld [vmem:[#allocation2 + $0x10] sm:$0xff]
  %v3230 = vld [vmem:[#allocation2 + $0x18] sm:$0xff]
  %v3231 = vld [vmem:[#allocation2 + $0x20] sm:$0xff]
  %v3232 = vld [vmem:[#allocation2 + $0x28] sm:$0xff]
  %v3233 = vld [vmem:[#allocation2 + $0x30] sm:$0xff]
  %v3234 = vld [vmem:[#allocation2 + $0x38] sm:$0xff]
  %v3235 = vld [vmem:[#allocation2 + $0x40] sm:$0xff]
  %v3236 = vld [vmem:[#allocation2 + $0x48] sm:$0xff]
  %v3237 = vld [vmem:[#allocation2 + $0x50] sm:$0xff]
  %v3238 = vld [vmem:[#allocation2 + $0x58] sm:$0xff]
  %v3239 = vld [vmem:[#allocation2 + $0x60] sm:$0xff]
  %v3240 = vld [vmem:[#allocation2 + $0x68] sm:$0xff]
  %v3241 = vld [vmem:[#allocation2 + $0x70] sm:$0xff]
  %v3242 = vld [vmem:[#allocation2 + $0x78] sm:$0xff]
  %v3243 = vld [vmem:[#allocation2 + $0x80] sm:$0xff]
  %v3244 = vld [vmem:[#allocation2 + $0x88] sm:$0xff]
  %v3245 = vld [vmem:[#allocation2 + $0x90] sm:$0xff]
  %v3246 = vld [vmem:[#allocation2 + $0x98] sm:$0xff]
  %v3247 = vld [vmem:[#allocation2 + $0xa0] sm:$0xff]
  %v3248 = vld [vmem:[#allocation2 + $0xa8] sm:$0xff]
  %v3249 = vld [vmem:[#allocation2 + $0xb0] sm:$0xff]
  %v3250 = vld [vmem:[#allocation2 + $0xb8] sm:$0xff]
  %v3251 = vld [vmem:[#allocation2 + $0xc0] sm:$0xff]
  %v3252 = vld [vmem:[#allocation2 + $0xc8] sm:$0xff]
  %v3253 = vld [vmem:[#allocation2 + $0xd0] sm:$0xff]
  %v3254 = vld [vmem:[#allocation2 + $0xd8] sm:$0xff]
  %v3255 = vld [vmem:[#allocation2 + $0xe0] sm:$0xff]
  %v3256 = vld [vmem:[#allocation2 + $0xe8] sm:$0xff]
  %v3257 = vld [vmem:[#allocation2 + $0xf0] sm:$0xff]
  %v3258 = vld [vmem:[#allocation2 + $0xf8] sm:$0xff]
  %v3259 = vld [vmem:[#allocation2 + $0x100] sm:$0xff]
  %v3260 = vld [vmem:[#allocation2 + $0x108] sm:$0xff]
  %v3261 = vld [vmem:[#allocation2 + $0x110] sm:$0xff]
  %v3262 = vld [vmem:[#allocation2 + $0x118] sm:$0xff]
  %v3263 = vld [vmem:[#allocation2 + $0x120] sm:$0xff]
  %v3264 = vld [vmem:[#allocation2 + $0x128] sm:$0xff]
  %v3265 = vld [vmem:[#allocation2 + $0x130] sm:$0xff]
  %v3266 = vld [vmem:[#allocation2 + $0x138] sm:$0xff]
  %v3267 = vld [vmem:[#allocation2 + $0x140] sm:$0xff]
  %v3268 = vld [vmem:[#allocation2 + $0x148] sm:$0xff]
  %v3269 = vld [vmem:[#allocation2 + $0x150] sm:$0xff]
  %v3270 = vld [vmem:[#allocation2 + $0x158] sm:$0xff]
  %v3271 = vld [vmem:[#allocation2 + $0x160] sm:$0xff]
  %v3272 = vld [vmem:[#allocation2 + $0x168] sm:$0xff]
  %v3273 = vld [vmem:[#allocation2 + $0x170] sm:$0xff]
  %v3274 = vld [vmem:[#allocation2 + $0x178] sm:$0xff]
  %v3275 = vld [vmem:[#allocation2 + $0x180] sm:$0xff]
  %v3276 = vld [vmem:[#allocation2 + $0x188] sm:$0xff]
  %v3277 = vld [vmem:[#allocation2 + $0x190] sm:$0xff]
  %v3278 = vld [vmem:[#allocation2 + $0x198] sm:$0xff]
  %v3279 = vld [vmem:[#allocation2 + $0x1a0] sm:$0xff]
  %v3280 = vld [vmem:[#allocation2 + $0x1a8] sm:$0xff]
  %v3281 = vld [vmem:[#allocation2 + $0x1b0] sm:$0xff]
  %v3282 = vld [vmem:[#allocation2 + $0x1b8] sm:$0xff]
  %v3283 = vld [vmem:[#allocation2 + $0x1c0] sm:$0xff]
  %v3284 = vld [vmem:[#allocation2 + $0x1c8] sm:$0xff]
  %v3285 = vld [vmem:[#allocation2 + $0x1d0] sm:$0xff]
  %v3286 = vld [vmem:[#allocation2 + $0x1d8] sm:$0xff]
  %v3287 = vld [vmem:[#allocation2 + $0x1e0] sm:$0xff]
  %v3288 = vld [vmem:[#allocation2 + $0x1e8] sm:$0xff]
  %v3289 = vld [vmem:[#allocation2 + $0x1f0] sm:$0xff]
  %v3290 = vld [vmem:[#allocation2 + $0x1f8] sm:$0xff]
  %v3291 = vld [vmem:[%s1] sm:$0xff]
  %v3292 = vld [vmem:[%s1 + $0x8] sm:$0xff]
  %v3293 = vld [vmem:[%s1 + $0x10] sm:$0xff]
  %v3294 = vld [vmem:[%s1 + $0x18] sm:$0xff]
  %v3295 = vld [vmem:[%s1 + $0x20] sm:$0xf]
  %v3296 = vld [vmem:[%s2] sm:$0x1]
  %v3298 = vlaneseq
  %v3299 = vshrl.u32 %v3298, 7
  %v3300 = vsub.s32 0, %v3299
  %v3301 = vrot.slane %v3296, %v3300
  %vm3303 = vcmask 293888
  %v3305 = vsel %vm3303, %v3227, 0
  %v3308 = vsel %vm3303, %v3228, 0
  %v3311 = vsel %vm3303, %v3229, 0
  %v3314 = vsel %vm3303, %v3230, 0
  %v3317 = vsel %vm3303, %v3231, 0
  %v3320 = vsel %vm3303, %v3232, 0
  %v3323 = vsel %vm3303, %v3233, 0
  %v3326 = vsel %vm3303, %v3234, 0
  %v3329 = vsel %vm3303, %v3235, 0
  %v3332 = vsel %vm3303, %v3236, 0
  %v3335 = vsel %vm3303, %v3237, 0
  %v3338 = vsel %vm3303, %v3238, 0
  %v3341 = vsel %vm3303, %v3239, 0
  %v3344 = vsel %vm3303, %v3240, 0
  %v3347 = vsel %vm3303, %v3241, 0
  %v3350 = vsel %vm3303, %v3242, 0
  %v3353 = vsel %vm3303, %v3243, 0
  %v3356 = vsel %vm3303, %v3244, 0
  %v3359 = vsel %vm3303, %v3245, 0
  %v3362 = vsel %vm3303, %v3246, 0
  %v3365 = vsel %vm3303, %v3247, 0
  %v3368 = vsel %vm3303, %v3248, 0
  %v3371 = vsel %vm3303, %v3249, 0
  %v3374 = vsel %vm3303, %v3250, 0
  %v3377 = vsel %vm3303, %v3251, 0
  %v3380 = vsel %vm3303, %v3252, 0
  %v3383 = vsel %vm3303, %v3253, 0
  %v3386 = vsel %vm3303, %v3254, 0
  %v3389 = vsel %vm3303, %v3255, 0
  %v3392 = vsel %vm3303, %v3256, 0
  %v3395 = vsel %vm3303, %v3257, 0
  %v3398 = vsel %vm3303, %v3258, 0
  %v3401 = vsel %vm3303, %v3259, 0
  %v3404 = vsel %vm3303, %v3260, 0
  %v3407 = vsel %vm3303, %v3261, 0
  %v3410 = vsel %vm3303, %v3262, 0
  %v3413 = vsel %vm3303, %v3263, 0
  %v3416 = vsel %vm3303, %v3264, 0
  %v3419 = vsel %vm3303, %v3265, 0
  %v3422 = vsel %vm3303, %v3266, 0
  %v3425 = vsel %vm3303, %v3267, 0
  %v3428 = vsel %vm3303, %v3268, 0
  %v3431 = vsel %vm3303, %v3269, 0
  %v3434 = vsel %vm3303, %v3270, 0
  %v3437 = vsel %vm3303, %v3271, 0
  %v3440 = vsel %vm3303, %v3272, 0
  %v3443 = vsel %vm3303, %v3273, 0
  %v3446 = vsel %vm3303, %v3274, 0
  %v3449 = vsel %vm3303, %v3275, 0
  %v3452 = vsel %vm3303, %v3276, 0
  %v3455 = vsel %vm3303, %v3277, 0
  %v3458 = vsel %vm3303, %v3278, 0
  %v3461 = vsel %vm3303, %v3279, 0
  %v3464 = vsel %vm3303, %v3280, 0
  %v3467 = vsel %vm3303, %v3281, 0
  %v3470 = vsel %vm3303, %v3282, 0
  %v3473 = vsel %vm3303, %v3283, 0
  %v3476 = vsel %vm3303, %v3284, 0
  %v3479 = vsel %vm3303, %v3285, 0
  %v3482 = vsel %vm3303, %v3286, 0
  %v3485 = vsel %vm3303, %v3287, 0
  %v3488 = vsel %vm3303, %v3288, 0
  %v3491 = vsel %vm3303, %v3289, 0
  %v3494 = vsel %vm3303, %v3290, 0
  %vm3496 = vcmask 1043456
  %v3498 = vsel %vm3496, %v3295, 0
  %3500 = vmatprep.subr.mxu0 0.0
  %3501 = vmatpush1.msra.mxu0 0.0
  %3502 = vmatprep.subr.mxu0 0.0
  %3503 = vmatpush1.msra.mxu0 0.0
  %3504 = vmatprep.subr.mxu0 0.0
  %3505 = vmatpush1.msra.mxu0 0.0
  %3506 = vmatprep.subr.mxu0 0.0
  %3507 = vmatpush1.msra.mxu0 0.0
  %3508 = vmatprep.subr.mxu0 0.0
  %3509 = vmatpush1.msra.mxu0 0.0
  %3510 = vmatprep.subr.mxu0 0.0
  %3511 = vmatpush1.msra.mxu0 0.0
  %3512 = vmatprep.subr.mxu0 0.0
  %3513 = vmatpush1.msra.mxu0 0.0
  %3514 = vmatprep.subr.mxu0 0.0
  %3515 = vmatpush1.msra.mxu0 0.0
  %3516 = vmatprep.subr.mxu0 0.0
  %3517 = vmatpush1.msra.mxu0 0.0
  %3518 = vmatprep.subr.mxu0 0.0
  %3519 = vmatpush1.msra.mxu0 0.0
  %3520 = vmatprep.subr.mxu0 0.0
  %3521 = vmatpush1.msra.mxu0 0.0
  %3522 = vmatprep.subr.mxu0 0.0
  %3523 = vmatpush1.msra.mxu0 %v3498
  %3524 = vmatprep.subr.mxu0 0.0
  %3525 = vmatpush1.msra.mxu0 %v3294
  %3526 = vmatprep.subr.mxu0 0.0
  %3527 = vmatpush1.msra.mxu0 %v3293
  %3528 = vmatprep.subr.mxu0 0.0
  %3529 = vmatpush1.msra.mxu0 %v3292
  %3530 = vmatprep.subr.mxu0 0.0
  %3531 = vmatpush1.msra.mxu0 %v3291
  %3532 = vmatprep.subr.mxu0 0.0
  %3533 = vmatpush2.msra.mxu0 0.0
  %3534 = vmatprep.subr.mxu0 0.0
  %3535 = vmatpush2.msra.mxu0 0.0
  %3536 = vmatprep.subr.mxu0 0.0
  %3537 = vmatpush2.msra.mxu0 0.0
  %3538 = vmatprep.subr.mxu0 0.0
  %3539 = vmatpush2.msra.mxu0 0.0
  %3540 = vmatprep.subr.mxu0 0.0
  %3541 = vmatpush2.msra.mxu0 0.0
  %3542 = vmatprep.subr.mxu0 0.0
  %3543 = vmatpush2.msra.mxu0 0.0
  %3544 = vmatprep.subr.mxu0 0.0
  %3545 = vmatpush2.msra.mxu0 0.0
  %3546 = vmatprep.subr.mxu0 0.0
  %3547 = vmatpush2.msra.mxu0 0.0
  %3548 = vmatprep.subr.mxu0 0.0
  %3549 = vmatpush2.msra.mxu0 0.0
  %3550 = vmatprep.subr.mxu0 0.0
  %3551 = vmatpush2.msra.mxu0 0.0
  %3552 = vmatprep.subr.mxu0 0.0
  %3553 = vmatpush2.msra.mxu0 0.0
  %3554 = vmatprep.subr.mxu0 0.0
  %3555 = vmatpush2.msra.mxu0 0.0
  %3556 = vmatprep.subr.mxu0 0.0
  %3557 = vmatpush2.msra.mxu0 0.0
  %3558 = vmatprep.subr.mxu0 0.0
  %3559 = vmatpush2.msra.mxu0 0.0
  %3560 = vmatprep.subr.mxu0 0.0
  %3561 = vmatpush2.msra.mxu0 0.0
  %3562 = vmatprep.subr.mxu0 0.0
  %3563 = vmatpush2.msra.mxu0 0.0
  %3564 = vmatprep.mubr.f32.mxu0 0.0
  %3565 = vmatmul.mubr.f32.gmra.mxu0 %v3305
  %v3566 = vpop.f32.mrf.mxu0
  %v3567 = vadd.f32 %v3301, %v3566
  %v3568 = vpop.f32.mrf.mxu0
  %3569 = vmatprep.mubr.f32.mxu0 0.0
  %3570 = vmatmul.mubr.f32.gmra.mxu0 %v3308
  %v3571 = vpop.f32.mrf.mxu0
  %v3572 = vadd.f32 %v3301, %v3571
  %v3573 = vpop.f32.mrf.mxu0
  %3574 = vmatprep.mubr.f32.mxu0 0.0
  %3575 = vmatmul.mubr.f32.gmra.mxu0 %v3311
  %v3576 = vpop.f32.mrf.mxu0
  %v3577 = vadd.f32 %v3301, %v3576
  %v3578 = vpop.f32.mrf.mxu0
  %3579 = vmatprep.mubr.f32.mxu0 0.0
  %3580 = vmatmul.mubr.f32.gmra.mxu0 %v3314
  %v3581 = vpop.f32.mrf.mxu0
  %v3582 = vadd.f32 %v3301, %v3581
  %v3583 = vpop.f32.mrf.mxu0
  %3584 = vmatprep.mubr.f32.mxu0 0.0
  %3585 = vmatmul.mubr.f32.gmra.mxu0 %v3317
  %v3586 = vpop.f32.mrf.mxu0
  %v3587 = vadd.f32 %v3301, %v3586
  %v3588 = vpop.f32.mrf.mxu0
  %3589 = vmatprep.mubr.f32.mxu0 0.0
  %3590 = vmatmul.mubr.f32.gmra.mxu0 %v3320
  %v3591 = vpop.f32.mrf.mxu0
  %v3592 = vadd.f32 %v3301, %v3591
  %v3593 = vpop.f32.mrf.mxu0
  %3594 = vmatprep.mubr.f32.mxu0 0.0
  %3595 = vmatmul.mubr.f32.gmra.mxu0 %v3323
  %v3596 = vpop.f32.mrf.mxu0
  %v3597 = vadd.f32 %v3301, %v3596
  %v3598 = vpop.f32.mrf.mxu0
  %3599 = vmatprep.mubr.f32.mxu0 0.0
  %3600 = vmatmul.mubr.f32.gmra.mxu0 %v3326
  %v3601 = vpop.f32.mrf.mxu0
  %v3602 = vadd.f32 %v3301, %v3601
  %v3603 = vpop.f32.mrf.mxu0
  %3604 = vmatprep.mubr.f32.mxu0 0.0
  %3605 = vmatmul.mubr.f32.gmra.mxu0 %v3329
  %v3606 = vpop.f32.mrf.mxu0
  %v3607 = vadd.f32 %v3301, %v3606
  %v3608 = vpop.f32.mrf.mxu0
  %3609 = vmatprep.mubr.f32.mxu0 0.0
  %3610 = vmatmul.mubr.f32.gmra.mxu0 %v3332
  %v3611 = vpop.f32.mrf.mxu0
  %v3612 = vadd.f32 %v3301, %v3611
  %v3613 = vpop.f32.mrf.mxu0
  %3614 = vmatprep.mubr.f32.mxu0 0.0
  %3615 = vmatmul.mubr.f32.gmra.mxu0 %v3335
  %v3616 = vpop.f32.mrf.mxu0
  %v3617 = vadd.f32 %v3301, %v3616
  %v3618 = vpop.f32.mrf.mxu0
  %3619 = vmatprep.mubr.f32.mxu0 0.0
  %3620 = vmatmul.mubr.f32.gmra.mxu0 %v3338
  %v3621 = vpop.f32.mrf.mxu0
  %v3622 = vadd.f32 %v3301, %v3621
  %v3623 = vpop.f32.mrf.mxu0
  %3624 = vmatprep.mubr.f32.mxu0 0.0
  %3625 = vmatmul.mubr.f32.gmra.mxu0 %v3341
  %v3626 = vpop.f32.mrf.mxu0
  %v3627 = vadd.f32 %v3301, %v3626
  %v3628 = vpop.f32.mrf.mxu0
  %3629 = vmatprep.mubr.f32.mxu0 0.0
  %3630 = vmatmul.mubr.f32.gmra.mxu0 %v3344
  %v3631 = vpop.f32.mrf.mxu0
  %v3632 = vadd.f32 %v3301, %v3631
  %v3633 = vpop.f32.mrf.mxu0
  %3634 = vmatprep.mubr.f32.mxu0 0.0
  %3635 = vmatmul.mubr.f32.gmra.mxu0 %v3347
  %v3636 = vpop.f32.mrf.mxu0
  %v3637 = vadd.f32 %v3301, %v3636
  %v3638 = vpop.f32.mrf.mxu0
  %3639 = vmatprep.mubr.f32.mxu0 0.0
  %3640 = vmatmul.mubr.f32.gmra.mxu0 %v3350
  %v3641 = vpop.f32.mrf.mxu0
  %v3642 = vadd.f32 %v3301, %v3641
  %v3643 = vpop.f32.mrf.mxu0
  %3644 = vmatprep.mubr.f32.mxu0 0.0
  %3645 = vmatmul.mubr.f32.gmra.mxu0 %v3353
  %v3646 = vpop.f32.mrf.mxu0
  %v3647 = vadd.f32 %v3301, %v3646
  %v3648 = vpop.f32.mrf.mxu0
  %3649 = vmatprep.mubr.f32.mxu0 0.0
  %3650 = vmatmul.mubr.f32.gmra.mxu0 %v3356
  %v3651 = vpop.f32.mrf.mxu0
  %v3652 = vadd.f32 %v3301, %v3651
  %v3653 = vpop.f32.mrf.mxu0
  %3654 = vmatprep.mubr.f32.mxu0 0.0
  %3655 = vmatmul.mubr.f32.gmra.mxu0 %v3359
  %v3656 = vpop.f32.mrf.mxu0
  %v3657 = vadd.f32 %v3301, %v3656
  %v3658 = vpop.f32.mrf.mxu0
  %3659 = vmatprep.mubr.f32.mxu0 0.0
  %3660 = vmatmul.mubr.f32.gmra.mxu0 %v3362
  %v3661 = vpop.f32.mrf.mxu0
  %v3662 = vadd.f32 %v3301, %v3661
  %v3663 = vpop.f32.mrf.mxu0
  %3664 = vmatprep.mubr.f32.mxu0 0.0
  %3665 = vmatmul.mubr.f32.gmra.mxu0 %v3365
  %v3666 = vpop.f32.mrf.mxu0
  %v3667 = vadd.f32 %v3301, %v3666
  %v3668 = vpop.f32.mrf.mxu0
  %3669 = vmatprep.mubr.f32.mxu0 0.0
  %3670 = vmatmul.mubr.f32.gmra.mxu0 %v3368
  %v3671 = vpop.f32.mrf.mxu0
  %v3672 = vadd.f32 %v3301, %v3671
  %v3673 = vpop.f32.mrf.mxu0
  %3674 = vmatprep.mubr.f32.mxu0 0.0
  %3675 = vmatmul.mubr.f32.gmra.mxu0 %v3371
  %v3676 = vpop.f32.mrf.mxu0
  %v3677 = vadd.f32 %v3301, %v3676
  %v3678 = vpop.f32.mrf.mxu0
  %3679 = vmatprep.mubr.f32.mxu0 0.0
  %3680 = vmatmul.mubr.f32.gmra.mxu0 %v3374
  %v3681 = vpop.f32.mrf.mxu0
  %v3682 = vadd.f32 %v3301, %v3681
  %v3683 = vpop.f32.mrf.mxu0
  %3684 = vmatprep.mubr.f32.mxu0 0.0
  %3685 = vmatmul.mubr.f32.gmra.mxu0 %v3377
  %v3686 = vpop.f32.mrf.mxu0
  %v3687 = vadd.f32 %v3301, %v3686
  %v3688 = vpop.f32.mrf.mxu0
  %3689 = vmatprep.mubr.f32.mxu0 0.0
  %3690 = vmatmul.mubr.f32.gmra.mxu0 %v3380
  %v3691 = vpop.f32.mrf.mxu0
  %v3692 = vadd.f32 %v3301, %v3691
  %v3693 = vpop.f32.mrf.mxu0
  %3694 = vmatprep.mubr.f32.mxu0 0.0
  %3695 = vmatmul.mubr.f32.gmra.mxu0 %v3383
  %v3696 = vpop.f32.mrf.mxu0
  %v3697 = vadd.f32 %v3301, %v3696
  %v3698 = vpop.f32.mrf.mxu0
  %3699 = vmatprep.mubr.f32.mxu0 0.0
  %3700 = vmatmul.mubr.f32.gmra.mxu0 %v3386
  %v3701 = vpop.f32.mrf.mxu0
  %v3702 = vadd.f32 %v3301, %v3701
  %v3703 = vpop.f32.mrf.mxu0
  %3704 = vmatprep.mubr.f32.mxu0 0.0
  %3705 = vmatmul.mubr.f32.gmra.mxu0 %v3389
  %v3706 = vpop.f32.mrf.mxu0
  %v3707 = vadd.f32 %v3301, %v3706
  %v3708 = vpop.f32.mrf.mxu0
  %3709 = vmatprep.mubr.f32.mxu0 0.0
  %3710 = vmatmul.mubr.f32.gmra.mxu0 %v3392
  %v3711 = vpop.f32.mrf.mxu0
  %v3712 = vadd.f32 %v3301, %v3711
  %v3713 = vpop.f32.mrf.mxu0
  %3714 = vmatprep.mubr.f32.mxu0 0.0
  %3715 = vmatmul.mubr.f32.gmra.mxu0 %v3395
  %v3716 = vpop.f32.mrf.mxu0
  %v3717 = vadd.f32 %v3301, %v3716
  %v3718 = vpop.f32.mrf.mxu0
  %3719 = vmatprep.mubr.f32.mxu0 0.0
  %3720 = vmatmul.mubr.f32.gmra.mxu0 %v3398
  %v3721 = vpop.f32.mrf.mxu0
  %v3722 = vadd.f32 %v3301, %v3721
  %v3723 = vpop.f32.mrf.mxu0
  %3724 = vmatprep.mubr.f32.mxu0 0.0
  %3725 = vmatmul.mubr.f32.gmra.mxu0 %v3401
  %v3726 = vpop.f32.mrf.mxu0
  %v3727 = vadd.f32 %v3301, %v3726
  %v3728 = vpop.f32.mrf.mxu0
  %3729 = vmatprep.mubr.f32.mxu0 0.0
  %3730 = vmatmul.mubr.f32.gmra.mxu0 %v3404
  %v3731 = vpop.f32.mrf.mxu0
  %v3732 = vadd.f32 %v3301, %v3731
  %v3733 = vpop.f32.mrf.mxu0
  %3734 = vmatprep.mubr.f32.mxu0 0.0
  %3735 = vmatmul.mubr.f32.gmra.mxu0 %v3407
  %v3736 = vpop.f32.mrf.mxu0
  %v3737 = vadd.f32 %v3301, %v3736
  %v3738 = vpop.f32.mrf.mxu0
  %3739 = vmatprep.mubr.f32.mxu0 0.0
  %3740 = vmatmul.mubr.f32.gmra.mxu0 %v3410
  %v3741 = vpop.f32.mrf.mxu0
  %v3742 = vadd.f32 %v3301, %v3741
  %v3743 = vpop.f32.mrf.mxu0
  %3744 = vmatprep.mubr.f32.mxu0 0.0
  %3745 = vmatmul.mubr.f32.gmra.mxu0 %v3413
  %v3746 = vpop.f32.mrf.mxu0
  %v3747 = vadd.f32 %v3301, %v3746
  %v3748 = vpop.f32.mrf.mxu0
  %3749 = vmatprep.mubr.f32.mxu0 0.0
  %3750 = vmatmul.mubr.f32.gmra.mxu0 %v3416
  %v3751 = vpop.f32.mrf.mxu0
  %v3752 = vadd.f32 %v3301, %v3751
  %v3753 = vpop.f32.mrf.mxu0
  %3754 = vmatprep.mubr.f32.mxu0 0.0
  %3755 = vmatmul.mubr.f32.gmra.mxu0 %v3419
  %v3756 = vpop.f32.mrf.mxu0
  %v3757 = vadd.f32 %v3301, %v3756
  %v3758 = vpop.f32.mrf.mxu0
  %3759 = vmatprep.mubr.f32.mxu0 0.0
  %3760 = vmatmul.mubr.f32.gmra.mxu0 %v3422
  %v3761 = vpop.f32.mrf.mxu0
  %v3762 = vadd.f32 %v3301, %v3761
  %v3763 = vpop.f32.mrf.mxu0
  %3764 = vmatprep.mubr.f32.mxu0 0.0
  %3765 = vmatmul.mubr.f32.gmra.mxu0 %v3425
  %v3766 = vpop.f32.mrf.mxu0
  %v3767 = vadd.f32 %v3301, %v3766
  %v3768 = vpop.f32.mrf.mxu0
  %3769 = vmatprep.mubr.f32.mxu0 0.0
  %3770 = vmatmul.mubr.f32.gmra.mxu0 %v3428
  %v3771 = vpop.f32.mrf.mxu0
  %v3772 = vadd.f32 %v3301, %v3771
  %v3773 = vpop.f32.mrf.mxu0
  %3774 = vmatprep.mubr.f32.mxu0 0.0
  %3775 = vmatmul.mubr.f32.gmra.mxu0 %v3431
  %v3776 = vpop.f32.mrf.mxu0
  %v3777 = vadd.f32 %v3301, %v3776
  %v3778 = vpop.f32.mrf.mxu0
  %3779 = vmatprep.mubr.f32.mxu0 0.0
  %3780 = vmatmul.mubr.f32.gmra.mxu0 %v3434
  %v3781 = vpop.f32.mrf.mxu0
  %v3782 = vadd.f32 %v3301, %v3781
  %v3783 = vpop.f32.mrf.mxu0
  %3784 = vmatprep.mubr.f32.mxu0 0.0
  %3785 = vmatmul.mubr.f32.gmra.mxu0 %v3437
  %v3786 = vpop.f32.mrf.mxu0
  %v3787 = vadd.f32 %v3301, %v3786
  %v3788 = vpop.f32.mrf.mxu0
  %3789 = vmatprep.mubr.f32.mxu0 0.0
  %3790 = vmatmul.mubr.f32.gmra.mxu0 %v3440
  %v3791 = vpop.f32.mrf.mxu0
  %v3792 = vadd.f32 %v3301, %v3791
  %v3793 = vpop.f32.mrf.mxu0
  %3794 = vmatprep.mubr.f32.mxu0 0.0
  %3795 = vmatmul.mubr.f32.gmra.mxu0 %v3443
  %v3796 = vpop.f32.mrf.mxu0
  %v3797 = vadd.f32 %v3301, %v3796
  %v3798 = vpop.f32.mrf.mxu0
  %3799 = vmatprep.mubr.f32.mxu0 0.0
  %3800 = vmatmul.mubr.f32.gmra.mxu0 %v3446
  %v3801 = vpop.f32.mrf.mxu0
  %v3802 = vadd.f32 %v3301, %v3801
  %v3803 = vpop.f32.mrf.mxu0
  %3804 = vmatprep.mubr.f32.mxu0 0.0
  %3805 = vmatmul.mubr.f32.gmra.mxu0 %v3449
  %v3806 = vpop.f32.mrf.mxu0
  %v3807 = vadd.f32 %v3301, %v3806
  %v3808 = vpop.f32.mrf.mxu0
  %3809 = vmatprep.mubr.f32.mxu0 0.0
  %3810 = vmatmul.mubr.f32.gmra.mxu0 %v3452
  %v3811 = vpop.f32.mrf.mxu0
  %v3812 = vadd.f32 %v3301, %v3811
  %v3813 = vpop.f32.mrf.mxu0
  %3814 = vmatprep.mubr.f32.mxu0 0.0
  %3815 = vmatmul.mubr.f32.gmra.mxu0 %v3455
  %v3816 = vpop.f32.mrf.mxu0
  %v3817 = vadd.f32 %v3301, %v3816
  %v3818 = vpop.f32.mrf.mxu0
  %3819 = vmatprep.mubr.f32.mxu0 0.0
  %3820 = vmatmul.mubr.f32.gmra.mxu0 %v3458
  %v3821 = vpop.f32.mrf.mxu0
  %v3822 = vadd.f32 %v3301, %v3821
  %v3823 = vpop.f32.mrf.mxu0
  %3824 = vmatprep.mubr.f32.mxu0 0.0
  %3825 = vmatmul.mubr.f32.gmra.mxu0 %v3461
  %v3826 = vpop.f32.mrf.mxu0
  %v3827 = vadd.f32 %v3301, %v3826
  %v3828 = vpop.f32.mrf.mxu0
  %3829 = vmatprep.mubr.f32.mxu0 0.0
  %3830 = vmatmul.mubr.f32.gmra.mxu0 %v3464
  %v3831 = vpop.f32.mrf.mxu0
  %v3832 = vadd.f32 %v3301, %v3831
  %v3833 = vpop.f32.mrf.mxu0
  %3834 = vmatprep.mubr.f32.mxu0 0.0
  %3835 = vmatmul.mubr.f32.gmra.mxu0 %v3467
  %v3836 = vpop.f32.mrf.mxu0
  %v3837 = vadd.f32 %v3301, %v3836
  %v3838 = vpop.f32.mrf.mxu0
  %3839 = vmatprep.mubr.f32.mxu0 0.0
  %3840 = vmatmul.mubr.f32.gmra.mxu0 %v3470
  %v3841 = vpop.f32.mrf.mxu0
  %v3842 = vadd.f32 %v3301, %v3841
  %v3843 = vpop.f32.mrf.mxu0
  %3844 = vmatprep.mubr.f32.mxu0 0.0
  %3845 = vmatmul.mubr.f32.gmra.mxu0 %v3473
  %v3846 = vpop.f32.mrf.mxu0
  %v3847 = vadd.f32 %v3301, %v3846
  %v3848 = vpop.f32.mrf.mxu0
  %3849 = vmatprep.mubr.f32.mxu0 0.0
  %3850 = vmatmul.mubr.f32.gmra.mxu0 %v3476
  %v3851 = vpop.f32.mrf.mxu0
  %v3852 = vadd.f32 %v3301, %v3851
  %v3853 = vpop.f32.mrf.mxu0
  %3854 = vmatprep.mubr.f32.mxu0 0.0
  %3855 = vmatmul.mubr.f32.gmra.mxu0 %v3479
  %v3856 = vpop.f32.mrf.mxu0
  %v3857 = vadd.f32 %v3301, %v3856
  %v3858 = vpop.f32.mrf.mxu0
  %3859 = vmatprep.mubr.f32.mxu0 0.0
  %3860 = vmatmul.mubr.f32.gmra.mxu0 %v3482
  %v3861 = vpop.f32.mrf.mxu0
  %v3862 = vadd.f32 %v3301, %v3861
  %v3863 = vpop.f32.mrf.mxu0
  %3864 = vmatprep.mubr.f32.mxu0 0.0
  %3865 = vmatmul.mubr.f32.gmra.mxu0 %v3485
  %v3866 = vpop.f32.mrf.mxu0
  %v3867 = vadd.f32 %v3301, %v3866
  %v3868 = vpop.f32.mrf.mxu0
  %3869 = vmatprep.mubr.f32.mxu0 0.0
  %3870 = vmatmul.mubr.f32.gmra.mxu0 %v3488
  %v3871 = vpop.f32.mrf.mxu0
  %v3872 = vadd.f32 %v3301, %v3871
  %v3873 = vpop.f32.mrf.mxu0
  %3874 = vmatprep.mubr.f32.mxu0 0.0
  %3875 = vmatmul.mubr.f32.gmra.mxu0 %v3491
  %v3876 = vpop.f32.mrf.mxu0
  %v3877 = vadd.f32 %v3301, %v3876
  %v3878 = vpop.f32.mrf.mxu0
  %3879 = vmatprep.mubr.f32.mxu0 0.0
  %3880 = vmatmul.mubr.f32.gmra.mxu0 %v3494
  %v3881 = vpop.f32.mrf.mxu0
  %v3882 = vadd.f32 %v3301, %v3881
  %v3883 = vpop.f32.mrf.mxu0
  %3884 = vdwg.mxu0
  %3885 = vst [vmem:[%s3] sm:$0xff] %v3567
  %3886 = vst [vmem:[%s3 + $0x8] sm:$0xff] %v3572
  %3887 = vst [vmem:[%s3 + $0x10] sm:$0xff] %v3577
  %3888 = vst [vmem:[%s3 + $0x18] sm:$0xff] %v3582
  %3889 = vst [vmem:[%s3 + $0x20] sm:$0xff] %v3587
  %3890 = vst [vmem:[%s3 + $0x28] sm:$0xff] %v3592
  %3891 = vst [vmem:[%s3 + $0x30] sm:$0xff] %v3597
  %3892 = vst [vmem:[%s3 + $0x38] sm:$0xff] %v3602
  %3893 = vst [vmem:[%s3 + $0x40] sm:$0xff] %v3607
  %3894 = vst [vmem:[%s3 + $0x48] sm:$0xff] %v3612
  %3895 = vst [vmem:[%s3 + $0x50] sm:$0xff] %v3617
  %3896 = vst [vmem:[%s3 + $0x58] sm:$0xff] %v3622
  %3897 = vst [vmem:[%s3 + $0x60] sm:$0xff] %v3627
  %3898 = vst [vmem:[%s3 + $0x68] sm:$0xff] %v3632
  %3899 = vst [vmem:[%s3 + $0x70] sm:$0xff] %v3637
  %3900 = vst [vmem:[%s3 + $0x78] sm:$0xff] %v3642
  %3901 = vst [vmem:[%s3 + $0x80] sm:$0xff] %v3647
  %3902 = vst [vmem:[%s3 + $0x88] sm:$0xff] %v3652
  %3903 = vst [vmem:[%s3 + $0x90] sm:$0xff] %v3657
  %3904 = vst [vmem:[%s3 + $0x98] sm:$0xff] %v3662
  %3905 = vst [vmem:[%s3 + $0xa0] sm:$0xff] %v3667
  %3906 = vst [vmem:[%s3 + $0xa8] sm:$0xff] %v3672
  %3907 = vst [vmem:[%s3 + $0xb0] sm:$0xff] %v3677
  %3908 = vst [vmem:[%s3 + $0xb8] sm:$0xff] %v3682
  %3909 = vst [vmem:[%s3 + $0xc0] sm:$0xff] %v3687
  %3910 = vst [vmem:[%s3 + $0xc8] sm:$0xff] %v3692
  %3911 = vst [vmem:[%s3 + $0xd0] sm:$0xff] %v3697
  %3912 = vst [vmem:[%s3 + $0xd8] sm:$0xff] %v3702
  %3913 = vst [vmem:[%s3 + $0xe0] sm:$0xff] %v3707
  %3914 = vst [vmem:[%s3 + $0xe8] sm:$0xff] %v3712
  %3915 = vst [vmem:[%s3 + $0xf0] sm:$0xff] %v3717
  %3916 = vst [vmem:[%s3 + $0xf8] sm:$0xff] %v3722
  %3917 = vst [vmem:[%s3 + $0x100] sm:$0xff] %v3727
  %3918 = vst [vmem:[%s3 + $0x108] sm:$0xff] %v3732
  %3919 = vst [vmem:[%s3 + $0x110] sm:$0xff] %v3737
  %3920 = vst [vmem:[%s3 + $0x118] sm:$0xff] %v3742
  %3921 = vst [vmem:[%s3 + $0x120] sm:$0xff] %v3747
  %3922 = vst [vmem:[%s3 + $0x128] sm:$0xff] %v3752
  %3923 = vst [vmem:[%s3 + $0x130] sm:$0xff] %v3757
  %3924 = vst [vmem:[%s3 + $0x138] sm:$0xff] %v3762
  %3925 = vst [vmem:[%s3 + $0x140] sm:$0xff] %v3767
  %3926 = vst [vmem:[%s3 + $0x148] sm:$0xff] %v3772
  %3927 = vst [vmem:[%s3 + $0x150] sm:$0xff] %v3777
  %3928 = vst [vmem:[%s3 + $0x158] sm:$0xff] %v3782
  %3929 = vst [vmem:[%s3 + $0x160] sm:$0xff] %v3787
  %3930 = vst [vmem:[%s3 + $0x168] sm:$0xff] %v3792
  %3931 = vst [vmem:[%s3 + $0x170] sm:$0xff] %v3797
  %3932 = vst [vmem:[%s3 + $0x178] sm:$0xff] %v3802
  %3933 = vst [vmem:[%s3 + $0x180] sm:$0xff] %v3807
  %3934 = vst [vmem:[%s3 + $0x188] sm:$0xff] %v3812
  %3935 = vst [vmem:[%s3 + $0x190] sm:$0xff] %v3817
  %3936 = vst [vmem:[%s3 + $0x198] sm:$0xff] %v3822
  %3937 = vst [vmem:[%s3 + $0x1a0] sm:$0xff] %v3827
  %3938 = vst [vmem:[%s3 + $0x1a8] sm:$0xff] %v3832
  %3939 = vst [vmem:[%s3 + $0x1b0] sm:$0xff] %v3837
  %3940 = vst [vmem:[%s3 + $0x1b8] sm:$0xff] %v3842
  %3941 = vst [vmem:[%s3 + $0x1c0] sm:$0xff] %v3847
  %3942 = vst [vmem:[%s3 + $0x1c8] sm:$0xff] %v3852
  %3943 = vst [vmem:[%s3 + $0x1d0] sm:$0xff] %v3857
  %3944 = vst [vmem:[%s3 + $0x1d8] sm:$0xff] %v3862
  %3945 = vst [vmem:[%s3 + $0x1e0] sm:$0xff] %v3867
  %3946 = vst [vmem:[%s3 + $0x1e8] sm:$0xff] %v3872
  %3947 = vst [vmem:[%s3 + $0x1f0] sm:$0xff] %v3877
  %3948 = vst [vmem:[%s3 + $0x1f8] sm:$0xff] %v3882
  %v3949 = vadd.f32 %v3567, %v3572
  %v3950 = vadd.f32 %v3949, %v3577
  %v3951 = vadd.f32 %v3950, %v3582
  %v3952 = vadd.f32 %v3951, %v3587
  %v3953 = vadd.f32 %v3952, %v3592
  %v3954 = vadd.f32 %v3953, %v3597
  %v3955 = vadd.f32 %v3954, %v3602
  %v3956 = vadd.f32 %v3955, %v3607
  %v3957 = vadd.f32 %v3956, %v3612
  %v3958 = vadd.f32 %v3957, %v3617
  %v3959 = vadd.f32 %v3958, %v3622
  %v3960 = vadd.f32 %v3959, %v3627
  %v3961 = vadd.f32 %v3960, %v3632
  %v3962 = vadd.f32 %v3961, %v3637
  %v3963 = vadd.f32 %v3962, %v3642
  %v3964 = vadd.f32 %v3963, %v3647
  %v3965 = vadd.f32 %v3964, %v3652
  %v3966 = vadd.f32 %v3965, %v3657
  %v3967 = vadd.f32 %v3966, %v3662
  %v3968 = vadd.f32 %v3967, %v3667
  %v3969 = vadd.f32 %v3968, %v3672
  %v3970 = vadd.f32 %v3969, %v3677
  %v3971 = vadd.f32 %v3970, %v3682
  %v3972 = vadd.f32 %v3971, %v3687
  %v3973 = vadd.f32 %v3972, %v3692
  %v3974 = vadd.f32 %v3973, %v3697
  %v3975 = vadd.f32 %v3974, %v3702
  %v3976 = vadd.f32 %v3975, %v3707
  %v3977 = vadd.f32 %v3976, %v3712
  %v3978 = vadd.f32 %v3977, %v3717
  %v3979 = vadd.f32 %v3978, %v3722
  %v3980 = vadd.f32 %v3979, %v3727
  %v3981 = vadd.f32 %v3980, %v3732
  %v3982 = vadd.f32 %v3981, %v3737
  %v3983 = vadd.f32 %v3982, %v3742
  %v3984 = vadd.f32 %v3983, %v3747
  %v3985 = vadd.f32 %v3984, %v3752
  %v3986 = vadd.f32 %v3985, %v3757
  %v3987 = vadd.f32 %v3986, %v3762
  %v3988 = vadd.f32 %v3987, %v3767
  %v3989 = vadd.f32 %v3988, %v3772
  %v3990 = vadd.f32 %v3989, %v3777
  %v3991 = vadd.f32 %v3990, %v3782
  %v3992 = vadd.f32 %v3991, %v3787
  %v3993 = vadd.f32 %v3992, %v3792
  %v3994 = vadd.f32 %v3993, %v3797
  %v3995 = vadd.f32 %v3994, %v3802
  %v3996 = vadd.f32 %v3995, %v3807
  %v3997 = vadd.f32 %v3996, %v3812
  %v3998 = vadd.f32 %v3997, %v3817
  %v3999 = vadd.f32 %v3998, %v3822
  %v4000 = vadd.f32 %v3999, %v3827
  %v4001 = vadd.f32 %v4000, %v3832
  %v4002 = vadd.f32 %v4001, %v3837
  %v4003 = vadd.f32 %v4002, %v3842
  %v4004 = vadd.f32 %v4003, %v3847
  %v4005 = vadd.f32 %v4004, %v3852
  %v4006 = vadd.f32 %v4005, %v3857
  %v4007 = vadd.f32 %v4006, %v3862
  %v4008 = vadd.f32 %v4007, %v3867
  %v4009 = vadd.f32 %v4008, %v3872
  %v4010 = vadd.f32 %v4009, %v3877
  %v4011 = vadd.f32 %v4010, %v3882
  %v4012 = vrot.slane %v4011, 4
  %v4013 = vadd.f32 %v4011, %v4012
  %v4014 = vrot.slane %v4013, 2
  %v4015 = vadd.f32 %v4013, %v4014
  %v4016 = vrot.slane %v4015, 1
  %v4017 = vadd.f32 %v4015, %v4016
  %4018 = vst [vmem:[%s4] sm:$0x1] %v4017
  %v4019 = vmul.f32 %v3567, %v3567
  %v4020 = vmul.f32 %v3572, %v3572
  %v4021 = vmul.f32 %v3577, %v3577
  %v4022 = vmul.f32 %v3582, %v3582
  %v4023 = vmul.f32 %v3587, %v3587
  %v4024 = vmul.f32 %v3592, %v3592
  %v4025 = vmul.f32 %v3597, %v3597
  %v4026 = vmul.f32 %v3602, %v3602
  %v4027 = vmul.f32 %v3607, %v3607
  %v4028 = vmul.f32 %v3612, %v3612
  %v4029 = vmul.f32 %v3617, %v3617
  %v4030 = vmul.f32 %v3622, %v3622
  %v4031 = vmul.f32 %v3627, %v3627
  %v4032 = vmul.f32 %v3632, %v3632
  %v4033 = vmul.f32 %v3637, %v3637
  %v4034 = vmul.f32 %v3642, %v3642
  %v4035 = vmul.f32 %v3647, %v3647
  %v4036 = vmul.f32 %v3652, %v3652
  %v4037 = vmul.f32 %v3657, %v3657
  %v4038 = vmul.f32 %v3662, %v3662
  %v4039 = vmul.f32 %v3667, %v3667
  %v4040 = vmul.f32 %v3672, %v3672
  %v4041 = vmul.f32 %v3677, %v3677
  %v4042 = vmul.f32 %v3682, %v3682
  %v4043 = vmul.f32 %v3687, %v3687
  %v4044 = vmul.f32 %v3692, %v3692
  %v4045 = vmul.f32 %v3697, %v3697
  %v4046 = vmul.f32 %v3702, %v3702
  %v4047 = vmul.f32 %v3707, %v3707
  %v4048 = vmul.f32 %v3712, %v3712
  %v4049 = vmul.f32 %v3717, %v3717
  %v4050 = vmul.f32 %v3722, %v3722
  %v4051 = vmul.f32 %v3727, %v3727
  %v4052 = vmul.f32 %v3732, %v3732
  %v4053 = vmul.f32 %v3737, %v3737
  %v4054 = vmul.f32 %v3742, %v3742
  %v4055 = vmul.f32 %v3747, %v3747
  %v4056 = vmul.f32 %v3752, %v3752
  %v4057 = vmul.f32 %v3757, %v3757
  %v4058 = vmul.f32 %v3762, %v3762
  %v4059 = vmul.f32 %v3767, %v3767
  %v4060 = vmul.f32 %v3772, %v3772
  %v4061 = vmul.f32 %v3777, %v3777
  %v4062 = vmul.f32 %v3782, %v3782
  %v4063 = vmul.f32 %v3787, %v3787
  %v4064 = vmul.f32 %v3792, %v3792
  %v4065 = vmul.f32 %v3797, %v3797
  %v4066 = vmul.f32 %v3802, %v3802
  %v4067 = vmul.f32 %v3807, %v3807
  %v4068 = vmul.f32 %v3812, %v3812
  %v4069 = vmul.f32 %v3817, %v3817
  %v4070 = vmul.f32 %v3822, %v3822
  %v4071 = vmul.f32 %v3827, %v3827
  %v4072 = vmul.f32 %v3832, %v3832
  %v4073 = vmul.f32 %v3837, %v3837
  %v4074 = vmul.f32 %v3842, %v3842
  %v4075 = vmul.f32 %v3847, %v3847
  %v4076 = vmul.f32 %v3852, %v3852
  %v4077 = vmul.f32 %v3857, %v3857
  %v4078 = vmul.f32 %v3862, %v3862
  %v4079 = vmul.f32 %v3867, %v3867
  %v4080 = vmul.f32 %v3872, %v3872
  %v4081 = vmul.f32 %v3877, %v3877
  %v4082 = vmul.f32 %v3882, %v3882
  %v4083 = vadd.f32 %v4019, %v4020
  %v4084 = vadd.f32 %v4083, %v4021
  %v4085 = vadd.f32 %v4084, %v4022
  %v4086 = vadd.f32 %v4085, %v4023
  %v4087 = vadd.f32 %v4086, %v4024
  %v4088 = vadd.f32 %v4087, %v4025
  %v4089 = vadd.f32 %v4088, %v4026
  %v4090 = vadd.f32 %v4089, %v4027
  %v4091 = vadd.f32 %v4090, %v4028
  %v4092 = vadd.f32 %v4091, %v4029
  %v4093 = vadd.f32 %v4092, %v4030
  %v4094 = vadd.f32 %v4093, %v4031
  %v4095 = vadd.f32 %v4094, %v4032
  %v4096 = vadd.f32 %v4095, %v4033
  %v4097 = vadd.f32 %v4096, %v4034
  %v4098 = vadd.f32 %v4097, %v4035
  %v4099 = vadd.f32 %v4098, %v4036
  %v4100 = vadd.f32 %v4099, %v4037
  %v4101 = vadd.f32 %v4100, %v4038
  %v4102 = vadd.f32 %v4101, %v4039
  %v4103 = vadd.f32 %v4102, %v4040
  %v4104 = vadd.f32 %v4103, %v4041
  %v4105 = vadd.f32 %v4104, %v4042
  %v4106 = vadd.f32 %v4105, %v4043
  %v4107 = vadd.f32 %v4106, %v4044
  %v4108 = vadd.f32 %v4107, %v4045
  %v4109 = vadd.f32 %v4108, %v4046
  %v4110 = vadd.f32 %v4109, %v4047
  %v4111 = vadd.f32 %v4110, %v4048
  %v4112 = vadd.f32 %v4111, %v4049
  %v4113 = vadd.f32 %v4112, %v4050
  %v4114 = vadd.f32 %v4113, %v4051
  %v4115 = vadd.f32 %v4114, %v4052
  %v4116 = vadd.f32 %v4115, %v4053
  %v4117 = vadd.f32 %v4116, %v4054
  %v4118 = vadd.f32 %v4117, %v4055
  %v4119 = vadd.f32 %v4118, %v4056
  %v4120 = vadd.f32 %v4119, %v4057
  %v4121 = vadd.f32 %v4120, %v4058
  %v4122 = vadd.f32 %v4121, %v4059
  %v4123 = vadd.f32 %v4122, %v4060
  %v4124 = vadd.f32 %v4123, %v4061
  %v4125 = vadd.f32 %v4124, %v4062
  %v4126 = vadd.f32 %v4125, %v4063
  %v4127 = vadd.f32 %v4126, %v4064
  %v4128 = vadd.f32 %v4127, %v4065
  %v4129 = vadd.f32 %v4128, %v4066
  %v4130 = vadd.f32 %v4129, %v4067
  %v4131 = vadd.f32 %v4130, %v4068
  %v4132 = vadd.f32 %v4131, %v4069
  %v4133 = vadd.f32 %v4132, %v4070
  %v4134 = vadd.f32 %v4133, %v4071
  %v4135 = vadd.f32 %v4134, %v4072
  %v4136 = vadd.f32 %v4135, %v4073
  %v4137 = vadd.f32 %v4136, %v4074
  %v4138 = vadd.f32 %v4137, %v4075
  %v4139 = vadd.f32 %v4138, %v4076
  %v4140 = vadd.f32 %v4139, %v4077
  %v4141 = vadd.f32 %v4140, %v4078
  %v4142 = vadd.f32 %v4141, %v4079
  %v4143 = vadd.f32 %v4142, %v4080
  %v4144 = vadd.f32 %v4143, %v4081
  %v4145 = vadd.f32 %v4144, %v4082
  %v4146 = vrot.slane %v4145, 4
  %v4147 = vadd.f32 %v4145, %v4146
  %v4148 = vrot.slane %v4147, 2
  %v4149 = vadd.f32 %v4147, %v4148
  %v4150 = vrot.slane %v4149, 1
  %v4151 = vadd.f32 %v4149, %v4150
  %4152 = vst [vmem:[%s4 + $0x1] sm:$0x1] %v4151
  // Predicated region
  $region14: #{basic_block_forward.3} parent=0 // pred_check
    _
  $region15: #{basic_block_forward.3} parent=0 // pred_check_branch
    %4154 = sbr.rel (0) target = $region17
  $region16: #{basic_block_forward.3} parent=0 // pred_region
    _
  $region17: #{basic_block_forward.3} parent=0 // pred_fallthru
    _
  // Predicated region
  $region18: #{basic_block_forward.3} parent=0 // pred_check
    _
  $region19: #{basic_block_forward.3} parent=0 // pred_check_branch
    %4156 = sbr.rel (0) target = $region21
  $region20: #{basic_block_forward.3} parent=0 // pred_region
    _
  $region21: #{basic_block_forward.3} parent=0 // pred_fallthru
    _
  // Predicated region
  $region22: #{basic_block_forward.3} parent=0 // pred_check
    _
  $region23: #{basic_block_forward.3} parent=0 // pred_check_branch
    %4158 = sbr.rel (0) target = $region25
  $region24: #{basic_block_forward.3} parent=0 // pred_region
    _
  $region25: #{basic_block_forward.3} parent=0 // pred_fallthru
    _
  // Predicated region
  $region26: #{basic_block_forward.3} parent=0 // pred_check
    _
  $region27: #{basic_block_forward.3} parent=0 // pred_check_branch
    %4160 = sbr.rel (0) target = $region29
  $region28: #{basic_block_forward.3} parent=0 // pred_region
    _
  $region29: #{basic_block_forward.3} parent=0 // pred_fallthru
    _

// kernel: basic_block_forward.4
$region0: #{basic_block_forward.4}
  #allocation0 [shape = 'u32[]', space=smem, size = 0x4, offset = 0x4, fixed_abs, tag = 'smem constant byte address 0x4 - core index']
  #allocation1 [shape = 'u32[144,128]{1,0:T(1,128)}', space=vmem, size = 0x12000, scoped, tag = 'internal scratch']
  #allocation2 [shape = 'f32[2,18,18,128]{3,2,1,0:T(8,128)}', space=vmem, size = 0x6c000, scoped, tag = 'scratch operand']
  #allocation3 [shape = 'f32[512,1152]{1,0:T(8,128)}', space=vmem, size = 0x240000, scoped, tag = 'scratch operand']
  %s0 = inlined_call_operand.vmem [shape: f32[2,256,128], index: 0, kind: input, shape index: {}]
  %s1 = inlined_call_operand.vmem [shape: f32[1,128], index: 1, kind: input, shape index: {}]
  %s2 = inlined_call_operand.vmem [shape: f32[1,128], index: 2, kind: input, shape index: {}]
  %s3 = inlined_call_operand.vmem [shape: f32[1152,128], index: 3, kind: input, shape index: {}]
  %s4 = inlined_call_operand.vmem [shape: f32[1,128], index: 4, kind: input, shape index: {}]
  %s5 = inlined_call_operand.vmem [shape: f32[2,256,128], index: 5, kind: output, shape index: {0}]
  %s6 = inlined_call_operand.vmem [shape: f32[1,2,128], index: 6, kind: output, shape index: {1}]
  %7 = xla_tuple %s5, %s6
  %s8 = sld [smem:[#allocation0]]
  $region38: #{basic_block_forward.4} parent=0
    _
  %s10 = ssub.s32 1, %s8
  %s11 = scalar_select 0, %s10, %s8
  // Predicated region
  $region2: #{basic_block_forward.4} parent=0 // pred_check
    _
  $region3: #{basic_block_forward.4} parent=0 // pred_check_branch
    %13 = sbr.rel (0) target = $region5
  $region4: #{basic_block_forward.4} parent=0 // pred_region
    _
  $region5: #{basic_block_forward.4} parent=0 // pred_fallthru
    _
  // Predicated region
  $region6: #{basic_block_forward.4} parent=0 // pred_check
    _
  $region7: #{basic_block_forward.4} parent=0 // pred_check_branch
    %15 = sbr.rel (0) target = $region9
  $region8: #{basic_block_forward.4} parent=0 // pred_region
    _
  $region9: #{basic_block_forward.4} parent=0 // pred_fallthru
    _
  // Predicated region
  $region10: #{basic_block_forward.4} parent=0 // pred_check
    _
  $region11: #{basic_block_forward.4} parent=0 // pred_check_branch
    %17 = sbr.rel (0) target = $region13
  $region12: #{basic_block_forward.4} parent=0 // pred_region
    _
  $region13: #{basic_block_forward.4} parent=0 // pred_fallthru
    _
  // Predicated region
  $region14: #{basic_block_forward.4} parent=0 // pred_check
    _
  $region15: #{basic_block_forward.4} parent=0 // pred_check_branch
    %19 = sbr.rel (0) target = $region17
  $region16: #{basic_block_forward.4} parent=0 // pred_region
    _
  $region17: #{basic_block_forward.4} parent=0 // pred_fallthru
    _
  // Predicated region
  $region18: #{basic_block_forward.4} parent=0 // pred_check
    _
  $region19: #{basic_block_forward.4} parent=0 // pred_check_branch
    %21 = sbr.rel (0) target = $region21
  $region20: #{basic_block_forward.4} parent=0 // pred_region
    _
  $region21: #{basic_block_forward.4} parent=0 // pred_fallthru
    _
  %v22 = vld [vmem:[%s0] sm:$0xff]
  %v23 = vld [vmem:[%s0 + $0x8] sm:$0xff]
  %v24 = vld [vmem:[%s0 + $0x10] sm:$0xff]
  %v25 = vld [vmem:[%s0 + $0x18] sm:$0xff]
  %v26 = vld [vmem:[%s0 + $0x20] sm:$0xff]
  %v27 = vld [vmem:[%s0 + $0x28] sm:$0xff]
  %v28 = vld [vmem:[%s0 + $0x30] sm:$0xff]
  %v29 = vld [vmem:[%s0 + $0x38] sm:$0xff]
  %v30 = vld [vmem:[%s0 + $0x40] sm:$0xff]
  %v31 = vld [vmem:[%s0 + $0x48] sm:$0xff]
  %v32 = vld [vmem:[%s0 + $0x50] sm:$0xff]
  %v33 = vld [vmem:[%s0 + $0x58] sm:$0xff]
  %v34 = vld [vmem:[%s0 + $0x60] sm:$0xff]
  %v35 = vld [vmem:[%s0 + $0x68] sm:$0xff]
  %v36 = vld [vmem:[%s0 + $0x70] sm:$0xff]
  %v37 = vld [vmem:[%s0 + $0x78] sm:$0xff]
  %v38 = vld [vmem:[%s0 + $0x80] sm:$0xff]
  %v39 = vld [vmem:[%s0 + $0x88] sm:$0xff]
  %v40 = vld [vmem:[%s0 + $0x90] sm:$0xff]
  %v41 = vld [vmem:[%s0 + $0x98] sm:$0xff]
  %v42 = vld [vmem:[%s0 + $0xa0] sm:$0xff]
  %v43 = vld [vmem:[%s0 + $0xa8] sm:$0xff]
  %v44 = vld [vmem:[%s0 + $0xb0] sm:$0xff]
  %v45 = vld [vmem:[%s0 + $0xb8] sm:$0xff]
  %v46 = vld [vmem:[%s0 + $0xc0] sm:$0xff]
  %v47 = vld [vmem:[%s0 + $0xc8] sm:$0xff]
  %v48 = vld [vmem:[%s0 + $0xd0] sm:$0xff]
  %v49 = vld [vmem:[%s0 + $0xd8] sm:$0xff]
  %v50 = vld [vmem:[%s0 + $0xe0] sm:$0xff]
  %v51 = vld [vmem:[%s0 + $0xe8] sm:$0xff]
  %v52 = vld [vmem:[%s0 + $0xf0] sm:$0xff]
  %v53 = vld [vmem:[%s0 + $0xf8] sm:$0xff]
  %v54 = vld [vmem:[%s0 + $0x100] sm:$0xff]
  %v55 = vld [vmem:[%s0 + $0x108] sm:$0xff]
  %v56 = vld [vmem:[%s0 + $0x110] sm:$0xff]
  %v57 = vld [vmem:[%s0 + $0x118] sm:$0xff]
  %v58 = vld [vmem:[%s0 + $0x120] sm:$0xff]
  %v59 = vld [vmem:[%s0 + $0x128] sm:$0xff]
  %v60 = vld [vmem:[%s0 + $0x130] sm:$0xff]
  %v61 = vld [vmem:[%s0 + $0x138] sm:$0xff]
  %v62 = vld [vmem:[%s0 + $0x140] sm:$0xff]
  %v63 = vld [vmem:[%s0 + $0x148] sm:$0xff]
  %v64 = vld [vmem:[%s0 + $0x150] sm:$0xff]
  %v65 = vld [vmem:[%s0 + $0x158] sm:$0xff]
  %v66 = vld [vmem:[%s0 + $0x160] sm:$0xff]
  %v67 = vld [vmem:[%s0 + $0x168] sm:$0xff]
  %v68 = vld [vmem:[%s0 + $0x170] sm:$0xff]
  %v69 = vld [vmem:[%s0 + $0x178] sm:$0xff]
  %v70 = vld [vmem:[%s0 + $0x180] sm:$0xff]
  %v71 = vld [vmem:[%s0 + $0x188] sm:$0xff]
  %v72 = vld [vmem:[%s0 + $0x190] sm:$0xff]
  %v73 = vld [vmem:[%s0 + $0x198] sm:$0xff]
  %v74 = vld [vmem:[%s0 + $0x1a0] sm:$0xff]
  %v75 = vld [vmem:[%s0 + $0x1a8] sm:$0xff]
  %v76 = vld [vmem:[%s0 + $0x1b0] sm:$0xff]
  %v77 = vld [vmem:[%s0 + $0x1b8] sm:$0xff]
  %v78 = vld [vmem:[%s0 + $0x1c0] sm:$0xff]
  %v79 = vld [vmem:[%s0 + $0x1c8] sm:$0xff]
  %v80 = vld [vmem:[%s0 + $0x1d0] sm:$0xff]
  %v81 = vld [vmem:[%s0 + $0x1d8] sm:$0xff]
  %v82 = vld [vmem:[%s0 + $0x1e0] sm:$0xff]
  %v83 = vld [vmem:[%s0 + $0x1e8] sm:$0xff]
  %v84 = vld [vmem:[%s0 + $0x1f0] sm:$0xff]
  %v85 = vld [vmem:[%s0 + $0x1f8] sm:$0xff]
  %v86 = vld [vmem:[%s1] sm:$0x1]
  %v88 = vlaneseq
  %v89 = vshrl.u32 %v88, 7
  %v90 = vsub.s32 0, %v89
  %v91 = vrot.slane %v86, %v90
  %v93 = vmul.f32 %v22, %v91
  %v94 = vmul.f32 %v23, %v91
  %v95 = vmul.f32 %v24, %v91
  %v96 = vmul.f32 %v25, %v91
  %v97 = vmul.f32 %v26, %v91
  %v98 = vmul.f32 %v27, %v91
  %v99 = vmul.f32 %v28, %v91
  %v100 = vmul.f32 %v29, %v91
  %v101 = vmul.f32 %v30, %v91
  %v102 = vmul.f32 %v31, %v91
  %v103 = vmul.f32 %v32, %v91
  %v104 = vmul.f32 %v33, %v91
  %v105 = vmul.f32 %v34, %v91
  %v106 = vmul.f32 %v35, %v91
  %v107 = vmul.f32 %v36, %v91
  %v108 = vmul.f32 %v37, %v91
  %v109 = vmul.f32 %v38, %v91
  %v110 = vmul.f32 %v39, %v91
  %v111 = vmul.f32 %v40, %v91
  %v112 = vmul.f32 %v41, %v91
  %v113 = vmul.f32 %v42, %v91
  %v114 = vmul.f32 %v43, %v91
  %v115 = vmul.f32 %v44, %v91
  %v116 = vmul.f32 %v45, %v91
  %v117 = vmul.f32 %v46, %v91
  %v118 = vmul.f32 %v47, %v91
  %v119 = vmul.f32 %v48, %v91
  %v120 = vmul.f32 %v49, %v91
  %v121 = vmul.f32 %v50, %v91
  %v122 = vmul.f32 %v51, %v91
  %v123 = vmul.f32 %v52, %v91
  %v124 = vmul.f32 %v53, %v91
  %v125 = vmul.f32 %v54, %v91
  %v126 = vmul.f32 %v55, %v91
  %v127 = vmul.f32 %v56, %v91
  %v128 = vmul.f32 %v57, %v91
  %v129 = vmul.f32 %v58, %v91
  %v130 = vmul.f32 %v59, %v91
  %v131 = vmul.f32 %v60, %v91
  %v132 = vmul.f32 %v61, %v91
  %v133 = vmul.f32 %v62, %v91
  %v134 = vmul.f32 %v63, %v91
  %v135 = vmul.f32 %v64, %v91
  %v136 = vmul.f32 %v65, %v91
  %v137 = vmul.f32 %v66, %v91
  %v138 = vmul.f32 %v67, %v91
  %v139 = vmul.f32 %v68, %v91
  %v140 = vmul.f32 %v69, %v91
  %v141 = vmul.f32 %v70, %v91
  %v142 = vmul.f32 %v71, %v91
  %v143 = vmul.f32 %v72, %v91
  %v144 = vmul.f32 %v73, %v91
  %v145 = vmul.f32 %v74, %v91
  %v146 = vmul.f32 %v75, %v91
  %v147 = vmul.f32 %v76, %v91
  %v148 = vmul.f32 %v77, %v91
  %v149 = vmul.f32 %v78, %v91
  %v150 = vmul.f32 %v79, %v91
  %v151 = vmul.f32 %v80, %v91
  %v152 = vmul.f32 %v81, %v91
  %v153 = vmul.f32 %v82, %v91
  %v154 = vmul.f32 %v83, %v91
  %v155 = vmul.f32 %v84, %v91
  %v156 = vmul.f32 %v85, %v91
  %v157 = vld [vmem:[%s2] sm:$0x1]
  %v159 = vlaneseq
  %v160 = vshrl.u32 %v159, 7
  %v161 = vsub.s32 0, %v160
  %v162 = vrot.slane %v157, %v161
  %v164 = vadd.f32 %v93, %v162
  %v165 = vadd.f32 %v94, %v162
  %v166 = vadd.f32 %v95, %v162
  %v167 = vadd.f32 %v96, %v162
  %v168 = vadd.f32 %v97, %v162
  %v169 = vadd.f32 %v98, %v162
  %v170 = vadd.f32 %v99, %v162
  %v171 = vadd.f32 %v100, %v162
  %v172 = vadd.f32 %v101, %v162
  %v173 = vadd.f32 %v102, %v162
  %v174 = vadd.f32 %v103, %v162
  %v175 = vadd.f32 %v104, %v162
  %v176 = vadd.f32 %v105, %v162
  %v177 = vadd.f32 %v106, %v162
  %v178 = vadd.f32 %v107, %v162
  %v179 = vadd.f32 %v108, %v162
  %v180 = vadd.f32 %v109, %v162
  %v181 = vadd.f32 %v110, %v162
  %v182 = vadd.f32 %v111, %v162
  %v183 = vadd.f32 %v112, %v162
  %v184 = vadd.f32 %v113, %v162
  %v185 = vadd.f32 %v114, %v162
  %v186 = vadd.f32 %v115, %v162
  %v187 = vadd.f32 %v116, %v162
  %v188 = vadd.f32 %v117, %v162
  %v189 = vadd.f32 %v118, %v162
  %v190 = vadd.f32 %v119, %v162
  %v191 = vadd.f32 %v120, %v162
  %v192 = vadd.f32 %v121, %v162
  %v193 = vadd.f32 %v122, %v162
  %v194 = vadd.f32 %v123, %v162
  %v195 = vadd.f32 %v124, %v162
  %v196 = vadd.f32 %v125, %v162
  %v197 = vadd.f32 %v126, %v162
  %v198 = vadd.f32 %v127, %v162
  %v199 = vadd.f32 %v128, %v162
  %v200 = vadd.f32 %v129, %v162
  %v201 = vadd.f32 %v130, %v162
  %v202 = vadd.f32 %v131, %v162
  %v203 = vadd.f32 %v132, %v162
  %v204 = vadd.f32 %v133, %v162
  %v205 = vadd.f32 %v134, %v162
  %v206 = vadd.f32 %v135, %v162
  %v207 = vadd.f32 %v136, %v162
  %v208 = vadd.f32 %v137, %v162
  %v209 = vadd.f32 %v138, %v162
  %v210 = vadd.f32 %v139, %v162
  %v211 = vadd.f32 %v140, %v162
  %v212 = vadd.f32 %v141, %v162
  %v213 = vadd.f32 %v142, %v162
  %v214 = vadd.f32 %v143, %v162
  %v215 = vadd.f32 %v144, %v162
  %v216 = vadd.f32 %v145, %v162
  %v217 = vadd.f32 %v146, %v162
  %v218 = vadd.f32 %v147, %v162
  %v219 = vadd.f32 %v148, %v162
  %v220 = vadd.f32 %v149, %v162
  %v221 = vadd.f32 %v150, %v162
  %v222 = vadd.f32 %v151, %v162
  %v223 = vadd.f32 %v152, %v162
  %v224 = vadd.f32 %v153, %v162
  %v225 = vadd.f32 %v154, %v162
  %v226 = vadd.f32 %v155, %v162
  %v227 = vadd.f32 %v156, %v162
  %v228 = vmax.f32 %v164, 0.0
  %v229 = vmax.f32 %v165, 0.0
  %v230 = vmax.f32 %v166, 0.0
  %v231 = vmax.f32 %v167, 0.0
  %v232 = vmax.f32 %v168, 0.0
  %v233 = vmax.f32 %v169, 0.0
  %v234 = vmax.f32 %v170, 0.0
  %v235 = vmax.f32 %v171, 0.0
  %v236 = vmax.f32 %v172, 0.0
  %v237 = vmax.f32 %v173, 0.0
  %v238 = vmax.f32 %v174, 0.0
  %v239 = vmax.f32 %v175, 0.0
  %v240 = vmax.f32 %v176, 0.0
  %v241 = vmax.f32 %v177, 0.0
  %v242 = vmax.f32 %v178, 0.0
  %v243 = vmax.f32 %v179, 0.0
  %v244 = vmax.f32 %v180, 0.0
  %v245 = vmax.f32 %v181, 0.0
  %v246 = vmax.f32 %v182, 0.0
  %v247 = vmax.f32 %v183, 0.0
  %v248 = vmax.f32 %v184, 0.0
  %v249 = vmax.f32 %v185, 0.0
  %v250 = vmax.f32 %v186, 0.0
  %v251 = vmax.f32 %v187, 0.0
  %v252 = vmax.f32 %v188, 0.0
  %v253 = vmax.f32 %v189, 0.0
  %v254 = vmax.f32 %v190, 0.0
  %v255 = vmax.f32 %v191, 0.0
  %v256 = vmax.f32 %v192, 0.0
  %v257 = vmax.f32 %v193, 0.0
  %v258 = vmax.f32 %v194, 0.0
  %v259 = vmax.f32 %v195, 0.0
  %v260 = vmax.f32 %v196, 0.0
  %v261 = vmax.f32 %v197, 0.0
  %v262 = vmax.f32 %v198, 0.0
  %v263 = vmax.f32 %v199, 0.0
  %v264 = vmax.f32 %v200, 0.0
  %v265 = vmax.f32 %v201, 0.0
  %v266 = vmax.f32 %v202, 0.0
  %v267 = vmax.f32 %v203, 0.0
  %v268 = vmax.f32 %v204, 0.0
  %v269 = vmax.f32 %v205, 0.0
  %v270 = vmax.f32 %v206, 0.0
  %v271 = vmax.f32 %v207, 0.0
  %v272 = vmax.f32 %v208, 0.0
  %v273 = vmax.f32 %v209, 0.0
  %v274 = vmax.f32 %v210, 0.0
  %v275 = vmax.f32 %v211, 0.0
  %v276 = vmax.f32 %v212, 0.0
  %v277 = vmax.f32 %v213, 0.0
  %v278 = vmax.f32 %v214, 0.0
  %v279 = vmax.f32 %v215, 0.0
  %v280 = vmax.f32 %v216, 0.0
  %v281 = vmax.f32 %v217, 0.0
  %v282 = vmax.f32 %v218, 0.0
  %v283 = vmax.f32 %v219, 0.0
  %v284 = vmax.f32 %v220, 0.0
  %v285 = vmax.f32 %v221, 0.0
  %v286 = vmax.f32 %v222, 0.0
  %v287 = vmax.f32 %v223, 0.0
  %v288 = vmax.f32 %v224, 0.0
  %v289 = vmax.f32 %v225, 0.0
  %v290 = vmax.f32 %v226, 0.0
  %v291 = vmax.f32 %v227, 0.0
  %292 = vst [vmem:[#allocation2] sm:$0xff] 0.0
  %293 = vst [vmem:[#allocation2 + $0x8] sm:$0xff] 0.0
  %294 = vst [vmem:[#allocation2 + $0x10] sm:$0x3] 0.0
  %295 = vst [vmem:[#allocation2 + $0x1b0] sm:$0xff] 0.0
  %296 = vst [vmem:[#allocation2 + $0x1b8] sm:$0xff] 0.0
  %297 = vst [vmem:[#allocation2 + $0x1c0] sm:$0x3] 0.0
  %s298 = scalar_lea.vmem [#allocation2], 408
  %299 = vst [vmem:[%s298] sm:$0xff] 0.0
  %300 = vst [vmem:[%s298 + $0x8] sm:$0xff] 0.0
  %301 = vst [vmem:[%s298 + $0x10] sm:$0x3] 0.0
  %302 = vst [vmem:[%s298 + $0x1b0] sm:$0xff] 0.0
  %303 = vst [vmem:[%s298 + $0x1b8] sm:$0xff] 0.0
  %304 = vst [vmem:[%s298 + $0x1c0] sm:$0x3] 0.0
  %305 = vst [vmem:[#allocation2] sm:$0x1] 0.0
  %306 = vst [vmem:[#allocation2 + $0x18] sm:$0x1] 0.0
  %307 = vst [vmem:[#allocation2 + $0x30] sm:$0x1] 0.0
  %308 = vst [vmem:[#allocation2 + $0x48] sm:$0x1] 0.0
  %309 = vst [vmem:[#allocation2 + $0x60] sm:$0x1] 0.0
  %310 = vst [vmem:[#allocation2 + $0x78] sm:$0x1] 0.0
  %311 = vst [vmem:[#allocation2 + $0x90] sm:$0x1] 0.0
  %312 = vst [vmem:[#allocation2 + $0xa8] sm:$0x1] 0.0
  %313 = vst [vmem:[#allocation2 + $0xc0] sm:$0x1] 0.0
  %314 = vst [vmem:[#allocation2 + $0xd8] sm:$0x1] 0.0
  %315 = vst [vmem:[#allocation2 + $0xf0] sm:$0x1] 0.0
  %316 = vst [vmem:[#allocation2 + $0x108] sm:$0x1] 0.0
  %317 = vst [vmem:[#allocation2 + $0x120] sm:$0x1] 0.0
  %318 = vst [vmem:[#allocation2 + $0x138] sm:$0x1] 0.0
  %319 = vst [vmem:[#allocation2 + $0x150] sm:$0x1] 0.0
  %320 = vst [vmem:[#allocation2 + $0x168] sm:$0x1] 0.0
  %321 = vst [vmem:[#allocation2 + $0x180] sm:$0x1] 0.0
  %322 = vst [vmem:[#allocation2 + $0x198] sm:$0x1] 0.0
  %323 = vst [vmem:[#allocation2 + $0x1b0] sm:$0x1] 0.0
  %324 = vst [vmem:[#allocation2 + $0x1c8] sm:$0x1] 0.0
  %325 = vst [vmem:[#allocation2 + $0x1e0] sm:$0x1] 0.0
  %326 = vst [vmem:[#allocation2 + $0x1f8] sm:$0x1] 0.0
  %327 = vst [vmem:[#allocation2 + $0x210] sm:$0x1] 0.0
  %328 = vst [vmem:[#allocation2 + $0x228] sm:$0x1] 0.0
  %329 = vst [vmem:[#allocation2 + $0x240] sm:$0x1] 0.0
  %330 = vst [vmem:[#allocation2 + $0x258] sm:$0x1] 0.0
  %331 = vst [vmem:[#allocation2 + $0x270] sm:$0x1] 0.0
  %332 = vst [vmem:[#allocation2 + $0x288] sm:$0x1] 0.0
  %333 = vst [vmem:[#allocation2 + $0x2a0] sm:$0x1] 0.0
  %334 = vst [vmem:[#allocation2 + $0x2b8] sm:$0x1] 0.0
  %335 = vst [vmem:[#allocation2 + $0x2d0] sm:$0x1] 0.0
  %336 = vst [vmem:[#allocation2 + $0x2e8] sm:$0x1] 0.0
  %337 = vst [vmem:[#allocation2 + $0x300] sm:$0x1] 0.0
  %338 = vst [vmem:[#allocation2 + $0x318] sm:$0x1] 0.0
  %339 = vst [vmem:[#allocation2 + $0x330] sm:$0x1] 0.0
  %340 = vst [vmem:[#allocation2 + $0x348] sm:$0x1] 0.0
  %341 = vst [vmem:[#allocation2 + $0x11] sm:$0x1] 0.0
  %342 = vst [vmem:[#allocation2 + $0x29] sm:$0x1] 0.0
  %343 = vst [vmem:[#allocation2 + $0x41] sm:$0x1] 0.0
  %344 = vst [vmem:[#allocation2 + $0x59] sm:$0x1] 0.0
  %345 = vst [vmem:[#allocation2 + $0x71] sm:$0x1] 0.0
  %346 = vst [vmem:[#allocation2 + $0x89] sm:$0x1] 0.0
  %347 = vst [vmem:[#allocation2 + $0xa1] sm:$0x1] 0.0
  %348 = vst [vmem:[#allocation2 + $0xb9] sm:$0x1] 0.0
  %349 = vst [vmem:[#allocation2 + $0xd1] sm:$0x1] 0.0
  %350 = vst [vmem:[#allocation2 + $0xe9] sm:$0x1] 0.0
  %351 = vst [vmem:[#allocation2 + $0x101] sm:$0x1] 0.0
  %352 = vst [vmem:[#allocation2 + $0x119] sm:$0x1] 0.0
  %353 = vst [vmem:[#allocation2 + $0x131] sm:$0x1] 0.0
  %354 = vst [vmem:[#allocation2 + $0x149] sm:$0x1] 0.0
  %355 = vst [vmem:[#allocation2 + $0x161] sm:$0x1] 0.0
  %356 = vst [vmem:[#allocation2 + $0x179] sm:$0x1] 0.0
  %357 = vst [vmem:[#allocation2 + $0x191] sm:$0x1] 0.0
  %358 = vst [vmem:[#allocation2 + $0x1a9] sm:$0x1] 0.0
  %359 = vst [vmem:[#allocation2 + $0x1c1] sm:$0x1] 0.0
  %360 = vst [vmem:[#allocation2 + $0x1d9] sm:$0x1] 0.0
  %361 = vst [vmem:[#allocation2 + $0x1f1] sm:$0x1] 0.0
  %362 = vst [vmem:[#allocation2 + $0x209] sm:$0x1] 0.0
  %363 = vst [vmem:[#allocation2 + $0x221] sm:$0x1] 0.0
  %364 = vst [vmem:[#allocation2 + $0x239] sm:$0x1] 0.0
  %365 = vst [vmem:[#allocation2 + $0x251] sm:$0x1] 0.0
  %366 = vst [vmem:[#allocation2 + $0x269] sm:$0x1] 0.0
  %367 = vst [vmem:[#allocation2 + $0x281] sm:$0x1] 0.0
  %368 = vst [vmem:[#allocation2 + $0x299] sm:$0x1] 0.0
  %369 = vst [vmem:[#allocation2 + $0x2b1] sm:$0x1] 0.0
  %370 = vst [vmem:[#allocation2 + $0x2c9] sm:$0x1] 0.0
  %371 = vst [vmem:[#allocation2 + $0x2e1] sm:$0x1] 0.0
  %372 = vst [vmem:[#allocation2 + $0x2f9] sm:$0x1] 0.0
  %373 = vst [vmem:[#allocation2 + $0x311] sm:$0x1] 0.0
  %374 = vst [vmem:[#allocation2 + $0x329] sm:$0x1] 0.0
  %375 = vst [vmem:[#allocation2 + $0x341] sm:$0x1] 0.0
  %376 = vst [vmem:[#allocation2 + $0x359] sm:$0x1] 0.0
  %s377 = scalar_lea.vmem [#allocation2], 24
  %378 = vst [vmem:[%s377 + $0x1] sm:$0xff] %v228
  %379 = vst [vmem:[%s377 + $0x9] sm:$0xff] %v229
  %380 = vst [vmem:[%s377 + $0x19] sm:$0xff] %v230
  %381 = vst [vmem:[%s377 + $0x21] sm:$0xff] %v231
  %382 = vst [vmem:[%s377 + $0x31] sm:$0xff] %v232
  %383 = vst [vmem:[%s377 + $0x39] sm:$0xff] %v233
  %384 = vst [vmem:[%s377 + $0x49] sm:$0xff] %v234
  %385 = vst [vmem:[%s377 + $0x51] sm:$0xff] %v235
  %386 = vst [vmem:[%s377 + $0x61] sm:$0xff] %v236
  %387 = vst [vmem:[%s377 + $0x69] sm:$0xff] %v237
  %388 = vst [vmem:[%s377 + $0x79] sm:$0xff] %v238
  %389 = vst [vmem:[%s377 + $0x81] sm:$0xff] %v239
  %390 = vst [vmem:[%s377 + $0x91] sm:$0xff] %v240
  %391 = vst [vmem:[%s377 + $0x99] sm:$0xff] %v241
  %392 = vst [vmem:[%s377 + $0xa9] sm:$0xff] %v242
  %393 = vst [vmem:[%s377 + $0xb1] sm:$0xff] %v243
  %394 = vst [vmem:[%s377 + $0xc1] sm:$0xff] %v244
  %395 = vst [vmem:[%s377 + $0xc9] sm:$0xff] %v245
  %396 = vst [vmem:[%s377 + $0xd9] sm:$0xff] %v246
  %397 = vst [vmem:[%s377 + $0xe1] sm:$0xff] %v247
  %398 = vst [vmem:[%s377 + $0xf1] sm:$0xff] %v248
  %399 = vst [vmem:[%s377 + $0xf9] sm:$0xff] %v249
  %400 = vst [vmem:[%s377 + $0x109] sm:$0xff] %v250
  %401 = vst [vmem:[%s377 + $0x111] sm:$0xff] %v251
  %402 = vst [vmem:[%s377 + $0x121] sm:$0xff] %v252
  %403 = vst [vmem:[%s377 + $0x129] sm:$0xff] %v253
  %404 = vst [vmem:[%s377 + $0x139] sm:$0xff] %v254
  %405 = vst [vmem:[%s377 + $0x141] sm:$0xff] %v255
  %406 = vst [vmem:[%s377 + $0x151] sm:$0xff] %v256
  %407 = vst [vmem:[%s377 + $0x159] sm:$0xff] %v257
  %408 = vst [vmem:[%s377 + $0x169] sm:$0xff] %v258
  %409 = vst [vmem:[%s377 + $0x171] sm:$0xff] %v259
  %410 = vst [vmem:[%s377 + $0x1b1] sm:$0xff] %v260
  %411 = vst [vmem:[%s377 + $0x1b9] sm:$0xff] %v261
  %412 = vst [vmem:[%s377 + $0x1c9] sm:$0xff] %v262
  %413 = vst [vmem:[%s377 + $0x1d1] sm:$0xff] %v263
  %414 = vst [vmem:[%s377 + $0x1e1] sm:$0xff] %v264
  %415 = vst [vmem:[%s377 + $0x1e9] sm:$0xff] %v265
  %416 = vst [vmem:[%s377 + $0x1f9] sm:$0xff] %v266
  %417 = vst [vmem:[%s377 + $0x201] sm:$0xff] %v267
  %418 = vst [vmem:[%s377 + $0x211] sm:$0xff] %v268
  %419 = vst [vmem:[%s377 + $0x219] sm:$0xff] %v269
  %420 = vst [vmem:[%s377 + $0x229] sm:$0xff] %v270
  %421 = vst [vmem:[%s377 + $0x231] sm:$0xff] %v271
  %422 = vst [vmem:[%s377 + $0x241] sm:$0xff] %v272
  %423 = vst [vmem:[%s377 + $0x249] sm:$0xff] %v273
  %424 = vst [vmem:[%s377 + $0x259] sm:$0xff] %v274
  %425 = vst [vmem:[%s377 + $0x261] sm:$0xff] %v275
  %426 = vst [vmem:[%s377 + $0x271] sm:$0xff] %v276
  %427 = vst [vmem:[%s377 + $0x279] sm:$0xff] %v277
  %428 = vst [vmem:[%s377 + $0x289] sm:$0xff] %v278
  %429 = vst [vmem:[%s377 + $0x291] sm:$0xff] %v279
  %430 = vst [vmem:[%s377 + $0x2a1] sm:$0xff] %v280
  %431 = vst [vmem:[%s377 + $0x2a9] sm:$0xff] %v281
  %432 = vst [vmem:[%s377 + $0x2b9] sm:$0xff] %v282
  %433 = vst [vmem:[%s377 + $0x2c1] sm:$0xff] %v283
  %434 = vst [vmem:[%s377 + $0x2d1] sm:$0xff] %v284
  %435 = vst [vmem:[%s377 + $0x2d9] sm:$0xff] %v285
  %436 = vst [vmem:[%s377 + $0x2e9] sm:$0xff] %v286
  %437 = vst [vmem:[%s377 + $0x2f1] sm:$0xff] %v287
  %438 = vst [vmem:[%s377 + $0x301] sm:$0xff] %v288
  %439 = vst [vmem:[%s377 + $0x309] sm:$0xff] %v289
  %440 = vst [vmem:[%s377 + $0x319] sm:$0xff] %v290
  %441 = vst [vmem:[%s377 + $0x321] sm:$0xff] %v291
  %v442 = vld [vmem:[#allocation2] sm:$0xff]
  %v443 = vld [vmem:[#allocation2 + $0x8] sm:$0xff]
  %v444 = vld [vmem:[#allocation2 + $0x18] sm:$0xff]
  %v445 = vld [vmem:[#allocation2 + $0x20] sm:$0xff]
  %v446 = vld [vmem:[#allocation2 + $0x30] sm:$0xff]
  %v447 = vld [vmem:[#allocation2 + $0x38] sm:$0xff]
  %v448 = vld [vmem:[#allocation2 + $0x48] sm:$0xff]
  %v449 = vld [vmem:[#allocation2 + $0x50] sm:$0xff]
  %v450 = vld [vmem:[#allocation2 + $0x60] sm:$0xff]
  %v451 = vld [vmem:[#allocation2 + $0x68] sm:$0xff]
  %v452 = vld [vmem:[#allocation2 + $0x78] sm:$0xff]
  %v453 = vld [vmem:[#allocation2 + $0x80] sm:$0xff]
  %v454 = vld [vmem:[#allocation2 + $0x90] sm:$0xff]
  %v455 = vld [vmem:[#allocation2 + $0x98] sm:$0xff]
  %v456 = vld [vmem:[#allocation2 + $0xa8] sm:$0xff]
  %v457 = vld [vmem:[#allocation2 + $0xb0] sm:$0xff]
  %v458 = vld [vmem:[#allocation2 + $0xc0] sm:$0xff]
  %v459 = vld [vmem:[#allocation2 + $0xc8] sm:$0xff]
  %v460 = vld [vmem:[#allocation2 + $0xd8] sm:$0xff]
  %v461 = vld [vmem:[#allocation2 + $0xe0] sm:$0xff]
  %v462 = vld [vmem:[#allocation2 + $0xf0] sm:$0xff]
  %v463 = vld [vmem:[#allocation2 + $0xf8] sm:$0xff]
  %v464 = vld [vmem:[#allocation2 + $0x108] sm:$0xff]
  %v465 = vld [vmem:[#allocation2 + $0x110] sm:$0xff]
  %v466 = vld [vmem:[#allocation2 + $0x120] sm:$0xff]
  %v467 = vld [vmem:[#allocation2 + $0x128] sm:$0xff]
  %v468 = vld [vmem:[#allocation2 + $0x138] sm:$0xff]
  %v469 = vld [vmem:[#allocation2 + $0x140] sm:$0xff]
  %v470 = vld [vmem:[#allocation2 + $0x150] sm:$0xff]
  %v471 = vld [vmem:[#allocation2 + $0x158] sm:$0xff]
  %v472 = vld [vmem:[#allocation2 + $0x168] sm:$0xff]
  %v473 = vld [vmem:[#allocation2 + $0x170] sm:$0xff]
  %v474 = vld [vmem:[#allocation2 + $0x1b0] sm:$0xff]
  %v475 = vld [vmem:[#allocation2 + $0x1b8] sm:$0xff]
  %v476 = vld [vmem:[#allocation2 + $0x1c8] sm:$0xff]
  %v477 = vld [vmem:[#allocation2 + $0x1d0] sm:$0xff]
  %v478 = vld [vmem:[#allocation2 + $0x1e0] sm:$0xff]
  %v479 = vld [vmem:[#allocation2 + $0x1e8] sm:$0xff]
  %v480 = vld [vmem:[#allocation2 + $0x1f8] sm:$0xff]
  %v481 = vld [vmem:[#allocation2 + $0x200] sm:$0xff]
  %v482 = vld [vmem:[#allocation2 + $0x210] sm:$0xff]
  %v483 = vld [vmem:[#allocation2 + $0x218] sm:$0xff]
  %v484 = vld [vmem:[#allocation2 + $0x228] sm:$0xff]
  %v485 = vld [vmem:[#allocation2 + $0x230] sm:$0xff]
  %v486 = vld [vmem:[#allocation2 + $0x240] sm:$0xff]
  %v487 = vld [vmem:[#allocation2 + $0x248] sm:$0xff]
  %v488 = vld [vmem:[#allocation2 + $0x258] sm:$0xff]
  %v489 = vld [vmem:[#allocation2 + $0x260] sm:$0xff]
  %v490 = vld [vmem:[#allocation2 + $0x270] sm:$0xff]
  %v491 = vld [vmem:[#allocation2 + $0x278] sm:$0xff]
  %v492 = vld [vmem:[#allocation2 + $0x288] sm:$0xff]
  %v493 = vld [vmem:[#allocation2 + $0x290] sm:$0xff]
  %v494 = vld [vmem:[#allocation2 + $0x2a0] sm:$0xff]
  %v495 = vld [vmem:[#allocation2 + $0x2a8] sm:$0xff]
  %v496 = vld [vmem:[#allocation2 + $0x2b8] sm:$0xff]
  %v497 = vld [vmem:[#allocation2 + $0x2c0] sm:$0xff]
  %v498 = vld [vmem:[#allocation2 + $0x2d0] sm:$0xff]
  %v499 = vld [vmem:[#allocation2 + $0x2d8] sm:$0xff]
  %v500 = vld [vmem:[#allocation2 + $0x2e8] sm:$0xff]
  %v501 = vld [vmem:[#allocation2 + $0x2f0] sm:$0xff]
  %v502 = vld [vmem:[#allocation2 + $0x300] sm:$0xff]
  %v503 = vld [vmem:[#allocation2 + $0x308] sm:$0xff]
  %v504 = vld [vmem:[#allocation2 + $0x318] sm:$0xff]
  %v505 = vld [vmem:[#allocation2 + $0x320] sm:$0xff]
  %506 = vst [vmem:[#allocation3] sm:$0xff] %v442
  %507 = vst [vmem:[#allocation3 + $0x48] sm:$0xff] %v443
  %508 = vst [vmem:[#allocation3 + $0x90] sm:$0xff] %v444
  %509 = vst [vmem:[#allocation3 + $0xd8] sm:$0xff] %v445
  %510 = vst [vmem:[#allocation3 + $0x120] sm:$0xff] %v446
  %511 = vst [vmem:[#allocation3 + $0x168] sm:$0xff] %v447
  %512 = vst [vmem:[#allocation3 + $0x1b0] sm:$0xff] %v448
  %513 = vst [vmem:[#allocation3 + $0x1f8] sm:$0xff] %v449
  %514 = vst [vmem:[#allocation3 + $0x240] sm:$0xff] %v450
  %515 = vst [vmem:[#allocation3 + $0x288] sm:$0xff] %v451
  %516 = vst [vmem:[#allocation3 + $0x2d0] sm:$0xff] %v452
  %517 = vst [vmem:[#allocation3 + $0x318] sm:$0xff] %v453
  %518 = vst [vmem:[#allocation3 + $0x360] sm:$0xff] %v454
  %519 = vst [vmem:[#allocation3 + $0x3a8] sm:$0xff] %v455
  %520 = vst [vmem:[#allocation3 + $0x3f0] sm:$0xff] %v456
  %521 = vst [vmem:[#allocation3 + $0x438] sm:$0xff] %v457
  %522 = vst [vmem:[#allocation3 + $0x480] sm:$0xff] %v458
  %523 = vst [vmem:[#allocation3 + $0x4c8] sm:$0xff] %v459
  %524 = vst [vmem:[#allocation3 + $0x510] sm:$0xff] %v460
  %525 = vst [vmem:[#allocation3 + $0x558] sm:$0xff] %v461
  %526 = vst [vmem:[#allocation3 + $0x5a0] sm:$0xff] %v462
  %527 = vst [vmem:[#allocation3 + $0x5e8] sm:$0xff] %v463
  %528 = vst [vmem:[#allocation3 + $0x630] sm:$0xff] %v464
  %529 = vst [vmem:[#allocation3 + $0x678] sm:$0xff] %v465
  %530 = vst [vmem:[#allocation3 + $0x6c0] sm:$0xff] %v466
  %531 = vst [vmem:[#allocation3 + $0x708] sm:$0xff] %v467
  %532 = vst [vmem:[#allocation3 + $0x750] sm:$0xff] %v468
  %533 = vst [vmem:[#allocation3 + $0x798] sm:$0xff] %v469
  %534 = vst [vmem:[#allocation3 + $0x7e0] sm:$0xff] %v470
  %535 = vst [vmem:[#allocation3 + $0x828] sm:$0xff] %v471
  %536 = vst [vmem:[#allocation3 + $0x870] sm:$0xff] %v472
  %537 = vst [vmem:[#allocation3 + $0x8b8] sm:$0xff] %v473
  %538 = vst [vmem:[#allocation3 + $0x900] sm:$0xff] %v474
  %539 = vst [vmem:[#allocation3 + $0x948] sm:$0xff] %v475
  %540 = vst [vmem:[#allocation3 + $0x990] sm:$0xff] %v476
  %541 = vst [vmem:[#allocation3 + $0x9d8] sm:$0xff] %v477
  %542 = vst [vmem:[#allocation3 + $0xa20] sm:$0xff] %v478
  %543 = vst [vmem:[#allocation3 + $0xa68] sm:$0xff] %v479
  %544 = vst [vmem:[#allocation3 + $0xab0] sm:$0xff] %v480
  %545 = vst [vmem:[#allocation3 + $0xaf8] sm:$0xff] %v481
  %546 = vst [vmem:[#allocation3 + $0xb40] sm:$0xff] %v482
  %547 = vst [vmem:[#allocation3 + $0xb88] sm:$0xff] %v483
  %548 = vst [vmem:[#allocation3 + $0xbd0] sm:$0xff] %v484
  %549 = vst [vmem:[#allocation3 + $0xc18] sm:$0xff] %v485
  %550 = vst [vmem:[#allocation3 + $0xc60] sm:$0xff] %v486
  %551 = vst [vmem:[#allocation3 + $0xca8] sm:$0xff] %v487
  %552 = vst [vmem:[#allocation3 + $0xcf0] sm:$0xff] %v488
  %553 = vst [vmem:[#allocation3 + $0xd38] sm:$0xff] %v489
  %554 = vst [vmem:[#allocation3 + $0xd80] sm:$0xff] %v490
  %555 = vst [vmem:[#allocation3 + $0xdc8] sm:$0xff] %v491
  %556 = vst [vmem:[#allocation3 + $0xe10] sm:$0xff] %v492
  %557 = vst [vmem:[#allocation3 + $0xe58] sm:$0xff] %v493
  %558 = vst [vmem:[#allocation3 + $0xea0] sm:$0xff] %v494
  %559 = vst [vmem:[#allocation3 + $0xee8] sm:$0xff] %v495
  %560 = vst [vmem:[#allocation3 + $0xf30] sm:$0xff] %v496
  %561 = vst [vmem:[#allocation3 + $0xf78] sm:$0xff] %v497
  %562 = vst [vmem:[#allocation3 + $0xfc0] sm:$0xff] %v498
  %563 = vst [vmem:[#allocation3 + $0x1008] sm:$0xff] %v499
  %564 = vst [vmem:[#allocation3 + $0x1050] sm:$0xff] %v500
  %565 = vst [vmem:[#allocation3 + $0x1098] sm:$0xff] %v501
  %566 = vst [vmem:[#allocation3 + $0x10e0] sm:$0xff] %v502
  %567 = vst [vmem:[#allocation3 + $0x1128] sm:$0xff] %v503
  %568 = vst [vmem:[#allocation3 + $0x1170] sm:$0xff] %v504
  %569 = vst [vmem:[#allocation3 + $0x11b8] sm:$0xff] %v505
  %v570 = vld [vmem:[#allocation2 + $0x1] sm:$0xff]
  %v571 = vld [vmem:[#allocation2 + $0x9] sm:$0xff]
  %v572 = vld [vmem:[#allocation2 + $0x19] sm:$0xff]
  %v573 = vld [vmem:[#allocation2 + $0x21] sm:$0xff]
  %v574 = vld [vmem:[#allocation2 + $0x31] sm:$0xff]
  %v575 = vld [vmem:[#allocation2 + $0x39] sm:$0xff]
  %v576 = vld [vmem:[#allocation2 + $0x49] sm:$0xff]
  %v577 = vld [vmem:[#allocation2 + $0x51] sm:$0xff]
  %v578 = vld [vmem:[#allocation2 + $0x61] sm:$0xff]
  %v579 = vld [vmem:[#allocation2 + $0x69] sm:$0xff]
  %v580 = vld [vmem:[#allocation2 + $0x79] sm:$0xff]
  %v581 = vld [vmem:[#allocation2 + $0x81] sm:$0xff]
  %v582 = vld [vmem:[#allocation2 + $0x91] sm:$0xff]
  %v583 = vld [vmem:[#allocation2 + $0x99] sm:$0xff]
  %v584 = vld [vmem:[#allocation2 + $0xa9] sm:$0xff]
  %v585 = vld [vmem:[#allocation2 + $0xb1] sm:$0xff]
  %v586 = vld [vmem:[#allocation2 + $0xc1] sm:$0xff]
  %v587 = vld [vmem:[#allocation2 + $0xc9] sm:$0xff]
  %v588 = vld [vmem:[#allocation2 + $0xd9] sm:$0xff]
  %v589 = vld [vmem:[#allocation2 + $0xe1] sm:$0xff]
  %v590 = vld [vmem:[#allocation2 + $0xf1] sm:$0xff]
  %v591 = vld [vmem:[#allocation2 + $0xf9] sm:$0xff]
  %v592 = vld [vmem:[#allocation2 + $0x109] sm:$0xff]
  %v593 = vld [vmem:[#allocation2 + $0x111] sm:$0xff]
  %v594 = vld [vmem:[#allocation2 + $0x121] sm:$0xff]
  %v595 = vld [vmem:[#allocation2 + $0x129] sm:$0xff]
  %v596 = vld [vmem:[#allocation2 + $0x139] sm:$0xff]
  %v597 = vld [vmem:[#allocation2 + $0x141] sm:$0xff]
  %v598 = vld [vmem:[#allocation2 + $0x151] sm:$0xff]
  %v599 = vld [vmem:[#allocation2 + $0x159] sm:$0xff]
  %v600 = vld [vmem:[#allocation2 + $0x169] sm:$0xff]
  %v601 = vld [vmem:[#allocation2 + $0x171] sm:$0xff]
  %v602 = vld [vmem:[#allocation2 + $0x1b1] sm:$0xff]
  %v603 = vld [vmem:[#allocation2 + $0x1b9] sm:$0xff]
  %v604 = vld [vmem:[#allocation2 + $0x1c9] sm:$0xff]
  %v605 = vld [vmem:[#allocation2 + $0x1d1] sm:$0xff]
  %v606 = vld [vmem:[#allocation2 + $0x1e1] sm:$0xff]
  %v607 = vld [vmem:[#allocation2 + $0x1e9] sm:$0xff]
  %v608 = vld [vmem:[#allocation2 + $0x1f9] sm:$0xff]
  %v609 = vld [vmem:[#allocation2 + $0x201] sm:$0xff]
  %v610 = vld [vmem:[#allocation2 + $0x211] sm:$0xff]
  %v611 = vld [vmem:[#allocation2 + $0x219] sm:$0xff]
  %v612 = vld [vmem:[#allocation2 + $0x229] sm:$0xff]
  %v613 = vld [vmem:[#allocation2 + $0x231] sm:$0xff]
  %v614 = vld [vmem:[#allocation2 + $0x241] sm:$0xff]
  %v615 = vld [vmem:[#allocation2 + $0x249] sm:$0xff]
  %v616 = vld [vmem:[#allocation2 + $0x259] sm:$0xff]
  %v617 = vld [vmem:[#allocation2 + $0x261] sm:$0xff]
  %v618 = vld [vmem:[#allocation2 + $0x271] sm:$0xff]
  %v619 = vld [vmem:[#allocation2 + $0x279] sm:$0xff]
  %v620 = vld [vmem:[#allocation2 + $0x289] sm:$0xff]
  %v621 = vld [vmem:[#allocation2 + $0x291] sm:$0xff]
  %v622 = vld [vmem:[#allocation2 + $0x2a1] sm:$0xff]
  %v623 = vld [vmem:[#allocation2 + $0x2a9] sm:$0xff]
  %v624 = vld [vmem:[#allocation2 + $0x2b9] sm:$0xff]
  %v625 = vld [vmem:[#allocation2 + $0x2c1] sm:$0xff]
  %v626 = vld [vmem:[#allocation2 + $0x2d1] sm:$0xff]
  %v627 = vld [vmem:[#allocation2 + $0x2d9] sm:$0xff]
  %v628 = vld [vmem:[#allocation2 + $0x2e9] sm:$0xff]
  %v629 = vld [vmem:[#allocation2 + $0x2f1] sm:$0xff]
  %v630 = vld [vmem:[#allocation2 + $0x301] sm:$0xff]
  %v631 = vld [vmem:[#allocation2 + $0x309] sm:$0xff]
  %v632 = vld [vmem:[#allocation2 + $0x319] sm:$0xff]
  %v633 = vld [vmem:[#allocation2 + $0x321] sm:$0xff]
  %634 = vst [vmem:[#allocation3 + $0x8] sm:$0xff] %v570
  %635 = vst [vmem:[#allocation3 + $0x50] sm:$0xff] %v571
  %636 = vst [vmem:[#allocation3 + $0x98] sm:$0xff] %v572
  %637 = vst [vmem:[#allocation3 + $0xe0] sm:$0xff] %v573
  %638 = vst [vmem:[#allocation3 + $0x128] sm:$0xff] %v574
  %639 = vst [vmem:[#allocation3 + $0x170] sm:$0xff] %v575
  %640 = vst [vmem:[#allocation3 + $0x1b8] sm:$0xff] %v576
  %641 = vst [vmem:[#allocation3 + $0x200] sm:$0xff] %v577
  %642 = vst [vmem:[#allocation3 + $0x248] sm:$0xff] %v578
  %643 = vst [vmem:[#allocation3 + $0x290] sm:$0xff] %v579
  %644 = vst [vmem:[#allocation3 + $0x2d8] sm:$0xff] %v580
  %645 = vst [vmem:[#allocation3 + $0x320] sm:$0xff] %v581
  %646 = vst [vmem:[#allocation3 + $0x368] sm:$0xff] %v582
  %647 = vst [vmem:[#allocation3 + $0x3b0] sm:$0xff] %v583
  %648 = vst [vmem:[#allocation3 + $0x3f8] sm:$0xff] %v584
  %649 = vst [vmem:[#allocation3 + $0x440] sm:$0xff] %v585
  %650 = vst [vmem:[#allocation3 + $0x488] sm:$0xff] %v586
  %651 = vst [vmem:[#allocation3 + $0x4d0] sm:$0xff] %v587
  %652 = vst [vmem:[#allocation3 + $0x518] sm:$0xff] %v588
  %653 = vst [vmem:[#allocation3 + $0x560] sm:$0xff] %v589
  %654 = vst [vmem:[#allocation3 + $0x5a8] sm:$0xff] %v590
  %655 = vst [vmem:[#allocation3 + $0x5f0] sm:$0xff] %v591
  %656 = vst [vmem:[#allocation3 + $0x638] sm:$0xff] %v592
  %657 = vst [vmem:[#allocation3 + $0x680] sm:$0xff] %v593
  %658 = vst [vmem:[#allocation3 + $0x6c8] sm:$0xff] %v594
  %659 = vst [vmem:[#allocation3 + $0x710] sm:$0xff] %v595
  %660 = vst [vmem:[#allocation3 + $0x758] sm:$0xff] %v596
  %661 = vst [vmem:[#allocation3 + $0x7a0] sm:$0xff] %v597
  %662 = vst [vmem:[#allocation3 + $0x7e8] sm:$0xff] %v598
  %663 = vst [vmem:[#allocation3 + $0x830] sm:$0xff] %v599
  %664 = vst [vmem:[#allocation3 + $0x878] sm:$0xff] %v600
  %665 = vst [vmem:[#allocation3 + $0x8c0] sm:$0xff] %v601
  %666 = vst [vmem:[#allocation3 + $0x908] sm:$0xff] %v602
  %667 = vst [vmem:[#allocation3 + $0x950] sm:$0xff] %v603
  %668 = vst [vmem:[#allocation3 + $0x998] sm:$0xff] %v604
  %669 = vst [vmem:[#allocation3 + $0x9e0] sm:$0xff] %v605
  %670 = vst [vmem:[#allocation3 + $0xa28] sm:$0xff] %v606
  %671 = vst [vmem:[#allocation3 + $0xa70] sm:$0xff] %v607
  %672 = vst [vmem:[#allocation3 + $0xab8] sm:$0xff] %v608
  %673 = vst [vmem:[#allocation3 + $0xb00] sm:$0xff] %v609
  %674 = vst [vmem:[#allocation3 + $0xb48] sm:$0xff] %v610
  %675 = vst [vmem:[#allocation3 + $0xb90] sm:$0xff] %v611
  %676 = vst [vmem:[#allocation3 + $0xbd8] sm:$0xff] %v612
  %677 = vst [vmem:[#allocation3 + $0xc20] sm:$0xff] %v613
  %678 = vst [vmem:[#allocation3 + $0xc68] sm:$0xff] %v614
  %679 = vst [vmem:[#allocation3 + $0xcb0] sm:$0xff] %v615
  %680 = vst [vmem:[#allocation3 + $0xcf8] sm:$0xff] %v616
  %681 = vst [vmem:[#allocation3 + $0xd40] sm:$0xff] %v617
  %682 = vst [vmem:[#allocation3 + $0xd88] sm:$0xff] %v618
  %683 = vst [vmem:[#allocation3 + $0xdd0] sm:$0xff] %v619
  %684 = vst [vmem:[#allocation3 + $0xe18] sm:$0xff] %v620
  %685 = vst [vmem:[#allocation3 + $0xe60] sm:$0xff] %v621
  %686 = vst [vmem:[#allocation3 + $0xea8] sm:$0xff] %v622
  %687 = vst [vmem:[#allocation3 + $0xef0] sm:$0xff] %v623
  %688 = vst [vmem:[#allocation3 + $0xf38] sm:$0xff] %v624
  %689 = vst [vmem:[#allocation3 + $0xf80] sm:$0xff] %v625
  %690 = vst [vmem:[#allocation3 + $0xfc8] sm:$0xff] %v626
  %691 = vst [vmem:[#allocation3 + $0x1010] sm:$0xff] %v627
  %692 = vst [vmem:[#allocation3 + $0x1058] sm:$0xff] %v628
  %693 = vst [vmem:[#allocation3 + $0x10a0] sm:$0xff] %v629
  %694 = vst [vmem:[#allocation3 + $0x10e8] sm:$0xff] %v630
  %695 = vst [vmem:[#allocation3 + $0x1130] sm:$0xff] %v631
  %696 = vst [vmem:[#allocation3 + $0x1178] sm:$0xff] %v632
  %697 = vst [vmem:[#allocation3 + $0x11c0] sm:$0xff] %v633
  %v698 = vld [vmem:[#allocation2 + $0x2] sm:$0xff]
  %v699 = vld [vmem:[#allocation2 + $0xa] sm:$0xff]
  %v700 = vld [vmem:[#allocation2 + $0x1a] sm:$0xff]
  %v701 = vld [vmem:[#allocation2 + $0x22] sm:$0xff]
  %v702 = vld [vmem:[#allocation2 + $0x32] sm:$0xff]
  %v703 = vld [vmem:[#allocation2 + $0x3a] sm:$0xff]
  %v704 = vld [vmem:[#allocation2 + $0x4a] sm:$0xff]
  %v705 = vld [vmem:[#allocation2 + $0x52] sm:$0xff]
  %v706 = vld [vmem:[#allocation2 + $0x62] sm:$0xff]
  %v707 = vld [vmem:[#allocation2 + $0x6a] sm:$0xff]
  %v708 = vld [vmem:[#allocation2 + $0x7a] sm:$0xff]
  %v709 = vld [vmem:[#allocation2 + $0x82] sm:$0xff]
  %v710 = vld [vmem:[#allocation2 + $0x92] sm:$0xff]
  %v711 = vld [vmem:[#allocation2 + $0x9a] sm:$0xff]
  %v712 = vld [vmem:[#allocation2 + $0xaa] sm:$0xff]
  %v713 = vld [vmem:[#allocation2 + $0xb2] sm:$0xff]
  %v714 = vld [vmem:[#allocation2 + $0xc2] sm:$0xff]
  %v715 = vld [vmem:[#allocation2 + $0xca] sm:$0xff]
  %v716 = vld [vmem:[#allocation2 + $0xda] sm:$0xff]
  %v717 = vld [vmem:[#allocation2 + $0xe2] sm:$0xff]
  %v718 = vld [vmem:[#allocation2 + $0xf2] sm:$0xff]
  %v719 = vld [vmem:[#allocation2 + $0xfa] sm:$0xff]
  %v720 = vld [vmem:[#allocation2 + $0x10a] sm:$0xff]
  %v721 = vld [vmem:[#allocation2 + $0x112] sm:$0xff]
  %v722 = vld [vmem:[#allocation2 + $0x122] sm:$0xff]
  %v723 = vld [vmem:[#allocation2 + $0x12a] sm:$0xff]
  %v724 = vld [vmem:[#allocation2 + $0x13a] sm:$0xff]
  %v725 = vld [vmem:[#allocation2 + $0x142] sm:$0xff]
  %v726 = vld [vmem:[#allocation2 + $0x152] sm:$0xff]
  %v727 = vld [vmem:[#allocation2 + $0x15a] sm:$0xff]
  %v728 = vld [vmem:[#allocation2 + $0x16a] sm:$0xff]
  %v729 = vld [vmem:[#allocation2 + $0x172] sm:$0xff]
  %v730 = vld [vmem:[#allocation2 + $0x1b2] sm:$0xff]
  %v731 = vld [vmem:[#allocation2 + $0x1ba] sm:$0xff]
  %v732 = vld [vmem:[#allocation2 + $0x1ca] sm:$0xff]
  %v733 = vld [vmem:[#allocation2 + $0x1d2] sm:$0xff]
  %v734 = vld [vmem:[#allocation2 + $0x1e2] sm:$0xff]
  %v735 = vld [vmem:[#allocation2 + $0x1ea] sm:$0xff]
  %v736 = vld [vmem:[#allocation2 + $0x1fa] sm:$0xff]
  %v737 = vld [vmem:[#allocation2 + $0x202] sm:$0xff]
  %v738 = vld [vmem:[#allocation2 + $0x212] sm:$0xff]
  %v739 = vld [vmem:[#allocation2 + $0x21a] sm:$0xff]
  %v740 = vld [vmem:[#allocation2 + $0x22a] sm:$0xff]
  %v741 = vld [vmem:[#allocation2 + $0x232] sm:$0xff]
  %v742 = vld [vmem:[#allocation2 + $0x242] sm:$0xff]
  %v743 = vld [vmem:[#allocation2 + $0x24a] sm:$0xff]
  %v744 = vld [vmem:[#allocation2 + $0x25a] sm:$0xff]
  %v745 = vld [vmem:[#allocation2 + $0x262] sm:$0xff]
  %v746 = vld [vmem:[#allocation2 + $0x272] sm:$0xff]
  %v747 = vld [vmem:[#allocation2 + $0x27a] sm:$0xff]
  %v748 = vld [vmem:[#allocation2 + $0x28a] sm:$0xff]
  %v749 = vld [vmem:[#allocation2 + $0x292] sm:$0xff]
  %v750 = vld [vmem:[#allocation2 + $0x2a2] sm:$0xff]
  %v751 = vld [vmem:[#allocation2 + $0x2aa] sm:$0xff]
  %v752 = vld [vmem:[#allocation2 + $0x2ba] sm:$0xff]
  %v753 = vld [vmem:[#allocation2 + $0x2c2] sm:$0xff]
  %v754 = vld [vmem:[#allocation2 + $0x2d2] sm:$0xff]
  %v755 = vld [vmem:[#allocation2 + $0x2da] sm:$0xff]
  %v756 = vld [vmem:[#allocation2 + $0x2ea] sm:$0xff]
  %v757 = vld [vmem:[#allocation2 + $0x2f2] sm:$0xff]
  %v758 = vld [vmem:[#allocation2 + $0x302] sm:$0xff]
  %v759 = vld [vmem:[#allocation2 + $0x30a] sm:$0xff]
  %v760 = vld [vmem:[#allocation2 + $0x31a] sm:$0xff]
  %v761 = vld [vmem:[#allocation2 + $0x322] sm:$0xff]
  %762 = vst [vmem:[#allocation3 + $0x10] sm:$0xff] %v698
  %763 = vst [vmem:[#allocation3 + $0x58] sm:$0xff] %v699
  %764 = vst [vmem:[#allocation3 + $0xa0] sm:$0xff] %v700
  %765 = vst [vmem:[#allocation3 + $0xe8] sm:$0xff] %v701
  %766 = vst [vmem:[#allocation3 + $0x130] sm:$0xff] %v702
  %767 = vst [vmem:[#allocation3 + $0x178] sm:$0xff] %v703
  %768 = vst [vmem:[#allocation3 + $0x1c0] sm:$0xff] %v704
  %769 = vst [vmem:[#allocation3 + $0x208] sm:$0xff] %v705
  %770 = vst [vmem:[#allocation3 + $0x250] sm:$0xff] %v706
  %771 = vst [vmem:[#allocation3 + $0x298] sm:$0xff] %v707
  %772 = vst [vmem:[#allocation3 + $0x2e0] sm:$0xff] %v708
  %773 = vst [vmem:[#allocation3 + $0x328] sm:$0xff] %v709
  %774 = vst [vmem:[#allocation3 + $0x370] sm:$0xff] %v710
  %775 = vst [vmem:[#allocation3 + $0x3b8] sm:$0xff] %v711
  %776 = vst [vmem:[#allocation3 + $0x400] sm:$0xff] %v712
  %777 = vst [vmem:[#allocation3 + $0x448] sm:$0xff] %v713
  %778 = vst [vmem:[#allocation3 + $0x490] sm:$0xff] %v714
  %779 = vst [vmem:[#allocation3 + $0x4d8] sm:$0xff] %v715
  %780 = vst [vmem:[#allocation3 + $0x520] sm:$0xff] %v716
  %781 = vst [vmem:[#allocation3 + $0x568] sm:$0xff] %v717
  %782 = vst [vmem:[#allocation3 + $0x5b0] sm:$0xff] %v718
  %783 = vst [vmem:[#allocation3 + $0x5f8] sm:$0xff] %v719
  %784 = vst [vmem:[#allocation3 + $0x640] sm:$0xff] %v720
  %785 = vst [vmem:[#allocation3 + $0x688] sm:$0xff] %v721
  %786 = vst [vmem:[#allocation3 + $0x6d0] sm:$0xff] %v722
  %787 = vst [vmem:[#allocation3 + $0x718] sm:$0xff] %v723
  %788 = vst [vmem:[#allocation3 + $0x760] sm:$0xff] %v724
  %789 = vst [vmem:[#allocation3 + $0x7a8] sm:$0xff] %v725
  %790 = vst [vmem:[#allocation3 + $0x7f0] sm:$0xff] %v726
  %791 = vst [vmem:[#allocation3 + $0x838] sm:$0xff] %v727
  %792 = vst [vmem:[#allocation3 + $0x880] sm:$0xff] %v728
  %793 = vst [vmem:[#allocation3 + $0x8c8] sm:$0xff] %v729
  %794 = vst [vmem:[#allocation3 + $0x910] sm:$0xff] %v730
  %795 = vst [vmem:[#allocation3 + $0x958] sm:$0xff] %v731
  %796 = vst [vmem:[#allocation3 + $0x9a0] sm:$0xff] %v732
  %797 = vst [vmem:[#allocation3 + $0x9e8] sm:$0xff] %v733
  %798 = vst [vmem:[#allocation3 + $0xa30] sm:$0xff] %v734
  %799 = vst [vmem:[#allocation3 + $0xa78] sm:$0xff] %v735
  %800 = vst [vmem:[#allocation3 + $0xac0] sm:$0xff] %v736
  %801 = vst [vmem:[#allocation3 + $0xb08] sm:$0xff] %v737
  %802 = vst [vmem:[#allocation3 + $0xb50] sm:$0xff] %v738
  %803 = vst [vmem:[#allocation3 + $0xb98] sm:$0xff] %v739
  %804 = vst [vmem:[#allocation3 + $0xbe0] sm:$0xff] %v740
  %805 = vst [vmem:[#allocation3 + $0xc28] sm:$0xff] %v741
  %806 = vst [vmem:[#allocation3 + $0xc70] sm:$0xff] %v742
  %807 = vst [vmem:[#allocation3 + $0xcb8] sm:$0xff] %v743
  %808 = vst [vmem:[#allocation3 + $0xd00] sm:$0xff] %v744
  %809 = vst [vmem:[#allocation3 + $0xd48] sm:$0xff] %v745
  %810 = vst [vmem:[#allocation3 + $0xd90] sm:$0xff] %v746
  %811 = vst [vmem:[#allocation3 + $0xdd8] sm:$0xff] %v747
  %812 = vst [vmem:[#allocation3 + $0xe20] sm:$0xff] %v748
  %813 = vst [vmem:[#allocation3 + $0xe68] sm:$0xff] %v749
  %814 = vst [vmem:[#allocation3 + $0xeb0] sm:$0xff] %v750
  %815 = vst [vmem:[#allocation3 + $0xef8] sm:$0xff] %v751
  %816 = vst [vmem:[#allocation3 + $0xf40] sm:$0xff] %v752
  %817 = vst [vmem:[#allocation3 + $0xf88] sm:$0xff] %v753
  %818 = vst [vmem:[#allocation3 + $0xfd0] sm:$0xff] %v754
  %819 = vst [vmem:[#allocation3 + $0x1018] sm:$0xff] %v755
  %820 = vst [vmem:[#allocation3 + $0x1060] sm:$0xff] %v756
  %821 = vst [vmem:[#allocation3 + $0x10a8] sm:$0xff] %v757
  %822 = vst [vmem:[#allocation3 + $0x10f0] sm:$0xff] %v758
  %823 = vst [vmem:[#allocation3 + $0x1138] sm:$0xff] %v759
  %824 = vst [vmem:[#allocation3 + $0x1180] sm:$0xff] %v760
  %825 = vst [vmem:[#allocation3 + $0x11c8] sm:$0xff] %v761
  %v826 = vld [vmem:[%s377] sm:$0xff]
  %v827 = vld [vmem:[%s377 + $0x8] sm:$0xff]
  %v828 = vld [vmem:[%s377 + $0x18] sm:$0xff]
  %v829 = vld [vmem:[%s377 + $0x20] sm:$0xff]
  %v830 = vld [vmem:[%s377 + $0x30] sm:$0xff]
  %v831 = vld [vmem:[%s377 + $0x38] sm:$0xff]
  %v832 = vld [vmem:[%s377 + $0x48] sm:$0xff]
  %v833 = vld [vmem:[%s377 + $0x50] sm:$0xff]
  %v834 = vld [vmem:[%s377 + $0x60] sm:$0xff]
  %v835 = vld [vmem:[%s377 + $0x68] sm:$0xff]
  %v836 = vld [vmem:[%s377 + $0x78] sm:$0xff]
  %v837 = vld [vmem:[%s377 + $0x80] sm:$0xff]
  %v838 = vld [vmem:[%s377 + $0x90] sm:$0xff]
  %v839 = vld [vmem:[%s377 + $0x98] sm:$0xff]
  %v840 = vld [vmem:[%s377 + $0xa8] sm:$0xff]
  %v841 = vld [vmem:[%s377 + $0xb0] sm:$0xff]
  %v842 = vld [vmem:[%s377 + $0xc0] sm:$0xff]
  %v843 = vld [vmem:[%s377 + $0xc8] sm:$0xff]
  %v844 = vld [vmem:[%s377 + $0xd8] sm:$0xff]
  %v845 = vld [vmem:[%s377 + $0xe0] sm:$0xff]
  %v846 = vld [vmem:[%s377 + $0xf0] sm:$0xff]
  %v847 = vld [vmem:[%s377 + $0xf8] sm:$0xff]
  %v848 = vld [vmem:[%s377 + $0x108] sm:$0xff]
  %v849 = vld [vmem:[%s377 + $0x110] sm:$0xff]
  %v850 = vld [vmem:[%s377 + $0x120] sm:$0xff]
  %v851 = vld [vmem:[%s377 + $0x128] sm:$0xff]
  %v852 = vld [vmem:[%s377 + $0x138] sm:$0xff]
  %v853 = vld [vmem:[%s377 + $0x140] sm:$0xff]
  %v854 = vld [vmem:[%s377 + $0x150] sm:$0xff]
  %v855 = vld [vmem:[%s377 + $0x158] sm:$0xff]
  %v856 = vld [vmem:[%s377 + $0x168] sm:$0xff]
  %v857 = vld [vmem:[%s377 + $0x170] sm:$0xff]
  %v858 = vld [vmem:[%s377 + $0x1b0] sm:$0xff]
  %v859 = vld [vmem:[%s377 + $0x1b8] sm:$0xff]
  %v860 = vld [vmem:[%s377 + $0x1c8] sm:$0xff]
  %v861 = vld [vmem:[%s377 + $0x1d0] sm:$0xff]
  %v862 = vld [vmem:[%s377 + $0x1e0] sm:$0xff]
  %v863 = vld [vmem:[%s377 + $0x1e8] sm:$0xff]
  %v864 = vld [vmem:[%s377 + $0x1f8] sm:$0xff]
  %v865 = vld [vmem:[%s377 + $0x200] sm:$0xff]
  %v866 = vld [vmem:[%s377 + $0x210] sm:$0xff]
  %v867 = vld [vmem:[%s377 + $0x218] sm:$0xff]
  %v868 = vld [vmem:[%s377 + $0x228] sm:$0xff]
  %v869 = vld [vmem:[%s377 + $0x230] sm:$0xff]
  %v870 = vld [vmem:[%s377 + $0x240] sm:$0xff]
  %v871 = vld [vmem:[%s377 + $0x248] sm:$0xff]
  %v872 = vld [vmem:[%s377 + $0x258] sm:$0xff]
  %v873 = vld [vmem:[%s377 + $0x260] sm:$0xff]
  %v874 = vld [vmem:[%s377 + $0x270] sm:$0xff]
  %v875 = vld [vmem:[%s377 + $0x278] sm:$0xff]
  %v876 = vld [vmem:[%s377 + $0x288] sm:$0xff]
  %v877 = vld [vmem:[%s377 + $0x290] sm:$0xff]
  %v878 = vld [vmem:[%s377 + $0x2a0] sm:$0xff]
  %v879 = vld [vmem:[%s377 + $0x2a8] sm:$0xff]
  %v880 = vld [vmem:[%s377 + $0x2b8] sm:$0xff]
  %v881 = vld [vmem:[%s377 + $0x2c0] sm:$0xff]
  %v882 = vld [vmem:[%s377 + $0x2d0] sm:$0xff]
  %v883 = vld [vmem:[%s377 + $0x2d8] sm:$0xff]
  %v884 = vld [vmem:[%s377 + $0x2e8] sm:$0xff]
  %v885 = vld [vmem:[%s377 + $0x2f0] sm:$0xff]
  %v886 = vld [vmem:[%s377 + $0x300] sm:$0xff]
  %v887 = vld [vmem:[%s377 + $0x308] sm:$0xff]
  %v888 = vld [vmem:[%s377 + $0x318] sm:$0xff]
  %v889 = vld [vmem:[%s377 + $0x320] sm:$0xff]
  %890 = vst [vmem:[#allocation3 + $0x18] sm:$0xff] %v826
  %891 = vst [vmem:[#allocation3 + $0x60] sm:$0xff] %v827
  %892 = vst [vmem:[#allocation3 + $0xa8] sm:$0xff] %v828
  %893 = vst [vmem:[#allocation3 + $0xf0] sm:$0xff] %v829
  %894 = vst [vmem:[#allocation3 + $0x138] sm:$0xff] %v830
  %895 = vst [vmem:[#allocation3 + $0x180] sm:$0xff] %v831
  %896 = vst [vmem:[#allocation3 + $0x1c8] sm:$0xff] %v832
  %897 = vst [vmem:[#allocation3 + $0x210] sm:$0xff] %v833
  %898 = vst [vmem:[#allocation3 + $0x258] sm:$0xff] %v834
  %899 = vst [vmem:[#allocation3 + $0x2a0] sm:$0xff] %v835
  %900 = vst [vmem:[#allocation3 + $0x2e8] sm:$0xff] %v836
  %901 = vst [vmem:[#allocation3 + $0x330] sm:$0xff] %v837
  %902 = vst [vmem:[#allocation3 + $0x378] sm:$0xff] %v838
  %903 = vst [vmem:[#allocation3 + $0x3c0] sm:$0xff] %v839
  %904 = vst [vmem:[#allocation3 + $0x408] sm:$0xff] %v840
  %905 = vst [vmem:[#allocation3 + $0x450] sm:$0xff] %v841
  %906 = vst [vmem:[#allocation3 + $0x498] sm:$0xff] %v842
  %907 = vst [vmem:[#allocation3 + $0x4e0] sm:$0xff] %v843
  %908 = vst [vmem:[#allocation3 + $0x528] sm:$0xff] %v844
  %909 = vst [vmem:[#allocation3 + $0x570] sm:$0xff] %v845
  %910 = vst [vmem:[#allocation3 + $0x5b8] sm:$0xff] %v846
  %911 = vst [vmem:[#allocation3 + $0x600] sm:$0xff] %v847
  %912 = vst [vmem:[#allocation3 + $0x648] sm:$0xff] %v848
  %913 = vst [vmem:[#allocation3 + $0x690] sm:$0xff] %v849
  %914 = vst [vmem:[#allocation3 + $0x6d8] sm:$0xff] %v850
  %915 = vst [vmem:[#allocation3 + $0x720] sm:$0xff] %v851
  %916 = vst [vmem:[#allocation3 + $0x768] sm:$0xff] %v852
  %917 = vst [vmem:[#allocation3 + $0x7b0] sm:$0xff] %v853
  %918 = vst [vmem:[#allocation3 + $0x7f8] sm:$0xff] %v854
  %919 = vst [vmem:[#allocation3 + $0x840] sm:$0xff] %v855
  %920 = vst [vmem:[#allocation3 + $0x888] sm:$0xff] %v856
  %921 = vst [vmem:[#allocation3 + $0x8d0] sm:$0xff] %v857
  %922 = vst [vmem:[#allocation3 + $0x918] sm:$0xff] %v858
  %923 = vst [vmem:[#allocation3 + $0x960] sm:$0xff] %v859
  %924 = vst [vmem:[#allocation3 + $0x9a8] sm:$0xff] %v860
  %925 = vst [vmem:[#allocation3 + $0x9f0] sm:$0xff] %v861
  %926 = vst [vmem:[#allocation3 + $0xa38] sm:$0xff] %v862
  %927 = vst [vmem:[#allocation3 + $0xa80] sm:$0xff] %v863
  %928 = vst [vmem:[#allocation3 + $0xac8] sm:$0xff] %v864
  %929 = vst [vmem:[#allocation3 + $0xb10] sm:$0xff] %v865
  %930 = vst [vmem:[#allocation3 + $0xb58] sm:$0xff] %v866
  %931 = vst [vmem:[#allocation3 + $0xba0] sm:$0xff] %v867
  %932 = vst [vmem:[#allocation3 + $0xbe8] sm:$0xff] %v868
  %933 = vst [vmem:[#allocation3 + $0xc30] sm:$0xff] %v869
  %934 = vst [vmem:[#allocation3 + $0xc78] sm:$0xff] %v870
  %935 = vst [vmem:[#allocation3 + $0xcc0] sm:$0xff] %v871
  %936 = vst [vmem:[#allocation3 + $0xd08] sm:$0xff] %v872
  %937 = vst [vmem:[#allocation3 + $0xd50] sm:$0xff] %v873
  %938 = vst [vmem:[#allocation3 + $0xd98] sm:$0xff] %v874
  %939 = vst [vmem:[#allocation3 + $0xde0] sm:$0xff] %v875
  %940 = vst [vmem:[#allocation3 + $0xe28] sm:$0xff] %v876
  %941 = vst [vmem:[#allocation3 + $0xe70] sm:$0xff] %v877
  %942 = vst [vmem:[#allocation3 + $0xeb8] sm:$0xff] %v878
  %943 = vst [vmem:[#allocation3 + $0xf00] sm:$0xff] %v879
  %944 = vst [vmem:[#allocation3 + $0xf48] sm:$0xff] %v880
  %945 = vst [vmem:[#allocation3 + $0xf90] sm:$0xff] %v881
  %946 = vst [vmem:[#allocation3 + $0xfd8] sm:$0xff] %v882
  %947 = vst [vmem:[#allocation3 + $0x1020] sm:$0xff] %v883
  %948 = vst [vmem:[#allocation3 + $0x1068] sm:$0xff] %v884
  %949 = vst [vmem:[#allocation3 + $0x10b0] sm:$0xff] %v885
  %950 = vst [vmem:[#allocation3 + $0x10f8] sm:$0xff] %v886
  %951 = vst [vmem:[#allocation3 + $0x1140] sm:$0xff] %v887
  %952 = vst [vmem:[#allocation3 + $0x1188] sm:$0xff] %v888
  %953 = vst [vmem:[#allocation3 + $0x11d0] sm:$0xff] %v889
  %v954 = vld [vmem:[%s377 + $0x1] sm:$0xff]
  %v955 = vld [vmem:[%s377 + $0x9] sm:$0xff]
  %v956 = vld [vmem:[%s377 + $0x19] sm:$0xff]
  %v957 = vld [vmem:[%s377 + $0x21] sm:$0xff]
  %v958 = vld [vmem:[%s377 + $0x31] sm:$0xff]
  %v959 = vld [vmem:[%s377 + $0x39] sm:$0xff]
  %v960 = vld [vmem:[%s377 + $0x49] sm:$0xff]
  %v961 = vld [vmem:[%s377 + $0x51] sm:$0xff]
  %v962 = vld [vmem:[%s377 + $0x61] sm:$0xff]
  %v963 = vld [vmem:[%s377 + $0x69] sm:$0xff]
  %v964 = vld [vmem:[%s377 + $0x79] sm:$0xff]
  %v965 = vld [vmem:[%s377 + $0x81] sm:$0xff]
  %v966 = vld [vmem:[%s377 + $0x91] sm:$0xff]
  %v967 = vld [vmem:[%s377 + $0x99] sm:$0xff]
  %v968 = vld [vmem:[%s377 + $0xa9] sm:$0xff]
  %v969 = vld [vmem:[%s377 + $0xb1] sm:$0xff]
  %v970 = vld [vmem:[%s377 + $0xc1] sm:$0xff]
  %v971 = vld [vmem:[%s377 + $0xc9] sm:$0xff]
  %v972 = vld [vmem:[%s377 + $0xd9] sm:$0xff]
  %v973 = vld [vmem:[%s377 + $0xe1] sm:$0xff]
  %v974 = vld [vmem:[%s377 + $0xf1] sm:$0xff]
  %v975 = vld [vmem:[%s377 + $0xf9] sm:$0xff]
  %v976 = vld [vmem:[%s377 + $0x109] sm:$0xff]
  %v977 = vld [vmem:[%s377 + $0x111] sm:$0xff]
  %v978 = vld [vmem:[%s377 + $0x121] sm:$0xff]
  %v979 = vld [vmem:[%s377 + $0x129] sm:$0xff]
  %v980 = vld [vmem:[%s377 + $0x139] sm:$0xff]
  %v981 = vld [vmem:[%s377 + $0x141] sm:$0xff]
  %v982 = vld [vmem:[%s377 + $0x151] sm:$0xff]
  %v983 = vld [vmem:[%s377 + $0x159] sm:$0xff]
  %v984 = vld [vmem:[%s377 + $0x169] sm:$0xff]
  %v985 = vld [vmem:[%s377 + $0x171] sm:$0xff]
  %v986 = vld [vmem:[%s377 + $0x1b1] sm:$0xff]
  %v987 = vld [vmem:[%s377 + $0x1b9] sm:$0xff]
  %v988 = vld [vmem:[%s377 + $0x1c9] sm:$0xff]
  %v989 = vld [vmem:[%s377 + $0x1d1] sm:$0xff]
  %v990 = vld [vmem:[%s377 + $0x1e1] sm:$0xff]
  %v991 = vld [vmem:[%s377 + $0x1e9] sm:$0xff]
  %v992 = vld [vmem:[%s377 + $0x1f9] sm:$0xff]
  %v993 = vld [vmem:[%s377 + $0x201] sm:$0xff]
  %v994 = vld [vmem:[%s377 + $0x211] sm:$0xff]
  %v995 = vld [vmem:[%s377 + $0x219] sm:$0xff]
  %v996 = vld [vmem:[%s377 + $0x229] sm:$0xff]
  %v997 = vld [vmem:[%s377 + $0x231] sm:$0xff]
  %v998 = vld [vmem:[%s377 + $0x241] sm:$0xff]
  %v999 = vld [vmem:[%s377 + $0x249] sm:$0xff]
  %v1000 = vld [vmem:[%s377 + $0x259] sm:$0xff]
  %v1001 = vld [vmem:[%s377 + $0x261] sm:$0xff]
  %v1002 = vld [vmem:[%s377 + $0x271] sm:$0xff]
  %v1003 = vld [vmem:[%s377 + $0x279] sm:$0xff]
  %v1004 = vld [vmem:[%s377 + $0x289] sm:$0xff]
  %v1005 = vld [vmem:[%s377 + $0x291] sm:$0xff]
  %v1006 = vld [vmem:[%s377 + $0x2a1] sm:$0xff]
  %v1007 = vld [vmem:[%s377 + $0x2a9] sm:$0xff]
  %v1008 = vld [vmem:[%s377 + $0x2b9] sm:$0xff]
  %v1009 = vld [vmem:[%s377 + $0x2c1] sm:$0xff]
  %v1010 = vld [vmem:[%s377 + $0x2d1] sm:$0xff]
  %v1011 = vld [vmem:[%s377 + $0x2d9] sm:$0xff]
  %v1012 = vld [vmem:[%s377 + $0x2e9] sm:$0xff]
  %v1013 = vld [vmem:[%s377 + $0x2f1] sm:$0xff]
  %v1014 = vld [vmem:[%s377 + $0x301] sm:$0xff]
  %v1015 = vld [vmem:[%s377 + $0x309] sm:$0xff]
  %v1016 = vld [vmem:[%s377 + $0x319] sm:$0xff]
  %v1017 = vld [vmem:[%s377 + $0x321] sm:$0xff]
  %1018 = vst [vmem:[#allocation3 + $0x20] sm:$0xff] %v954
  %1019 = vst [vmem:[#allocation3 + $0x68] sm:$0xff] %v955
  %1020 = vst [vmem:[#allocation3 + $0xb0] sm:$0xff] %v956
  %1021 = vst [vmem:[#allocation3 + $0xf8] sm:$0xff] %v957
  %1022 = vst [vmem:[#allocation3 + $0x140] sm:$0xff] %v958
  %1023 = vst [vmem:[#allocation3 + $0x188] sm:$0xff] %v959
  %1024 = vst [vmem:[#allocation3 + $0x1d0] sm:$0xff] %v960
  %1025 = vst [vmem:[#allocation3 + $0x218] sm:$0xff] %v961
  %1026 = vst [vmem:[#allocation3 + $0x260] sm:$0xff] %v962
  %1027 = vst [vmem:[#allocation3 + $0x2a8] sm:$0xff] %v963
  %1028 = vst [vmem:[#allocation3 + $0x2f0] sm:$0xff] %v964
  %1029 = vst [vmem:[#allocation3 + $0x338] sm:$0xff] %v965
  %1030 = vst [vmem:[#allocation3 + $0x380] sm:$0xff] %v966
  %1031 = vst [vmem:[#allocation3 + $0x3c8] sm:$0xff] %v967
  %1032 = vst [vmem:[#allocation3 + $0x410] sm:$0xff] %v968
  %1033 = vst [vmem:[#allocation3 + $0x458] sm:$0xff] %v969
  %1034 = vst [vmem:[#allocation3 + $0x4a0] sm:$0xff] %v970
  %1035 = vst [vmem:[#allocation3 + $0x4e8] sm:$0xff] %v971
  %1036 = vst [vmem:[#allocation3 + $0x530] sm:$0xff] %v972
  %1037 = vst [vmem:[#allocation3 + $0x578] sm:$0xff] %v973
  %1038 = vst [vmem:[#allocation3 + $0x5c0] sm:$0xff] %v974
  %1039 = vst [vmem:[#allocation3 + $0x608] sm:$0xff] %v975
  %1040 = vst [vmem:[#allocation3 + $0x650] sm:$0xff] %v976
  %1041 = vst [vmem:[#allocation3 + $0x698] sm:$0xff] %v977
  %1042 = vst [vmem:[#allocation3 + $0x6e0] sm:$0xff] %v978
  %1043 = vst [vmem:[#allocation3 + $0x728] sm:$0xff] %v979
  %1044 = vst [vmem:[#allocation3 + $0x770] sm:$0xff] %v980
  %1045 = vst [vmem:[#allocation3 + $0x7b8] sm:$0xff] %v981
  %1046 = vst [vmem:[#allocation3 + $0x800] sm:$0xff] %v982
  %1047 = vst [vmem:[#allocation3 + $0x848] sm:$0xff] %v983
  %1048 = vst [vmem:[#allocation3 + $0x890] sm:$0xff] %v984
  %1049 = vst [vmem:[#allocation3 + $0x8d8] sm:$0xff] %v985
  %1050 = vst [vmem:[#allocation3 + $0x920] sm:$0xff] %v986
  %1051 = vst [vmem:[#allocation3 + $0x968] sm:$0xff] %v987
  %1052 = vst [vmem:[#allocation3 + $0x9b0] sm:$0xff] %v988
  %1053 = vst [vmem:[#allocation3 + $0x9f8] sm:$0xff] %v989
  %1054 = vst [vmem:[#allocation3 + $0xa40] sm:$0xff] %v990
  %1055 = vst [vmem:[#allocation3 + $0xa88] sm:$0xff] %v991
  %1056 = vst [vmem:[#allocation3 + $0xad0] sm:$0xff] %v992
  %1057 = vst [vmem:[#allocation3 + $0xb18] sm:$0xff] %v993
  %1058 = vst [vmem:[#allocation3 + $0xb60] sm:$0xff] %v994
  %1059 = vst [vmem:[#allocation3 + $0xba8] sm:$0xff] %v995
  %1060 = vst [vmem:[#allocation3 + $0xbf0] sm:$0xff] %v996
  %1061 = vst [vmem:[#allocation3 + $0xc38] sm:$0xff] %v997
  %1062 = vst [vmem:[#allocation3 + $0xc80] sm:$0xff] %v998
  %1063 = vst [vmem:[#allocation3 + $0xcc8] sm:$0xff] %v999
  %1064 = vst [vmem:[#allocation3 + $0xd10] sm:$0xff] %v1000
  %1065 = vst [vmem:[#allocation3 + $0xd58] sm:$0xff] %v1001
  %1066 = vst [vmem:[#allocation3 + $0xda0] sm:$0xff] %v1002
  %1067 = vst [vmem:[#allocation3 + $0xde8] sm:$0xff] %v1003
  %1068 = vst [vmem:[#allocation3 + $0xe30] sm:$0xff] %v1004
  %1069 = vst [vmem:[#allocation3 + $0xe78] sm:$0xff] %v1005
  %1070 = vst [vmem:[#allocation3 + $0xec0] sm:$0xff] %v1006
  %1071 = vst [vmem:[#allocation3 + $0xf08] sm:$0xff] %v1007
  %1072 = vst [vmem:[#allocation3 + $0xf50] sm:$0xff] %v1008
  %1073 = vst [vmem:[#allocation3 + $0xf98] sm:$0xff] %v1009
  %1074 = vst [vmem:[#allocation3 + $0xfe0] sm:$0xff] %v1010
  %1075 = vst [vmem:[#allocation3 + $0x1028] sm:$0xff] %v1011
  %1076 = vst [vmem:[#allocation3 + $0x1070] sm:$0xff] %v1012
  %1077 = vst [vmem:[#allocation3 + $0x10b8] sm:$0xff] %v1013
  %1078 = vst [vmem:[#allocation3 + $0x1100] sm:$0xff] %v1014
  %1079 = vst [vmem:[#allocation3 + $0x1148] sm:$0xff] %v1015
  %1080 = vst [vmem:[#allocation3 + $0x1190] sm:$0xff] %v1016
  %1081 = vst [vmem:[#allocation3 + $0x11d8] sm:$0xff] %v1017
  %v1082 = vld [vmem:[%s377 + $0x2] sm:$0xff]
  %v1083 = vld [vmem:[%s377 + $0xa] sm:$0xff]
  %v1084 = vld [vmem:[%s377 + $0x1a] sm:$0xff]
  %v1085 = vld [vmem:[%s377 + $0x22] sm:$0xff]
  %v1086 = vld [vmem:[%s377 + $0x32] sm:$0xff]
  %v1087 = vld [vmem:[%s377 + $0x3a] sm:$0xff]
  %v1088 = vld [vmem:[%s377 + $0x4a] sm:$0xff]
  %v1089 = vld [vmem:[%s377 + $0x52] sm:$0xff]
  %v1090 = vld [vmem:[%s377 + $0x62] sm:$0xff]
  %v1091 = vld [vmem:[%s377 + $0x6a] sm:$0xff]
  %v1092 = vld [vmem:[%s377 + $0x7a] sm:$0xff]
  %v1093 = vld [vmem:[%s377 + $0x82] sm:$0xff]
  %v1094 = vld [vmem:[%s377 + $0x92] sm:$0xff]
  %v1095 = vld [vmem:[%s377 + $0x9a] sm:$0xff]
  %v1096 = vld [vmem:[%s377 + $0xaa] sm:$0xff]
  %v1097 = vld [vmem:[%s377 + $0xb2] sm:$0xff]
  %v1098 = vld [vmem:[%s377 + $0xc2] sm:$0xff]
  %v1099 = vld [vmem:[%s377 + $0xca] sm:$0xff]
  %v1100 = vld [vmem:[%s377 + $0xda] sm:$0xff]
  %v1101 = vld [vmem:[%s377 + $0xe2] sm:$0xff]
  %v1102 = vld [vmem:[%s377 + $0xf2] sm:$0xff]
  %v1103 = vld [vmem:[%s377 + $0xfa] sm:$0xff]
  %v1104 = vld [vmem:[%s377 + $0x10a] sm:$0xff]
  %v1105 = vld [vmem:[%s377 + $0x112] sm:$0xff]
  %v1106 = vld [vmem:[%s377 + $0x122] sm:$0xff]
  %v1107 = vld [vmem:[%s377 + $0x12a] sm:$0xff]
  %v1108 = vld [vmem:[%s377 + $0x13a] sm:$0xff]
  %v1109 = vld [vmem:[%s377 + $0x142] sm:$0xff]
  %v1110 = vld [vmem:[%s377 + $0x152] sm:$0xff]
  %v1111 = vld [vmem:[%s377 + $0x15a] sm:$0xff]
  %v1112 = vld [vmem:[%s377 + $0x16a] sm:$0xff]
  %v1113 = vld [vmem:[%s377 + $0x172] sm:$0xff]
  %v1114 = vld [vmem:[%s377 + $0x1b2] sm:$0xff]
  %v1115 = vld [vmem:[%s377 + $0x1ba] sm:$0xff]
  %v1116 = vld [vmem:[%s377 + $0x1ca] sm:$0xff]
  %v1117 = vld [vmem:[%s377 + $0x1d2] sm:$0xff]
  %v1118 = vld [vmem:[%s377 + $0x1e2] sm:$0xff]
  %v1119 = vld [vmem:[%s377 + $0x1ea] sm:$0xff]
  %v1120 = vld [vmem:[%s377 + $0x1fa] sm:$0xff]
  %v1121 = vld [vmem:[%s377 + $0x202] sm:$0xff]
  %v1122 = vld [vmem:[%s377 + $0x212] sm:$0xff]
  %v1123 = vld [vmem:[%s377 + $0x21a] sm:$0xff]
  %v1124 = vld [vmem:[%s377 + $0x22a] sm:$0xff]
  %v1125 = vld [vmem:[%s377 + $0x232] sm:$0xff]
  %v1126 = vld [vmem:[%s377 + $0x242] sm:$0xff]
  %v1127 = vld [vmem:[%s377 + $0x24a] sm:$0xff]
  %v1128 = vld [vmem:[%s377 + $0x25a] sm:$0xff]
  %v1129 = vld [vmem:[%s377 + $0x262] sm:$0xff]
  %v1130 = vld [vmem:[%s377 + $0x272] sm:$0xff]
  %v1131 = vld [vmem:[%s377 + $0x27a] sm:$0xff]
  %v1132 = vld [vmem:[%s377 + $0x28a] sm:$0xff]
  %v1133 = vld [vmem:[%s377 + $0x292] sm:$0xff]
  %v1134 = vld [vmem:[%s377 + $0x2a2] sm:$0xff]
  %v1135 = vld [vmem:[%s377 + $0x2aa] sm:$0xff]
  %v1136 = vld [vmem:[%s377 + $0x2ba] sm:$0xff]
  %v1137 = vld [vmem:[%s377 + $0x2c2] sm:$0xff]
  %v1138 = vld [vmem:[%s377 + $0x2d2] sm:$0xff]
  %v1139 = vld [vmem:[%s377 + $0x2da] sm:$0xff]
  %v1140 = vld [vmem:[%s377 + $0x2ea] sm:$0xff]
  %v1141 = vld [vmem:[%s377 + $0x2f2] sm:$0xff]
  %v1142 = vld [vmem:[%s377 + $0x302] sm:$0xff]
  %v1143 = vld [vmem:[%s377 + $0x30a] sm:$0xff]
  %v1144 = vld [vmem:[%s377 + $0x31a] sm:$0xff]
  %v1145 = vld [vmem:[%s377 + $0x322] sm:$0xff]
  %1146 = vst [vmem:[#allocation3 + $0x28] sm:$0xff] %v1082
  %1147 = vst [vmem:[#allocation3 + $0x70] sm:$0xff] %v1083
  %1148 = vst [vmem:[#allocation3 + $0xb8] sm:$0xff] %v1084
  %1149 = vst [vmem:[#allocation3 + $0x100] sm:$0xff] %v1085
  %1150 = vst [vmem:[#allocation3 + $0x148] sm:$0xff] %v1086
  %1151 = vst [vmem:[#allocation3 + $0x190] sm:$0xff] %v1087
  %1152 = vst [vmem:[#allocation3 + $0x1d8] sm:$0xff] %v1088
  %1153 = vst [vmem:[#allocation3 + $0x220] sm:$0xff] %v1089
  %1154 = vst [vmem:[#allocation3 + $0x268] sm:$0xff] %v1090
  %1155 = vst [vmem:[#allocation3 + $0x2b0] sm:$0xff] %v1091
  %1156 = vst [vmem:[#allocation3 + $0x2f8] sm:$0xff] %v1092
  %1157 = vst [vmem:[#allocation3 + $0x340] sm:$0xff] %v1093
  %1158 = vst [vmem:[#allocation3 + $0x388] sm:$0xff] %v1094
  %1159 = vst [vmem:[#allocation3 + $0x3d0] sm:$0xff] %v1095
  %1160 = vst [vmem:[#allocation3 + $0x418] sm:$0xff] %v1096
  %1161 = vst [vmem:[#allocation3 + $0x460] sm:$0xff] %v1097
  %1162 = vst [vmem:[#allocation3 + $0x4a8] sm:$0xff] %v1098
  %1163 = vst [vmem:[#allocation3 + $0x4f0] sm:$0xff] %v1099
  %1164 = vst [vmem:[#allocation3 + $0x538] sm:$0xff] %v1100
  %1165 = vst [vmem:[#allocation3 + $0x580] sm:$0xff] %v1101
  %1166 = vst [vmem:[#allocation3 + $0x5c8] sm:$0xff] %v1102
  %1167 = vst [vmem:[#allocation3 + $0x610] sm:$0xff] %v1103
  %1168 = vst [vmem:[#allocation3 + $0x658] sm:$0xff] %v1104
  %1169 = vst [vmem:[#allocation3 + $0x6a0] sm:$0xff] %v1105
  %1170 = vst [vmem:[#allocation3 + $0x6e8] sm:$0xff] %v1106
  %1171 = vst [vmem:[#allocation3 + $0x730] sm:$0xff] %v1107
  %1172 = vst [vmem:[#allocation3 + $0x778] sm:$0xff] %v1108
  %1173 = vst [vmem:[#allocation3 + $0x7c0] sm:$0xff] %v1109
  %1174 = vst [vmem:[#allocation3 + $0x808] sm:$0xff] %v1110
  %1175 = vst [vmem:[#allocation3 + $0x850] sm:$0xff] %v1111
  %1176 = vst [vmem:[#allocation3 + $0x898] sm:$0xff] %v1112
  %1177 = vst [vmem:[#allocation3 + $0x8e0] sm:$0xff] %v1113
  %1178 = vst [vmem:[#allocation3 + $0x928] sm:$0xff] %v1114
  %1179 = vst [vmem:[#allocation3 + $0x970] sm:$0xff] %v1115
  %1180 = vst [vmem:[#allocation3 + $0x9b8] sm:$0xff] %v1116
  %1181 = vst [vmem:[#allocation3 + $0xa00] sm:$0xff] %v1117
  %1182 = vst [vmem:[#allocation3 + $0xa48] sm:$0xff] %v1118
  %1183 = vst [vmem:[#allocation3 + $0xa90] sm:$0xff] %v1119
  %1184 = vst [vmem:[#allocation3 + $0xad8] sm:$0xff] %v1120
  %1185 = vst [vmem:[#allocation3 + $0xb20] sm:$0xff] %v1121
  %1186 = vst [vmem:[#allocation3 + $0xb68] sm:$0xff] %v1122
  %1187 = vst [vmem:[#allocation3 + $0xbb0] sm:$0xff] %v1123
  %1188 = vst [vmem:[#allocation3 + $0xbf8] sm:$0xff] %v1124
  %1189 = vst [vmem:[#allocation3 + $0xc40] sm:$0xff] %v1125
  %1190 = vst [vmem:[#allocation3 + $0xc88] sm:$0xff] %v1126
  %1191 = vst [vmem:[#allocation3 + $0xcd0] sm:$0xff] %v1127
  %1192 = vst [vmem:[#allocation3 + $0xd18] sm:$0xff] %v1128
  %1193 = vst [vmem:[#allocation3 + $0xd60] sm:$0xff] %v1129
  %1194 = vst [vmem:[#allocation3 + $0xda8] sm:$0xff] %v1130
  %1195 = vst [vmem:[#allocation3 + $0xdf0] sm:$0xff] %v1131
  %1196 = vst [vmem:[#allocation3 + $0xe38] sm:$0xff] %v1132
  %1197 = vst [vmem:[#allocation3 + $0xe80] sm:$0xff] %v1133
  %1198 = vst [vmem:[#allocation3 + $0xec8] sm:$0xff] %v1134
  %1199 = vst [vmem:[#allocation3 + $0xf10] sm:$0xff] %v1135
  %1200 = vst [vmem:[#allocation3 + $0xf58] sm:$0xff] %v1136
  %1201 = vst [vmem:[#allocation3 + $0xfa0] sm:$0xff] %v1137
  %1202 = vst [vmem:[#allocation3 + $0xfe8] sm:$0xff] %v1138
  %1203 = vst [vmem:[#allocation3 + $0x1030] sm:$0xff] %v1139
  %1204 = vst [vmem:[#allocation3 + $0x1078] sm:$0xff] %v1140
  %1205 = vst [vmem:[#allocation3 + $0x10c0] sm:$0xff] %v1141
  %1206 = vst [vmem:[#allocation3 + $0x1108] sm:$0xff] %v1142
  %1207 = vst [vmem:[#allocation3 + $0x1150] sm:$0xff] %v1143
  %1208 = vst [vmem:[#allocation3 + $0x1198] sm:$0xff] %v1144
  %1209 = vst [vmem:[#allocation3 + $0x11e0] sm:$0xff] %v1145
  %s1210 = scalar_lea.vmem [#allocation2], 48
  %v1211 = vld [vmem:[%s1210] sm:$0xff]
  %v1212 = vld [vmem:[%s1210 + $0x8] sm:$0xff]
  %v1213 = vld [vmem:[%s1210 + $0x18] sm:$0xff]
  %v1214 = vld [vmem:[%s1210 + $0x20] sm:$0xff]
  %v1215 = vld [vmem:[%s1210 + $0x30] sm:$0xff]
  %v1216 = vld [vmem:[%s1210 + $0x38] sm:$0xff]
  %v1217 = vld [vmem:[%s1210 + $0x48] sm:$0xff]
  %v1218 = vld [vmem:[%s1210 + $0x50] sm:$0xff]
  %v1219 = vld [vmem:[%s1210 + $0x60] sm:$0xff]
  %v1220 = vld [vmem:[%s1210 + $0x68] sm:$0xff]
  %v1221 = vld [vmem:[%s1210 + $0x78] sm:$0xff]
  %v1222 = vld [vmem:[%s1210 + $0x80] sm:$0xff]
  %v1223 = vld [vmem:[%s1210 + $0x90] sm:$0xff]
  %v1224 = vld [vmem:[%s1210 + $0x98] sm:$0xff]
  %v1225 = vld [vmem:[%s1210 + $0xa8] sm:$0xff]
  %v1226 = vld [vmem:[%s1210 + $0xb0] sm:$0xff]
  %v1227 = vld [vmem:[%s1210 + $0xc0] sm:$0xff]
  %v1228 = vld [vmem:[%s1210 + $0xc8] sm:$0xff]
  %v1229 = vld [vmem:[%s1210 + $0xd8] sm:$0xff]
  %v1230 = vld [vmem:[%s1210 + $0xe0] sm:$0xff]
  %v1231 = vld [vmem:[%s1210 + $0xf0] sm:$0xff]
  %v1232 = vld [vmem:[%s1210 + $0xf8] sm:$0xff]
  %v1233 = vld [vmem:[%s1210 + $0x108] sm:$0xff]
  %v1234 = vld [vmem:[%s1210 + $0x110] sm:$0xff]
  %v1235 = vld [vmem:[%s1210 + $0x120] sm:$0xff]
  %v1236 = vld [vmem:[%s1210 + $0x128] sm:$0xff]
  %v1237 = vld [vmem:[%s1210 + $0x138] sm:$0xff]
  %v1238 = vld [vmem:[%s1210 + $0x140] sm:$0xff]
  %v1239 = vld [vmem:[%s1210 + $0x150] sm:$0xff]
  %v1240 = vld [vmem:[%s1210 + $0x158] sm:$0xff]
  %v1241 = vld [vmem:[%s1210 + $0x168] sm:$0xff]
  %v1242 = vld [vmem:[%s1210 + $0x170] sm:$0xff]
  %v1243 = vld [vmem:[%s1210 + $0x1b0] sm:$0xff]
  %v1244 = vld [vmem:[%s1210 + $0x1b8] sm:$0xff]
  %v1245 = vld [vmem:[%s1210 + $0x1c8] sm:$0xff]
  %v1246 = vld [vmem:[%s1210 + $0x1d0] sm:$0xff]
  %v1247 = vld [vmem:[%s1210 + $0x1e0] sm:$0xff]
  %v1248 = vld [vmem:[%s1210 + $0x1e8] sm:$0xff]
  %v1249 = vld [vmem:[%s1210 + $0x1f8] sm:$0xff]
  %v1250 = vld [vmem:[%s1210 + $0x200] sm:$0xff]
  %v1251 = vld [vmem:[%s1210 + $0x210] sm:$0xff]
  %v1252 = vld [vmem:[%s1210 + $0x218] sm:$0xff]
  %v1253 = vld [vmem:[%s1210 + $0x228] sm:$0xff]
  %v1254 = vld [vmem:[%s1210 + $0x230] sm:$0xff]
  %v1255 = vld [vmem:[%s1210 + $0x240] sm:$0xff]
  %v1256 = vld [vmem:[%s1210 + $0x248] sm:$0xff]
  %v1257 = vld [vmem:[%s1210 + $0x258] sm:$0xff]
  %v1258 = vld [vmem:[%s1210 + $0x260] sm:$0xff]
  %v1259 = vld [vmem:[%s1210 + $0x270] sm:$0xff]
  %v1260 = vld [vmem:[%s1210 + $0x278] sm:$0xff]
  %v1261 = vld [vmem:[%s1210 + $0x288] sm:$0xff]
  %v1262 = vld [vmem:[%s1210 + $0x290] sm:$0xff]
  %v1263 = vld [vmem:[%s1210 + $0x2a0] sm:$0xff]
  %v1264 = vld [vmem:[%s1210 + $0x2a8] sm:$0xff]
  %v1265 = vld [vmem:[%s1210 + $0x2b8] sm:$0xff]
  %v1266 = vld [vmem:[%s1210 + $0x2c0] sm:$0xff]
  %v1267 = vld [vmem:[%s1210 + $0x2d0] sm:$0xff]
  %v1268 = vld [vmem:[%s1210 + $0x2d8] sm:$0xff]
  %v1269 = vld [vmem:[%s1210 + $0x2e8] sm:$0xff]
  %v1270 = vld [vmem:[%s1210 + $0x2f0] sm:$0xff]
  %v1271 = vld [vmem:[%s1210 + $0x300] sm:$0xff]
  %v1272 = vld [vmem:[%s1210 + $0x308] sm:$0xff]
  %v1273 = vld [vmem:[%s1210 + $0x318] sm:$0xff]
  %v1274 = vld [vmem:[%s1210 + $0x320] sm:$0xff]
  %1275 = vst [vmem:[#allocation3 + $0x30] sm:$0xff] %v1211
  %1276 = vst [vmem:[#allocation3 + $0x78] sm:$0xff] %v1212
  %1277 = vst [vmem:[#allocation3 + $0xc0] sm:$0xff] %v1213
  %1278 = vst [vmem:[#allocation3 + $0x108] sm:$0xff] %v1214
  %1279 = vst [vmem:[#allocation3 + $0x150] sm:$0xff] %v1215
  %1280 = vst [vmem:[#allocation3 + $0x198] sm:$0xff] %v1216
  %1281 = vst [vmem:[#allocation3 + $0x1e0] sm:$0xff] %v1217
  %1282 = vst [vmem:[#allocation3 + $0x228] sm:$0xff] %v1218
  %1283 = vst [vmem:[#allocation3 + $0x270] sm:$0xff] %v1219
  %1284 = vst [vmem:[#allocation3 + $0x2b8] sm:$0xff] %v1220
  %1285 = vst [vmem:[#allocation3 + $0x300] sm:$0xff] %v1221
  %1286 = vst [vmem:[#allocation3 + $0x348] sm:$0xff] %v1222
  %1287 = vst [vmem:[#allocation3 + $0x390] sm:$0xff] %v1223
  %1288 = vst [vmem:[#allocation3 + $0x3d8] sm:$0xff] %v1224
  %1289 = vst [vmem:[#allocation3 + $0x420] sm:$0xff] %v1225
  %1290 = vst [vmem:[#allocation3 + $0x468] sm:$0xff] %v1226
  %1291 = vst [vmem:[#allocation3 + $0x4b0] sm:$0xff] %v1227
  %1292 = vst [vmem:[#allocation3 + $0x4f8] sm:$0xff] %v1228
  %1293 = vst [vmem:[#allocation3 + $0x540] sm:$0xff] %v1229
  %1294 = vst [vmem:[#allocation3 + $0x588] sm:$0xff] %v1230
  %1295 = vst [vmem:[#allocation3 + $0x5d0] sm:$0xff] %v1231
  %1296 = vst [vmem:[#allocation3 + $0x618] sm:$0xff] %v1232
  %1297 = vst [vmem:[#allocation3 + $0x660] sm:$0xff] %v1233
  %1298 = vst [vmem:[#allocation3 + $0x6a8] sm:$0xff] %v1234
  %1299 = vst [vmem:[#allocation3 + $0x6f0] sm:$0xff] %v1235
  %1300 = vst [vmem:[#allocation3 + $0x738] sm:$0xff] %v1236
  %1301 = vst [vmem:[#allocation3 + $0x780] sm:$0xff] %v1237
  %1302 = vst [vmem:[#allocation3 + $0x7c8] sm:$0xff] %v1238
  %1303 = vst [vmem:[#allocation3 + $0x810] sm:$0xff] %v1239
  %1304 = vst [vmem:[#allocation3 + $0x858] sm:$0xff] %v1240
  %1305 = vst [vmem:[#allocation3 + $0x8a0] sm:$0xff] %v1241
  %1306 = vst [vmem:[#allocation3 + $0x8e8] sm:$0xff] %v1242
  %1307 = vst [vmem:[#allocation3 + $0x930] sm:$0xff] %v1243
  %1308 = vst [vmem:[#allocation3 + $0x978] sm:$0xff] %v1244
  %1309 = vst [vmem:[#allocation3 + $0x9c0] sm:$0xff] %v1245
  %1310 = vst [vmem:[#allocation3 + $0xa08] sm:$0xff] %v1246
  %1311 = vst [vmem:[#allocation3 + $0xa50] sm:$0xff] %v1247
  %1312 = vst [vmem:[#allocation3 + $0xa98] sm:$0xff] %v1248
  %1313 = vst [vmem:[#allocation3 + $0xae0] sm:$0xff] %v1249
  %1314 = vst [vmem:[#allocation3 + $0xb28] sm:$0xff] %v1250
  %1315 = vst [vmem:[#allocation3 + $0xb70] sm:$0xff] %v1251
  %1316 = vst [vmem:[#allocation3 + $0xbb8] sm:$0xff] %v1252
  %1317 = vst [vmem:[#allocation3 + $0xc00] sm:$0xff] %v1253
  %1318 = vst [vmem:[#allocation3 + $0xc48] sm:$0xff] %v1254
  %1319 = vst [vmem:[#allocation3 + $0xc90] sm:$0xff] %v1255
  %1320 = vst [vmem:[#allocation3 + $0xcd8] sm:$0xff] %v1256
  %1321 = vst [vmem:[#allocation3 + $0xd20] sm:$0xff] %v1257
  %1322 = vst [vmem:[#allocation3 + $0xd68] sm:$0xff] %v1258
  %1323 = vst [vmem:[#allocation3 + $0xdb0] sm:$0xff] %v1259
  %1324 = vst [vmem:[#allocation3 + $0xdf8] sm:$0xff] %v1260
  %1325 = vst [vmem:[#allocation3 + $0xe40] sm:$0xff] %v1261
  %1326 = vst [vmem:[#allocation3 + $0xe88] sm:$0xff] %v1262
  %1327 = vst [vmem:[#allocation3 + $0xed0] sm:$0xff] %v1263
  %1328 = vst [vmem:[#allocation3 + $0xf18] sm:$0xff] %v1264
  %1329 = vst [vmem:[#allocation3 + $0xf60] sm:$0xff] %v1265
  %1330 = vst [vmem:[#allocation3 + $0xfa8] sm:$0xff] %v1266
  %1331 = vst [vmem:[#allocation3 + $0xff0] sm:$0xff] %v1267
  %1332 = vst [vmem:[#allocation3 + $0x1038] sm:$0xff] %v1268
  %1333 = vst [vmem:[#allocation3 + $0x1080] sm:$0xff] %v1269
  %1334 = vst [vmem:[#allocation3 + $0x10c8] sm:$0xff] %v1270
  %1335 = vst [vmem:[#allocation3 + $0x1110] sm:$0xff] %v1271
  %1336 = vst [vmem:[#allocation3 + $0x1158] sm:$0xff] %v1272
  %1337 = vst [vmem:[#allocation3 + $0x11a0] sm:$0xff] %v1273
  %1338 = vst [vmem:[#allocation3 + $0x11e8] sm:$0xff] %v1274
  %v1339 = vld [vmem:[%s1210 + $0x1] sm:$0xff]
  %v1340 = vld [vmem:[%s1210 + $0x9] sm:$0xff]
  %v1341 = vld [vmem:[%s1210 + $0x19] sm:$0xff]
  %v1342 = vld [vmem:[%s1210 + $0x21] sm:$0xff]
  %v1343 = vld [vmem:[%s1210 + $0x31] sm:$0xff]
  %v1344 = vld [vmem:[%s1210 + $0x39] sm:$0xff]
  %v1345 = vld [vmem:[%s1210 + $0x49] sm:$0xff]
  %v1346 = vld [vmem:[%s1210 + $0x51] sm:$0xff]
  %v1347 = vld [vmem:[%s1210 + $0x61] sm:$0xff]
  %v1348 = vld [vmem:[%s1210 + $0x69] sm:$0xff]
  %v1349 = vld [vmem:[%s1210 + $0x79] sm:$0xff]
  %v1350 = vld [vmem:[%s1210 + $0x81] sm:$0xff]
  %v1351 = vld [vmem:[%s1210 + $0x91] sm:$0xff]
  %v1352 = vld [vmem:[%s1210 + $0x99] sm:$0xff]
  %v1353 = vld [vmem:[%s1210 + $0xa9] sm:$0xff]
  %v1354 = vld [vmem:[%s1210 + $0xb1] sm:$0xff]
  %v1355 = vld [vmem:[%s1210 + $0xc1] sm:$0xff]
  %v1356 = vld [vmem:[%s1210 + $0xc9] sm:$0xff]
  %v1357 = vld [vmem:[%s1210 + $0xd9] sm:$0xff]
  %v1358 = vld [vmem:[%s1210 + $0xe1] sm:$0xff]
  %v1359 = vld [vmem:[%s1210 + $0xf1] sm:$0xff]
  %v1360 = vld [vmem:[%s1210 + $0xf9] sm:$0xff]
  %v1361 = vld [vmem:[%s1210 + $0x109] sm:$0xff]
  %v1362 = vld [vmem:[%s1210 + $0x111] sm:$0xff]
  %v1363 = vld [vmem:[%s1210 + $0x121] sm:$0xff]
  %v1364 = vld [vmem:[%s1210 + $0x129] sm:$0xff]
  %v1365 = vld [vmem:[%s1210 + $0x139] sm:$0xff]
  %v1366 = vld [vmem:[%s1210 + $0x141] sm:$0xff]
  %v1367 = vld [vmem:[%s1210 + $0x151] sm:$0xff]
  %v1368 = vld [vmem:[%s1210 + $0x159] sm:$0xff]
  %v1369 = vld [vmem:[%s1210 + $0x169] sm:$0xff]
  %v1370 = vld [vmem:[%s1210 + $0x171] sm:$0xff]
  %v1371 = vld [vmem:[%s1210 + $0x1b1] sm:$0xff]
  %v1372 = vld [vmem:[%s1210 + $0x1b9] sm:$0xff]
  %v1373 = vld [vmem:[%s1210 + $0x1c9] sm:$0xff]
  %v1374 = vld [vmem:[%s1210 + $0x1d1] sm:$0xff]
  %v1375 = vld [vmem:[%s1210 + $0x1e1] sm:$0xff]
  %v1376 = vld [vmem:[%s1210 + $0x1e9] sm:$0xff]
  %v1377 = vld [vmem:[%s1210 + $0x1f9] sm:$0xff]
  %v1378 = vld [vmem:[%s1210 + $0x201] sm:$0xff]
  %v1379 = vld [vmem:[%s1210 + $0x211] sm:$0xff]
  %v1380 = vld [vmem:[%s1210 + $0x219] sm:$0xff]
  %v1381 = vld [vmem:[%s1210 + $0x229] sm:$0xff]
  %v1382 = vld [vmem:[%s1210 + $0x231] sm:$0xff]
  %v1383 = vld [vmem:[%s1210 + $0x241] sm:$0xff]
  %v1384 = vld [vmem:[%s1210 + $0x249] sm:$0xff]
  %v1385 = vld [vmem:[%s1210 + $0x259] sm:$0xff]
  %v1386 = vld [vmem:[%s1210 + $0x261] sm:$0xff]
  %v1387 = vld [vmem:[%s1210 + $0x271] sm:$0xff]
  %v1388 = vld [vmem:[%s1210 + $0x279] sm:$0xff]
  %v1389 = vld [vmem:[%s1210 + $0x289] sm:$0xff]
  %v1390 = vld [vmem:[%s1210 + $0x291] sm:$0xff]
  %v1391 = vld [vmem:[%s1210 + $0x2a1] sm:$0xff]
  %v1392 = vld [vmem:[%s1210 + $0x2a9] sm:$0xff]
  %v1393 = vld [vmem:[%s1210 + $0x2b9] sm:$0xff]
  %v1394 = vld [vmem:[%s1210 + $0x2c1] sm:$0xff]
  %v1395 = vld [vmem:[%s1210 + $0x2d1] sm:$0xff]
  %v1396 = vld [vmem:[%s1210 + $0x2d9] sm:$0xff]
  %v1397 = vld [vmem:[%s1210 + $0x2e9] sm:$0xff]
  %v1398 = vld [vmem:[%s1210 + $0x2f1] sm:$0xff]
  %v1399 = vld [vmem:[%s1210 + $0x301] sm:$0xff]
  %v1400 = vld [vmem:[%s1210 + $0x309] sm:$0xff]
  %v1401 = vld [vmem:[%s1210 + $0x319] sm:$0xff]
  %v1402 = vld [vmem:[%s1210 + $0x321] sm:$0xff]
  %1403 = vst [vmem:[#allocation3 + $0x38] sm:$0xff] %v1339
  %1404 = vst [vmem:[#allocation3 + $0x80] sm:$0xff] %v1340
  %1405 = vst [vmem:[#allocation3 + $0xc8] sm:$0xff] %v1341
  %1406 = vst [vmem:[#allocation3 + $0x110] sm:$0xff] %v1342
  %1407 = vst [vmem:[#allocation3 + $0x158] sm:$0xff] %v1343
  %1408 = vst [vmem:[#allocation3 + $0x1a0] sm:$0xff] %v1344
  %1409 = vst [vmem:[#allocation3 + $0x1e8] sm:$0xff] %v1345
  %1410 = vst [vmem:[#allocation3 + $0x230] sm:$0xff] %v1346
  %1411 = vst [vmem:[#allocation3 + $0x278] sm:$0xff] %v1347
  %1412 = vst [vmem:[#allocation3 + $0x2c0] sm:$0xff] %v1348
  %1413 = vst [vmem:[#allocation3 + $0x308] sm:$0xff] %v1349
  %1414 = vst [vmem:[#allocation3 + $0x350] sm:$0xff] %v1350
  %1415 = vst [vmem:[#allocation3 + $0x398] sm:$0xff] %v1351
  %1416 = vst [vmem:[#allocation3 + $0x3e0] sm:$0xff] %v1352
  %1417 = vst [vmem:[#allocation3 + $0x428] sm:$0xff] %v1353
  %1418 = vst [vmem:[#allocation3 + $0x470] sm:$0xff] %v1354
  %1419 = vst [vmem:[#allocation3 + $0x4b8] sm:$0xff] %v1355
  %1420 = vst [vmem:[#allocation3 + $0x500] sm:$0xff] %v1356
  %1421 = vst [vmem:[#allocation3 + $0x548] sm:$0xff] %v1357
  %1422 = vst [vmem:[#allocation3 + $0x590] sm:$0xff] %v1358
  %1423 = vst [vmem:[#allocation3 + $0x5d8] sm:$0xff] %v1359
  %1424 = vst [vmem:[#allocation3 + $0x620] sm:$0xff] %v1360
  %1425 = vst [vmem:[#allocation3 + $0x668] sm:$0xff] %v1361
  %1426 = vst [vmem:[#allocation3 + $0x6b0] sm:$0xff] %v1362
  %1427 = vst [vmem:[#allocation3 + $0x6f8] sm:$0xff] %v1363
  %1428 = vst [vmem:[#allocation3 + $0x740] sm:$0xff] %v1364
  %1429 = vst [vmem:[#allocation3 + $0x788] sm:$0xff] %v1365
  %1430 = vst [vmem:[#allocation3 + $0x7d0] sm:$0xff] %v1366
  %1431 = vst [vmem:[#allocation3 + $0x818] sm:$0xff] %v1367
  %1432 = vst [vmem:[#allocation3 + $0x860] sm:$0xff] %v1368
  %1433 = vst [vmem:[#allocation3 + $0x8a8] sm:$0xff] %v1369
  %1434 = vst [vmem:[#allocation3 + $0x8f0] sm:$0xff] %v1370
  %1435 = vst [vmem:[#allocation3 + $0x938] sm:$0xff] %v1371
  %1436 = vst [vmem:[#allocation3 + $0x980] sm:$0xff] %v1372
  %1437 = vst [vmem:[#allocation3 + $0x9c8] sm:$0xff] %v1373
  %1438 = vst [vmem:[#allocation3 + $0xa10] sm:$0xff] %v1374
  %1439 = vst [vmem:[#allocation3 + $0xa58] sm:$0xff] %v1375
  %1440 = vst [vmem:[#allocation3 + $0xaa0] sm:$0xff] %v1376
  %1441 = vst [vmem:[#allocation3 + $0xae8] sm:$0xff] %v1377
  %1442 = vst [vmem:[#allocation3 + $0xb30] sm:$0xff] %v1378
  %1443 = vst [vmem:[#allocation3 + $0xb78] sm:$0xff] %v1379
  %1444 = vst [vmem:[#allocation3 + $0xbc0] sm:$0xff] %v1380
  %1445 = vst [vmem:[#allocation3 + $0xc08] sm:$0xff] %v1381
  %1446 = vst [vmem:[#allocation3 + $0xc50] sm:$0xff] %v1382
  %1447 = vst [vmem:[#allocation3 + $0xc98] sm:$0xff] %v1383
  %1448 = vst [vmem:[#allocation3 + $0xce0] sm:$0xff] %v1384
  %1449 = vst [vmem:[#allocation3 + $0xd28] sm:$0xff] %v1385
  %1450 = vst [vmem:[#allocation3 + $0xd70] sm:$0xff] %v1386
  %1451 = vst [vmem:[#allocation3 + $0xdb8] sm:$0xff] %v1387
  %1452 = vst [vmem:[#allocation3 + $0xe00] sm:$0xff] %v1388
  %1453 = vst [vmem:[#allocation3 + $0xe48] sm:$0xff] %v1389
  %1454 = vst [vmem:[#allocation3 + $0xe90] sm:$0xff] %v1390
  %1455 = vst [vmem:[#allocation3 + $0xed8] sm:$0xff] %v1391
  %1456 = vst [vmem:[#allocation3 + $0xf20] sm:$0xff] %v1392
  %1457 = vst [vmem:[#allocation3 + $0xf68] sm:$0xff] %v1393
  %1458 = vst [vmem:[#allocation3 + $0xfb0] sm:$0xff] %v1394
  %1459 = vst [vmem:[#allocation3 + $0xff8] sm:$0xff] %v1395
  %1460 = vst [vmem:[#allocation3 + $0x1040] sm:$0xff] %v1396
  %1461 = vst [vmem:[#allocation3 + $0x1088] sm:$0xff] %v1397
  %1462 = vst [vmem:[#allocation3 + $0x10d0] sm:$0xff] %v1398
  %1463 = vst [vmem:[#allocation3 + $0x1118] sm:$0xff] %v1399
  %1464 = vst [vmem:[#allocation3 + $0x1160] sm:$0xff] %v1400
  %1465 = vst [vmem:[#allocation3 + $0x11a8] sm:$0xff] %v1401
  %1466 = vst [vmem:[#allocation3 + $0x11f0] sm:$0xff] %v1402
  %v1467 = vld [vmem:[%s1210 + $0x2] sm:$0xff]
  %v1468 = vld [vmem:[%s1210 + $0xa] sm:$0xff]
  %v1469 = vld [vmem:[%s1210 + $0x1a] sm:$0xff]
  %v1470 = vld [vmem:[%s1210 + $0x22] sm:$0xff]
  %v1471 = vld [vmem:[%s1210 + $0x32] sm:$0xff]
  %v1472 = vld [vmem:[%s1210 + $0x3a] sm:$0xff]
  %v1473 = vld [vmem:[%s1210 + $0x4a] sm:$0xff]
  %v1474 = vld [vmem:[%s1210 + $0x52] sm:$0xff]
  %v1475 = vld [vmem:[%s1210 + $0x62] sm:$0xff]
  %v1476 = vld [vmem:[%s1210 + $0x6a] sm:$0xff]
  %v1477 = vld [vmem:[%s1210 + $0x7a] sm:$0xff]
  %v1478 = vld [vmem:[%s1210 + $0x82] sm:$0xff]
  %v1479 = vld [vmem:[%s1210 + $0x92] sm:$0xff]
  %v1480 = vld [vmem:[%s1210 + $0x9a] sm:$0xff]
  %v1481 = vld [vmem:[%s1210 + $0xaa] sm:$0xff]
  %v1482 = vld [vmem:[%s1210 + $0xb2] sm:$0xff]
  %v1483 = vld [vmem:[%s1210 + $0xc2] sm:$0xff]
  %v1484 = vld [vmem:[%s1210 + $0xca] sm:$0xff]
  %v1485 = vld [vmem:[%s1210 + $0xda] sm:$0xff]
  %v1486 = vld [vmem:[%s1210 + $0xe2] sm:$0xff]
  %v1487 = vld [vmem:[%s1210 + $0xf2] sm:$0xff]
  %v1488 = vld [vmem:[%s1210 + $0xfa] sm:$0xff]
  %v1489 = vld [vmem:[%s1210 + $0x10a] sm:$0xff]
  %v1490 = vld [vmem:[%s1210 + $0x112] sm:$0xff]
  %v1491 = vld [vmem:[%s1210 + $0x122] sm:$0xff]
  %v1492 = vld [vmem:[%s1210 + $0x12a] sm:$0xff]
  %v1493 = vld [vmem:[%s1210 + $0x13a] sm:$0xff]
  %v1494 = vld [vmem:[%s1210 + $0x142] sm:$0xff]
  %v1495 = vld [vmem:[%s1210 + $0x152] sm:$0xff]
  %v1496 = vld [vmem:[%s1210 + $0x15a] sm:$0xff]
  %v1497 = vld [vmem:[%s1210 + $0x16a] sm:$0xff]
  %v1498 = vld [vmem:[%s1210 + $0x172] sm:$0xff]
  %v1499 = vld [vmem:[%s1210 + $0x1b2] sm:$0xff]
  %v1500 = vld [vmem:[%s1210 + $0x1ba] sm:$0xff]
  %v1501 = vld [vmem:[%s1210 + $0x1ca] sm:$0xff]
  %v1502 = vld [vmem:[%s1210 + $0x1d2] sm:$0xff]
  %v1503 = vld [vmem:[%s1210 + $0x1e2] sm:$0xff]
  %v1504 = vld [vmem:[%s1210 + $0x1ea] sm:$0xff]
  %v1505 = vld [vmem:[%s1210 + $0x1fa] sm:$0xff]
  %v1506 = vld [vmem:[%s1210 + $0x202] sm:$0xff]
  %v1507 = vld [vmem:[%s1210 + $0x212] sm:$0xff]
  %v1508 = vld [vmem:[%s1210 + $0x21a] sm:$0xff]
  %v1509 = vld [vmem:[%s1210 + $0x22a] sm:$0xff]
  %v1510 = vld [vmem:[%s1210 + $0x232] sm:$0xff]
  %v1511 = vld [vmem:[%s1210 + $0x242] sm:$0xff]
  %v1512 = vld [vmem:[%s1210 + $0x24a] sm:$0xff]
  %v1513 = vld [vmem:[%s1210 + $0x25a] sm:$0xff]
  %v1514 = vld [vmem:[%s1210 + $0x262] sm:$0xff]
  %v1515 = vld [vmem:[%s1210 + $0x272] sm:$0xff]
  %v1516 = vld [vmem:[%s1210 + $0x27a] sm:$0xff]
  %v1517 = vld [vmem:[%s1210 + $0x28a] sm:$0xff]
  %v1518 = vld [vmem:[%s1210 + $0x292] sm:$0xff]
  %v1519 = vld [vmem:[%s1210 + $0x2a2] sm:$0xff]
  %v1520 = vld [vmem:[%s1210 + $0x2aa] sm:$0xff]
  %v1521 = vld [vmem:[%s1210 + $0x2ba] sm:$0xff]
  %v1522 = vld [vmem:[%s1210 + $0x2c2] sm:$0xff]
  %v1523 = vld [vmem:[%s1210 + $0x2d2] sm:$0xff]
  %v1524 = vld [vmem:[%s1210 + $0x2da] sm:$0xff]
  %v1525 = vld [vmem:[%s1210 + $0x2ea] sm:$0xff]
  %v1526 = vld [vmem:[%s1210 + $0x2f2] sm:$0xff]
  %v1527 = vld [vmem:[%s1210 + $0x302] sm:$0xff]
  %v1528 = vld [vmem:[%s1210 + $0x30a] sm:$0xff]
  %v1529 = vld [vmem:[%s1210 + $0x31a] sm:$0xff]
  %v1530 = vld [vmem:[%s1210 + $0x322] sm:$0xff]
  %1531 = vst [vmem:[#allocation3 + $0x40] sm:$0xff] %v1467
  %1532 = vst [vmem:[#allocation3 + $0x88] sm:$0xff] %v1468
  %1533 = vst [vmem:[#allocation3 + $0xd0] sm:$0xff] %v1469
  %1534 = vst [vmem:[#allocation3 + $0x118] sm:$0xff] %v1470
  %1535 = vst [vmem:[#allocation3 + $0x160] sm:$0xff] %v1471
  %1536 = vst [vmem:[#allocation3 + $0x1a8] sm:$0xff] %v1472
  %1537 = vst [vmem:[#allocation3 + $0x1f0] sm:$0xff] %v1473
  %1538 = vst [vmem:[#allocation3 + $0x238] sm:$0xff] %v1474
  %1539 = vst [vmem:[#allocation3 + $0x280] sm:$0xff] %v1475
  %1540 = vst [vmem:[#allocation3 + $0x2c8] sm:$0xff] %v1476
  %1541 = vst [vmem:[#allocation3 + $0x310] sm:$0xff] %v1477
  %1542 = vst [vmem:[#allocation3 + $0x358] sm:$0xff] %v1478
  %1543 = vst [vmem:[#allocation3 + $0x3a0] sm:$0xff] %v1479
  %1544 = vst [vmem:[#allocation3 + $0x3e8] sm:$0xff] %v1480
  %1545 = vst [vmem:[#allocation3 + $0x430] sm:$0xff] %v1481
  %1546 = vst [vmem:[#allocation3 + $0x478] sm:$0xff] %v1482
  %1547 = vst [vmem:[#allocation3 + $0x4c0] sm:$0xff] %v1483
  %1548 = vst [vmem:[#allocation3 + $0x508] sm:$0xff] %v1484
  %1549 = vst [vmem:[#allocation3 + $0x550] sm:$0xff] %v1485
  %1550 = vst [vmem:[#allocation3 + $0x598] sm:$0xff] %v1486
  %1551 = vst [vmem:[#allocation3 + $0x5e0] sm:$0xff] %v1487
  %1552 = vst [vmem:[#allocation3 + $0x628] sm:$0xff] %v1488
  %1553 = vst [vmem:[#allocation3 + $0x670] sm:$0xff] %v1489
  %1554 = vst [vmem:[#allocation3 + $0x6b8] sm:$0xff] %v1490
  %1555 = vst [vmem:[#allocation3 + $0x700] sm:$0xff] %v1491
  %1556 = vst [vmem:[#allocation3 + $0x748] sm:$0xff] %v1492
  %1557 = vst [vmem:[#allocation3 + $0x790] sm:$0xff] %v1493
  %1558 = vst [vmem:[#allocation3 + $0x7d8] sm:$0xff] %v1494
  %1559 = vst [vmem:[#allocation3 + $0x820] sm:$0xff] %v1495
  %1560 = vst [vmem:[#allocation3 + $0x868] sm:$0xff] %v1496
  %1561 = vst [vmem:[#allocation3 + $0x8b0] sm:$0xff] %v1497
  %1562 = vst [vmem:[#allocation3 + $0x8f8] sm:$0xff] %v1498
  %1563 = vst [vmem:[#allocation3 + $0x940] sm:$0xff] %v1499
  %1564 = vst [vmem:[#allocation3 + $0x988] sm:$0xff] %v1500
  %1565 = vst [vmem:[#allocation3 + $0x9d0] sm:$0xff] %v1501
  %1566 = vst [vmem:[#allocation3 + $0xa18] sm:$0xff] %v1502
  %1567 = vst [vmem:[#allocation3 + $0xa60] sm:$0xff] %v1503
  %1568 = vst [vmem:[#allocation3 + $0xaa8] sm:$0xff] %v1504
  %1569 = vst [vmem:[#allocation3 + $0xaf0] sm:$0xff] %v1505
  %1570 = vst [vmem:[#allocation3 + $0xb38] sm:$0xff] %v1506
  %1571 = vst [vmem:[#allocation3 + $0xb80] sm:$0xff] %v1507
  %1572 = vst [vmem:[#allocation3 + $0xbc8] sm:$0xff] %v1508
  %1573 = vst [vmem:[#allocation3 + $0xc10] sm:$0xff] %v1509
  %1574 = vst [vmem:[#allocation3 + $0xc58] sm:$0xff] %v1510
  %1575 = vst [vmem:[#allocation3 + $0xca0] sm:$0xff] %v1511
  %1576 = vst [vmem:[#allocation3 + $0xce8] sm:$0xff] %v1512
  %1577 = vst [vmem:[#allocation3 + $0xd30] sm:$0xff] %v1513
  %1578 = vst [vmem:[#allocation3 + $0xd78] sm:$0xff] %v1514
  %1579 = vst [vmem:[#allocation3 + $0xdc0] sm:$0xff] %v1515
  %1580 = vst [vmem:[#allocation3 + $0xe08] sm:$0xff] %v1516
  %1581 = vst [vmem:[#allocation3 + $0xe50] sm:$0xff] %v1517
  %1582 = vst [vmem:[#allocation3 + $0xe98] sm:$0xff] %v1518
  %1583 = vst [vmem:[#allocation3 + $0xee0] sm:$0xff] %v1519
  %1584 = vst [vmem:[#allocation3 + $0xf28] sm:$0xff] %v1520
  %1585 = vst [vmem:[#allocation3 + $0xf70] sm:$0xff] %v1521
  %1586 = vst [vmem:[#allocation3 + $0xfb8] sm:$0xff] %v1522
  %1587 = vst [vmem:[#allocation3 + $0x1000] sm:$0xff] %v1523
  %1588 = vst [vmem:[#allocation3 + $0x1048] sm:$0xff] %v1524
  %1589 = vst [vmem:[#allocation3 + $0x1090] sm:$0xff] %v1525
  %1590 = vst [vmem:[#allocation3 + $0x10d8] sm:$0xff] %v1526
  %1591 = vst [vmem:[#allocation3 + $0x1120] sm:$0xff] %v1527
  %1592 = vst [vmem:[#allocation3 + $0x1168] sm:$0xff] %v1528
  %1593 = vst [vmem:[#allocation3 + $0x11b0] sm:$0xff] %v1529
  %1594 = vst [vmem:[#allocation3 + $0x11f8] sm:$0xff] %v1530
  %v1595 = vld [vmem:[#allocation3] sm:$0xff]
  %v1596 = vld [vmem:[#allocation3 + $0x8] sm:$0xff]
  %v1597 = vld [vmem:[#allocation3 + $0x10] sm:$0xff]
  %v1598 = vld [vmem:[#allocation3 + $0x18] sm:$0xff]
  %v1599 = vld [vmem:[#allocation3 + $0x20] sm:$0xff]
  %v1600 = vld [vmem:[#allocation3 + $0x28] sm:$0xff]
  %v1601 = vld [vmem:[#allocation3 + $0x30] sm:$0xff]
  %v1602 = vld [vmem:[#allocation3 + $0x38] sm:$0xff]
  %v1603 = vld [vmem:[#allocation3 + $0x40] sm:$0xff]
  %v1604 = vld [vmem:[#allocation3 + $0x48] sm:$0xff]
  %v1605 = vld [vmem:[#allocation3 + $0x50] sm:$0xff]
  %v1606 = vld [vmem:[#allocation3 + $0x58] sm:$0xff]
  %v1607 = vld [vmem:[#allocation3 + $0x60] sm:$0xff]
  %v1608 = vld [vmem:[#allocation3 + $0x68] sm:$0xff]
  %v1609 = vld [vmem:[#allocation3 + $0x70] sm:$0xff]
  %v1610 = vld [vmem:[#allocation3 + $0x78] sm:$0xff]
  %v1611 = vld [vmem:[#allocation3 + $0x80] sm:$0xff]
  %v1612 = vld [vmem:[#allocation3 + $0x88] sm:$0xff]
  %v1613 = vld [vmem:[#allocation3 + $0x90] sm:$0xff]
  %v1614 = vld [vmem:[#allocation3 + $0x98] sm:$0xff]
  %v1615 = vld [vmem:[#allocation3 + $0xa0] sm:$0xff]
  %v1616 = vld [vmem:[#allocation3 + $0xa8] sm:$0xff]
  %v1617 = vld [vmem:[#allocation3 + $0xb0] sm:$0xff]
  %v1618 = vld [vmem:[#allocation3 + $0xb8] sm:$0xff]
  %v1619 = vld [vmem:[#allocation3 + $0xc0] sm:$0xff]
  %v1620 = vld [vmem:[#allocation3 + $0xc8] sm:$0xff]
  %v1621 = vld [vmem:[#allocation3 + $0xd0] sm:$0xff]
  %v1622 = vld [vmem:[#allocation3 + $0xd8] sm:$0xff]
  %v1623 = vld [vmem:[#allocation3 + $0xe0] sm:$0xff]
  %v1624 = vld [vmem:[#allocation3 + $0xe8] sm:$0xff]
  %v1625 = vld [vmem:[#allocation3 + $0xf0] sm:$0xff]
  %v1626 = vld [vmem:[#allocation3 + $0xf8] sm:$0xff]
  %v1627 = vld [vmem:[#allocation3 + $0x100] sm:$0xff]
  %v1628 = vld [vmem:[#allocation3 + $0x108] sm:$0xff]
  %v1629 = vld [vmem:[#allocation3 + $0x110] sm:$0xff]
  %v1630 = vld [vmem:[#allocation3 + $0x118] sm:$0xff]
  %v1631 = vld [vmem:[#allocation3 + $0x120] sm:$0xff]
  %v1632 = vld [vmem:[#allocation3 + $0x128] sm:$0xff]
  %v1633 = vld [vmem:[#allocation3 + $0x130] sm:$0xff]
  %v1634 = vld [vmem:[#allocation3 + $0x138] sm:$0xff]
  %v1635 = vld [vmem:[#allocation3 + $0x140] sm:$0xff]
  %v1636 = vld [vmem:[#allocation3 + $0x148] sm:$0xff]
  %v1637 = vld [vmem:[#allocation3 + $0x150] sm:$0xff]
  %v1638 = vld [vmem:[#allocation3 + $0x158] sm:$0xff]
  %v1639 = vld [vmem:[#allocation3 + $0x160] sm:$0xff]
  %v1640 = vld [vmem:[#allocation3 + $0x168] sm:$0xff]
  %v1641 = vld [vmem:[#allocation3 + $0x170] sm:$0xff]
  %v1642 = vld [vmem:[#allocation3 + $0x178] sm:$0xff]
  %v1643 = vld [vmem:[#allocation3 + $0x180] sm:$0xff]
  %v1644 = vld [vmem:[#allocation3 + $0x188] sm:$0xff]
  %v1645 = vld [vmem:[#allocation3 + $0x190] sm:$0xff]
  %v1646 = vld [vmem:[#allocation3 + $0x198] sm:$0xff]
  %v1647 = vld [vmem:[#allocation3 + $0x1a0] sm:$0xff]
  %v1648 = vld [vmem:[#allocation3 + $0x1a8] sm:$0xff]
  %v1649 = vld [vmem:[#allocation3 + $0x1b0] sm:$0xff]
  %v1650 = vld [vmem:[#allocation3 + $0x1b8] sm:$0xff]
  %v1651 = vld [vmem:[#allocation3 + $0x1c0] sm:$0xff]
  %v1652 = vld [vmem:[#allocation3 + $0x1c8] sm:$0xff]
  %v1653 = vld [vmem:[#allocation3 + $0x1d0] sm:$0xff]
  %v1654 = vld [vmem:[#allocation3 + $0x1d8] sm:$0xff]
  %v1655 = vld [vmem:[#allocation3 + $0x1e0] sm:$0xff]
  %v1656 = vld [vmem:[#allocation3 + $0x1e8] sm:$0xff]
  %v1657 = vld [vmem:[#allocation3 + $0x1f0] sm:$0xff]
  %v1658 = vld [vmem:[#allocation3 + $0x1f8] sm:$0xff]
  %v1659 = vld [vmem:[#allocation3 + $0x200] sm:$0xff]
  %v1660 = vld [vmem:[#allocation3 + $0x208] sm:$0xff]
  %v1661 = vld [vmem:[#allocation3 + $0x210] sm:$0xff]
  %v1662 = vld [vmem:[#allocation3 + $0x218] sm:$0xff]
  %v1663 = vld [vmem:[#allocation3 + $0x220] sm:$0xff]
  %v1664 = vld [vmem:[#allocation3 + $0x228] sm:$0xff]
  %v1665 = vld [vmem:[#allocation3 + $0x230] sm:$0xff]
  %v1666 = vld [vmem:[#allocation3 + $0x238] sm:$0xff]
  %v1667 = vld [vmem:[#allocation3 + $0x240] sm:$0xff]
  %v1668 = vld [vmem:[#allocation3 + $0x248] sm:$0xff]
  %v1669 = vld [vmem:[#allocation3 + $0x250] sm:$0xff]
  %v1670 = vld [vmem:[#allocation3 + $0x258] sm:$0xff]
  %v1671 = vld [vmem:[#allocation3 + $0x260] sm:$0xff]
  %v1672 = vld [vmem:[#allocation3 + $0x268] sm:$0xff]
  %v1673 = vld [vmem:[#allocation3 + $0x270] sm:$0xff]
  %v1674 = vld [vmem:[#allocation3 + $0x278] sm:$0xff]
  %v1675 = vld [vmem:[#allocation3 + $0x280] sm:$0xff]
  %v1676 = vld [vmem:[#allocation3 + $0x288] sm:$0xff]
  %v1677 = vld [vmem:[#allocation3 + $0x290] sm:$0xff]
  %v1678 = vld [vmem:[#allocation3 + $0x298] sm:$0xff]
  %v1679 = vld [vmem:[#allocation3 + $0x2a0] sm:$0xff]
  %v1680 = vld [vmem:[#allocation3 + $0x2a8] sm:$0xff]
  %v1681 = vld [vmem:[#allocation3 + $0x2b0] sm:$0xff]
  %v1682 = vld [vmem:[#allocation3 + $0x2b8] sm:$0xff]
  %v1683 = vld [vmem:[#allocation3 + $0x2c0] sm:$0xff]
  %v1684 = vld [vmem:[#allocation3 + $0x2c8] sm:$0xff]
  %v1685 = vld [vmem:[#allocation3 + $0x2d0] sm:$0xff]
  %v1686 = vld [vmem:[#allocation3 + $0x2d8] sm:$0xff]
  %v1687 = vld [vmem:[#allocation3 + $0x2e0] sm:$0xff]
  %v1688 = vld [vmem:[#allocation3 + $0x2e8] sm:$0xff]
  %v1689 = vld [vmem:[#allocation3 + $0x2f0] sm:$0xff]
  %v1690 = vld [vmem:[#allocation3 + $0x2f8] sm:$0xff]
  %v1691 = vld [vmem:[#allocation3 + $0x300] sm:$0xff]
  %v1692 = vld [vmem:[#allocation3 + $0x308] sm:$0xff]
  %v1693 = vld [vmem:[#allocation3 + $0x310] sm:$0xff]
  %v1694 = vld [vmem:[#allocation3 + $0x318] sm:$0xff]
  %v1695 = vld [vmem:[#allocation3 + $0x320] sm:$0xff]
  %v1696 = vld [vmem:[#allocation3 + $0x328] sm:$0xff]
  %v1697 = vld [vmem:[#allocation3 + $0x330] sm:$0xff]
  %v1698 = vld [vmem:[#allocation3 + $0x338] sm:$0xff]
  %v1699 = vld [vmem:[#allocation3 + $0x340] sm:$0xff]
  %v1700 = vld [vmem:[#allocation3 + $0x348] sm:$0xff]
  %v1701 = vld [vmem:[#allocation3 + $0x350] sm:$0xff]
  %v1702 = vld [vmem:[#allocation3 + $0x358] sm:$0xff]
  %v1703 = vld [vmem:[#allocation3 + $0x360] sm:$0xff]
  %v1704 = vld [vmem:[#allocation3 + $0x368] sm:$0xff]
  %v1705 = vld [vmem:[#allocation3 + $0x370] sm:$0xff]
  %v1706 = vld [vmem:[#allocation3 + $0x378] sm:$0xff]
  %v1707 = vld [vmem:[#allocation3 + $0x380] sm:$0xff]
  %v1708 = vld [vmem:[#allocation3 + $0x388] sm:$0xff]
  %v1709 = vld [vmem:[#allocation3 + $0x390] sm:$0xff]
  %v1710 = vld [vmem:[#allocation3 + $0x398] sm:$0xff]
  %v1711 = vld [vmem:[#allocation3 + $0x3a0] sm:$0xff]
  %v1712 = vld [vmem:[#allocation3 + $0x3a8] sm:$0xff]
  %v1713 = vld [vmem:[#allocation3 + $0x3b0] sm:$0xff]
  %v1714 = vld [vmem:[#allocation3 + $0x3b8] sm:$0xff]
  %v1715 = vld [vmem:[#allocation3 + $0x3c0] sm:$0xff]
  %v1716 = vld [vmem:[#allocation3 + $0x3c8] sm:$0xff]
  %v1717 = vld [vmem:[#allocation3 + $0x3d0] sm:$0xff]
  %v1718 = vld [vmem:[#allocation3 + $0x3d8] sm:$0xff]
  %v1719 = vld [vmem:[#allocation3 + $0x3e0] sm:$0xff]
  %v1720 = vld [vmem:[#allocation3 + $0x3e8] sm:$0xff]
  %v1721 = vld [vmem:[#allocation3 + $0x3f0] sm:$0xff]
  %v1722 = vld [vmem:[#allocation3 + $0x3f8] sm:$0xff]
  %v1723 = vld [vmem:[#allocation3 + $0x400] sm:$0xff]
  %v1724 = vld [vmem:[#allocation3 + $0x408] sm:$0xff]
  %v1725 = vld [vmem:[#allocation3 + $0x410] sm:$0xff]
  %v1726 = vld [vmem:[#allocation3 + $0x418] sm:$0xff]
  %v1727 = vld [vmem:[#allocation3 + $0x420] sm:$0xff]
  %v1728 = vld [vmem:[#allocation3 + $0x428] sm:$0xff]
  %v1729 = vld [vmem:[#allocation3 + $0x430] sm:$0xff]
  %v1730 = vld [vmem:[#allocation3 + $0x438] sm:$0xff]
  %v1731 = vld [vmem:[#allocation3 + $0x440] sm:$0xff]
  %v1732 = vld [vmem:[#allocation3 + $0x448] sm:$0xff]
  %v1733 = vld [vmem:[#allocation3 + $0x450] sm:$0xff]
  %v1734 = vld [vmem:[#allocation3 + $0x458] sm:$0xff]
  %v1735 = vld [vmem:[#allocation3 + $0x460] sm:$0xff]
  %v1736 = vld [vmem:[#allocation3 + $0x468] sm:$0xff]
  %v1737 = vld [vmem:[#allocation3 + $0x470] sm:$0xff]
  %v1738 = vld [vmem:[#allocation3 + $0x478] sm:$0xff]
  %v1739 = vld [vmem:[#allocation3 + $0x480] sm:$0xff]
  %v1740 = vld [vmem:[#allocation3 + $0x488] sm:$0xff]
  %v1741 = vld [vmem:[#allocation3 + $0x490] sm:$0xff]
  %v1742 = vld [vmem:[#allocation3 + $0x498] sm:$0xff]
  %v1743 = vld [vmem:[#allocation3 + $0x4a0] sm:$0xff]
  %v1744 = vld [vmem:[#allocation3 + $0x4a8] sm:$0xff]
  %v1745 = vld [vmem:[#allocation3 + $0x4b0] sm:$0xff]
  %v1746 = vld [vmem:[#allocation3 + $0x4b8] sm:$0xff]
  %v1747 = vld [vmem:[#allocation3 + $0x4c0] sm:$0xff]
  %v1748 = vld [vmem:[#allocation3 + $0x4c8] sm:$0xff]
  %v1749 = vld [vmem:[#allocation3 + $0x4d0] sm:$0xff]
  %v1750 = vld [vmem:[#allocation3 + $0x4d8] sm:$0xff]
  %v1751 = vld [vmem:[#allocation3 + $0x4e0] sm:$0xff]
  %v1752 = vld [vmem:[#allocation3 + $0x4e8] sm:$0xff]
  %v1753 = vld [vmem:[#allocation3 + $0x4f0] sm:$0xff]
  %v1754 = vld [vmem:[#allocation3 + $0x4f8] sm:$0xff]
  %v1755 = vld [vmem:[#allocation3 + $0x500] sm:$0xff]
  %v1756 = vld [vmem:[#allocation3 + $0x508] sm:$0xff]
  %v1757 = vld [vmem:[#allocation3 + $0x510] sm:$0xff]
  %v1758 = vld [vmem:[#allocation3 + $0x518] sm:$0xff]
  %v1759 = vld [vmem:[#allocation3 + $0x520] sm:$0xff]
  %v1760 = vld [vmem:[#allocation3 + $0x528] sm:$0xff]
  %v1761 = vld [vmem:[#allocation3 + $0x530] sm:$0xff]
  %v1762 = vld [vmem:[#allocation3 + $0x538] sm:$0xff]
  %v1763 = vld [vmem:[#allocation3 + $0x540] sm:$0xff]
  %v1764 = vld [vmem:[#allocation3 + $0x548] sm:$0xff]
  %v1765 = vld [vmem:[#allocation3 + $0x550] sm:$0xff]
  %v1766 = vld [vmem:[#allocation3 + $0x558] sm:$0xff]
  %v1767 = vld [vmem:[#allocation3 + $0x560] sm:$0xff]
  %v1768 = vld [vmem:[#allocation3 + $0x568] sm:$0xff]
  %v1769 = vld [vmem:[#allocation3 + $0x570] sm:$0xff]
  %v1770 = vld [vmem:[#allocation3 + $0x578] sm:$0xff]
  %v1771 = vld [vmem:[#allocation3 + $0x580] sm:$0xff]
  %v1772 = vld [vmem:[#allocation3 + $0x588] sm:$0xff]
  %v1773 = vld [vmem:[#allocation3 + $0x590] sm:$0xff]
  %v1774 = vld [vmem:[#allocation3 + $0x598] sm:$0xff]
  %v1775 = vld [vmem:[#allocation3 + $0x5a0] sm:$0xff]
  %v1776 = vld [vmem:[#allocation3 + $0x5a8] sm:$0xff]
  %v1777 = vld [vmem:[#allocation3 + $0x5b0] sm:$0xff]
  %v1778 = vld [vmem:[#allocation3 + $0x5b8] sm:$0xff]
  %v1779 = vld [vmem:[#allocation3 + $0x5c0] sm:$0xff]
  %v1780 = vld [vmem:[#allocation3 + $0x5c8] sm:$0xff]
  %v1781 = vld [vmem:[#allocation3 + $0x5d0] sm:$0xff]
  %v1782 = vld [vmem:[#allocation3 + $0x5d8] sm:$0xff]
  %v1783 = vld [vmem:[#allocation3 + $0x5e0] sm:$0xff]
  %v1784 = vld [vmem:[#allocation3 + $0x5e8] sm:$0xff]
  %v1785 = vld [vmem:[#allocation3 + $0x5f0] sm:$0xff]
  %v1786 = vld [vmem:[#allocation3 + $0x5f8] sm:$0xff]
  %v1787 = vld [vmem:[#allocation3 + $0x600] sm:$0xff]
  %v1788 = vld [vmem:[#allocation3 + $0x608] sm:$0xff]
  %v1789 = vld [vmem:[#allocation3 + $0x610] sm:$0xff]
  %v1790 = vld [vmem:[#allocation3 + $0x618] sm:$0xff]
  %v1791 = vld [vmem:[#allocation3 + $0x620] sm:$0xff]
  %v1792 = vld [vmem:[#allocation3 + $0x628] sm:$0xff]
  %v1793 = vld [vmem:[#allocation3 + $0x630] sm:$0xff]
  %v1794 = vld [vmem:[#allocation3 + $0x638] sm:$0xff]
  %v1795 = vld [vmem:[#allocation3 + $0x640] sm:$0xff]
  %v1796 = vld [vmem:[#allocation3 + $0x648] sm:$0xff]
  %v1797 = vld [vmem:[#allocation3 + $0x650] sm:$0xff]
  %v1798 = vld [vmem:[#allocation3 + $0x658] sm:$0xff]
  %v1799 = vld [vmem:[#allocation3 + $0x660] sm:$0xff]
  %v1800 = vld [vmem:[#allocation3 + $0x668] sm:$0xff]
  %v1801 = vld [vmem:[#allocation3 + $0x670] sm:$0xff]
  %v1802 = vld [vmem:[#allocation3 + $0x678] sm:$0xff]
  %v1803 = vld [vmem:[#allocation3 + $0x680] sm:$0xff]
  %v1804 = vld [vmem:[#allocation3 + $0x688] sm:$0xff]
  %v1805 = vld [vmem:[#allocation3 + $0x690] sm:$0xff]
  %v1806 = vld [vmem:[#allocation3 + $0x698] sm:$0xff]
  %v1807 = vld [vmem:[#allocation3 + $0x6a0] sm:$0xff]
  %v1808 = vld [vmem:[#allocation3 + $0x6a8] sm:$0xff]
  %v1809 = vld [vmem:[#allocation3 + $0x6b0] sm:$0xff]
  %v1810 = vld [vmem:[#allocation3 + $0x6b8] sm:$0xff]
  %v1811 = vld [vmem:[#allocation3 + $0x6c0] sm:$0xff]
  %v1812 = vld [vmem:[#allocation3 + $0x6c8] sm:$0xff]
  %v1813 = vld [vmem:[#allocation3 + $0x6d0] sm:$0xff]
  %v1814 = vld [vmem:[#allocation3 + $0x6d8] sm:$0xff]
  %v1815 = vld [vmem:[#allocation3 + $0x6e0] sm:$0xff]
  %v1816 = vld [vmem:[#allocation3 + $0x6e8] sm:$0xff]
  %v1817 = vld [vmem:[#allocation3 + $0x6f0] sm:$0xff]
  %v1818 = vld [vmem:[#allocation3 + $0x6f8] sm:$0xff]
  %v1819 = vld [vmem:[#allocation3 + $0x700] sm:$0xff]
  %v1820 = vld [vmem:[#allocation3 + $0x708] sm:$0xff]
  %v1821 = vld [vmem:[#allocation3 + $0x710] sm:$0xff]
  %v1822 = vld [vmem:[#allocation3 + $0x718] sm:$0xff]
  %v1823 = vld [vmem:[#allocation3 + $0x720] sm:$0xff]
  %v1824 = vld [vmem:[#allocation3 + $0x728] sm:$0xff]
  %v1825 = vld [vmem:[#allocation3 + $0x730] sm:$0xff]
  %v1826 = vld [vmem:[#allocation3 + $0x738] sm:$0xff]
  %v1827 = vld [vmem:[#allocation3 + $0x740] sm:$0xff]
  %v1828 = vld [vmem:[#allocation3 + $0x748] sm:$0xff]
  %v1829 = vld [vmem:[#allocation3 + $0x750] sm:$0xff]
  %v1830 = vld [vmem:[#allocation3 + $0x758] sm:$0xff]
  %v1831 = vld [vmem:[#allocation3 + $0x760] sm:$0xff]
  %v1832 = vld [vmem:[#allocation3 + $0x768] sm:$0xff]
  %v1833 = vld [vmem:[#allocation3 + $0x770] sm:$0xff]
  %v1834 = vld [vmem:[#allocation3 + $0x778] sm:$0xff]
  %v1835 = vld [vmem:[#allocation3 + $0x780] sm:$0xff]
  %v1836 = vld [vmem:[#allocation3 + $0x788] sm:$0xff]
  %v1837 = vld [vmem:[#allocation3 + $0x790] sm:$0xff]
  %v1838 = vld [vmem:[#allocation3 + $0x798] sm:$0xff]
  %v1839 = vld [vmem:[#allocation3 + $0x7a0] sm:$0xff]
  %v1840 = vld [vmem:[#allocation3 + $0x7a8] sm:$0xff]
  %v1841 = vld [vmem:[#allocation3 + $0x7b0] sm:$0xff]
  %v1842 = vld [vmem:[#allocation3 + $0x7b8] sm:$0xff]
  %v1843 = vld [vmem:[#allocation3 + $0x7c0] sm:$0xff]
  %v1844 = vld [vmem:[#allocation3 + $0x7c8] sm:$0xff]
  %v1845 = vld [vmem:[#allocation3 + $0x7d0] sm:$0xff]
  %v1846 = vld [vmem:[#allocation3 + $0x7d8] sm:$0xff]
  %v1847 = vld [vmem:[#allocation3 + $0x7e0] sm:$0xff]
  %v1848 = vld [vmem:[#allocation3 + $0x7e8] sm:$0xff]
  %v1849 = vld [vmem:[#allocation3 + $0x7f0] sm:$0xff]
  %v1850 = vld [vmem:[#allocation3 + $0x7f8] sm:$0xff]
  %v1851 = vld [vmem:[#allocation3 + $0x800] sm:$0xff]
  %v1852 = vld [vmem:[#allocation3 + $0x808] sm:$0xff]
  %v1853 = vld [vmem:[#allocation3 + $0x810] sm:$0xff]
  %v1854 = vld [vmem:[#allocation3 + $0x818] sm:$0xff]
  %v1855 = vld [vmem:[#allocation3 + $0x820] sm:$0xff]
  %v1856 = vld [vmem:[#allocation3 + $0x828] sm:$0xff]
  %v1857 = vld [vmem:[#allocation3 + $0x830] sm:$0xff]
  %v1858 = vld [vmem:[#allocation3 + $0x838] sm:$0xff]
  %v1859 = vld [vmem:[#allocation3 + $0x840] sm:$0xff]
  %v1860 = vld [vmem:[#allocation3 + $0x848] sm:$0xff]
  %v1861 = vld [vmem:[#allocation3 + $0x850] sm:$0xff]
  %v1862 = vld [vmem:[#allocation3 + $0x858] sm:$0xff]
  %v1863 = vld [vmem:[#allocation3 + $0x860] sm:$0xff]
  %v1864 = vld [vmem:[#allocation3 + $0x868] sm:$0xff]
  %v1865 = vld [vmem:[#allocation3 + $0x870] sm:$0xff]
  %v1866 = vld [vmem:[#allocation3 + $0x878] sm:$0xff]
  %v1867 = vld [vmem:[#allocation3 + $0x880] sm:$0xff]
  %v1868 = vld [vmem:[#allocation3 + $0x888] sm:$0xff]
  %v1869 = vld [vmem:[#allocation3 + $0x890] sm:$0xff]
  %v1870 = vld [vmem:[#allocation3 + $0x898] sm:$0xff]
  %v1871 = vld [vmem:[#allocation3 + $0x8a0] sm:$0xff]
  %v1872 = vld [vmem:[#allocation3 + $0x8a8] sm:$0xff]
  %v1873 = vld [vmem:[#allocation3 + $0x8b0] sm:$0xff]
  %v1874 = vld [vmem:[#allocation3 + $0x8b8] sm:$0xff]
  %v1875 = vld [vmem:[#allocation3 + $0x8c0] sm:$0xff]
  %v1876 = vld [vmem:[#allocation3 + $0x8c8] sm:$0xff]
  %v1877 = vld [vmem:[#allocation3 + $0x8d0] sm:$0xff]
  %v1878 = vld [vmem:[#allocation3 + $0x8d8] sm:$0xff]
  %v1879 = vld [vmem:[#allocation3 + $0x8e0] sm:$0xff]
  %v1880 = vld [vmem:[#allocation3 + $0x8e8] sm:$0xff]
  %v1881 = vld [vmem:[#allocation3 + $0x8f0] sm:$0xff]
  %v1882 = vld [vmem:[#allocation3 + $0x8f8] sm:$0xff]
  %v1883 = vld [vmem:[#allocation3 + $0x900] sm:$0xff]
  %v1884 = vld [vmem:[#allocation3 + $0x908] sm:$0xff]
  %v1885 = vld [vmem:[#allocation3 + $0x910] sm:$0xff]
  %v1886 = vld [vmem:[#allocation3 + $0x918] sm:$0xff]
  %v1887 = vld [vmem:[#allocation3 + $0x920] sm:$0xff]
  %v1888 = vld [vmem:[#allocation3 + $0x928] sm:$0xff]
  %v1889 = vld [vmem:[#allocation3 + $0x930] sm:$0xff]
  %v1890 = vld [vmem:[#allocation3 + $0x938] sm:$0xff]
  %v1891 = vld [vmem:[#allocation3 + $0x940] sm:$0xff]
  %v1892 = vld [vmem:[#allocation3 + $0x948] sm:$0xff]
  %v1893 = vld [vmem:[#allocation3 + $0x950] sm:$0xff]
  %v1894 = vld [vmem:[#allocation3 + $0x958] sm:$0xff]
  %v1895 = vld [vmem:[#allocation3 + $0x960] sm:$0xff]
  %v1896 = vld [vmem:[#allocation3 + $0x968] sm:$0xff]
  %v1897 = vld [vmem:[#allocation3 + $0x970] sm:$0xff]
  %v1898 = vld [vmem:[#allocation3 + $0x978] sm:$0xff]
  %v1899 = vld [vmem:[#allocation3 + $0x980] sm:$0xff]
  %v1900 = vld [vmem:[#allocation3 + $0x988] sm:$0xff]
  %v1901 = vld [vmem:[#allocation3 + $0x990] sm:$0xff]
  %v1902 = vld [vmem:[#allocation3 + $0x998] sm:$0xff]
  %v1903 = vld [vmem:[#allocation3 + $0x9a0] sm:$0xff]
  %v1904 = vld [vmem:[#allocation3 + $0x9a8] sm:$0xff]
  %v1905 = vld [vmem:[#allocation3 + $0x9b0] sm:$0xff]
  %v1906 = vld [vmem:[#allocation3 + $0x9b8] sm:$0xff]
  %v1907 = vld [vmem:[#allocation3 + $0x9c0] sm:$0xff]
  %v1908 = vld [vmem:[#allocation3 + $0x9c8] sm:$0xff]
  %v1909 = vld [vmem:[#allocation3 + $0x9d0] sm:$0xff]
  %v1910 = vld [vmem:[#allocation3 + $0x9d8] sm:$0xff]
  %v1911 = vld [vmem:[#allocation3 + $0x9e0] sm:$0xff]
  %v1912 = vld [vmem:[#allocation3 + $0x9e8] sm:$0xff]
  %v1913 = vld [vmem:[#allocation3 + $0x9f0] sm:$0xff]
  %v1914 = vld [vmem:[#allocation3 + $0x9f8] sm:$0xff]
  %v1915 = vld [vmem:[#allocation3 + $0xa00] sm:$0xff]
  %v1916 = vld [vmem:[#allocation3 + $0xa08] sm:$0xff]
  %v1917 = vld [vmem:[#allocation3 + $0xa10] sm:$0xff]
  %v1918 = vld [vmem:[#allocation3 + $0xa18] sm:$0xff]
  %v1919 = vld [vmem:[#allocation3 + $0xa20] sm:$0xff]
  %v1920 = vld [vmem:[#allocation3 + $0xa28] sm:$0xff]
  %v1921 = vld [vmem:[#allocation3 + $0xa30] sm:$0xff]
  %v1922 = vld [vmem:[#allocation3 + $0xa38] sm:$0xff]
  %v1923 = vld [vmem:[#allocation3 + $0xa40] sm:$0xff]
  %v1924 = vld [vmem:[#allocation3 + $0xa48] sm:$0xff]
  %v1925 = vld [vmem:[#allocation3 + $0xa50] sm:$0xff]
  %v1926 = vld [vmem:[#allocation3 + $0xa58] sm:$0xff]
  %v1927 = vld [vmem:[#allocation3 + $0xa60] sm:$0xff]
  %v1928 = vld [vmem:[#allocation3 + $0xa68] sm:$0xff]
  %v1929 = vld [vmem:[#allocation3 + $0xa70] sm:$0xff]
  %v1930 = vld [vmem:[#allocation3 + $0xa78] sm:$0xff]
  %v1931 = vld [vmem:[#allocation3 + $0xa80] sm:$0xff]
  %v1932 = vld [vmem:[#allocation3 + $0xa88] sm:$0xff]
  %v1933 = vld [vmem:[#allocation3 + $0xa90] sm:$0xff]
  %v1934 = vld [vmem:[#allocation3 + $0xa98] sm:$0xff]
  %v1935 = vld [vmem:[#allocation3 + $0xaa0] sm:$0xff]
  %v1936 = vld [vmem:[#allocation3 + $0xaa8] sm:$0xff]
  %v1937 = vld [vmem:[#allocation3 + $0xab0] sm:$0xff]
  %v1938 = vld [vmem:[#allocation3 + $0xab8] sm:$0xff]
  %v1939 = vld [vmem:[#allocation3 + $0xac0] sm:$0xff]
  %v1940 = vld [vmem:[#allocation3 + $0xac8] sm:$0xff]
  %v1941 = vld [vmem:[#allocation3 + $0xad0] sm:$0xff]
  %v1942 = vld [vmem:[#allocation3 + $0xad8] sm:$0xff]
  %v1943 = vld [vmem:[#allocation3 + $0xae0] sm:$0xff]
  %v1944 = vld [vmem:[#allocation3 + $0xae8] sm:$0xff]
  %v1945 = vld [vmem:[#allocation3 + $0xaf0] sm:$0xff]
  %v1946 = vld [vmem:[#allocation3 + $0xaf8] sm:$0xff]
  %v1947 = vld [vmem:[#allocation3 + $0xb00] sm:$0xff]
  %v1948 = vld [vmem:[#allocation3 + $0xb08] sm:$0xff]
  %v1949 = vld [vmem:[#allocation3 + $0xb10] sm:$0xff]
  %v1950 = vld [vmem:[#allocation3 + $0xb18] sm:$0xff]
  %v1951 = vld [vmem:[#allocation3 + $0xb20] sm:$0xff]
  %v1952 = vld [vmem:[#allocation3 + $0xb28] sm:$0xff]
  %v1953 = vld [vmem:[#allocation3 + $0xb30] sm:$0xff]
  %v1954 = vld [vmem:[#allocation3 + $0xb38] sm:$0xff]
  %v1955 = vld [vmem:[#allocation3 + $0xb40] sm:$0xff]
  %v1956 = vld [vmem:[#allocation3 + $0xb48] sm:$0xff]
  %v1957 = vld [vmem:[#allocation3 + $0xb50] sm:$0xff]
  %v1958 = vld [vmem:[#allocation3 + $0xb58] sm:$0xff]
  %v1959 = vld [vmem:[#allocation3 + $0xb60] sm:$0xff]
  %v1960 = vld [vmem:[#allocation3 + $0xb68] sm:$0xff]
  %v1961 = vld [vmem:[#allocation3 + $0xb70] sm:$0xff]
  %v1962 = vld [vmem:[#allocation3 + $0xb78] sm:$0xff]
  %v1963 = vld [vmem:[#allocation3 + $0xb80] sm:$0xff]
  %v1964 = vld [vmem:[#allocation3 + $0xb88] sm:$0xff]
  %v1965 = vld [vmem:[#allocation3 + $0xb90] sm:$0xff]
  %v1966 = vld [vmem:[#allocation3 + $0xb98] sm:$0xff]
  %v1967 = vld [vmem:[#allocation3 + $0xba0] sm:$0xff]
  %v1968 = vld [vmem:[#allocation3 + $0xba8] sm:$0xff]
  %v1969 = vld [vmem:[#allocation3 + $0xbb0] sm:$0xff]
  %v1970 = vld [vmem:[#allocation3 + $0xbb8] sm:$0xff]
  %v1971 = vld [vmem:[#allocation3 + $0xbc0] sm:$0xff]
  %v1972 = vld [vmem:[#allocation3 + $0xbc8] sm:$0xff]
  %v1973 = vld [vmem:[#allocation3 + $0xbd0] sm:$0xff]
  %v1974 = vld [vmem:[#allocation3 + $0xbd8] sm:$0xff]
  %v1975 = vld [vmem:[#allocation3 + $0xbe0] sm:$0xff]
  %v1976 = vld [vmem:[#allocation3 + $0xbe8] sm:$0xff]
  %v1977 = vld [vmem:[#allocation3 + $0xbf0] sm:$0xff]
  %v1978 = vld [vmem:[#allocation3 + $0xbf8] sm:$0xff]
  %v1979 = vld [vmem:[#allocation3 + $0xc00] sm:$0xff]
  %v1980 = vld [vmem:[#allocation3 + $0xc08] sm:$0xff]
  %v1981 = vld [vmem:[#allocation3 + $0xc10] sm:$0xff]
  %v1982 = vld [vmem:[#allocation3 + $0xc18] sm:$0xff]
  %v1983 = vld [vmem:[#allocation3 + $0xc20] sm:$0xff]
  %v1984 = vld [vmem:[#allocation3 + $0xc28] sm:$0xff]
  %v1985 = vld [vmem:[#allocation3 + $0xc30] sm:$0xff]
  %v1986 = vld [vmem:[#allocation3 + $0xc38] sm:$0xff]
  %v1987 = vld [vmem:[#allocation3 + $0xc40] sm:$0xff]
  %v1988 = vld [vmem:[#allocation3 + $0xc48] sm:$0xff]
  %v1989 = vld [vmem:[#allocation3 + $0xc50] sm:$0xff]
  %v1990 = vld [vmem:[#allocation3 + $0xc58] sm:$0xff]
  %v1991 = vld [vmem:[#allocation3 + $0xc60] sm:$0xff]
  %v1992 = vld [vmem:[#allocation3 + $0xc68] sm:$0xff]
  %v1993 = vld [vmem:[#allocation3 + $0xc70] sm:$0xff]
  %v1994 = vld [vmem:[#allocation3 + $0xc78] sm:$0xff]
  %v1995 = vld [vmem:[#allocation3 + $0xc80] sm:$0xff]
  %v1996 = vld [vmem:[#allocation3 + $0xc88] sm:$0xff]
  %v1997 = vld [vmem:[#allocation3 + $0xc90] sm:$0xff]
  %v1998 = vld [vmem:[#allocation3 + $0xc98] sm:$0xff]
  %v1999 = vld [vmem:[#allocation3 + $0xca0] sm:$0xff]
  %v2000 = vld [vmem:[#allocation3 + $0xca8] sm:$0xff]
  %v2001 = vld [vmem:[#allocation3 + $0xcb0] sm:$0xff]
  %v2002 = vld [vmem:[#allocation3 + $0xcb8] sm:$0xff]
  %v2003 = vld [vmem:[#allocation3 + $0xcc0] sm:$0xff]
  %v2004 = vld [vmem:[#allocation3 + $0xcc8] sm:$0xff]
  %v2005 = vld [vmem:[#allocation3 + $0xcd0] sm:$0xff]
  %v2006 = vld [vmem:[#allocation3 + $0xcd8] sm:$0xff]
  %v2007 = vld [vmem:[#allocation3 + $0xce0] sm:$0xff]
  %v2008 = vld [vmem:[#allocation3 + $0xce8] sm:$0xff]
  %v2009 = vld [vmem:[#allocation3 + $0xcf0] sm:$0xff]
  %v2010 = vld [vmem:[#allocation3 + $0xcf8] sm:$0xff]
  %v2011 = vld [vmem:[#allocation3 + $0xd00] sm:$0xff]
  %v2012 = vld [vmem:[#allocation3 + $0xd08] sm:$0xff]
  %v2013 = vld [vmem:[#allocation3 + $0xd10] sm:$0xff]
  %v2014 = vld [vmem:[#allocation3 + $0xd18] sm:$0xff]
  %v2015 = vld [vmem:[#allocation3 + $0xd20] sm:$0xff]
  %v2016 = vld [vmem:[#allocation3 + $0xd28] sm:$0xff]
  %v2017 = vld [vmem:[#allocation3 + $0xd30] sm:$0xff]
  %v2018 = vld [vmem:[#allocation3 + $0xd38] sm:$0xff]
  %v2019 = vld [vmem:[#allocation3 + $0xd40] sm:$0xff]
  %v2020 = vld [vmem:[#allocation3 + $0xd48] sm:$0xff]
  %v2021 = vld [vmem:[#allocation3 + $0xd50] sm:$0xff]
  %v2022 = vld [vmem:[#allocation3 + $0xd58] sm:$0xff]
  %v2023 = vld [vmem:[#allocation3 + $0xd60] sm:$0xff]
  %v2024 = vld [vmem:[#allocation3 + $0xd68] sm:$0xff]
  %v2025 = vld [vmem:[#allocation3 + $0xd70] sm:$0xff]
  %v2026 = vld [vmem:[#allocation3 + $0xd78] sm:$0xff]
  %v2027 = vld [vmem:[#allocation3 + $0xd80] sm:$0xff]
  %v2028 = vld [vmem:[#allocation3 + $0xd88] sm:$0xff]
  %v2029 = vld [vmem:[#allocation3 + $0xd90] sm:$0xff]
  %v2030 = vld [vmem:[#allocation3 + $0xd98] sm:$0xff]
  %v2031 = vld [vmem:[#allocation3 + $0xda0] sm:$0xff]
  %v2032 = vld [vmem:[#allocation3 + $0xda8] sm:$0xff]
  %v2033 = vld [vmem:[#allocation3 + $0xdb0] sm:$0xff]
  %v2034 = vld [vmem:[#allocation3 + $0xdb8] sm:$0xff]
  %v2035 = vld [vmem:[#allocation3 + $0xdc0] sm:$0xff]
  %v2036 = vld [vmem:[#allocation3 + $0xdc8] sm:$0xff]
  %v2037 = vld [vmem:[#allocation3 + $0xdd0] sm:$0xff]
  %v2038 = vld [vmem:[#allocation3 + $0xdd8] sm:$0xff]
  %v2039 = vld [vmem:[#allocation3 + $0xde0] sm:$0xff]
  %v2040 = vld [vmem:[#allocation3 + $0xde8] sm:$0xff]
  %v2041 = vld [vmem:[#allocation3 + $0xdf0] sm:$0xff]
  %v2042 = vld [vmem:[#allocation3 + $0xdf8] sm:$0xff]
  %v2043 = vld [vmem:[#allocation3 + $0xe00] sm:$0xff]
  %v2044 = vld [vmem:[#allocation3 + $0xe08] sm:$0xff]
  %v2045 = vld [vmem:[#allocation3 + $0xe10] sm:$0xff]
  %v2046 = vld [vmem:[#allocation3 + $0xe18] sm:$0xff]
  %v2047 = vld [vmem:[#allocation3 + $0xe20] sm:$0xff]
  %v2048 = vld [vmem:[#allocation3 + $0xe28] sm:$0xff]
  %v2049 = vld [vmem:[#allocation3 + $0xe30] sm:$0xff]
  %v2050 = vld [vmem:[#allocation3 + $0xe38] sm:$0xff]
  %v2051 = vld [vmem:[#allocation3 + $0xe40] sm:$0xff]
  %v2052 = vld [vmem:[#allocation3 + $0xe48] sm:$0xff]
  %v2053 = vld [vmem:[#allocation3 + $0xe50] sm:$0xff]
  %v2054 = vld [vmem:[#allocation3 + $0xe58] sm:$0xff]
  %v2055 = vld [vmem:[#allocation3 + $0xe60] sm:$0xff]
  %v2056 = vld [vmem:[#allocation3 + $0xe68] sm:$0xff]
  %v2057 = vld [vmem:[#allocation3 + $0xe70] sm:$0xff]
  %v2058 = vld [vmem:[#allocation3 + $0xe78] sm:$0xff]
  %v2059 = vld [vmem:[#allocation3 + $0xe80] sm:$0xff]
  %v2060 = vld [vmem:[#allocation3 + $0xe88] sm:$0xff]
  %v2061 = vld [vmem:[#allocation3 + $0xe90] sm:$0xff]
  %v2062 = vld [vmem:[#allocation3 + $0xe98] sm:$0xff]
  %v2063 = vld [vmem:[#allocation3 + $0xea0] sm:$0xff]
  %v2064 = vld [vmem:[#allocation3 + $0xea8] sm:$0xff]
  %v2065 = vld [vmem:[#allocation3 + $0xeb0] sm:$0xff]
  %v2066 = vld [vmem:[#allocation3 + $0xeb8] sm:$0xff]
  %v2067 = vld [vmem:[#allocation3 + $0xec0] sm:$0xff]
  %v2068 = vld [vmem:[#allocation3 + $0xec8] sm:$0xff]
  %v2069 = vld [vmem:[#allocation3 + $0xed0] sm:$0xff]
  %v2070 = vld [vmem:[#allocation3 + $0xed8] sm:$0xff]
  %v2071 = vld [vmem:[#allocation3 + $0xee0] sm:$0xff]
  %v2072 = vld [vmem:[#allocation3 + $0xee8] sm:$0xff]
  %v2073 = vld [vmem:[#allocation3 + $0xef0] sm:$0xff]
  %v2074 = vld [vmem:[#allocation3 + $0xef8] sm:$0xff]
  %v2075 = vld [vmem:[#allocation3 + $0xf00] sm:$0xff]
  %v2076 = vld [vmem:[#allocation3 + $0xf08] sm:$0xff]
  %v2077 = vld [vmem:[#allocation3 + $0xf10] sm:$0xff]
  %v2078 = vld [vmem:[#allocation3 + $0xf18] sm:$0xff]
  %v2079 = vld [vmem:[#allocation3 + $0xf20] sm:$0xff]
  %v2080 = vld [vmem:[#allocation3 + $0xf28] sm:$0xff]
  %v2081 = vld [vmem:[#allocation3 + $0xf30] sm:$0xff]
  %v2082 = vld [vmem:[#allocation3 + $0xf38] sm:$0xff]
  %v2083 = vld [vmem:[#allocation3 + $0xf40] sm:$0xff]
  %v2084 = vld [vmem:[#allocation3 + $0xf48] sm:$0xff]
  %v2085 = vld [vmem:[#allocation3 + $0xf50] sm:$0xff]
  %v2086 = vld [vmem:[#allocation3 + $0xf58] sm:$0xff]
  %v2087 = vld [vmem:[#allocation3 + $0xf60] sm:$0xff]
  %v2088 = vld [vmem:[#allocation3 + $0xf68] sm:$0xff]
  %v2089 = vld [vmem:[#allocation3 + $0xf70] sm:$0xff]
  %v2090 = vld [vmem:[#allocation3 + $0xf78] sm:$0xff]
  %v2091 = vld [vmem:[#allocation3 + $0xf80] sm:$0xff]
  %v2092 = vld [vmem:[#allocation3 + $0xf88] sm:$0xff]
  %v2093 = vld [vmem:[#allocation3 + $0xf90] sm:$0xff]
  %v2094 = vld [vmem:[#allocation3 + $0xf98] sm:$0xff]
  %v2095 = vld [vmem:[#allocation3 + $0xfa0] sm:$0xff]
  %v2096 = vld [vmem:[#allocation3 + $0xfa8] sm:$0xff]
  %v2097 = vld [vmem:[#allocation3 + $0xfb0] sm:$0xff]
  %v2098 = vld [vmem:[#allocation3 + $0xfb8] sm:$0xff]
  %v2099 = vld [vmem:[#allocation3 + $0xfc0] sm:$0xff]
  %v2100 = vld [vmem:[#allocation3 + $0xfc8] sm:$0xff]
  %v2101 = vld [vmem:[#allocation3 + $0xfd0] sm:$0xff]
  %v2102 = vld [vmem:[#allocation3 + $0xfd8] sm:$0xff]
  %v2103 = vld [vmem:[#allocation3 + $0xfe0] sm:$0xff]
  %v2104 = vld [vmem:[#allocation3 + $0xfe8] sm:$0xff]
  %v2105 = vld [vmem:[#allocation3 + $0xff0] sm:$0xff]
  %v2106 = vld [vmem:[#allocation3 + $0xff8] sm:$0xff]
  %v2107 = vld [vmem:[#allocation3 + $0x1000] sm:$0xff]
  %v2108 = vld [vmem:[#allocation3 + $0x1008] sm:$0xff]
  %v2109 = vld [vmem:[#allocation3 + $0x1010] sm:$0xff]
  %v2110 = vld [vmem:[#allocation3 + $0x1018] sm:$0xff]
  %v2111 = vld [vmem:[#allocation3 + $0x1020] sm:$0xff]
  %v2112 = vld [vmem:[#allocation3 + $0x1028] sm:$0xff]
  %v2113 = vld [vmem:[#allocation3 + $0x1030] sm:$0xff]
  %v2114 = vld [vmem:[#allocation3 + $0x1038] sm:$0xff]
  %v2115 = vld [vmem:[#allocation3 + $0x1040] sm:$0xff]
  %v2116 = vld [vmem:[#allocation3 + $0x1048] sm:$0xff]
  %v2117 = vld [vmem:[#allocation3 + $0x1050] sm:$0xff]
  %v2118 = vld [vmem:[#allocation3 + $0x1058] sm:$0xff]
  %v2119 = vld [vmem:[#allocation3 + $0x1060] sm:$0xff]
  %v2120 = vld [vmem:[#allocation3 + $0x1068] sm:$0xff]
  %v2121 = vld [vmem:[#allocation3 + $0x1070] sm:$0xff]
  %v2122 = vld [vmem:[#allocation3 + $0x1078] sm:$0xff]
  %v2123 = vld [vmem:[#allocation3 + $0x1080] sm:$0xff]
  %v2124 = vld [vmem:[#allocation3 + $0x1088] sm:$0xff]
  %v2125 = vld [vmem:[#allocation3 + $0x1090] sm:$0xff]
  %v2126 = vld [vmem:[#allocation3 + $0x1098] sm:$0xff]
  %v2127 = vld [vmem:[#allocation3 + $0x10a0] sm:$0xff]
  %v2128 = vld [vmem:[#allocation3 + $0x10a8] sm:$0xff]
  %v2129 = vld [vmem:[#allocation3 + $0x10b0] sm:$0xff]
  %v2130 = vld [vmem:[#allocation3 + $0x10b8] sm:$0xff]
  %v2131 = vld [vmem:[#allocation3 + $0x10c0] sm:$0xff]
  %v2132 = vld [vmem:[#allocation3 + $0x10c8] sm:$0xff]
  %v2133 = vld [vmem:[#allocation3 + $0x10d0] sm:$0xff]
  %v2134 = vld [vmem:[#allocation3 + $0x10d8] sm:$0xff]
  %v2135 = vld [vmem:[#allocation3 + $0x10e0] sm:$0xff]
  %v2136 = vld [vmem:[#allocation3 + $0x10e8] sm:$0xff]
  %v2137 = vld [vmem:[#allocation3 + $0x10f0] sm:$0xff]
  %v2138 = vld [vmem:[#allocation3 + $0x10f8] sm:$0xff]
  %v2139 = vld [vmem:[#allocation3 + $0x1100] sm:$0xff]
  %v2140 = vld [vmem:[#allocation3 + $0x1108] sm:$0xff]
  %v2141 = vld [vmem:[#allocation3 + $0x1110] sm:$0xff]
  %v2142 = vld [vmem:[#allocation3 + $0x1118] sm:$0xff]
  %v2143 = vld [vmem:[#allocation3 + $0x1120] sm:$0xff]
  %v2144 = vld [vmem:[#allocation3 + $0x1128] sm:$0xff]
  %v2145 = vld [vmem:[#allocation3 + $0x1130] sm:$0xff]
  %v2146 = vld [vmem:[#allocation3 + $0x1138] sm:$0xff]
  %v2147 = vld [vmem:[#allocation3 + $0x1140] sm:$0xff]
  %v2148 = vld [vmem:[#allocation3 + $0x1148] sm:$0xff]
  %v2149 = vld [vmem:[#allocation3 + $0x1150] sm:$0xff]
  %v2150 = vld [vmem:[#allocation3 + $0x1158] sm:$0xff]
  %v2151 = vld [vmem:[#allocation3 + $0x1160] sm:$0xff]
  %v2152 = vld [vmem:[#allocation3 + $0x1168] sm:$0xff]
  %v2153 = vld [vmem:[#allocation3 + $0x1170] sm:$0xff]
  %v2154 = vld [vmem:[#allocation3 + $0x1178] sm:$0xff]
  %v2155 = vld [vmem:[#allocation3 + $0x1180] sm:$0xff]
  %v2156 = vld [vmem:[#allocation3 + $0x1188] sm:$0xff]
  %v2157 = vld [vmem:[#allocation3 + $0x1190] sm:$0xff]
  %v2158 = vld [vmem:[#allocation3 + $0x1198] sm:$0xff]
  %v2159 = vld [vmem:[#allocation3 + $0x11a0] sm:$0xff]
  %v2160 = vld [vmem:[#allocation3 + $0x11a8] sm:$0xff]
  %v2161 = vld [vmem:[#allocation3 + $0x11b0] sm:$0xff]
  %v2162 = vld [vmem:[#allocation3 + $0x11b8] sm:$0xff]
  %v2163 = vld [vmem:[#allocation3 + $0x11c0] sm:$0xff]
  %v2164 = vld [vmem:[#allocation3 + $0x11c8] sm:$0xff]
  %v2165 = vld [vmem:[#allocation3 + $0x11d0] sm:$0xff]
  %v2166 = vld [vmem:[#allocation3 + $0x11d8] sm:$0xff]
  %v2167 = vld [vmem:[#allocation3 + $0x11e0] sm:$0xff]
  %v2168 = vld [vmem:[#allocation3 + $0x11e8] sm:$0xff]
  %v2169 = vld [vmem:[#allocation3 + $0x11f0] sm:$0xff]
  %v2170 = vld [vmem:[#allocation3 + $0x11f8] sm:$0xff]
  %v2171 = vld [vmem:[%s3] sm:$0xff]
  %v2172 = vld [vmem:[%s3 + $0x8] sm:$0xff]
  %v2173 = vld [vmem:[%s3 + $0x10] sm:$0xff]
  %v2174 = vld [vmem:[%s3 + $0x18] sm:$0xff]
  %v2175 = vld [vmem:[%s3 + $0x20] sm:$0xff]
  %v2176 = vld [vmem:[%s3 + $0x28] sm:$0xff]
  %v2177 = vld [vmem:[%s3 + $0x30] sm:$0xff]
  %v2178 = vld [vmem:[%s3 + $0x38] sm:$0xff]
  %v2179 = vld [vmem:[%s3 + $0x40] sm:$0xff]
  %v2180 = vld [vmem:[%s3 + $0x48] sm:$0xff]
  %v2181 = vld [vmem:[%s3 + $0x50] sm:$0xff]
  %v2182 = vld [vmem:[%s3 + $0x58] sm:$0xff]
  %v2183 = vld [vmem:[%s3 + $0x60] sm:$0xff]
  %v2184 = vld [vmem:[%s3 + $0x68] sm:$0xff]
  %v2185 = vld [vmem:[%s3 + $0x70] sm:$0xff]
  %v2186 = vld [vmem:[%s3 + $0x78] sm:$0xff]
  %v2187 = vld [vmem:[%s3 + $0x80] sm:$0xff]
  %v2188 = vld [vmem:[%s3 + $0x88] sm:$0xff]
  %v2189 = vld [vmem:[%s3 + $0x90] sm:$0xff]
  %v2190 = vld [vmem:[%s3 + $0x98] sm:$0xff]
  %v2191 = vld [vmem:[%s3 + $0xa0] sm:$0xff]
  %v2192 = vld [vmem:[%s3 + $0xa8] sm:$0xff]
  %v2193 = vld [vmem:[%s3 + $0xb0] sm:$0xff]
  %v2194 = vld [vmem:[%s3 + $0xb8] sm:$0xff]
  %v2195 = vld [vmem:[%s3 + $0xc0] sm:$0xff]
  %v2196 = vld [vmem:[%s3 + $0xc8] sm:$0xff]
  %v2197 = vld [vmem:[%s3 + $0xd0] sm:$0xff]
  %v2198 = vld [vmem:[%s3 + $0xd8] sm:$0xff]
  %v2199 = vld [vmem:[%s3 + $0xe0] sm:$0xff]
  %v2200 = vld [vmem:[%s3 + $0xe8] sm:$0xff]
  %v2201 = vld [vmem:[%s3 + $0xf0] sm:$0xff]
  %v2202 = vld [vmem:[%s3 + $0xf8] sm:$0xff]
  %v2203 = vld [vmem:[%s3 + $0x100] sm:$0xff]
  %v2204 = vld [vmem:[%s3 + $0x108] sm:$0xff]
  %v2205 = vld [vmem:[%s3 + $0x110] sm:$0xff]
  %v2206 = vld [vmem:[%s3 + $0x118] sm:$0xff]
  %v2207 = vld [vmem:[%s3 + $0x120] sm:$0xff]
  %v2208 = vld [vmem:[%s3 + $0x128] sm:$0xff]
  %v2209 = vld [vmem:[%s3 + $0x130] sm:$0xff]
  %v2210 = vld [vmem:[%s3 + $0x138] sm:$0xff]
  %v2211 = vld [vmem:[%s3 + $0x140] sm:$0xff]
  %v2212 = vld [vmem:[%s3 + $0x148] sm:$0xff]
  %v2213 = vld [vmem:[%s3 + $0x150] sm:$0xff]
  %v2214 = vld [vmem:[%s3 + $0x158] sm:$0xff]
  %v2215 = vld [vmem:[%s3 + $0x160] sm:$0xff]
  %v2216 = vld [vmem:[%s3 + $0x168] sm:$0xff]
  %v2217 = vld [vmem:[%s3 + $0x170] sm:$0xff]
  %v2218 = vld [vmem:[%s3 + $0x178] sm:$0xff]
  %v2219 = vld [vmem:[%s3 + $0x180] sm:$0xff]
  %v2220 = vld [vmem:[%s3 + $0x188] sm:$0xff]
  %v2221 = vld [vmem:[%s3 + $0x190] sm:$0xff]
  %v2222 = vld [vmem:[%s3 + $0x198] sm:$0xff]
  %v2223 = vld [vmem:[%s3 + $0x1a0] sm:$0xff]
  %v2224 = vld [vmem:[%s3 + $0x1a8] sm:$0xff]
  %v2225 = vld [vmem:[%s3 + $0x1b0] sm:$0xff]
  %v2226 = vld [vmem:[%s3 + $0x1b8] sm:$0xff]
  %v2227 = vld [vmem:[%s3 + $0x1c0] sm:$0xff]
  %v2228 = vld [vmem:[%s3 + $0x1c8] sm:$0xff]
  %v2229 = vld [vmem:[%s3 + $0x1d0] sm:$0xff]
  %v2230 = vld [vmem:[%s3 + $0x1d8] sm:$0xff]
  %v2231 = vld [vmem:[%s3 + $0x1e0] sm:$0xff]
  %v2232 = vld [vmem:[%s3 + $0x1e8] sm:$0xff]
  %v2233 = vld [vmem:[%s3 + $0x1f0] sm:$0xff]
  %v2234 = vld [vmem:[%s3 + $0x1f8] sm:$0xff]
  %v2235 = vld [vmem:[%s3 + $0x200] sm:$0xff]
  %v2236 = vld [vmem:[%s3 + $0x208] sm:$0xff]
  %v2237 = vld [vmem:[%s3 + $0x210] sm:$0xff]
  %v2238 = vld [vmem:[%s3 + $0x218] sm:$0xff]
  %v2239 = vld [vmem:[%s3 + $0x220] sm:$0xff]
  %v2240 = vld [vmem:[%s3 + $0x228] sm:$0xff]
  %v2241 = vld [vmem:[%s3 + $0x230] sm:$0xff]
  %v2242 = vld [vmem:[%s3 + $0x238] sm:$0xff]
  %v2243 = vld [vmem:[%s3 + $0x240] sm:$0xff]
  %v2244 = vld [vmem:[%s3 + $0x248] sm:$0xff]
  %v2245 = vld [vmem:[%s3 + $0x250] sm:$0xff]
  %v2246 = vld [vmem:[%s3 + $0x258] sm:$0xff]
  %v2247 = vld [vmem:[%s3 + $0x260] sm:$0xff]
  %v2248 = vld [vmem:[%s3 + $0x268] sm:$0xff]
  %v2249 = vld [vmem:[%s3 + $0x270] sm:$0xff]
  %v2250 = vld [vmem:[%s3 + $0x278] sm:$0xff]
  %v2251 = vld [vmem:[%s3 + $0x280] sm:$0xff]
  %v2252 = vld [vmem:[%s3 + $0x288] sm:$0xff]
  %v2253 = vld [vmem:[%s3 + $0x290] sm:$0xff]
  %v2254 = vld [vmem:[%s3 + $0x298] sm:$0xff]
  %v2255 = vld [vmem:[%s3 + $0x2a0] sm:$0xff]
  %v2256 = vld [vmem:[%s3 + $0x2a8] sm:$0xff]
  %v2257 = vld [vmem:[%s3 + $0x2b0] sm:$0xff]
  %v2258 = vld [vmem:[%s3 + $0x2b8] sm:$0xff]
  %v2259 = vld [vmem:[%s3 + $0x2c0] sm:$0xff]
  %v2260 = vld [vmem:[%s3 + $0x2c8] sm:$0xff]
  %v2261 = vld [vmem:[%s3 + $0x2d0] sm:$0xff]
  %v2262 = vld [vmem:[%s3 + $0x2d8] sm:$0xff]
  %v2263 = vld [vmem:[%s3 + $0x2e0] sm:$0xff]
  %v2264 = vld [vmem:[%s3 + $0x2e8] sm:$0xff]
  %v2265 = vld [vmem:[%s3 + $0x2f0] sm:$0xff]
  %v2266 = vld [vmem:[%s3 + $0x2f8] sm:$0xff]
  %v2267 = vld [vmem:[%s3 + $0x300] sm:$0xff]
  %v2268 = vld [vmem:[%s3 + $0x308] sm:$0xff]
  %v2269 = vld [vmem:[%s3 + $0x310] sm:$0xff]
  %v2270 = vld [vmem:[%s3 + $0x318] sm:$0xff]
  %v2271 = vld [vmem:[%s3 + $0x320] sm:$0xff]
  %v2272 = vld [vmem:[%s3 + $0x328] sm:$0xff]
  %v2273 = vld [vmem:[%s3 + $0x330] sm:$0xff]
  %v2274 = vld [vmem:[%s3 + $0x338] sm:$0xff]
  %v2275 = vld [vmem:[%s3 + $0x340] sm:$0xff]
  %v2276 = vld [vmem:[%s3 + $0x348] sm:$0xff]
  %v2277 = vld [vmem:[%s3 + $0x350] sm:$0xff]
  %v2278 = vld [vmem:[%s3 + $0x358] sm:$0xff]
  %v2279 = vld [vmem:[%s3 + $0x360] sm:$0xff]
  %v2280 = vld [vmem:[%s3 + $0x368] sm:$0xff]
  %v2281 = vld [vmem:[%s3 + $0x370] sm:$0xff]
  %v2282 = vld [vmem:[%s3 + $0x378] sm:$0xff]
  %v2283 = vld [vmem:[%s3 + $0x380] sm:$0xff]
  %v2284 = vld [vmem:[%s3 + $0x388] sm:$0xff]
  %v2285 = vld [vmem:[%s3 + $0x390] sm:$0xff]
  %v2286 = vld [vmem:[%s3 + $0x398] sm:$0xff]
  %v2287 = vld [vmem:[%s3 + $0x3a0] sm:$0xff]
  %v2288 = vld [vmem:[%s3 + $0x3a8] sm:$0xff]
  %v2289 = vld [vmem:[%s3 + $0x3b0] sm:$0xff]
  %v2290 = vld [vmem:[%s3 + $0x3b8] sm:$0xff]
  %v2291 = vld [vmem:[%s3 + $0x3c0] sm:$0xff]
  %v2292 = vld [vmem:[%s3 + $0x3c8] sm:$0xff]
  %v2293 = vld [vmem:[%s3 + $0x3d0] sm:$0xff]
  %v2294 = vld [vmem:[%s3 + $0x3d8] sm:$0xff]
  %v2295 = vld [vmem:[%s3 + $0x3e0] sm:$0xff]
  %v2296 = vld [vmem:[%s3 + $0x3e8] sm:$0xff]
  %v2297 = vld [vmem:[%s3 + $0x3f0] sm:$0xff]
  %v2298 = vld [vmem:[%s3 + $0x3f8] sm:$0xff]
  %v2299 = vld [vmem:[%s3 + $0x400] sm:$0xff]
  %v2300 = vld [vmem:[%s3 + $0x408] sm:$0xff]
  %v2301 = vld [vmem:[%s3 + $0x410] sm:$0xff]
  %v2302 = vld [vmem:[%s3 + $0x418] sm:$0xff]
  %v2303 = vld [vmem:[%s3 + $0x420] sm:$0xff]
  %v2304 = vld [vmem:[%s3 + $0x428] sm:$0xff]
  %v2305 = vld [vmem:[%s3 + $0x430] sm:$0xff]
  %v2306 = vld [vmem:[%s3 + $0x438] sm:$0xff]
  %v2307 = vld [vmem:[%s3 + $0x440] sm:$0xff]
  %v2308 = vld [vmem:[%s3 + $0x448] sm:$0xff]
  %v2309 = vld [vmem:[%s3 + $0x450] sm:$0xff]
  %v2310 = vld [vmem:[%s3 + $0x458] sm:$0xff]
  %v2311 = vld [vmem:[%s3 + $0x460] sm:$0xff]
  %v2312 = vld [vmem:[%s3 + $0x468] sm:$0xff]
  %v2313 = vld [vmem:[%s3 + $0x470] sm:$0xff]
  %v2314 = vld [vmem:[%s3 + $0x478] sm:$0xff]
  %v2315 = vld [vmem:[%s4] sm:$0x1]
  %v2317 = vlaneseq
  %v2318 = vshrl.u32 %v2317, 7
  %v2319 = vsub.s32 0, %v2318
  %v2320 = vrot.slane %v2315, %v2319
  %2322 = vmatprep.subr.mxu0 0.0
  %2323 = vmatpush1.msra.mxu0 %v2186
  %2324 = vmatprep.subr.mxu0 0.0
  %2325 = vmatpush1.msra.mxu0 %v2185
  %2326 = vmatprep.subr.mxu0 0.0
  %2327 = vmatpush1.msra.mxu0 %v2184
  %2328 = vmatprep.subr.mxu0 0.0
  %2329 = vmatpush1.msra.mxu0 %v2183
  %2330 = vmatprep.subr.mxu0 0.0
  %2331 = vmatpush1.msra.mxu0 %v2182
  %2332 = vmatprep.subr.mxu0 0.0
  %2333 = vmatpush1.msra.mxu0 %v2181
  %2334 = vmatprep.subr.mxu0 0.0
  %2335 = vmatpush1.msra.mxu0 %v2180
  %2336 = vmatprep.subr.mxu0 0.0
  %2337 = vmatpush1.msra.mxu0 %v2179
  %2338 = vmatprep.subr.mxu0 0.0
  %2339 = vmatpush1.msra.mxu0 %v2178
  %2340 = vmatprep.subr.mxu0 0.0
  %2341 = vmatpush1.msra.mxu0 %v2177
  %2342 = vmatprep.subr.mxu0 0.0
  %2343 = vmatpush1.msra.mxu0 %v2176
  %2344 = vmatprep.subr.mxu0 0.0
  %2345 = vmatpush1.msra.mxu0 %v2175
  %2346 = vmatprep.subr.mxu0 0.0
  %2347 = vmatpush1.msra.mxu0 %v2174
  %2348 = vmatprep.subr.mxu0 0.0
  %2349 = vmatpush1.msra.mxu0 %v2173
  %2350 = vmatprep.subr.mxu0 0.0
  %2351 = vmatpush1.msra.mxu0 %v2172
  %2352 = vmatprep.subr.mxu0 0.0
  %2353 = vmatpush1.msra.mxu0 %v2171
  %2354 = vmatprep.subr.mxu0 0.0
  %2355 = vmatpush2.msra.mxu0 %v2202
  %2356 = vmatprep.subr.mxu0 0.0
  %2357 = vmatpush2.msra.mxu0 %v2201
  %2358 = vmatprep.subr.mxu0 0.0
  %2359 = vmatpush2.msra.mxu0 %v2200
  %2360 = vmatprep.subr.mxu0 0.0
  %2361 = vmatpush2.msra.mxu0 %v2199
  %2362 = vmatprep.subr.mxu0 0.0
  %2363 = vmatpush2.msra.mxu0 %v2198
  %2364 = vmatprep.subr.mxu0 0.0
  %2365 = vmatpush2.msra.mxu0 %v2197
  %2366 = vmatprep.subr.mxu0 0.0
  %2367 = vmatpush2.msra.mxu0 %v2196
  %2368 = vmatprep.subr.mxu0 0.0
  %2369 = vmatpush2.msra.mxu0 %v2195
  %2370 = vmatprep.subr.mxu0 0.0
  %2371 = vmatpush2.msra.mxu0 %v2194
  %2372 = vmatprep.subr.mxu0 0.0
  %2373 = vmatpush2.msra.mxu0 %v2193
  %2374 = vmatprep.subr.mxu0 0.0
  %2375 = vmatpush2.msra.mxu0 %v2192
  %2376 = vmatprep.subr.mxu0 0.0
  %2377 = vmatpush2.msra.mxu0 %v2191
  %2378 = vmatprep.subr.mxu0 0.0
  %2379 = vmatpush2.msra.mxu0 %v2190
  %2380 = vmatprep.subr.mxu0 0.0
  %2381 = vmatpush2.msra.mxu0 %v2189
  %2382 = vmatprep.subr.mxu0 0.0
  %2383 = vmatpush2.msra.mxu0 %v2188
  %2384 = vmatprep.subr.mxu0 0.0
  %2385 = vmatpush2.msra.mxu0 %v2187
  %2386 = vmatprep.mubr.f32.mxu0 %v1596
  %2387 = vmatmul.mubr.f32.gmra.mxu0 %v1595
  %v2388 = vpop.f32.mrf.mxu0
  %v2389 = vadd.f32 %v2320, %v2388
  %v2390 = vpop.f32.mrf.mxu0
  %2391 = vmatprep.mubr.f32.mxu0 %v1605
  %2392 = vmatmul.mubr.f32.gmra.mxu0 %v1604
  %v2393 = vpop.f32.mrf.mxu0
  %v2394 = vadd.f32 %v2320, %v2393
  %v2395 = vpop.f32.mrf.mxu0
  %2396 = vmatprep.mubr.f32.mxu0 %v1614
  %2397 = vmatmul.mubr.f32.gmra.mxu0 %v1613
  %v2398 = vpop.f32.mrf.mxu0
  %v2399 = vadd.f32 %v2320, %v2398
  %v2400 = vpop.f32.mrf.mxu0
  %2401 = vmatprep.mubr.f32.mxu0 %v1623
  %2402 = vmatmul.mubr.f32.gmra.mxu0 %v1622
  %v2403 = vpop.f32.mrf.mxu0
  %v2404 = vadd.f32 %v2320, %v2403
  %v2405 = vpop.f32.mrf.mxu0
  %2406 = vmatprep.mubr.f32.mxu0 %v1632
  %2407 = vmatmul.mubr.f32.gmra.mxu0 %v1631
  %v2408 = vpop.f32.mrf.mxu0
  %v2409 = vadd.f32 %v2320, %v2408
  %v2410 = vpop.f32.mrf.mxu0
  %2411 = vmatprep.mubr.f32.mxu0 %v1641
  %2412 = vmatmul.mubr.f32.gmra.mxu0 %v1640
  %v2413 = vpop.f32.mrf.mxu0
  %v2414 = vadd.f32 %v2320, %v2413
  %v2415 = vpop.f32.mrf.mxu0
  %2416 = vmatprep.mubr.f32.mxu0 %v1650
  %2417 = vmatmul.mubr.f32.gmra.mxu0 %v1649
  %v2418 = vpop.f32.mrf.mxu0
  %v2419 = vadd.f32 %v2320, %v2418
  %v2420 = vpop.f32.mrf.mxu0
  %2421 = vmatprep.mubr.f32.mxu0 %v1659
  %2422 = vmatmul.mubr.f32.gmra.mxu0 %v1658
  %v2423 = vpop.f32.mrf.mxu0
  %v2424 = vadd.f32 %v2320, %v2423
  %v2425 = vpop.f32.mrf.mxu0
  %2426 = vmatprep.mubr.f32.mxu0 %v1668
  %2427 = vmatmul.mubr.f32.gmra.mxu0 %v1667
  %v2428 = vpop.f32.mrf.mxu0
  %v2429 = vadd.f32 %v2320, %v2428
  %v2430 = vpop.f32.mrf.mxu0
  %2431 = vmatprep.mubr.f32.mxu0 %v1677
  %2432 = vmatmul.mubr.f32.gmra.mxu0 %v1676
  %v2433 = vpop.f32.mrf.mxu0
  %v2434 = vadd.f32 %v2320, %v2433
  %v2435 = vpop.f32.mrf.mxu0
  %2436 = vmatprep.mubr.f32.mxu0 %v1686
  %2437 = vmatmul.mubr.f32.gmra.mxu0 %v1685
  %v2438 = vpop.f32.mrf.mxu0
  %v2439 = vadd.f32 %v2320, %v2438
  %v2440 = vpop.f32.mrf.mxu0
  %2441 = vmatprep.mubr.f32.mxu0 %v1695
  %2442 = vmatmul.mubr.f32.gmra.mxu0 %v1694
  %v2443 = vpop.f32.mrf.mxu0
  %v2444 = vadd.f32 %v2320, %v2443
  %v2445 = vpop.f32.mrf.mxu0
  %2446 = vmatprep.mubr.f32.mxu0 %v1704
  %2447 = vmatmul.mubr.f32.gmra.mxu0 %v1703
  %v2448 = vpop.f32.mrf.mxu0
  %v2449 = vadd.f32 %v2320, %v2448
  %v2450 = vpop.f32.mrf.mxu0
  %2451 = vmatprep.mubr.f32.mxu0 %v1713
  %2452 = vmatmul.mubr.f32.gmra.mxu0 %v1712
  %v2453 = vpop.f32.mrf.mxu0
  %v2454 = vadd.f32 %v2320, %v2453
  %v2455 = vpop.f32.mrf.mxu0
  %2456 = vmatprep.mubr.f32.mxu0 %v1722
  %2457 = vmatmul.mubr.f32.gmra.mxu0 %v1721
  %v2458 = vpop.f32.mrf.mxu0
  %v2459 = vadd.f32 %v2320, %v2458
  %v2460 = vpop.f32.mrf.mxu0
  %2461 = vmatprep.mubr.f32.mxu0 %v1731
  %2462 = vmatmul.mubr.f32.gmra.mxu0 %v1730
  %v2463 = vpop.f32.mrf.mxu0
  %v2464 = vadd.f32 %v2320, %v2463
  %v2465 = vpop.f32.mrf.mxu0
  %2466 = vmatprep.mubr.f32.mxu0 %v1740
  %2467 = vmatmul.mubr.f32.gmra.mxu0 %v1739
  %v2468 = vpop.f32.mrf.mxu0
  %v2469 = vadd.f32 %v2320, %v2468
  %v2470 = vpop.f32.mrf.mxu0
  %2471 = vmatprep.mubr.f32.mxu0 %v1749
  %2472 = vmatmul.mubr.f32.gmra.mxu0 %v1748
  %v2473 = vpop.f32.mrf.mxu0
  %v2474 = vadd.f32 %v2320, %v2473
  %v2475 = vpop.f32.mrf.mxu0
  %2476 = vmatprep.mubr.f32.mxu0 %v1758
  %2477 = vmatmul.mubr.f32.gmra.mxu0 %v1757
  %v2478 = vpop.f32.mrf.mxu0
  %v2479 = vadd.f32 %v2320, %v2478
  %v2480 = vpop.f32.mrf.mxu0
  %2481 = vmatprep.mubr.f32.mxu0 %v1767
  %2482 = vmatmul.mubr.f32.gmra.mxu0 %v1766
  %v2483 = vpop.f32.mrf.mxu0
  %v2484 = vadd.f32 %v2320, %v2483
  %v2485 = vpop.f32.mrf.mxu0
  %2486 = vmatprep.mubr.f32.mxu0 %v1776
  %2487 = vmatmul.mubr.f32.gmra.mxu0 %v1775
  %v2488 = vpop.f32.mrf.mxu0
  %v2489 = vadd.f32 %v2320, %v2488
  %v2490 = vpop.f32.mrf.mxu0
  %2491 = vmatprep.mubr.f32.mxu0 %v1785
  %2492 = vmatmul.mubr.f32.gmra.mxu0 %v1784
  %v2493 = vpop.f32.mrf.mxu0
  %v2494 = vadd.f32 %v2320, %v2493
  %v2495 = vpop.f32.mrf.mxu0
  %2496 = vmatprep.mubr.f32.mxu0 %v1794
  %2497 = vmatmul.mubr.f32.gmra.mxu0 %v1793
  %v2498 = vpop.f32.mrf.mxu0
  %v2499 = vadd.f32 %v2320, %v2498
  %v2500 = vpop.f32.mrf.mxu0
  %2501 = vmatprep.mubr.f32.mxu0 %v1803
  %2502 = vmatmul.mubr.f32.gmra.mxu0 %v1802
  %v2503 = vpop.f32.mrf.mxu0
  %v2504 = vadd.f32 %v2320, %v2503
  %v2505 = vpop.f32.mrf.mxu0
  %2506 = vmatprep.mubr.f32.mxu0 %v1812
  %2507 = vmatmul.mubr.f32.gmra.mxu0 %v1811
  %v2508 = vpop.f32.mrf.mxu0
  %v2509 = vadd.f32 %v2320, %v2508
  %v2510 = vpop.f32.mrf.mxu0
  %2511 = vmatprep.mubr.f32.mxu0 %v1821
  %2512 = vmatmul.mubr.f32.gmra.mxu0 %v1820
  %v2513 = vpop.f32.mrf.mxu0
  %v2514 = vadd.f32 %v2320, %v2513
  %v2515 = vpop.f32.mrf.mxu0
  %2516 = vmatprep.mubr.f32.mxu0 %v1830
  %2517 = vmatmul.mubr.f32.gmra.mxu0 %v1829
  %v2518 = vpop.f32.mrf.mxu0
  %v2519 = vadd.f32 %v2320, %v2518
  %v2520 = vpop.f32.mrf.mxu0
  %2521 = vmatprep.mubr.f32.mxu0 %v1839
  %2522 = vmatmul.mubr.f32.gmra.mxu0 %v1838
  %v2523 = vpop.f32.mrf.mxu0
  %v2524 = vadd.f32 %v2320, %v2523
  %v2525 = vpop.f32.mrf.mxu0
  %2526 = vmatprep.mubr.f32.mxu0 %v1848
  %2527 = vmatmul.mubr.f32.gmra.mxu0 %v1847
  %v2528 = vpop.f32.mrf.mxu0
  %v2529 = vadd.f32 %v2320, %v2528
  %v2530 = vpop.f32.mrf.mxu0
  %2531 = vmatprep.mubr.f32.mxu0 %v1857
  %2532 = vmatmul.mubr.f32.gmra.mxu0 %v1856
  %v2533 = vpop.f32.mrf.mxu0
  %v2534 = vadd.f32 %v2320, %v2533
  %v2535 = vpop.f32.mrf.mxu0
  %2536 = vmatprep.mubr.f32.mxu0 %v1866
  %2537 = vmatmul.mubr.f32.gmra.mxu0 %v1865
  %v2538 = vpop.f32.mrf.mxu0
  %v2539 = vadd.f32 %v2320, %v2538
  %v2540 = vpop.f32.mrf.mxu0
  %2541 = vmatprep.mubr.f32.mxu0 %v1875
  %2542 = vmatmul.mubr.f32.gmra.mxu0 %v1874
  %v2543 = vpop.f32.mrf.mxu0
  %v2544 = vadd.f32 %v2320, %v2543
  %v2545 = vpop.f32.mrf.mxu0
  %2546 = vmatprep.mubr.f32.mxu0 %v1884
  %2547 = vmatmul.mubr.f32.gmra.mxu0 %v1883
  %v2548 = vpop.f32.mrf.mxu0
  %v2549 = vadd.f32 %v2320, %v2548
  %v2550 = vpop.f32.mrf.mxu0
  %2551 = vmatprep.mubr.f32.mxu0 %v1893
  %2552 = vmatmul.mubr.f32.gmra.mxu0 %v1892
  %v2553 = vpop.f32.mrf.mxu0
  %v2554 = vadd.f32 %v2320, %v2553
  %v2555 = vpop.f32.mrf.mxu0
  %2556 = vmatprep.mubr.f32.mxu0 %v1902
  %2557 = vmatmul.mubr.f32.gmra.mxu0 %v1901
  %v2558 = vpop.f32.mrf.mxu0
  %v2559 = vadd.f32 %v2320, %v2558
  %v2560 = vpop.f32.mrf.mxu0
  %2561 = vmatprep.mubr.f32.mxu0 %v1911
  %2562 = vmatmul.mubr.f32.gmra.mxu0 %v1910
  %v2563 = vpop.f32.mrf.mxu0
  %v2564 = vadd.f32 %v2320, %v2563
  %v2565 = vpop.f32.mrf.mxu0
  %2566 = vmatprep.mubr.f32.mxu0 %v1920
  %2567 = vmatmul.mubr.f32.gmra.mxu0 %v1919
  %v2568 = vpop.f32.mrf.mxu0
  %v2569 = vadd.f32 %v2320, %v2568
  %v2570 = vpop.f32.mrf.mxu0
  %2571 = vmatprep.mubr.f32.mxu0 %v1929
  %2572 = vmatmul.mubr.f32.gmra.mxu0 %v1928
  %v2573 = vpop.f32.mrf.mxu0
  %v2574 = vadd.f32 %v2320, %v2573
  %v2575 = vpop.f32.mrf.mxu0
  %2576 = vmatprep.mubr.f32.mxu0 %v1938
  %2577 = vmatmul.mubr.f32.gmra.mxu0 %v1937
  %v2578 = vpop.f32.mrf.mxu0
  %v2579 = vadd.f32 %v2320, %v2578
  %v2580 = vpop.f32.mrf.mxu0
  %2581 = vmatprep.mubr.f32.mxu0 %v1947
  %2582 = vmatmul.mubr.f32.gmra.mxu0 %v1946
  %v2583 = vpop.f32.mrf.mxu0
  %v2584 = vadd.f32 %v2320, %v2583
  %v2585 = vpop.f32.mrf.mxu0
  %2586 = vmatprep.mubr.f32.mxu0 %v1956
  %2587 = vmatmul.mubr.f32.gmra.mxu0 %v1955
  %v2588 = vpop.f32.mrf.mxu0
  %v2589 = vadd.f32 %v2320, %v2588
  %v2590 = vpop.f32.mrf.mxu0
  %2591 = vmatprep.mubr.f32.mxu0 %v1965
  %2592 = vmatmul.mubr.f32.gmra.mxu0 %v1964
  %v2593 = vpop.f32.mrf.mxu0
  %v2594 = vadd.f32 %v2320, %v2593
  %v2595 = vpop.f32.mrf.mxu0
  %2596 = vmatprep.mubr.f32.mxu0 %v1974
  %2597 = vmatmul.mubr.f32.gmra.mxu0 %v1973
  %v2598 = vpop.f32.mrf.mxu0
  %v2599 = vadd.f32 %v2320, %v2598
  %v2600 = vpop.f32.mrf.mxu0
  %2601 = vmatprep.mubr.f32.mxu0 %v1983
  %2602 = vmatmul.mubr.f32.gmra.mxu0 %v1982
  %v2603 = vpop.f32.mrf.mxu0
  %v2604 = vadd.f32 %v2320, %v2603
  %v2605 = vpop.f32.mrf.mxu0
  %2606 = vmatprep.mubr.f32.mxu0 %v1992
  %2607 = vmatmul.mubr.f32.gmra.mxu0 %v1991
  %v2608 = vpop.f32.mrf.mxu0
  %v2609 = vadd.f32 %v2320, %v2608
  %v2610 = vpop.f32.mrf.mxu0
  %2611 = vmatprep.mubr.f32.mxu0 %v2001
  %2612 = vmatmul.mubr.f32.gmra.mxu0 %v2000
  %v2613 = vpop.f32.mrf.mxu0
  %v2614 = vadd.f32 %v2320, %v2613
  %v2615 = vpop.f32.mrf.mxu0
  %2616 = vmatprep.mubr.f32.mxu0 %v2010
  %2617 = vmatmul.mubr.f32.gmra.mxu0 %v2009
  %v2618 = vpop.f32.mrf.mxu0
  %v2619 = vadd.f32 %v2320, %v2618
  %v2620 = vpop.f32.mrf.mxu0
  %2621 = vmatprep.mubr.f32.mxu0 %v2019
  %2622 = vmatmul.mubr.f32.gmra.mxu0 %v2018
  %v2623 = vpop.f32.mrf.mxu0
  %v2624 = vadd.f32 %v2320, %v2623
  %v2625 = vpop.f32.mrf.mxu0
  %2626 = vmatprep.mubr.f32.mxu0 %v2028
  %2627 = vmatmul.mubr.f32.gmra.mxu0 %v2027
  %v2628 = vpop.f32.mrf.mxu0
  %v2629 = vadd.f32 %v2320, %v2628
  %v2630 = vpop.f32.mrf.mxu0
  %2631 = vmatprep.mubr.f32.mxu0 %v2037
  %2632 = vmatmul.mubr.f32.gmra.mxu0 %v2036
  %v2633 = vpop.f32.mrf.mxu0
  %v2634 = vadd.f32 %v2320, %v2633
  %v2635 = vpop.f32.mrf.mxu0
  %2636 = vmatprep.mubr.f32.mxu0 %v2046
  %2637 = vmatmul.mubr.f32.gmra.mxu0 %v2045
  %v2638 = vpop.f32.mrf.mxu0
  %v2639 = vadd.f32 %v2320, %v2638
  %v2640 = vpop.f32.mrf.mxu0
  %2641 = vmatprep.mubr.f32.mxu0 %v2055
  %2642 = vmatmul.mubr.f32.gmra.mxu0 %v2054
  %v2643 = vpop.f32.mrf.mxu0
  %v2644 = vadd.f32 %v2320, %v2643
  %v2645 = vpop.f32.mrf.mxu0
  %2646 = vmatprep.mubr.f32.mxu0 %v2064
  %2647 = vmatmul.mubr.f32.gmra.mxu0 %v2063
  %v2648 = vpop.f32.mrf.mxu0
  %v2649 = vadd.f32 %v2320, %v2648
  %v2650 = vpop.f32.mrf.mxu0
  %2651 = vmatprep.mubr.f32.mxu0 %v2073
  %2652 = vmatmul.mubr.f32.gmra.mxu0 %v2072
  %v2653 = vpop.f32.mrf.mxu0
  %v2654 = vadd.f32 %v2320, %v2653
  %v2655 = vpop.f32.mrf.mxu0
  %2656 = vmatprep.mubr.f32.mxu0 %v2082
  %2657 = vmatmul.mubr.f32.gmra.mxu0 %v2081
  %v2658 = vpop.f32.mrf.mxu0
  %v2659 = vadd.f32 %v2320, %v2658
  %v2660 = vpop.f32.mrf.mxu0
  %2661 = vmatprep.mubr.f32.mxu0 %v2091
  %2662 = vmatmul.mubr.f32.gmra.mxu0 %v2090
  %v2663 = vpop.f32.mrf.mxu0
  %v2664 = vadd.f32 %v2320, %v2663
  %v2665 = vpop.f32.mrf.mxu0
  %2666 = vmatprep.mubr.f32.mxu0 %v2100
  %2667 = vmatmul.mubr.f32.gmra.mxu0 %v2099
  %v2668 = vpop.f32.mrf.mxu0
  %v2669 = vadd.f32 %v2320, %v2668
  %v2670 = vpop.f32.mrf.mxu0
  %2671 = vmatprep.mubr.f32.mxu0 %v2109
  %2672 = vmatmul.mubr.f32.gmra.mxu0 %v2108
  %v2673 = vpop.f32.mrf.mxu0
  %v2674 = vadd.f32 %v2320, %v2673
  %v2675 = vpop.f32.mrf.mxu0
  %2676 = vmatprep.mubr.f32.mxu0 %v2118
  %2677 = vmatmul.mubr.f32.gmra.mxu0 %v2117
  %v2678 = vpop.f32.mrf.mxu0
  %v2679 = vadd.f32 %v2320, %v2678
  %v2680 = vpop.f32.mrf.mxu0
  %2681 = vmatprep.mubr.f32.mxu0 %v2127
  %2682 = vmatmul.mubr.f32.gmra.mxu0 %v2126
  %v2683 = vpop.f32.mrf.mxu0
  %v2684 = vadd.f32 %v2320, %v2683
  %v2685 = vpop.f32.mrf.mxu0
  %2686 = vmatprep.mubr.f32.mxu0 %v2136
  %2687 = vmatmul.mubr.f32.gmra.mxu0 %v2135
  %v2688 = vpop.f32.mrf.mxu0
  %v2689 = vadd.f32 %v2320, %v2688
  %v2690 = vpop.f32.mrf.mxu0
  %2691 = vmatprep.mubr.f32.mxu0 %v2145
  %2692 = vmatmul.mubr.f32.gmra.mxu0 %v2144
  %v2693 = vpop.f32.mrf.mxu0
  %v2694 = vadd.f32 %v2320, %v2693
  %v2695 = vpop.f32.mrf.mxu0
  %2696 = vmatprep.mubr.f32.mxu0 %v2154
  %2697 = vmatmul.mubr.f32.gmra.mxu0 %v2153
  %v2698 = vpop.f32.mrf.mxu0
  %v2699 = vadd.f32 %v2320, %v2698
  %v2700 = vpop.f32.mrf.mxu0
  %2701 = vmatprep.mubr.f32.mxu0 %v2163
  %2702 = vmatmul.mubr.f32.gmra.mxu0 %v2162
  %v2703 = vpop.f32.mrf.mxu0
  %v2704 = vadd.f32 %v2320, %v2703
  %v2705 = vpop.f32.mrf.mxu0
  %2706 = vdwg.mxu0
  %2707 = vmatprep.subr.mxu0 0.0
  %2708 = vmatpush1.msra.mxu0 %v2218
  %2709 = vmatprep.subr.mxu0 0.0
  %2710 = vmatpush1.msra.mxu0 %v2217
  %2711 = vmatprep.subr.mxu0 0.0
  %2712 = vmatpush1.msra.mxu0 %v2216
  %2713 = vmatprep.subr.mxu0 0.0
  %2714 = vmatpush1.msra.mxu0 %v2215
  %2715 = vmatprep.subr.mxu0 0.0
  %2716 = vmatpush1.msra.mxu0 %v2214
  %2717 = vmatprep.subr.mxu0 0.0
  %2718 = vmatpush1.msra.mxu0 %v2213
  %2719 = vmatprep.subr.mxu0 0.0
  %2720 = vmatpush1.msra.mxu0 %v2212
  %2721 = vmatprep.subr.mxu0 0.0
  %2722 = vmatpush1.msra.mxu0 %v2211
  %2723 = vmatprep.subr.mxu0 0.0
  %2724 = vmatpush1.msra.mxu0 %v2210
  %2725 = vmatprep.subr.mxu0 0.0
  %2726 = vmatpush1.msra.mxu0 %v2209
  %2727 = vmatprep.subr.mxu0 0.0
  %2728 = vmatpush1.msra.mxu0 %v2208
  %2729 = vmatprep.subr.mxu0 0.0
  %2730 = vmatpush1.msra.mxu0 %v2207
  %2731 = vmatprep.subr.mxu0 0.0
  %2732 = vmatpush1.msra.mxu0 %v2206
  %2733 = vmatprep.subr.mxu0 0.0
  %2734 = vmatpush1.msra.mxu0 %v2205
  %2735 = vmatprep.subr.mxu0 0.0
  %2736 = vmatpush1.msra.mxu0 %v2204
  %2737 = vmatprep.subr.mxu0 0.0
  %2738 = vmatpush1.msra.mxu0 %v2203
  %2739 = vmatprep.subr.mxu0 0.0
  %2740 = vmatpush2.msra.mxu0 %v2234
  %2741 = vmatprep.subr.mxu0 0.0
  %2742 = vmatpush2.msra.mxu0 %v2233
  %2743 = vmatprep.subr.mxu0 0.0
  %2744 = vmatpush2.msra.mxu0 %v2232
  %2745 = vmatprep.subr.mxu0 0.0
  %2746 = vmatpush2.msra.mxu0 %v2231
  %2747 = vmatprep.subr.mxu0 0.0
  %2748 = vmatpush2.msra.mxu0 %v2230
  %2749 = vmatprep.subr.mxu0 0.0
  %2750 = vmatpush2.msra.mxu0 %v2229
  %2751 = vmatprep.subr.mxu0 0.0
  %2752 = vmatpush2.msra.mxu0 %v2228
  %2753 = vmatprep.subr.mxu0 0.0
  %2754 = vmatpush2.msra.mxu0 %v2227
  %2755 = vmatprep.subr.mxu0 0.0
  %2756 = vmatpush2.msra.mxu0 %v2226
  %2757 = vmatprep.subr.mxu0 0.0
  %2758 = vmatpush2.msra.mxu0 %v2225
  %2759 = vmatprep.subr.mxu0 0.0
  %2760 = vmatpush2.msra.mxu0 %v2224
  %2761 = vmatprep.subr.mxu0 0.0
  %2762 = vmatpush2.msra.mxu0 %v2223
  %2763 = vmatprep.subr.mxu0 0.0
  %2764 = vmatpush2.msra.mxu0 %v2222
  %2765 = vmatprep.subr.mxu0 0.0
  %2766 = vmatpush2.msra.mxu0 %v2221
  %2767 = vmatprep.subr.mxu0 0.0
  %2768 = vmatpush2.msra.mxu0 %v2220
  %2769 = vmatprep.subr.mxu0 0.0
  %2770 = vmatpush2.msra.mxu0 %v2219
  %2771 = vmatprep.mubr.f32.mxu0 %v1598
  %2772 = vmatmul.mubr.f32.gmra.mxu0 %v1597
  %v2773 = vpop.f32.mrf.mxu0
  %v2774 = vadd.f32 %v2389, %v2773
  %v2775 = vpop.f32.mrf.mxu0
  %2776 = vmatprep.mubr.f32.mxu0 %v1607
  %2777 = vmatmul.mubr.f32.gmra.mxu0 %v1606
  %v2778 = vpop.f32.mrf.mxu0
  %v2779 = vadd.f32 %v2394, %v2778
  %v2780 = vpop.f32.mrf.mxu0
  %2781 = vmatprep.mubr.f32.mxu0 %v1616
  %2782 = vmatmul.mubr.f32.gmra.mxu0 %v1615
  %v2783 = vpop.f32.mrf.mxu0
  %v2784 = vadd.f32 %v2399, %v2783
  %v2785 = vpop.f32.mrf.mxu0
  %2786 = vmatprep.mubr.f32.mxu0 %v1625
  %2787 = vmatmul.mubr.f32.gmra.mxu0 %v1624
  %v2788 = vpop.f32.mrf.mxu0
  %v2789 = vadd.f32 %v2404, %v2788
  %v2790 = vpop.f32.mrf.mxu0
  %2791 = vmatprep.mubr.f32.mxu0 %v1634
  %2792 = vmatmul.mubr.f32.gmra.mxu0 %v1633
  %v2793 = vpop.f32.mrf.mxu0
  %v2794 = vadd.f32 %v2409, %v2793
  %v2795 = vpop.f32.mrf.mxu0
  %2796 = vmatprep.mubr.f32.mxu0 %v1643
  %2797 = vmatmul.mubr.f32.gmra.mxu0 %v1642
  %v2798 = vpop.f32.mrf.mxu0
  %v2799 = vadd.f32 %v2414, %v2798
  %v2800 = vpop.f32.mrf.mxu0
  %2801 = vmatprep.mubr.f32.mxu0 %v1652
  %2802 = vmatmul.mubr.f32.gmra.mxu0 %v1651
  %v2803 = vpop.f32.mrf.mxu0
  %v2804 = vadd.f32 %v2419, %v2803
  %v2805 = vpop.f32.mrf.mxu0
  %2806 = vmatprep.mubr.f32.mxu0 %v1661
  %2807 = vmatmul.mubr.f32.gmra.mxu0 %v1660
  %v2808 = vpop.f32.mrf.mxu0
  %v2809 = vadd.f32 %v2424, %v2808
  %v2810 = vpop.f32.mrf.mxu0
  %2811 = vmatprep.mubr.f32.mxu0 %v1670
  %2812 = vmatmul.mubr.f32.gmra.mxu0 %v1669
  %v2813 = vpop.f32.mrf.mxu0
  %v2814 = vadd.f32 %v2429, %v2813
  %v2815 = vpop.f32.mrf.mxu0
  %2816 = vmatprep.mubr.f32.mxu0 %v1679
  %2817 = vmatmul.mubr.f32.gmra.mxu0 %v1678
  %v2818 = vpop.f32.mrf.mxu0
  %v2819 = vadd.f32 %v2434, %v2818
  %v2820 = vpop.f32.mrf.mxu0
  %2821 = vmatprep.mubr.f32.mxu0 %v1688
  %2822 = vmatmul.mubr.f32.gmra.mxu0 %v1687
  %v2823 = vpop.f32.mrf.mxu0
  %v2824 = vadd.f32 %v2439, %v2823
  %v2825 = vpop.f32.mrf.mxu0
  %2826 = vmatprep.mubr.f32.mxu0 %v1697
  %2827 = vmatmul.mubr.f32.gmra.mxu0 %v1696
  %v2828 = vpop.f32.mrf.mxu0
  %v2829 = vadd.f32 %v2444, %v2828
  %v2830 = vpop.f32.mrf.mxu0
  %2831 = vmatprep.mubr.f32.mxu0 %v1706
  %2832 = vmatmul.mubr.f32.gmra.mxu0 %v1705
  %v2833 = vpop.f32.mrf.mxu0
  %v2834 = vadd.f32 %v2449, %v2833
  %v2835 = vpop.f32.mrf.mxu0
  %2836 = vmatprep.mubr.f32.mxu0 %v1715
  %2837 = vmatmul.mubr.f32.gmra.mxu0 %v1714
  %v2838 = vpop.f32.mrf.mxu0
  %v2839 = vadd.f32 %v2454, %v2838
  %v2840 = vpop.f32.mrf.mxu0
  %2841 = vmatprep.mubr.f32.mxu0 %v1724
  %2842 = vmatmul.mubr.f32.gmra.mxu0 %v1723
  %v2843 = vpop.f32.mrf.mxu0
  %v2844 = vadd.f32 %v2459, %v2843
  %v2845 = vpop.f32.mrf.mxu0
  %2846 = vmatprep.mubr.f32.mxu0 %v1733
  %2847 = vmatmul.mubr.f32.gmra.mxu0 %v1732
  %v2848 = vpop.f32.mrf.mxu0
  %v2849 = vadd.f32 %v2464, %v2848
  %v2850 = vpop.f32.mrf.mxu0
  %2851 = vmatprep.mubr.f32.mxu0 %v1742
  %2852 = vmatmul.mubr.f32.gmra.mxu0 %v1741
  %v2853 = vpop.f32.mrf.mxu0
  %v2854 = vadd.f32 %v2469, %v2853
  %v2855 = vpop.f32.mrf.mxu0
  %2856 = vmatprep.mubr.f32.mxu0 %v1751
  %2857 = vmatmul.mubr.f32.gmra.mxu0 %v1750
  %v2858 = vpop.f32.mrf.mxu0
  %v2859 = vadd.f32 %v2474, %v2858
  %v2860 = vpop.f32.mrf.mxu0
  %2861 = vmatprep.mubr.f32.mxu0 %v1760
  %2862 = vmatmul.mubr.f32.gmra.mxu0 %v1759
  %v2863 = vpop.f32.mrf.mxu0
  %v2864 = vadd.f32 %v2479, %v2863
  %v2865 = vpop.f32.mrf.mxu0
  %2866 = vmatprep.mubr.f32.mxu0 %v1769
  %2867 = vmatmul.mubr.f32.gmra.mxu0 %v1768
  %v2868 = vpop.f32.mrf.mxu0
  %v2869 = vadd.f32 %v2484, %v2868
  %v2870 = vpop.f32.mrf.mxu0
  %2871 = vmatprep.mubr.f32.mxu0 %v1778
  %2872 = vmatmul.mubr.f32.gmra.mxu0 %v1777
  %v2873 = vpop.f32.mrf.mxu0
  %v2874 = vadd.f32 %v2489, %v2873
  %v2875 = vpop.f32.mrf.mxu0
  %2876 = vmatprep.mubr.f32.mxu0 %v1787
  %2877 = vmatmul.mubr.f32.gmra.mxu0 %v1786
  %v2878 = vpop.f32.mrf.mxu0
  %v2879 = vadd.f32 %v2494, %v2878
  %v2880 = vpop.f32.mrf.mxu0
  %2881 = vmatprep.mubr.f32.mxu0 %v1796
  %2882 = vmatmul.mubr.f32.gmra.mxu0 %v1795
  %v2883 = vpop.f32.mrf.mxu0
  %v2884 = vadd.f32 %v2499, %v2883
  %v2885 = vpop.f32.mrf.mxu0
  %2886 = vmatprep.mubr.f32.mxu0 %v1805
  %2887 = vmatmul.mubr.f32.gmra.mxu0 %v1804
  %v2888 = vpop.f32.mrf.mxu0
  %v2889 = vadd.f32 %v2504, %v2888
  %v2890 = vpop.f32.mrf.mxu0
  %2891 = vmatprep.mubr.f32.mxu0 %v1814
  %2892 = vmatmul.mubr.f32.gmra.mxu0 %v1813
  %v2893 = vpop.f32.mrf.mxu0
  %v2894 = vadd.f32 %v2509, %v2893
  %v2895 = vpop.f32.mrf.mxu0
  %2896 = vmatprep.mubr.f32.mxu0 %v1823
  %2897 = vmatmul.mubr.f32.gmra.mxu0 %v1822
  %v2898 = vpop.f32.mrf.mxu0
  %v2899 = vadd.f32 %v2514, %v2898
  %v2900 = vpop.f32.mrf.mxu0
  %2901 = vmatprep.mubr.f32.mxu0 %v1832
  %2902 = vmatmul.mubr.f32.gmra.mxu0 %v1831
  %v2903 = vpop.f32.mrf.mxu0
  %v2904 = vadd.f32 %v2519, %v2903
  %v2905 = vpop.f32.mrf.mxu0
  %2906 = vmatprep.mubr.f32.mxu0 %v1841
  %2907 = vmatmul.mubr.f32.gmra.mxu0 %v1840
  %v2908 = vpop.f32.mrf.mxu0
  %v2909 = vadd.f32 %v2524, %v2908
  %v2910 = vpop.f32.mrf.mxu0
  %2911 = vmatprep.mubr.f32.mxu0 %v1850
  %2912 = vmatmul.mubr.f32.gmra.mxu0 %v1849
  %v2913 = vpop.f32.mrf.mxu0
  %v2914 = vadd.f32 %v2529, %v2913
  %v2915 = vpop.f32.mrf.mxu0
  %2916 = vmatprep.mubr.f32.mxu0 %v1859
  %2917 = vmatmul.mubr.f32.gmra.mxu0 %v1858
  %v2918 = vpop.f32.mrf.mxu0
  %v2919 = vadd.f32 %v2534, %v2918
  %v2920 = vpop.f32.mrf.mxu0
  %2921 = vmatprep.mubr.f32.mxu0 %v1868
  %2922 = vmatmul.mubr.f32.gmra.mxu0 %v1867
  %v2923 = vpop.f32.mrf.mxu0
  %v2924 = vadd.f32 %v2539, %v2923
  %v2925 = vpop.f32.mrf.mxu0
  %2926 = vmatprep.mubr.f32.mxu0 %v1877
  %2927 = vmatmul.mubr.f32.gmra.mxu0 %v1876
  %v2928 = vpop.f32.mrf.mxu0
  %v2929 = vadd.f32 %v2544, %v2928
  %v2930 = vpop.f32.mrf.mxu0
  %2931 = vmatprep.mubr.f32.mxu0 %v1886
  %2932 = vmatmul.mubr.f32.gmra.mxu0 %v1885
  %v2933 = vpop.f32.mrf.mxu0
  %v2934 = vadd.f32 %v2549, %v2933
  %v2935 = vpop.f32.mrf.mxu0
  %2936 = vmatprep.mubr.f32.mxu0 %v1895
  %2937 = vmatmul.mubr.f32.gmra.mxu0 %v1894
  %v2938 = vpop.f32.mrf.mxu0
  %v2939 = vadd.f32 %v2554, %v2938
  %v2940 = vpop.f32.mrf.mxu0
  %2941 = vmatprep.mubr.f32.mxu0 %v1904
  %2942 = vmatmul.mubr.f32.gmra.mxu0 %v1903
  %v2943 = vpop.f32.mrf.mxu0
  %v2944 = vadd.f32 %v2559, %v2943
  %v2945 = vpop.f32.mrf.mxu0
  %2946 = vmatprep.mubr.f32.mxu0 %v1913
  %2947 = vmatmul.mubr.f32.gmra.mxu0 %v1912
  %v2948 = vpop.f32.mrf.mxu0
  %v2949 = vadd.f32 %v2564, %v2948
  %v2950 = vpop.f32.mrf.mxu0
  %2951 = vmatprep.mubr.f32.mxu0 %v1922
  %2952 = vmatmul.mubr.f32.gmra.mxu0 %v1921
  %v2953 = vpop.f32.mrf.mxu0
  %v2954 = vadd.f32 %v2569, %v2953
  %v2955 = vpop.f32.mrf.mxu0
  %2956 = vmatprep.mubr.f32.mxu0 %v1931
  %2957 = vmatmul.mubr.f32.gmra.mxu0 %v1930
  %v2958 = vpop.f32.mrf.mxu0
  %v2959 = vadd.f32 %v2574, %v2958
  %v2960 = vpop.f32.mrf.mxu0
  %2961 = vmatprep.mubr.f32.mxu0 %v1940
  %2962 = vmatmul.mubr.f32.gmra.mxu0 %v1939
  %v2963 = vpop.f32.mrf.mxu0
  %v2964 = vadd.f32 %v2579, %v2963
  %v2965 = vpop.f32.mrf.mxu0
  %2966 = vmatprep.mubr.f32.mxu0 %v1949
  %2967 = vmatmul.mubr.f32.gmra.mxu0 %v1948
  %v2968 = vpop.f32.mrf.mxu0
  %v2969 = vadd.f32 %v2584, %v2968
  %v2970 = vpop.f32.mrf.mxu0
  %2971 = vmatprep.mubr.f32.mxu0 %v1958
  %2972 = vmatmul.mubr.f32.gmra.mxu0 %v1957
  %v2973 = vpop.f32.mrf.mxu0
  %v2974 = vadd.f32 %v2589, %v2973
  %v2975 = vpop.f32.mrf.mxu0
  %2976 = vmatprep.mubr.f32.mxu0 %v1967
  %2977 = vmatmul.mubr.f32.gmra.mxu0 %v1966
  %v2978 = vpop.f32.mrf.mxu0
  %v2979 = vadd.f32 %v2594, %v2978
  %v2980 = vpop.f32.mrf.mxu0
  %2981 = vmatprep.mubr.f32.mxu0 %v1976
  %2982 = vmatmul.mubr.f32.gmra.mxu0 %v1975
  %v2983 = vpop.f32.mrf.mxu0
  %v2984 = vadd.f32 %v2599, %v2983
  %v2985 = vpop.f32.mrf.mxu0
  %2986 = vmatprep.mubr.f32.mxu0 %v1985
  %2987 = vmatmul.mubr.f32.gmra.mxu0 %v1984
  %v2988 = vpop.f32.mrf.mxu0
  %v2989 = vadd.f32 %v2604, %v2988
  %v2990 = vpop.f32.mrf.mxu0
  %2991 = vmatprep.mubr.f32.mxu0 %v1994
  %2992 = vmatmul.mubr.f32.gmra.mxu0 %v1993
  %v2993 = vpop.f32.mrf.mxu0
  %v2994 = vadd.f32 %v2609, %v2993
  %v2995 = vpop.f32.mrf.mxu0
  %2996 = vmatprep.mubr.f32.mxu0 %v2003
  %2997 = vmatmul.mubr.f32.gmra.mxu0 %v2002
  %v2998 = vpop.f32.mrf.mxu0
  %v2999 = vadd.f32 %v2614, %v2998
  %v3000 = vpop.f32.mrf.mxu0
  %3001 = vmatprep.mubr.f32.mxu0 %v2012
  %3002 = vmatmul.mubr.f32.gmra.mxu0 %v2011
  %v3003 = vpop.f32.mrf.mxu0
  %v3004 = vadd.f32 %v2619, %v3003
  %v3005 = vpop.f32.mrf.mxu0
  %3006 = vmatprep.mubr.f32.mxu0 %v2021
  %3007 = vmatmul.mubr.f32.gmra.mxu0 %v2020
  %v3008 = vpop.f32.mrf.mxu0
  %v3009 = vadd.f32 %v2624, %v3008
  %v3010 = vpop.f32.mrf.mxu0
  %3011 = vmatprep.mubr.f32.mxu0 %v2030
  %3012 = vmatmul.mubr.f32.gmra.mxu0 %v2029
  %v3013 = vpop.f32.mrf.mxu0
  %v3014 = vadd.f32 %v2629, %v3013
  %v3015 = vpop.f32.mrf.mxu0
  %3016 = vmatprep.mubr.f32.mxu0 %v2039
  %3017 = vmatmul.mubr.f32.gmra.mxu0 %v2038
  %v3018 = vpop.f32.mrf.mxu0
  %v3019 = vadd.f32 %v2634, %v3018
  %v3020 = vpop.f32.mrf.mxu0
  %3021 = vmatprep.mubr.f32.mxu0 %v2048
  %3022 = vmatmul.mubr.f32.gmra.mxu0 %v2047
  %v3023 = vpop.f32.mrf.mxu0
  %v3024 = vadd.f32 %v2639, %v3023
  %v3025 = vpop.f32.mrf.mxu0
  %3026 = vmatprep.mubr.f32.mxu0 %v2057
  %3027 = vmatmul.mubr.f32.gmra.mxu0 %v2056
  %v3028 = vpop.f32.mrf.mxu0
  %v3029 = vadd.f32 %v2644, %v3028
  %v3030 = vpop.f32.mrf.mxu0
  %3031 = vmatprep.mubr.f32.mxu0 %v2066
  %3032 = vmatmul.mubr.f32.gmra.mxu0 %v2065
  %v3033 = vpop.f32.mrf.mxu0
  %v3034 = vadd.f32 %v2649, %v3033
  %v3035 = vpop.f32.mrf.mxu0
  %3036 = vmatprep.mubr.f32.mxu0 %v2075
  %3037 = vmatmul.mubr.f32.gmra.mxu0 %v2074
  %v3038 = vpop.f32.mrf.mxu0
  %v3039 = vadd.f32 %v2654, %v3038
  %v3040 = vpop.f32.mrf.mxu0
  %3041 = vmatprep.mubr.f32.mxu0 %v2084
  %3042 = vmatmul.mubr.f32.gmra.mxu0 %v2083
  %v3043 = vpop.f32.mrf.mxu0
  %v3044 = vadd.f32 %v2659, %v3043
  %v3045 = vpop.f32.mrf.mxu0
  %3046 = vmatprep.mubr.f32.mxu0 %v2093
  %3047 = vmatmul.mubr.f32.gmra.mxu0 %v2092
  %v3048 = vpop.f32.mrf.mxu0
  %v3049 = vadd.f32 %v2664, %v3048
  %v3050 = vpop.f32.mrf.mxu0
  %3051 = vmatprep.mubr.f32.mxu0 %v2102
  %3052 = vmatmul.mubr.f32.gmra.mxu0 %v2101
  %v3053 = vpop.f32.mrf.mxu0
  %v3054 = vadd.f32 %v2669, %v3053
  %v3055 = vpop.f32.mrf.mxu0
  %3056 = vmatprep.mubr.f32.mxu0 %v2111
  %3057 = vmatmul.mubr.f32.gmra.mxu0 %v2110
  %v3058 = vpop.f32.mrf.mxu0
  %v3059 = vadd.f32 %v2674, %v3058
  %v3060 = vpop.f32.mrf.mxu0
  %3061 = vmatprep.mubr.f32.mxu0 %v2120
  %3062 = vmatmul.mubr.f32.gmra.mxu0 %v2119
  %v3063 = vpop.f32.mrf.mxu0
  %v3064 = vadd.f32 %v2679, %v3063
  %v3065 = vpop.f32.mrf.mxu0
  %3066 = vmatprep.mubr.f32.mxu0 %v2129
  %3067 = vmatmul.mubr.f32.gmra.mxu0 %v2128
  %v3068 = vpop.f32.mrf.mxu0
  %v3069 = vadd.f32 %v2684, %v3068
  %v3070 = vpop.f32.mrf.mxu0
  %3071 = vmatprep.mubr.f32.mxu0 %v2138
  %3072 = vmatmul.mubr.f32.gmra.mxu0 %v2137
  %v3073 = vpop.f32.mrf.mxu0
  %v3074 = vadd.f32 %v2689, %v3073
  %v3075 = vpop.f32.mrf.mxu0
  %3076 = vmatprep.mubr.f32.mxu0 %v2147
  %3077 = vmatmul.mubr.f32.gmra.mxu0 %v2146
  %v3078 = vpop.f32.mrf.mxu0
  %v3079 = vadd.f32 %v2694, %v3078
  %v3080 = vpop.f32.mrf.mxu0
  %3081 = vmatprep.mubr.f32.mxu0 %v2156
  %3082 = vmatmul.mubr.f32.gmra.mxu0 %v2155
  %v3083 = vpop.f32.mrf.mxu0
  %v3084 = vadd.f32 %v2699, %v3083
  %v3085 = vpop.f32.mrf.mxu0
  %3086 = vmatprep.mubr.f32.mxu0 %v2165
  %3087 = vmatmul.mubr.f32.gmra.mxu0 %v2164
  %v3088 = vpop.f32.mrf.mxu0
  %v3089 = vadd.f32 %v2704, %v3088
  %v3090 = vpop.f32.mrf.mxu0
  %3091 = vdwg.mxu0
  %3092 = vmatprep.subr.mxu0 0.0
  %3093 = vmatpush1.msra.mxu0 %v2250
  %3094 = vmatprep.subr.mxu0 0.0
  %3095 = vmatpush1.msra.mxu0 %v2249
  %3096 = vmatprep.subr.mxu0 0.0
  %3097 = vmatpush1.msra.mxu0 %v2248
  %3098 = vmatprep.subr.mxu0 0.0
  %3099 = vmatpush1.msra.mxu0 %v2247
  %3100 = vmatprep.subr.mxu0 0.0
  %3101 = vmatpush1.msra.mxu0 %v2246
  %3102 = vmatprep.subr.mxu0 0.0
  %3103 = vmatpush1.msra.mxu0 %v2245
  %3104 = vmatprep.subr.mxu0 0.0
  %3105 = vmatpush1.msra.mxu0 %v2244
  %3106 = vmatprep.subr.mxu0 0.0
  %3107 = vmatpush1.msra.mxu0 %v2243
  %3108 = vmatprep.subr.mxu0 0.0
  %3109 = vmatpush1.msra.mxu0 %v2242
  %3110 = vmatprep.subr.mxu0 0.0
  %3111 = vmatpush1.msra.mxu0 %v2241
  %3112 = vmatprep.subr.mxu0 0.0
  %3113 = vmatpush1.msra.mxu0 %v2240
  %3114 = vmatprep.subr.mxu0 0.0
  %3115 = vmatpush1.msra.mxu0 %v2239
  %3116 = vmatprep.subr.mxu0 0.0
  %3117 = vmatpush1.msra.mxu0 %v2238
  %3118 = vmatprep.subr.mxu0 0.0
  %3119 = vmatpush1.msra.mxu0 %v2237
  %3120 = vmatprep.subr.mxu0 0.0
  %3121 = vmatpush1.msra.mxu0 %v2236
  %3122 = vmatprep.subr.mxu0 0.0
  %3123 = vmatpush1.msra.mxu0 %v2235
  %3124 = vmatprep.subr.mxu0 0.0
  %3125 = vmatpush2.msra.mxu0 %v2266
  %3126 = vmatprep.subr.mxu0 0.0
  %3127 = vmatpush2.msra.mxu0 %v2265
  %3128 = vmatprep.subr.mxu0 0.0
  %3129 = vmatpush2.msra.mxu0 %v2264
  %3130 = vmatprep.subr.mxu0 0.0
  %3131 = vmatpush2.msra.mxu0 %v2263
  %3132 = vmatprep.subr.mxu0 0.0
  %3133 = vmatpush2.msra.mxu0 %v2262
  %3134 = vmatprep.subr.mxu0 0.0
  %3135 = vmatpush2.msra.mxu0 %v2261
  %3136 = vmatprep.subr.mxu0 0.0
  %3137 = vmatpush2.msra.mxu0 %v2260
  %3138 = vmatprep.subr.mxu0 0.0
  %3139 = vmatpush2.msra.mxu0 %v2259
  %3140 = vmatprep.subr.mxu0 0.0
  %3141 = vmatpush2.msra.mxu0 %v2258
  %3142 = vmatprep.subr.mxu0 0.0
  %3143 = vmatpush2.msra.mxu0 %v2257
  %3144 = vmatprep.subr.mxu0 0.0
  %3145 = vmatpush2.msra.mxu0 %v2256
  %3146 = vmatprep.subr.mxu0 0.0
  %3147 = vmatpush2.msra.mxu0 %v2255
  %3148 = vmatprep.subr.mxu0 0.0
  %3149 = vmatpush2.msra.mxu0 %v2254
  %3150 = vmatprep.subr.mxu0 0.0
  %3151 = vmatpush2.msra.mxu0 %v2253
  %3152 = vmatprep.subr.mxu0 0.0
  %3153 = vmatpush2.msra.mxu0 %v2252
  %3154 = vmatprep.subr.mxu0 0.0
  %3155 = vmatpush2.msra.mxu0 %v2251
  %3156 = vmatprep.mubr.f32.mxu0 %v1600
  %3157 = vmatmul.mubr.f32.gmra.mxu0 %v1599
  %v3158 = vpop.f32.mrf.mxu0
  %v3159 = vadd.f32 %v2774, %v3158
  %v3160 = vpop.f32.mrf.mxu0
  %3161 = vmatprep.mubr.f32.mxu0 %v1609
  %3162 = vmatmul.mubr.f32.gmra.mxu0 %v1608
  %v3163 = vpop.f32.mrf.mxu0
  %v3164 = vadd.f32 %v2779, %v3163
  %v3165 = vpop.f32.mrf.mxu0
  %3166 = vmatprep.mubr.f32.mxu0 %v1618
  %3167 = vmatmul.mubr.f32.gmra.mxu0 %v1617
  %v3168 = vpop.f32.mrf.mxu0
  %v3169 = vadd.f32 %v2784, %v3168
  %v3170 = vpop.f32.mrf.mxu0
  %3171 = vmatprep.mubr.f32.mxu0 %v1627
  %3172 = vmatmul.mubr.f32.gmra.mxu0 %v1626
  %v3173 = vpop.f32.mrf.mxu0
  %v3174 = vadd.f32 %v2789, %v3173
  %v3175 = vpop.f32.mrf.mxu0
  %3176 = vmatprep.mubr.f32.mxu0 %v1636
  %3177 = vmatmul.mubr.f32.gmra.mxu0 %v1635
  %v3178 = vpop.f32.mrf.mxu0
  %v3179 = vadd.f32 %v2794, %v3178
  %v3180 = vpop.f32.mrf.mxu0
  %3181 = vmatprep.mubr.f32.mxu0 %v1645
  %3182 = vmatmul.mubr.f32.gmra.mxu0 %v1644
  %v3183 = vpop.f32.mrf.mxu0
  %v3184 = vadd.f32 %v2799, %v3183
  %v3185 = vpop.f32.mrf.mxu0
  %3186 = vmatprep.mubr.f32.mxu0 %v1654
  %3187 = vmatmul.mubr.f32.gmra.mxu0 %v1653
  %v3188 = vpop.f32.mrf.mxu0
  %v3189 = vadd.f32 %v2804, %v3188
  %v3190 = vpop.f32.mrf.mxu0
  %3191 = vmatprep.mubr.f32.mxu0 %v1663
  %3192 = vmatmul.mubr.f32.gmra.mxu0 %v1662
  %v3193 = vpop.f32.mrf.mxu0
  %v3194 = vadd.f32 %v2809, %v3193
  %v3195 = vpop.f32.mrf.mxu0
  %3196 = vmatprep.mubr.f32.mxu0 %v1672
  %3197 = vmatmul.mubr.f32.gmra.mxu0 %v1671
  %v3198 = vpop.f32.mrf.mxu0
  %v3199 = vadd.f32 %v2814, %v3198
  %v3200 = vpop.f32.mrf.mxu0
  %3201 = vmatprep.mubr.f32.mxu0 %v1681
  %3202 = vmatmul.mubr.f32.gmra.mxu0 %v1680
  %v3203 = vpop.f32.mrf.mxu0
  %v3204 = vadd.f32 %v2819, %v3203
  %v3205 = vpop.f32.mrf.mxu0
  %3206 = vmatprep.mubr.f32.mxu0 %v1690
  %3207 = vmatmul.mubr.f32.gmra.mxu0 %v1689
  %v3208 = vpop.f32.mrf.mxu0
  %v3209 = vadd.f32 %v2824, %v3208
  %v3210 = vpop.f32.mrf.mxu0
  %3211 = vmatprep.mubr.f32.mxu0 %v1699
  %3212 = vmatmul.mubr.f32.gmra.mxu0 %v1698
  %v3213 = vpop.f32.mrf.mxu0
  %v3214 = vadd.f32 %v2829, %v3213
  %v3215 = vpop.f32.mrf.mxu0
  %3216 = vmatprep.mubr.f32.mxu0 %v1708
  %3217 = vmatmul.mubr.f32.gmra.mxu0 %v1707
  %v3218 = vpop.f32.mrf.mxu0
  %v3219 = vadd.f32 %v2834, %v3218
  %v3220 = vpop.f32.mrf.mxu0
  %3221 = vmatprep.mubr.f32.mxu0 %v1717
  %3222 = vmatmul.mubr.f32.gmra.mxu0 %v1716
  %v3223 = vpop.f32.mrf.mxu0
  %v3224 = vadd.f32 %v2839, %v3223
  %v3225 = vpop.f32.mrf.mxu0
  %3226 = vmatprep.mubr.f32.mxu0 %v1726
  %3227 = vmatmul.mubr.f32.gmra.mxu0 %v1725
  %v3228 = vpop.f32.mrf.mxu0
  %v3229 = vadd.f32 %v2844, %v3228
  %v3230 = vpop.f32.mrf.mxu0
  %3231 = vmatprep.mubr.f32.mxu0 %v1735
  %3232 = vmatmul.mubr.f32.gmra.mxu0 %v1734
  %v3233 = vpop.f32.mrf.mxu0
  %v3234 = vadd.f32 %v2849, %v3233
  %v3235 = vpop.f32.mrf.mxu0
  %3236 = vmatprep.mubr.f32.mxu0 %v1744
  %3237 = vmatmul.mubr.f32.gmra.mxu0 %v1743
  %v3238 = vpop.f32.mrf.mxu0
  %v3239 = vadd.f32 %v2854, %v3238
  %v3240 = vpop.f32.mrf.mxu0
  %3241 = vmatprep.mubr.f32.mxu0 %v1753
  %3242 = vmatmul.mubr.f32.gmra.mxu0 %v1752
  %v3243 = vpop.f32.mrf.mxu0
  %v3244 = vadd.f32 %v2859, %v3243
  %v3245 = vpop.f32.mrf.mxu0
  %3246 = vmatprep.mubr.f32.mxu0 %v1762
  %3247 = vmatmul.mubr.f32.gmra.mxu0 %v1761
  %v3248 = vpop.f32.mrf.mxu0
  %v3249 = vadd.f32 %v2864, %v3248
  %v3250 = vpop.f32.mrf.mxu0
  %3251 = vmatprep.mubr.f32.mxu0 %v1771
  %3252 = vmatmul.mubr.f32.gmra.mxu0 %v1770
  %v3253 = vpop.f32.mrf.mxu0
  %v3254 = vadd.f32 %v2869, %v3253
  %v3255 = vpop.f32.mrf.mxu0
  %3256 = vmatprep.mubr.f32.mxu0 %v1780
  %3257 = vmatmul.mubr.f32.gmra.mxu0 %v1779
  %v3258 = vpop.f32.mrf.mxu0
  %v3259 = vadd.f32 %v2874, %v3258
  %v3260 = vpop.f32.mrf.mxu0
  %3261 = vmatprep.mubr.f32.mxu0 %v1789
  %3262 = vmatmul.mubr.f32.gmra.mxu0 %v1788
  %v3263 = vpop.f32.mrf.mxu0
  %v3264 = vadd.f32 %v2879, %v3263
  %v3265 = vpop.f32.mrf.mxu0
  %3266 = vmatprep.mubr.f32.mxu0 %v1798
  %3267 = vmatmul.mubr.f32.gmra.mxu0 %v1797
  %v3268 = vpop.f32.mrf.mxu0
  %v3269 = vadd.f32 %v2884, %v3268
  %v3270 = vpop.f32.mrf.mxu0
  %3271 = vmatprep.mubr.f32.mxu0 %v1807
  %3272 = vmatmul.mubr.f32.gmra.mxu0 %v1806
  %v3273 = vpop.f32.mrf.mxu0
  %v3274 = vadd.f32 %v2889, %v3273
  %v3275 = vpop.f32.mrf.mxu0
  %3276 = vmatprep.mubr.f32.mxu0 %v1816
  %3277 = vmatmul.mubr.f32.gmra.mxu0 %v1815
  %v3278 = vpop.f32.mrf.mxu0
  %v3279 = vadd.f32 %v2894, %v3278
  %v3280 = vpop.f32.mrf.mxu0
  %3281 = vmatprep.mubr.f32.mxu0 %v1825
  %3282 = vmatmul.mubr.f32.gmra.mxu0 %v1824
  %v3283 = vpop.f32.mrf.mxu0
  %v3284 = vadd.f32 %v2899, %v3283
  %v3285 = vpop.f32.mrf.mxu0
  %3286 = vmatprep.mubr.f32.mxu0 %v1834
  %3287 = vmatmul.mubr.f32.gmra.mxu0 %v1833
  %v3288 = vpop.f32.mrf.mxu0
  %v3289 = vadd.f32 %v2904, %v3288
  %v3290 = vpop.f32.mrf.mxu0
  %3291 = vmatprep.mubr.f32.mxu0 %v1843
  %3292 = vmatmul.mubr.f32.gmra.mxu0 %v1842
  %v3293 = vpop.f32.mrf.mxu0
  %v3294 = vadd.f32 %v2909, %v3293
  %v3295 = vpop.f32.mrf.mxu0
  %3296 = vmatprep.mubr.f32.mxu0 %v1852
  %3297 = vmatmul.mubr.f32.gmra.mxu0 %v1851
  %v3298 = vpop.f32.mrf.mxu0
  %v3299 = vadd.f32 %v2914, %v3298
  %v3300 = vpop.f32.mrf.mxu0
  %3301 = vmatprep.mubr.f32.mxu0 %v1861
  %3302 = vmatmul.mubr.f32.gmra.mxu0 %v1860
  %v3303 = vpop.f32.mrf.mxu0
  %v3304 = vadd.f32 %v2919, %v3303
  %v3305 = vpop.f32.mrf.mxu0
  %3306 = vmatprep.mubr.f32.mxu0 %v1870
  %3307 = vmatmul.mubr.f32.gmra.mxu0 %v1869
  %v3308 = vpop.f32.mrf.mxu0
  %v3309 = vadd.f32 %v2924, %v3308
  %v3310 = vpop.f32.mrf.mxu0
  %3311 = vmatprep.mubr.f32.mxu0 %v1879
  %3312 = vmatmul.mubr.f32.gmra.mxu0 %v1878
  %v3313 = vpop.f32.mrf.mxu0
  %v3314 = vadd.f32 %v2929, %v3313
  %v3315 = vpop.f32.mrf.mxu0
  %3316 = vmatprep.mubr.f32.mxu0 %v1888
  %3317 = vmatmul.mubr.f32.gmra.mxu0 %v1887
  %v3318 = vpop.f32.mrf.mxu0
  %v3319 = vadd.f32 %v2934, %v3318
  %v3320 = vpop.f32.mrf.mxu0
  %3321 = vmatprep.mubr.f32.mxu0 %v1897
  %3322 = vmatmul.mubr.f32.gmra.mxu0 %v1896
  %v3323 = vpop.f32.mrf.mxu0
  %v3324 = vadd.f32 %v2939, %v3323
  %v3325 = vpop.f32.mrf.mxu0
  %3326 = vmatprep.mubr.f32.mxu0 %v1906
  %3327 = vmatmul.mubr.f32.gmra.mxu0 %v1905
  %v3328 = vpop.f32.mrf.mxu0
  %v3329 = vadd.f32 %v2944, %v3328
  %v3330 = vpop.f32.mrf.mxu0
  %3331 = vmatprep.mubr.f32.mxu0 %v1915
  %3332 = vmatmul.mubr.f32.gmra.mxu0 %v1914
  %v3333 = vpop.f32.mrf.mxu0
  %v3334 = vadd.f32 %v2949, %v3333
  %v3335 = vpop.f32.mrf.mxu0
  %3336 = vmatprep.mubr.f32.mxu0 %v1924
  %3337 = vmatmul.mubr.f32.gmra.mxu0 %v1923
  %v3338 = vpop.f32.mrf.mxu0
  %v3339 = vadd.f32 %v2954, %v3338
  %v3340 = vpop.f32.mrf.mxu0
  %3341 = vmatprep.mubr.f32.mxu0 %v1933
  %3342 = vmatmul.mubr.f32.gmra.mxu0 %v1932
  %v3343 = vpop.f32.mrf.mxu0
  %v3344 = vadd.f32 %v2959, %v3343
  %v3345 = vpop.f32.mrf.mxu0
  %3346 = vmatprep.mubr.f32.mxu0 %v1942
  %3347 = vmatmul.mubr.f32.gmra.mxu0 %v1941
  %v3348 = vpop.f32.mrf.mxu0
  %v3349 = vadd.f32 %v2964, %v3348
  %v3350 = vpop.f32.mrf.mxu0
  %3351 = vmatprep.mubr.f32.mxu0 %v1951
  %3352 = vmatmul.mubr.f32.gmra.mxu0 %v1950
  %v3353 = vpop.f32.mrf.mxu0
  %v3354 = vadd.f32 %v2969, %v3353
  %v3355 = vpop.f32.mrf.mxu0
  %3356 = vmatprep.mubr.f32.mxu0 %v1960
  %3357 = vmatmul.mubr.f32.gmra.mxu0 %v1959
  %v3358 = vpop.f32.mrf.mxu0
  %v3359 = vadd.f32 %v2974, %v3358
  %v3360 = vpop.f32.mrf.mxu0
  %3361 = vmatprep.mubr.f32.mxu0 %v1969
  %3362 = vmatmul.mubr.f32.gmra.mxu0 %v1968
  %v3363 = vpop.f32.mrf.mxu0
  %v3364 = vadd.f32 %v2979, %v3363
  %v3365 = vpop.f32.mrf.mxu0
  %3366 = vmatprep.mubr.f32.mxu0 %v1978
  %3367 = vmatmul.mubr.f32.gmra.mxu0 %v1977
  %v3368 = vpop.f32.mrf.mxu0
  %v3369 = vadd.f32 %v2984, %v3368
  %v3370 = vpop.f32.mrf.mxu0
  %3371 = vmatprep.mubr.f32.mxu0 %v1987
  %3372 = vmatmul.mubr.f32.gmra.mxu0 %v1986
  %v3373 = vpop.f32.mrf.mxu0
  %v3374 = vadd.f32 %v2989, %v3373
  %v3375 = vpop.f32.mrf.mxu0
  %3376 = vmatprep.mubr.f32.mxu0 %v1996
  %3377 = vmatmul.mubr.f32.gmra.mxu0 %v1995
  %v3378 = vpop.f32.mrf.mxu0
  %v3379 = vadd.f32 %v2994, %v3378
  %v3380 = vpop.f32.mrf.mxu0
  %3381 = vmatprep.mubr.f32.mxu0 %v2005
  %3382 = vmatmul.mubr.f32.gmra.mxu0 %v2004
  %v3383 = vpop.f32.mrf.mxu0
  %v3384 = vadd.f32 %v2999, %v3383
  %v3385 = vpop.f32.mrf.mxu0
  %3386 = vmatprep.mubr.f32.mxu0 %v2014
  %3387 = vmatmul.mubr.f32.gmra.mxu0 %v2013
  %v3388 = vpop.f32.mrf.mxu0
  %v3389 = vadd.f32 %v3004, %v3388
  %v3390 = vpop.f32.mrf.mxu0
  %3391 = vmatprep.mubr.f32.mxu0 %v2023
  %3392 = vmatmul.mubr.f32.gmra.mxu0 %v2022
  %v3393 = vpop.f32.mrf.mxu0
  %v3394 = vadd.f32 %v3009, %v3393
  %v3395 = vpop.f32.mrf.mxu0
  %3396 = vmatprep.mubr.f32.mxu0 %v2032
  %3397 = vmatmul.mubr.f32.gmra.mxu0 %v2031
  %v3398 = vpop.f32.mrf.mxu0
  %v3399 = vadd.f32 %v3014, %v3398
  %v3400 = vpop.f32.mrf.mxu0
  %3401 = vmatprep.mubr.f32.mxu0 %v2041
  %3402 = vmatmul.mubr.f32.gmra.mxu0 %v2040
  %v3403 = vpop.f32.mrf.mxu0
  %v3404 = vadd.f32 %v3019, %v3403
  %v3405 = vpop.f32.mrf.mxu0
  %3406 = vmatprep.mubr.f32.mxu0 %v2050
  %3407 = vmatmul.mubr.f32.gmra.mxu0 %v2049
  %v3408 = vpop.f32.mrf.mxu0
  %v3409 = vadd.f32 %v3024, %v3408
  %v3410 = vpop.f32.mrf.mxu0
  %3411 = vmatprep.mubr.f32.mxu0 %v2059
  %3412 = vmatmul.mubr.f32.gmra.mxu0 %v2058
  %v3413 = vpop.f32.mrf.mxu0
  %v3414 = vadd.f32 %v3029, %v3413
  %v3415 = vpop.f32.mrf.mxu0
  %3416 = vmatprep.mubr.f32.mxu0 %v2068
  %3417 = vmatmul.mubr.f32.gmra.mxu0 %v2067
  %v3418 = vpop.f32.mrf.mxu0
  %v3419 = vadd.f32 %v3034, %v3418
  %v3420 = vpop.f32.mrf.mxu0
  %3421 = vmatprep.mubr.f32.mxu0 %v2077
  %3422 = vmatmul.mubr.f32.gmra.mxu0 %v2076
  %v3423 = vpop.f32.mrf.mxu0
  %v3424 = vadd.f32 %v3039, %v3423
  %v3425 = vpop.f32.mrf.mxu0
  %3426 = vmatprep.mubr.f32.mxu0 %v2086
  %3427 = vmatmul.mubr.f32.gmra.mxu0 %v2085
  %v3428 = vpop.f32.mrf.mxu0
  %v3429 = vadd.f32 %v3044, %v3428
  %v3430 = vpop.f32.mrf.mxu0
  %3431 = vmatprep.mubr.f32.mxu0 %v2095
  %3432 = vmatmul.mubr.f32.gmra.mxu0 %v2094
  %v3433 = vpop.f32.mrf.mxu0
  %v3434 = vadd.f32 %v3049, %v3433
  %v3435 = vpop.f32.mrf.mxu0
  %3436 = vmatprep.mubr.f32.mxu0 %v2104
  %3437 = vmatmul.mubr.f32.gmra.mxu0 %v2103
  %v3438 = vpop.f32.mrf.mxu0
  %v3439 = vadd.f32 %v3054, %v3438
  %v3440 = vpop.f32.mrf.mxu0
  %3441 = vmatprep.mubr.f32.mxu0 %v2113
  %3442 = vmatmul.mubr.f32.gmra.mxu0 %v2112
  %v3443 = vpop.f32.mrf.mxu0
  %v3444 = vadd.f32 %v3059, %v3443
  %v3445 = vpop.f32.mrf.mxu0
  %3446 = vmatprep.mubr.f32.mxu0 %v2122
  %3447 = vmatmul.mubr.f32.gmra.mxu0 %v2121
  %v3448 = vpop.f32.mrf.mxu0
  %v3449 = vadd.f32 %v3064, %v3448
  %v3450 = vpop.f32.mrf.mxu0
  %3451 = vmatprep.mubr.f32.mxu0 %v2131
  %3452 = vmatmul.mubr.f32.gmra.mxu0 %v2130
  %v3453 = vpop.f32.mrf.mxu0
  %v3454 = vadd.f32 %v3069, %v3453
  %v3455 = vpop.f32.mrf.mxu0
  %3456 = vmatprep.mubr.f32.mxu0 %v2140
  %3457 = vmatmul.mubr.f32.gmra.mxu0 %v2139
  %v3458 = vpop.f32.mrf.mxu0
  %v3459 = vadd.f32 %v3074, %v3458
  %v3460 = vpop.f32.mrf.mxu0
  %3461 = vmatprep.mubr.f32.mxu0 %v2149
  %3462 = vmatmul.mubr.f32.gmra.mxu0 %v2148
  %v3463 = vpop.f32.mrf.mxu0
  %v3464 = vadd.f32 %v3079, %v3463
  %v3465 = vpop.f32.mrf.mxu0
  %3466 = vmatprep.mubr.f32.mxu0 %v2158
  %3467 = vmatmul.mubr.f32.gmra.mxu0 %v2157
  %v3468 = vpop.f32.mrf.mxu0
  %v3469 = vadd.f32 %v3084, %v3468
  %v3470 = vpop.f32.mrf.mxu0
  %3471 = vmatprep.mubr.f32.mxu0 %v2167
  %3472 = vmatmul.mubr.f32.gmra.mxu0 %v2166
  %v3473 = vpop.f32.mrf.mxu0
  %v3474 = vadd.f32 %v3089, %v3473
  %v3475 = vpop.f32.mrf.mxu0
  %3476 = vdwg.mxu0
  %3477 = vmatprep.subr.mxu0 0.0
  %3478 = vmatpush1.msra.mxu0 %v2282
  %3479 = vmatprep.subr.mxu0 0.0
  %3480 = vmatpush1.msra.mxu0 %v2281
  %3481 = vmatprep.subr.mxu0 0.0
  %3482 = vmatpush1.msra.mxu0 %v2280
  %3483 = vmatprep.subr.mxu0 0.0
  %3484 = vmatpush1.msra.mxu0 %v2279
  %3485 = vmatprep.subr.mxu0 0.0
  %3486 = vmatpush1.msra.mxu0 %v2278
  %3487 = vmatprep.subr.mxu0 0.0
  %3488 = vmatpush1.msra.mxu0 %v2277
  %3489 = vmatprep.subr.mxu0 0.0
  %3490 = vmatpush1.msra.mxu0 %v2276
  %3491 = vmatprep.subr.mxu0 0.0
  %3492 = vmatpush1.msra.mxu0 %v2275
  %3493 = vmatprep.subr.mxu0 0.0
  %3494 = vmatpush1.msra.mxu0 %v2274
  %3495 = vmatprep.subr.mxu0 0.0
  %3496 = vmatpush1.msra.mxu0 %v2273
  %3497 = vmatprep.subr.mxu0 0.0
  %3498 = vmatpush1.msra.mxu0 %v2272
  %3499 = vmatprep.subr.mxu0 0.0
  %3500 = vmatpush1.msra.mxu0 %v2271
  %3501 = vmatprep.subr.mxu0 0.0
  %3502 = vmatpush1.msra.mxu0 %v2270
  %3503 = vmatprep.subr.mxu0 0.0
  %3504 = vmatpush1.msra.mxu0 %v2269
  %3505 = vmatprep.subr.mxu0 0.0
  %3506 = vmatpush1.msra.mxu0 %v2268
  %3507 = vmatprep.subr.mxu0 0.0
  %3508 = vmatpush1.msra.mxu0 %v2267
  %3509 = vmatprep.subr.mxu0 0.0
  %3510 = vmatpush2.msra.mxu0 %v2298
  %3511 = vmatprep.subr.mxu0 0.0
  %3512 = vmatpush2.msra.mxu0 %v2297
  %3513 = vmatprep.subr.mxu0 0.0
  %3514 = vmatpush2.msra.mxu0 %v2296
  %3515 = vmatprep.subr.mxu0 0.0
  %3516 = vmatpush2.msra.mxu0 %v2295
  %3517 = vmatprep.subr.mxu0 0.0
  %3518 = vmatpush2.msra.mxu0 %v2294
  %3519 = vmatprep.subr.mxu0 0.0
  %3520 = vmatpush2.msra.mxu0 %v2293
  %3521 = vmatprep.subr.mxu0 0.0
  %3522 = vmatpush2.msra.mxu0 %v2292
  %3523 = vmatprep.subr.mxu0 0.0
  %3524 = vmatpush2.msra.mxu0 %v2291
  %3525 = vmatprep.subr.mxu0 0.0
  %3526 = vmatpush2.msra.mxu0 %v2290
  %3527 = vmatprep.subr.mxu0 0.0
  %3528 = vmatpush2.msra.mxu0 %v2289
  %3529 = vmatprep.subr.mxu0 0.0
  %3530 = vmatpush2.msra.mxu0 %v2288
  %3531 = vmatprep.subr.mxu0 0.0
  %3532 = vmatpush2.msra.mxu0 %v2287
  %3533 = vmatprep.subr.mxu0 0.0
  %3534 = vmatpush2.msra.mxu0 %v2286
  %3535 = vmatprep.subr.mxu0 0.0
  %3536 = vmatpush2.msra.mxu0 %v2285
  %3537 = vmatprep.subr.mxu0 0.0
  %3538 = vmatpush2.msra.mxu0 %v2284
  %3539 = vmatprep.subr.mxu0 0.0
  %3540 = vmatpush2.msra.mxu0 %v2283
  %3541 = vmatprep.mubr.f32.mxu0 %v1602
  %3542 = vmatmul.mubr.f32.gmra.mxu0 %v1601
  %v3543 = vpop.f32.mrf.mxu0
  %v3544 = vadd.f32 %v3159, %v3543
  %v3545 = vpop.f32.mrf.mxu0
  %3546 = vmatprep.mubr.f32.mxu0 %v1611
  %3547 = vmatmul.mubr.f32.gmra.mxu0 %v1610
  %v3548 = vpop.f32.mrf.mxu0
  %v3549 = vadd.f32 %v3164, %v3548
  %v3550 = vpop.f32.mrf.mxu0
  %3551 = vmatprep.mubr.f32.mxu0 %v1620
  %3552 = vmatmul.mubr.f32.gmra.mxu0 %v1619
  %v3553 = vpop.f32.mrf.mxu0
  %v3554 = vadd.f32 %v3169, %v3553
  %v3555 = vpop.f32.mrf.mxu0
  %3556 = vmatprep.mubr.f32.mxu0 %v1629
  %3557 = vmatmul.mubr.f32.gmra.mxu0 %v1628
  %v3558 = vpop.f32.mrf.mxu0
  %v3559 = vadd.f32 %v3174, %v3558
  %v3560 = vpop.f32.mrf.mxu0
  %3561 = vmatprep.mubr.f32.mxu0 %v1638
  %3562 = vmatmul.mubr.f32.gmra.mxu0 %v1637
  %v3563 = vpop.f32.mrf.mxu0
  %v3564 = vadd.f32 %v3179, %v3563
  %v3565 = vpop.f32.mrf.mxu0
  %3566 = vmatprep.mubr.f32.mxu0 %v1647
  %3567 = vmatmul.mubr.f32.gmra.mxu0 %v1646
  %v3568 = vpop.f32.mrf.mxu0
  %v3569 = vadd.f32 %v3184, %v3568
  %v3570 = vpop.f32.mrf.mxu0
  %3571 = vmatprep.mubr.f32.mxu0 %v1656
  %3572 = vmatmul.mubr.f32.gmra.mxu0 %v1655
  %v3573 = vpop.f32.mrf.mxu0
  %v3574 = vadd.f32 %v3189, %v3573
  %v3575 = vpop.f32.mrf.mxu0
  %3576 = vmatprep.mubr.f32.mxu0 %v1665
  %3577 = vmatmul.mubr.f32.gmra.mxu0 %v1664
  %v3578 = vpop.f32.mrf.mxu0
  %v3579 = vadd.f32 %v3194, %v3578
  %v3580 = vpop.f32.mrf.mxu0
  %3581 = vmatprep.mubr.f32.mxu0 %v1674
  %3582 = vmatmul.mubr.f32.gmra.mxu0 %v1673
  %v3583 = vpop.f32.mrf.mxu0
  %v3584 = vadd.f32 %v3199, %v3583
  %v3585 = vpop.f32.mrf.mxu0
  %3586 = vmatprep.mubr.f32.mxu0 %v1683
  %3587 = vmatmul.mubr.f32.gmra.mxu0 %v1682
  %v3588 = vpop.f32.mrf.mxu0
  %v3589 = vadd.f32 %v3204, %v3588
  %v3590 = vpop.f32.mrf.mxu0
  %3591 = vmatprep.mubr.f32.mxu0 %v1692
  %3592 = vmatmul.mubr.f32.gmra.mxu0 %v1691
  %v3593 = vpop.f32.mrf.mxu0
  %v3594 = vadd.f32 %v3209, %v3593
  %v3595 = vpop.f32.mrf.mxu0
  %3596 = vmatprep.mubr.f32.mxu0 %v1701
  %3597 = vmatmul.mubr.f32.gmra.mxu0 %v1700
  %v3598 = vpop.f32.mrf.mxu0
  %v3599 = vadd.f32 %v3214, %v3598
  %v3600 = vpop.f32.mrf.mxu0
  %3601 = vmatprep.mubr.f32.mxu0 %v1710
  %3602 = vmatmul.mubr.f32.gmra.mxu0 %v1709
  %v3603 = vpop.f32.mrf.mxu0
  %v3604 = vadd.f32 %v3219, %v3603
  %v3605 = vpop.f32.mrf.mxu0
  %3606 = vmatprep.mubr.f32.mxu0 %v1719
  %3607 = vmatmul.mubr.f32.gmra.mxu0 %v1718
  %v3608 = vpop.f32.mrf.mxu0
  %v3609 = vadd.f32 %v3224, %v3608
  %v3610 = vpop.f32.mrf.mxu0
  %3611 = vmatprep.mubr.f32.mxu0 %v1728
  %3612 = vmatmul.mubr.f32.gmra.mxu0 %v1727
  %v3613 = vpop.f32.mrf.mxu0
  %v3614 = vadd.f32 %v3229, %v3613
  %v3615 = vpop.f32.mrf.mxu0
  %3616 = vmatprep.mubr.f32.mxu0 %v1737
  %3617 = vmatmul.mubr.f32.gmra.mxu0 %v1736
  %v3618 = vpop.f32.mrf.mxu0
  %v3619 = vadd.f32 %v3234, %v3618
  %v3620 = vpop.f32.mrf.mxu0
  %3621 = vmatprep.mubr.f32.mxu0 %v1746
  %3622 = vmatmul.mubr.f32.gmra.mxu0 %v1745
  %v3623 = vpop.f32.mrf.mxu0
  %v3624 = vadd.f32 %v3239, %v3623
  %v3625 = vpop.f32.mrf.mxu0
  %3626 = vmatprep.mubr.f32.mxu0 %v1755
  %3627 = vmatmul.mubr.f32.gmra.mxu0 %v1754
  %v3628 = vpop.f32.mrf.mxu0
  %v3629 = vadd.f32 %v3244, %v3628
  %v3630 = vpop.f32.mrf.mxu0
  %3631 = vmatprep.mubr.f32.mxu0 %v1764
  %3632 = vmatmul.mubr.f32.gmra.mxu0 %v1763
  %v3633 = vpop.f32.mrf.mxu0
  %v3634 = vadd.f32 %v3249, %v3633
  %v3635 = vpop.f32.mrf.mxu0
  %3636 = vmatprep.mubr.f32.mxu0 %v1773
  %3637 = vmatmul.mubr.f32.gmra.mxu0 %v1772
  %v3638 = vpop.f32.mrf.mxu0
  %v3639 = vadd.f32 %v3254, %v3638
  %v3640 = vpop.f32.mrf.mxu0
  %3641 = vmatprep.mubr.f32.mxu0 %v1782
  %3642 = vmatmul.mubr.f32.gmra.mxu0 %v1781
  %v3643 = vpop.f32.mrf.mxu0
  %v3644 = vadd.f32 %v3259, %v3643
  %v3645 = vpop.f32.mrf.mxu0
  %3646 = vmatprep.mubr.f32.mxu0 %v1791
  %3647 = vmatmul.mubr.f32.gmra.mxu0 %v1790
  %v3648 = vpop.f32.mrf.mxu0
  %v3649 = vadd.f32 %v3264, %v3648
  %v3650 = vpop.f32.mrf.mxu0
  %3651 = vmatprep.mubr.f32.mxu0 %v1800
  %3652 = vmatmul.mubr.f32.gmra.mxu0 %v1799
  %v3653 = vpop.f32.mrf.mxu0
  %v3654 = vadd.f32 %v3269, %v3653
  %v3655 = vpop.f32.mrf.mxu0
  %3656 = vmatprep.mubr.f32.mxu0 %v1809
  %3657 = vmatmul.mubr.f32.gmra.mxu0 %v1808
  %v3658 = vpop.f32.mrf.mxu0
  %v3659 = vadd.f32 %v3274, %v3658
  %v3660 = vpop.f32.mrf.mxu0
  %3661 = vmatprep.mubr.f32.mxu0 %v1818
  %3662 = vmatmul.mubr.f32.gmra.mxu0 %v1817
  %v3663 = vpop.f32.mrf.mxu0
  %v3664 = vadd.f32 %v3279, %v3663
  %v3665 = vpop.f32.mrf.mxu0
  %3666 = vmatprep.mubr.f32.mxu0 %v1827
  %3667 = vmatmul.mubr.f32.gmra.mxu0 %v1826
  %v3668 = vpop.f32.mrf.mxu0
  %v3669 = vadd.f32 %v3284, %v3668
  %v3670 = vpop.f32.mrf.mxu0
  %3671 = vmatprep.mubr.f32.mxu0 %v1836
  %3672 = vmatmul.mubr.f32.gmra.mxu0 %v1835
  %v3673 = vpop.f32.mrf.mxu0
  %v3674 = vadd.f32 %v3289, %v3673
  %v3675 = vpop.f32.mrf.mxu0
  %3676 = vmatprep.mubr.f32.mxu0 %v1845
  %3677 = vmatmul.mubr.f32.gmra.mxu0 %v1844
  %v3678 = vpop.f32.mrf.mxu0
  %v3679 = vadd.f32 %v3294, %v3678
  %v3680 = vpop.f32.mrf.mxu0
  %3681 = vmatprep.mubr.f32.mxu0 %v1854
  %3682 = vmatmul.mubr.f32.gmra.mxu0 %v1853
  %v3683 = vpop.f32.mrf.mxu0
  %v3684 = vadd.f32 %v3299, %v3683
  %v3685 = vpop.f32.mrf.mxu0
  %3686 = vmatprep.mubr.f32.mxu0 %v1863
  %3687 = vmatmul.mubr.f32.gmra.mxu0 %v1862
  %v3688 = vpop.f32.mrf.mxu0
  %v3689 = vadd.f32 %v3304, %v3688
  %v3690 = vpop.f32.mrf.mxu0
  %3691 = vmatprep.mubr.f32.mxu0 %v1872
  %3692 = vmatmul.mubr.f32.gmra.mxu0 %v1871
  %v3693 = vpop.f32.mrf.mxu0
  %v3694 = vadd.f32 %v3309, %v3693
  %v3695 = vpop.f32.mrf.mxu0
  %3696 = vmatprep.mubr.f32.mxu0 %v1881
  %3697 = vmatmul.mubr.f32.gmra.mxu0 %v1880
  %v3698 = vpop.f32.mrf.mxu0
  %v3699 = vadd.f32 %v3314, %v3698
  %v3700 = vpop.f32.mrf.mxu0
  %3701 = vmatprep.mubr.f32.mxu0 %v1890
  %3702 = vmatmul.mubr.f32.gmra.mxu0 %v1889
  %v3703 = vpop.f32.mrf.mxu0
  %v3704 = vadd.f32 %v3319, %v3703
  %v3705 = vpop.f32.mrf.mxu0
  %3706 = vmatprep.mubr.f32.mxu0 %v1899
  %3707 = vmatmul.mubr.f32.gmra.mxu0 %v1898
  %v3708 = vpop.f32.mrf.mxu0
  %v3709 = vadd.f32 %v3324, %v3708
  %v3710 = vpop.f32.mrf.mxu0
  %3711 = vmatprep.mubr.f32.mxu0 %v1908
  %3712 = vmatmul.mubr.f32.gmra.mxu0 %v1907
  %v3713 = vpop.f32.mrf.mxu0
  %v3714 = vadd.f32 %v3329, %v3713
  %v3715 = vpop.f32.mrf.mxu0
  %3716 = vmatprep.mubr.f32.mxu0 %v1917
  %3717 = vmatmul.mubr.f32.gmra.mxu0 %v1916
  %v3718 = vpop.f32.mrf.mxu0
  %v3719 = vadd.f32 %v3334, %v3718
  %v3720 = vpop.f32.mrf.mxu0
  %3721 = vmatprep.mubr.f32.mxu0 %v1926
  %3722 = vmatmul.mubr.f32.gmra.mxu0 %v1925
  %v3723 = vpop.f32.mrf.mxu0
  %v3724 = vadd.f32 %v3339, %v3723
  %v3725 = vpop.f32.mrf.mxu0
  %3726 = vmatprep.mubr.f32.mxu0 %v1935
  %3727 = vmatmul.mubr.f32.gmra.mxu0 %v1934
  %v3728 = vpop.f32.mrf.mxu0
  %v3729 = vadd.f32 %v3344, %v3728
  %v3730 = vpop.f32.mrf.mxu0
  %3731 = vmatprep.mubr.f32.mxu0 %v1944
  %3732 = vmatmul.mubr.f32.gmra.mxu0 %v1943
  %v3733 = vpop.f32.mrf.mxu0
  %v3734 = vadd.f32 %v3349, %v3733
  %v3735 = vpop.f32.mrf.mxu0
  %3736 = vmatprep.mubr.f32.mxu0 %v1953
  %3737 = vmatmul.mubr.f32.gmra.mxu0 %v1952
  %v3738 = vpop.f32.mrf.mxu0
  %v3739 = vadd.f32 %v3354, %v3738
  %v3740 = vpop.f32.mrf.mxu0
  %3741 = vmatprep.mubr.f32.mxu0 %v1962
  %3742 = vmatmul.mubr.f32.gmra.mxu0 %v1961
  %v3743 = vpop.f32.mrf.mxu0
  %v3744 = vadd.f32 %v3359, %v3743
  %v3745 = vpop.f32.mrf.mxu0
  %3746 = vmatprep.mubr.f32.mxu0 %v1971
  %3747 = vmatmul.mubr.f32.gmra.mxu0 %v1970
  %v3748 = vpop.f32.mrf.mxu0
  %v3749 = vadd.f32 %v3364, %v3748
  %v3750 = vpop.f32.mrf.mxu0
  %3751 = vmatprep.mubr.f32.mxu0 %v1980
  %3752 = vmatmul.mubr.f32.gmra.mxu0 %v1979
  %v3753 = vpop.f32.mrf.mxu0
  %v3754 = vadd.f32 %v3369, %v3753
  %v3755 = vpop.f32.mrf.mxu0
  %3756 = vmatprep.mubr.f32.mxu0 %v1989
  %3757 = vmatmul.mubr.f32.gmra.mxu0 %v1988
  %v3758 = vpop.f32.mrf.mxu0
  %v3759 = vadd.f32 %v3374, %v3758
  %v3760 = vpop.f32.mrf.mxu0
  %3761 = vmatprep.mubr.f32.mxu0 %v1998
  %3762 = vmatmul.mubr.f32.gmra.mxu0 %v1997
  %v3763 = vpop.f32.mrf.mxu0
  %v3764 = vadd.f32 %v3379, %v3763
  %v3765 = vpop.f32.mrf.mxu0
  %3766 = vmatprep.mubr.f32.mxu0 %v2007
  %3767 = vmatmul.mubr.f32.gmra.mxu0 %v2006
  %v3768 = vpop.f32.mrf.mxu0
  %v3769 = vadd.f32 %v3384, %v3768
  %v3770 = vpop.f32.mrf.mxu0
  %3771 = vmatprep.mubr.f32.mxu0 %v2016
  %3772 = vmatmul.mubr.f32.gmra.mxu0 %v2015
  %v3773 = vpop.f32.mrf.mxu0
  %v3774 = vadd.f32 %v3389, %v3773
  %v3775 = vpop.f32.mrf.mxu0
  %3776 = vmatprep.mubr.f32.mxu0 %v2025
  %3777 = vmatmul.mubr.f32.gmra.mxu0 %v2024
  %v3778 = vpop.f32.mrf.mxu0
  %v3779 = vadd.f32 %v3394, %v3778
  %v3780 = vpop.f32.mrf.mxu0
  %3781 = vmatprep.mubr.f32.mxu0 %v2034
  %3782 = vmatmul.mubr.f32.gmra.mxu0 %v2033
  %v3783 = vpop.f32.mrf.mxu0
  %v3784 = vadd.f32 %v3399, %v3783
  %v3785 = vpop.f32.mrf.mxu0
  %3786 = vmatprep.mubr.f32.mxu0 %v2043
  %3787 = vmatmul.mubr.f32.gmra.mxu0 %v2042
  %v3788 = vpop.f32.mrf.mxu0
  %v3789 = vadd.f32 %v3404, %v3788
  %v3790 = vpop.f32.mrf.mxu0
  %3791 = vmatprep.mubr.f32.mxu0 %v2052
  %3792 = vmatmul.mubr.f32.gmra.mxu0 %v2051
  %v3793 = vpop.f32.mrf.mxu0
  %v3794 = vadd.f32 %v3409, %v3793
  %v3795 = vpop.f32.mrf.mxu0
  %3796 = vmatprep.mubr.f32.mxu0 %v2061
  %3797 = vmatmul.mubr.f32.gmra.mxu0 %v2060
  %v3798 = vpop.f32.mrf.mxu0
  %v3799 = vadd.f32 %v3414, %v3798
  %v3800 = vpop.f32.mrf.mxu0
  %3801 = vmatprep.mubr.f32.mxu0 %v2070
  %3802 = vmatmul.mubr.f32.gmra.mxu0 %v2069
  %v3803 = vpop.f32.mrf.mxu0
  %v3804 = vadd.f32 %v3419, %v3803
  %v3805 = vpop.f32.mrf.mxu0
  %3806 = vmatprep.mubr.f32.mxu0 %v2079
  %3807 = vmatmul.mubr.f32.gmra.mxu0 %v2078
  %v3808 = vpop.f32.mrf.mxu0
  %v3809 = vadd.f32 %v3424, %v3808
  %v3810 = vpop.f32.mrf.mxu0
  %3811 = vmatprep.mubr.f32.mxu0 %v2088
  %3812 = vmatmul.mubr.f32.gmra.mxu0 %v2087
  %v3813 = vpop.f32.mrf.mxu0
  %v3814 = vadd.f32 %v3429, %v3813
  %v3815 = vpop.f32.mrf.mxu0
  %3816 = vmatprep.mubr.f32.mxu0 %v2097
  %3817 = vmatmul.mubr.f32.gmra.mxu0 %v2096
  %v3818 = vpop.f32.mrf.mxu0
  %v3819 = vadd.f32 %v3434, %v3818
  %v3820 = vpop.f32.mrf.mxu0
  %3821 = vmatprep.mubr.f32.mxu0 %v2106
  %3822 = vmatmul.mubr.f32.gmra.mxu0 %v2105
  %v3823 = vpop.f32.mrf.mxu0
  %v3824 = vadd.f32 %v3439, %v3823
  %v3825 = vpop.f32.mrf.mxu0
  %3826 = vmatprep.mubr.f32.mxu0 %v2115
  %3827 = vmatmul.mubr.f32.gmra.mxu0 %v2114
  %v3828 = vpop.f32.mrf.mxu0
  %v3829 = vadd.f32 %v3444, %v3828
  %v3830 = vpop.f32.mrf.mxu0
  %3831 = vmatprep.mubr.f32.mxu0 %v2124
  %3832 = vmatmul.mubr.f32.gmra.mxu0 %v2123
  %v3833 = vpop.f32.mrf.mxu0
  %v3834 = vadd.f32 %v3449, %v3833
  %v3835 = vpop.f32.mrf.mxu0
  %3836 = vmatprep.mubr.f32.mxu0 %v2133
  %3837 = vmatmul.mubr.f32.gmra.mxu0 %v2132
  %v3838 = vpop.f32.mrf.mxu0
  %v3839 = vadd.f32 %v3454, %v3838
  %v3840 = vpop.f32.mrf.mxu0
  %3841 = vmatprep.mubr.f32.mxu0 %v2142
  %3842 = vmatmul.mubr.f32.gmra.mxu0 %v2141
  %v3843 = vpop.f32.mrf.mxu0
  %v3844 = vadd.f32 %v3459, %v3843
  %v3845 = vpop.f32.mrf.mxu0
  %3846 = vmatprep.mubr.f32.mxu0 %v2151
  %3847 = vmatmul.mubr.f32.gmra.mxu0 %v2150
  %v3848 = vpop.f32.mrf.mxu0
  %v3849 = vadd.f32 %v3464, %v3848
  %v3850 = vpop.f32.mrf.mxu0
  %3851 = vmatprep.mubr.f32.mxu0 %v2160
  %3852 = vmatmul.mubr.f32.gmra.mxu0 %v2159
  %v3853 = vpop.f32.mrf.mxu0
  %v3854 = vadd.f32 %v3469, %v3853
  %v3855 = vpop.f32.mrf.mxu0
  %3856 = vmatprep.mubr.f32.mxu0 %v2169
  %3857 = vmatmul.mubr.f32.gmra.mxu0 %v2168
  %v3858 = vpop.f32.mrf.mxu0
  %v3859 = vadd.f32 %v3474, %v3858
  %v3860 = vpop.f32.mrf.mxu0
  %3861 = vdwg.mxu0
  %3862 = vmatprep.subr.mxu0 0.0
  %3863 = vmatpush1.msra.mxu0 %v2314
  %3864 = vmatprep.subr.mxu0 0.0
  %3865 = vmatpush1.msra.mxu0 %v2313
  %3866 = vmatprep.subr.mxu0 0.0
  %3867 = vmatpush1.msra.mxu0 %v2312
  %3868 = vmatprep.subr.mxu0 0.0
  %3869 = vmatpush1.msra.mxu0 %v2311
  %3870 = vmatprep.subr.mxu0 0.0
  %3871 = vmatpush1.msra.mxu0 %v2310
  %3872 = vmatprep.subr.mxu0 0.0
  %3873 = vmatpush1.msra.mxu0 %v2309
  %3874 = vmatprep.subr.mxu0 0.0
  %3875 = vmatpush1.msra.mxu0 %v2308
  %3876 = vmatprep.subr.mxu0 0.0
  %3877 = vmatpush1.msra.mxu0 %v2307
  %3878 = vmatprep.subr.mxu0 0.0
  %3879 = vmatpush1.msra.mxu0 %v2306
  %3880 = vmatprep.subr.mxu0 0.0
  %3881 = vmatpush1.msra.mxu0 %v2305
  %3882 = vmatprep.subr.mxu0 0.0
  %3883 = vmatpush1.msra.mxu0 %v2304
  %3884 = vmatprep.subr.mxu0 0.0
  %3885 = vmatpush1.msra.mxu0 %v2303
  %3886 = vmatprep.subr.mxu0 0.0
  %3887 = vmatpush1.msra.mxu0 %v2302
  %3888 = vmatprep.subr.mxu0 0.0
  %3889 = vmatpush1.msra.mxu0 %v2301
  %3890 = vmatprep.subr.mxu0 0.0
  %3891 = vmatpush1.msra.mxu0 %v2300
  %3892 = vmatprep.subr.mxu0 0.0
  %3893 = vmatpush1.msra.mxu0 %v2299
  %3894 = vmatprep.subr.mxu0 0.0
  %3895 = vmatpush2.msra.mxu0 0.0
  %3896 = vmatprep.subr.mxu0 0.0
  %3897 = vmatpush2.msra.mxu0 0.0
  %3898 = vmatprep.subr.mxu0 0.0
  %3899 = vmatpush2.msra.mxu0 0.0
  %3900 = vmatprep.subr.mxu0 0.0
  %3901 = vmatpush2.msra.mxu0 0.0
  %3902 = vmatprep.subr.mxu0 0.0
  %3903 = vmatpush2.msra.mxu0 0.0
  %3904 = vmatprep.subr.mxu0 0.0
  %3905 = vmatpush2.msra.mxu0 0.0
  %3906 = vmatprep.subr.mxu0 0.0
  %3907 = vmatpush2.msra.mxu0 0.0
  %3908 = vmatprep.subr.mxu0 0.0
  %3909 = vmatpush2.msra.mxu0 0.0
  %3910 = vmatprep.subr.mxu0 0.0
  %3911 = vmatpush2.msra.mxu0 0.0
  %3912 = vmatprep.subr.mxu0 0.0
  %3913 = vmatpush2.msra.mxu0 0.0
  %3914 = vmatprep.subr.mxu0 0.0
  %3915 = vmatpush2.msra.mxu0 0.0
  %3916 = vmatprep.subr.mxu0 0.0
  %3917 = vmatpush2.msra.mxu0 0.0
  %3918 = vmatprep.subr.mxu0 0.0
  %3919 = vmatpush2.msra.mxu0 0.0
  %3920 = vmatprep.subr.mxu0 0.0
  %3921 = vmatpush2.msra.mxu0 0.0
  %3922 = vmatprep.subr.mxu0 0.0
  %3923 = vmatpush2.msra.mxu0 0.0
  %3924 = vmatprep.subr.mxu0 0.0
  %3925 = vmatpush2.msra.mxu0 0.0
  %3926 = vmatprep.mubr.f32.mxu0 0.0
  %3927 = vmatmul.mubr.f32.gmra.mxu0 %v1603
  %v3928 = vpop.f32.mrf.mxu0
  %v3929 = vadd.f32 %v3544, %v3928
  %v3930 = vpop.f32.mrf.mxu0
  %3931 = vmatprep.mubr.f32.mxu0 0.0
  %3932 = vmatmul.mubr.f32.gmra.mxu0 %v1612
  %v3933 = vpop.f32.mrf.mxu0
  %v3934 = vadd.f32 %v3549, %v3933
  %v3935 = vpop.f32.mrf.mxu0
  %3936 = vmatprep.mubr.f32.mxu0 0.0
  %3937 = vmatmul.mubr.f32.gmra.mxu0 %v1621
  %v3938 = vpop.f32.mrf.mxu0
  %v3939 = vadd.f32 %v3554, %v3938
  %v3940 = vpop.f32.mrf.mxu0
  %3941 = vmatprep.mubr.f32.mxu0 0.0
  %3942 = vmatmul.mubr.f32.gmra.mxu0 %v1630
  %v3943 = vpop.f32.mrf.mxu0
  %v3944 = vadd.f32 %v3559, %v3943
  %v3945 = vpop.f32.mrf.mxu0
  %3946 = vmatprep.mubr.f32.mxu0 0.0
  %3947 = vmatmul.mubr.f32.gmra.mxu0 %v1639
  %v3948 = vpop.f32.mrf.mxu0
  %v3949 = vadd.f32 %v3564, %v3948
  %v3950 = vpop.f32.mrf.mxu0
  %3951 = vmatprep.mubr.f32.mxu0 0.0
  %3952 = vmatmul.mubr.f32.gmra.mxu0 %v1648
  %v3953 = vpop.f32.mrf.mxu0
  %v3954 = vadd.f32 %v3569, %v3953
  %v3955 = vpop.f32.mrf.mxu0
  %3956 = vmatprep.mubr.f32.mxu0 0.0
  %3957 = vmatmul.mubr.f32.gmra.mxu0 %v1657
  %v3958 = vpop.f32.mrf.mxu0
  %v3959 = vadd.f32 %v3574, %v3958
  %v3960 = vpop.f32.mrf.mxu0
  %3961 = vmatprep.mubr.f32.mxu0 0.0
  %3962 = vmatmul.mubr.f32.gmra.mxu0 %v1666
  %v3963 = vpop.f32.mrf.mxu0
  %v3964 = vadd.f32 %v3579, %v3963
  %v3965 = vpop.f32.mrf.mxu0
  %3966 = vmatprep.mubr.f32.mxu0 0.0
  %3967 = vmatmul.mubr.f32.gmra.mxu0 %v1675
  %v3968 = vpop.f32.mrf.mxu0
  %v3969 = vadd.f32 %v3584, %v3968
  %v3970 = vpop.f32.mrf.mxu0
  %3971 = vmatprep.mubr.f32.mxu0 0.0
  %3972 = vmatmul.mubr.f32.gmra.mxu0 %v1684
  %v3973 = vpop.f32.mrf.mxu0
  %v3974 = vadd.f32 %v3589, %v3973
  %v3975 = vpop.f32.mrf.mxu0
  %3976 = vmatprep.mubr.f32.mxu0 0.0
  %3977 = vmatmul.mubr.f32.gmra.mxu0 %v1693
  %v3978 = vpop.f32.mrf.mxu0
  %v3979 = vadd.f32 %v3594, %v3978
  %v3980 = vpop.f32.mrf.mxu0
  %3981 = vmatprep.mubr.f32.mxu0 0.0
  %3982 = vmatmul.mubr.f32.gmra.mxu0 %v1702
  %v3983 = vpop.f32.mrf.mxu0
  %v3984 = vadd.f32 %v3599, %v3983
  %v3985 = vpop.f32.mrf.mxu0
  %3986 = vmatprep.mubr.f32.mxu0 0.0
  %3987 = vmatmul.mubr.f32.gmra.mxu0 %v1711
  %v3988 = vpop.f32.mrf.mxu0
  %v3989 = vadd.f32 %v3604, %v3988
  %v3990 = vpop.f32.mrf.mxu0
  %3991 = vmatprep.mubr.f32.mxu0 0.0
  %3992 = vmatmul.mubr.f32.gmra.mxu0 %v1720
  %v3993 = vpop.f32.mrf.mxu0
  %v3994 = vadd.f32 %v3609, %v3993
  %v3995 = vpop.f32.mrf.mxu0
  %3996 = vmatprep.mubr.f32.mxu0 0.0
  %3997 = vmatmul.mubr.f32.gmra.mxu0 %v1729
  %v3998 = vpop.f32.mrf.mxu0
  %v3999 = vadd.f32 %v3614, %v3998
  %v4000 = vpop.f32.mrf.mxu0
  %4001 = vmatprep.mubr.f32.mxu0 0.0
  %4002 = vmatmul.mubr.f32.gmra.mxu0 %v1738
  %v4003 = vpop.f32.mrf.mxu0
  %v4004 = vadd.f32 %v3619, %v4003
  %v4005 = vpop.f32.mrf.mxu0
  %4006 = vmatprep.mubr.f32.mxu0 0.0
  %4007 = vmatmul.mubr.f32.gmra.mxu0 %v1747
  %v4008 = vpop.f32.mrf.mxu0
  %v4009 = vadd.f32 %v3624, %v4008
  %v4010 = vpop.f32.mrf.mxu0
  %4011 = vmatprep.mubr.f32.mxu0 0.0
  %4012 = vmatmul.mubr.f32.gmra.mxu0 %v1756
  %v4013 = vpop.f32.mrf.mxu0
  %v4014 = vadd.f32 %v3629, %v4013
  %v4015 = vpop.f32.mrf.mxu0
  %4016 = vmatprep.mubr.f32.mxu0 0.0
  %4017 = vmatmul.mubr.f32.gmra.mxu0 %v1765
  %v4018 = vpop.f32.mrf.mxu0
  %v4019 = vadd.f32 %v3634, %v4018
  %v4020 = vpop.f32.mrf.mxu0
  %4021 = vmatprep.mubr.f32.mxu0 0.0
  %4022 = vmatmul.mubr.f32.gmra.mxu0 %v1774
  %v4023 = vpop.f32.mrf.mxu0
  %v4024 = vadd.f32 %v3639, %v4023
  %v4025 = vpop.f32.mrf.mxu0
  %4026 = vmatprep.mubr.f32.mxu0 0.0
  %4027 = vmatmul.mubr.f32.gmra.mxu0 %v1783
  %v4028 = vpop.f32.mrf.mxu0
  %v4029 = vadd.f32 %v3644, %v4028
  %v4030 = vpop.f32.mrf.mxu0
  %4031 = vmatprep.mubr.f32.mxu0 0.0
  %4032 = vmatmul.mubr.f32.gmra.mxu0 %v1792
  %v4033 = vpop.f32.mrf.mxu0
  %v4034 = vadd.f32 %v3649, %v4033
  %v4035 = vpop.f32.mrf.mxu0
  %4036 = vmatprep.mubr.f32.mxu0 0.0
  %4037 = vmatmul.mubr.f32.gmra.mxu0 %v1801
  %v4038 = vpop.f32.mrf.mxu0
  %v4039 = vadd.f32 %v3654, %v4038
  %v4040 = vpop.f32.mrf.mxu0
  %4041 = vmatprep.mubr.f32.mxu0 0.0
  %4042 = vmatmul.mubr.f32.gmra.mxu0 %v1810
  %v4043 = vpop.f32.mrf.mxu0
  %v4044 = vadd.f32 %v3659, %v4043
  %v4045 = vpop.f32.mrf.mxu0
  %4046 = vmatprep.mubr.f32.mxu0 0.0
  %4047 = vmatmul.mubr.f32.gmra.mxu0 %v1819
  %v4048 = vpop.f32.mrf.mxu0
  %v4049 = vadd.f32 %v3664, %v4048
  %v4050 = vpop.f32.mrf.mxu0
  %4051 = vmatprep.mubr.f32.mxu0 0.0
  %4052 = vmatmul.mubr.f32.gmra.mxu0 %v1828
  %v4053 = vpop.f32.mrf.mxu0
  %v4054 = vadd.f32 %v3669, %v4053
  %v4055 = vpop.f32.mrf.mxu0
  %4056 = vmatprep.mubr.f32.mxu0 0.0
  %4057 = vmatmul.mubr.f32.gmra.mxu0 %v1837
  %v4058 = vpop.f32.mrf.mxu0
  %v4059 = vadd.f32 %v3674, %v4058
  %v4060 = vpop.f32.mrf.mxu0
  %4061 = vmatprep.mubr.f32.mxu0 0.0
  %4062 = vmatmul.mubr.f32.gmra.mxu0 %v1846
  %v4063 = vpop.f32.mrf.mxu0
  %v4064 = vadd.f32 %v3679, %v4063
  %v4065 = vpop.f32.mrf.mxu0
  %4066 = vmatprep.mubr.f32.mxu0 0.0
  %4067 = vmatmul.mubr.f32.gmra.mxu0 %v1855
  %v4068 = vpop.f32.mrf.mxu0
  %v4069 = vadd.f32 %v3684, %v4068
  %v4070 = vpop.f32.mrf.mxu0
  %4071 = vmatprep.mubr.f32.mxu0 0.0
  %4072 = vmatmul.mubr.f32.gmra.mxu0 %v1864
  %v4073 = vpop.f32.mrf.mxu0
  %v4074 = vadd.f32 %v3689, %v4073
  %v4075 = vpop.f32.mrf.mxu0
  %4076 = vmatprep.mubr.f32.mxu0 0.0
  %4077 = vmatmul.mubr.f32.gmra.mxu0 %v1873
  %v4078 = vpop.f32.mrf.mxu0
  %v4079 = vadd.f32 %v3694, %v4078
  %v4080 = vpop.f32.mrf.mxu0
  %4081 = vmatprep.mubr.f32.mxu0 0.0
  %4082 = vmatmul.mubr.f32.gmra.mxu0 %v1882
  %v4083 = vpop.f32.mrf.mxu0
  %v4084 = vadd.f32 %v3699, %v4083
  %v4085 = vpop.f32.mrf.mxu0
  %4086 = vmatprep.mubr.f32.mxu0 0.0
  %4087 = vmatmul.mubr.f32.gmra.mxu0 %v1891
  %v4088 = vpop.f32.mrf.mxu0
  %v4089 = vadd.f32 %v3704, %v4088
  %v4090 = vpop.f32.mrf.mxu0
  %4091 = vmatprep.mubr.f32.mxu0 0.0
  %4092 = vmatmul.mubr.f32.gmra.mxu0 %v1900
  %v4093 = vpop.f32.mrf.mxu0
  %v4094 = vadd.f32 %v3709, %v4093
  %v4095 = vpop.f32.mrf.mxu0
  %4096 = vmatprep.mubr.f32.mxu0 0.0
  %4097 = vmatmul.mubr.f32.gmra.mxu0 %v1909
  %v4098 = vpop.f32.mrf.mxu0
  %v4099 = vadd.f32 %v3714, %v4098
  %v4100 = vpop.f32.mrf.mxu0
  %4101 = vmatprep.mubr.f32.mxu0 0.0
  %4102 = vmatmul.mubr.f32.gmra.mxu0 %v1918
  %v4103 = vpop.f32.mrf.mxu0
  %v4104 = vadd.f32 %v3719, %v4103
  %v4105 = vpop.f32.mrf.mxu0
  %4106 = vmatprep.mubr.f32.mxu0 0.0
  %4107 = vmatmul.mubr.f32.gmra.mxu0 %v1927
  %v4108 = vpop.f32.mrf.mxu0
  %v4109 = vadd.f32 %v3724, %v4108
  %v4110 = vpop.f32.mrf.mxu0
  %4111 = vmatprep.mubr.f32.mxu0 0.0
  %4112 = vmatmul.mubr.f32.gmra.mxu0 %v1936
  %v4113 = vpop.f32.mrf.mxu0
  %v4114 = vadd.f32 %v3729, %v4113
  %v4115 = vpop.f32.mrf.mxu0
  %4116 = vmatprep.mubr.f32.mxu0 0.0
  %4117 = vmatmul.mubr.f32.gmra.mxu0 %v1945
  %v4118 = vpop.f32.mrf.mxu0
  %v4119 = vadd.f32 %v3734, %v4118
  %v4120 = vpop.f32.mrf.mxu0
  %4121 = vmatprep.mubr.f32.mxu0 0.0
  %4122 = vmatmul.mubr.f32.gmra.mxu0 %v1954
  %v4123 = vpop.f32.mrf.mxu0
  %v4124 = vadd.f32 %v3739, %v4123
  %v4125 = vpop.f32.mrf.mxu0
  %4126 = vmatprep.mubr.f32.mxu0 0.0
  %4127 = vmatmul.mubr.f32.gmra.mxu0 %v1963
  %v4128 = vpop.f32.mrf.mxu0
  %v4129 = vadd.f32 %v3744, %v4128
  %v4130 = vpop.f32.mrf.mxu0
  %4131 = vmatprep.mubr.f32.mxu0 0.0
  %4132 = vmatmul.mubr.f32.gmra.mxu0 %v1972
  %v4133 = vpop.f32.mrf.mxu0
  %v4134 = vadd.f32 %v3749, %v4133
  %v4135 = vpop.f32.mrf.mxu0
  %4136 = vmatprep.mubr.f32.mxu0 0.0
  %4137 = vmatmul.mubr.f32.gmra.mxu0 %v1981
  %v4138 = vpop.f32.mrf.mxu0
  %v4139 = vadd.f32 %v3754, %v4138
  %v4140 = vpop.f32.mrf.mxu0
  %4141 = vmatprep.mubr.f32.mxu0 0.0
  %4142 = vmatmul.mubr.f32.gmra.mxu0 %v1990
  %v4143 = vpop.f32.mrf.mxu0
  %v4144 = vadd.f32 %v3759, %v4143
  %v4145 = vpop.f32.mrf.mxu0
  %4146 = vmatprep.mubr.f32.mxu0 0.0
  %4147 = vmatmul.mubr.f32.gmra.mxu0 %v1999
  %v4148 = vpop.f32.mrf.mxu0
  %v4149 = vadd.f32 %v3764, %v4148
  %v4150 = vpop.f32.mrf.mxu0
  %4151 = vmatprep.mubr.f32.mxu0 0.0
  %4152 = vmatmul.mubr.f32.gmra.mxu0 %v2008
  %v4153 = vpop.f32.mrf.mxu0
  %v4154 = vadd.f32 %v3769, %v4153
  %v4155 = vpop.f32.mrf.mxu0
  %4156 = vmatprep.mubr.f32.mxu0 0.0
  %4157 = vmatmul.mubr.f32.gmra.mxu0 %v2017
  %v4158 = vpop.f32.mrf.mxu0
  %v4159 = vadd.f32 %v3774, %v4158
  %v4160 = vpop.f32.mrf.mxu0
  %4161 = vmatprep.mubr.f32.mxu0 0.0
  %4162 = vmatmul.mubr.f32.gmra.mxu0 %v2026
  %v4163 = vpop.f32.mrf.mxu0
  %v4164 = vadd.f32 %v3779, %v4163
  %v4165 = vpop.f32.mrf.mxu0
  %4166 = vmatprep.mubr.f32.mxu0 0.0
  %4167 = vmatmul.mubr.f32.gmra.mxu0 %v2035
  %v4168 = vpop.f32.mrf.mxu0
  %v4169 = vadd.f32 %v3784, %v4168
  %v4170 = vpop.f32.mrf.mxu0
  %4171 = vmatprep.mubr.f32.mxu0 0.0
  %4172 = vmatmul.mubr.f32.gmra.mxu0 %v2044
  %v4173 = vpop.f32.mrf.mxu0
  %v4174 = vadd.f32 %v3789, %v4173
  %v4175 = vpop.f32.mrf.mxu0
  %4176 = vmatprep.mubr.f32.mxu0 0.0
  %4177 = vmatmul.mubr.f32.gmra.mxu0 %v2053
  %v4178 = vpop.f32.mrf.mxu0
  %v4179 = vadd.f32 %v3794, %v4178
  %v4180 = vpop.f32.mrf.mxu0
  %4181 = vmatprep.mubr.f32.mxu0 0.0
  %4182 = vmatmul.mubr.f32.gmra.mxu0 %v2062
  %v4183 = vpop.f32.mrf.mxu0
  %v4184 = vadd.f32 %v3799, %v4183
  %v4185 = vpop.f32.mrf.mxu0
  %4186 = vmatprep.mubr.f32.mxu0 0.0
  %4187 = vmatmul.mubr.f32.gmra.mxu0 %v2071
  %v4188 = vpop.f32.mrf.mxu0
  %v4189 = vadd.f32 %v3804, %v4188
  %v4190 = vpop.f32.mrf.mxu0
  %4191 = vmatprep.mubr.f32.mxu0 0.0
  %4192 = vmatmul.mubr.f32.gmra.mxu0 %v2080
  %v4193 = vpop.f32.mrf.mxu0
  %v4194 = vadd.f32 %v3809, %v4193
  %v4195 = vpop.f32.mrf.mxu0
  %4196 = vmatprep.mubr.f32.mxu0 0.0
  %4197 = vmatmul.mubr.f32.gmra.mxu0 %v2089
  %v4198 = vpop.f32.mrf.mxu0
  %v4199 = vadd.f32 %v3814, %v4198
  %v4200 = vpop.f32.mrf.mxu0
  %4201 = vmatprep.mubr.f32.mxu0 0.0
  %4202 = vmatmul.mubr.f32.gmra.mxu0 %v2098
  %v4203 = vpop.f32.mrf.mxu0
  %v4204 = vadd.f32 %v3819, %v4203
  %v4205 = vpop.f32.mrf.mxu0
  %4206 = vmatprep.mubr.f32.mxu0 0.0
  %4207 = vmatmul.mubr.f32.gmra.mxu0 %v2107
  %v4208 = vpop.f32.mrf.mxu0
  %v4209 = vadd.f32 %v3824, %v4208
  %v4210 = vpop.f32.mrf.mxu0
  %4211 = vmatprep.mubr.f32.mxu0 0.0
  %4212 = vmatmul.mubr.f32.gmra.mxu0 %v2116
  %v4213 = vpop.f32.mrf.mxu0
  %v4214 = vadd.f32 %v3829, %v4213
  %v4215 = vpop.f32.mrf.mxu0
  %4216 = vmatprep.mubr.f32.mxu0 0.0
  %4217 = vmatmul.mubr.f32.gmra.mxu0 %v2125
  %v4218 = vpop.f32.mrf.mxu0
  %v4219 = vadd.f32 %v3834, %v4218
  %v4220 = vpop.f32.mrf.mxu0
  %4221 = vmatprep.mubr.f32.mxu0 0.0
  %4222 = vmatmul.mubr.f32.gmra.mxu0 %v2134
  %v4223 = vpop.f32.mrf.mxu0
  %v4224 = vadd.f32 %v3839, %v4223
  %v4225 = vpop.f32.mrf.mxu0
  %4226 = vmatprep.mubr.f32.mxu0 0.0
  %4227 = vmatmul.mubr.f32.gmra.mxu0 %v2143
  %v4228 = vpop.f32.mrf.mxu0
  %v4229 = vadd.f32 %v3844, %v4228
  %v4230 = vpop.f32.mrf.mxu0
  %4231 = vmatprep.mubr.f32.mxu0 0.0
  %4232 = vmatmul.mubr.f32.gmra.mxu0 %v2152
  %v4233 = vpop.f32.mrf.mxu0
  %v4234 = vadd.f32 %v3849, %v4233
  %v4235 = vpop.f32.mrf.mxu0
  %4236 = vmatprep.mubr.f32.mxu0 0.0
  %4237 = vmatmul.mubr.f32.gmra.mxu0 %v2161
  %v4238 = vpop.f32.mrf.mxu0
  %v4239 = vadd.f32 %v3854, %v4238
  %v4240 = vpop.f32.mrf.mxu0
  %4241 = vmatprep.mubr.f32.mxu0 0.0
  %4242 = vmatmul.mubr.f32.gmra.mxu0 %v2170
  %v4243 = vpop.f32.mrf.mxu0
  %v4244 = vadd.f32 %v3859, %v4243
  %v4245 = vpop.f32.mrf.mxu0
  %4246 = vdwg.mxu0
  %4247 = vst [vmem:[%s5] sm:$0xff] %v3929
  %4248 = vst [vmem:[%s5 + $0x8] sm:$0xff] %v3934
  %4249 = vst [vmem:[%s5 + $0x10] sm:$0xff] %v3939
  %4250 = vst [vmem:[%s5 + $0x18] sm:$0xff] %v3944
  %4251 = vst [vmem:[%s5 + $0x20] sm:$0xff] %v3949
  %4252 = vst [vmem:[%s5 + $0x28] sm:$0xff] %v3954
  %4253 = vst [vmem:[%s5 + $0x30] sm:$0xff] %v3959
  %4254 = vst [vmem:[%s5 + $0x38] sm:$0xff] %v3964
  %4255 = vst [vmem:[%s5 + $0x40] sm:$0xff] %v3969
  %4256 = vst [vmem:[%s5 + $0x48] sm:$0xff] %v3974
  %4257 = vst [vmem:[%s5 + $0x50] sm:$0xff] %v3979
  %4258 = vst [vmem:[%s5 + $0x58] sm:$0xff] %v3984
  %4259 = vst [vmem:[%s5 + $0x60] sm:$0xff] %v3989
  %4260 = vst [vmem:[%s5 + $0x68] sm:$0xff] %v3994
  %4261 = vst [vmem:[%s5 + $0x70] sm:$0xff] %v3999
  %4262 = vst [vmem:[%s5 + $0x78] sm:$0xff] %v4004
  %4263 = vst [vmem:[%s5 + $0x80] sm:$0xff] %v4009
  %4264 = vst [vmem:[%s5 + $0x88] sm:$0xff] %v4014
  %4265 = vst [vmem:[%s5 + $0x90] sm:$0xff] %v4019
  %4266 = vst [vmem:[%s5 + $0x98] sm:$0xff] %v4024
  %4267 = vst [vmem:[%s5 + $0xa0] sm:$0xff] %v4029
  %4268 = vst [vmem:[%s5 + $0xa8] sm:$0xff] %v4034
  %4269 = vst [vmem:[%s5 + $0xb0] sm:$0xff] %v4039
  %4270 = vst [vmem:[%s5 + $0xb8] sm:$0xff] %v4044
  %4271 = vst [vmem:[%s5 + $0xc0] sm:$0xff] %v4049
  %4272 = vst [vmem:[%s5 + $0xc8] sm:$0xff] %v4054
  %4273 = vst [vmem:[%s5 + $0xd0] sm:$0xff] %v4059
  %4274 = vst [vmem:[%s5 + $0xd8] sm:$0xff] %v4064
  %4275 = vst [vmem:[%s5 + $0xe0] sm:$0xff] %v4069
  %4276 = vst [vmem:[%s5 + $0xe8] sm:$0xff] %v4074
  %4277 = vst [vmem:[%s5 + $0xf0] sm:$0xff] %v4079
  %4278 = vst [vmem:[%s5 + $0xf8] sm:$0xff] %v4084
  %4279 = vst [vmem:[%s5 + $0x100] sm:$0xff] %v4089
  %4280 = vst [vmem:[%s5 + $0x108] sm:$0xff] %v4094
  %4281 = vst [vmem:[%s5 + $0x110] sm:$0xff] %v4099
  %4282 = vst [vmem:[%s5 + $0x118] sm:$0xff] %v4104
  %4283 = vst [vmem:[%s5 + $0x120] sm:$0xff] %v4109
  %4284 = vst [vmem:[%s5 + $0x128] sm:$0xff] %v4114
  %4285 = vst [vmem:[%s5 + $0x130] sm:$0xff] %v4119
  %4286 = vst [vmem:[%s5 + $0x138] sm:$0xff] %v4124
  %4287 = vst [vmem:[%s5 + $0x140] sm:$0xff] %v4129
  %4288 = vst [vmem:[%s5 + $0x148] sm:$0xff] %v4134
  %4289 = vst [vmem:[%s5 + $0x150] sm:$0xff] %v4139
  %4290 = vst [vmem:[%s5 + $0x158] sm:$0xff] %v4144
  %4291 = vst [vmem:[%s5 + $0x160] sm:$0xff] %v4149
  %4292 = vst [vmem:[%s5 + $0x168] sm:$0xff] %v4154
  %4293 = vst [vmem:[%s5 + $0x170] sm:$0xff] %v4159
  %4294 = vst [vmem:[%s5 + $0x178] sm:$0xff] %v4164
  %4295 = vst [vmem:[%s5 + $0x180] sm:$0xff] %v4169
  %4296 = vst [vmem:[%s5 + $0x188] sm:$0xff] %v4174
  %4297 = vst [vmem:[%s5 + $0x190] sm:$0xff] %v4179
  %4298 = vst [vmem:[%s5 + $0x198] sm:$0xff] %v4184
  %4299 = vst [vmem:[%s5 + $0x1a0] sm:$0xff] %v4189
  %4300 = vst [vmem:[%s5 + $0x1a8] sm:$0xff] %v4194
  %4301 = vst [vmem:[%s5 + $0x1b0] sm:$0xff] %v4199
  %4302 = vst [vmem:[%s5 + $0x1b8] sm:$0xff] %v4204
  %4303 = vst [vmem:[%s5 + $0x1c0] sm:$0xff] %v4209
  %4304 = vst [vmem:[%s5 + $0x1c8] sm:$0xff] %v4214
  %4305 = vst [vmem:[%s5 + $0x1d0] sm:$0xff] %v4219
  %4306 = vst [vmem:[%s5 + $0x1d8] sm:$0xff] %v4224
  %4307 = vst [vmem:[%s5 + $0x1e0] sm:$0xff] %v4229
  %4308 = vst [vmem:[%s5 + $0x1e8] sm:$0xff] %v4234
  %4309 = vst [vmem:[%s5 + $0x1f0] sm:$0xff] %v4239
  %4310 = vst [vmem:[%s5 + $0x1f8] sm:$0xff] %v4244
  %v4311 = vadd.f32 %v3929, %v3934
  %v4312 = vadd.f32 %v4311, %v3939
  %v4313 = vadd.f32 %v4312, %v3944
  %v4314 = vadd.f32 %v4313, %v3949
  %v4315 = vadd.f32 %v4314, %v3954
  %v4316 = vadd.f32 %v4315, %v3959
  %v4317 = vadd.f32 %v4316, %v3964
  %v4318 = vadd.f32 %v4317, %v3969
  %v4319 = vadd.f32 %v4318, %v3974
  %v4320 = vadd.f32 %v4319, %v3979
  %v4321 = vadd.f32 %v4320, %v3984
  %v4322 = vadd.f32 %v4321, %v3989
  %v4323 = vadd.f32 %v4322, %v3994
  %v4324 = vadd.f32 %v4323, %v3999
  %v4325 = vadd.f32 %v4324, %v4004
  %v4326 = vadd.f32 %v4325, %v4009
  %v4327 = vadd.f32 %v4326, %v4014
  %v4328 = vadd.f32 %v4327, %v4019
  %v4329 = vadd.f32 %v4328, %v4024
  %v4330 = vadd.f32 %v4329, %v4029
  %v4331 = vadd.f32 %v4330, %v4034
  %v4332 = vadd.f32 %v4331, %v4039
  %v4333 = vadd.f32 %v4332, %v4044
  %v4334 = vadd.f32 %v4333, %v4049
  %v4335 = vadd.f32 %v4334, %v4054
  %v4336 = vadd.f32 %v4335, %v4059
  %v4337 = vadd.f32 %v4336, %v4064
  %v4338 = vadd.f32 %v4337, %v4069
  %v4339 = vadd.f32 %v4338, %v4074
  %v4340 = vadd.f32 %v4339, %v4079
  %v4341 = vadd.f32 %v4340, %v4084
  %v4342 = vadd.f32 %v4341, %v4089
  %v4343 = vadd.f32 %v4342, %v4094
  %v4344 = vadd.f32 %v4343, %v4099
  %v4345 = vadd.f32 %v4344, %v4104
  %v4346 = vadd.f32 %v4345, %v4109
  %v4347 = vadd.f32 %v4346, %v4114
  %v4348 = vadd.f32 %v4347, %v4119
  %v4349 = vadd.f32 %v4348, %v4124
  %v4350 = vadd.f32 %v4349, %v4129
  %v4351 = vadd.f32 %v4350, %v4134
  %v4352 = vadd.f32 %v4351, %v4139
  %v4353 = vadd.f32 %v4352, %v4144
  %v4354 = vadd.f32 %v4353, %v4149
  %v4355 = vadd.f32 %v4354, %v4154
  %v4356 = vadd.f32 %v4355, %v4159
  %v4357 = vadd.f32 %v4356, %v4164
  %v4358 = vadd.f32 %v4357, %v4169
  %v4359 = vadd.f32 %v4358, %v4174
  %v4360 = vadd.f32 %v4359, %v4179
  %v4361 = vadd.f32 %v4360, %v4184
  %v4362 = vadd.f32 %v4361, %v4189
  %v4363 = vadd.f32 %v4362, %v4194
  %v4364 = vadd.f32 %v4363, %v4199
  %v4365 = vadd.f32 %v4364, %v4204
  %v4366 = vadd.f32 %v4365, %v4209
  %v4367 = vadd.f32 %v4366, %v4214
  %v4368 = vadd.f32 %v4367, %v4219
  %v4369 = vadd.f32 %v4368, %v4224
  %v4370 = vadd.f32 %v4369, %v4229
  %v4371 = vadd.f32 %v4370, %v4234
  %v4372 = vadd.f32 %v4371, %v4239
  %v4373 = vadd.f32 %v4372, %v4244
  %v4374 = vrot.slane %v4373, 4
  %v4375 = vadd.f32 %v4373, %v4374
  %v4376 = vrot.slane %v4375, 2
  %v4377 = vadd.f32 %v4375, %v4376
  %v4378 = vrot.slane %v4377, 1
  %v4379 = vadd.f32 %v4377, %v4378
  %4380 = vst [vmem:[%s6] sm:$0x1] %v4379
  %v4381 = vmul.f32 %v3929, %v3929
  %v4382 = vmul.f32 %v3934, %v3934
  %v4383 = vmul.f32 %v3939, %v3939
  %v4384 = vmul.f32 %v3944, %v3944
  %v4385 = vmul.f32 %v3949, %v3949
  %v4386 = vmul.f32 %v3954, %v3954
  %v4387 = vmul.f32 %v3959, %v3959
  %v4388 = vmul.f32 %v3964, %v3964
  %v4389 = vmul.f32 %v3969, %v3969
  %v4390 = vmul.f32 %v3974, %v3974
  %v4391 = vmul.f32 %v3979, %v3979
  %v4392 = vmul.f32 %v3984, %v3984
  %v4393 = vmul.f32 %v3989, %v3989
  %v4394 = vmul.f32 %v3994, %v3994
  %v4395 = vmul.f32 %v3999, %v3999
  %v4396 = vmul.f32 %v4004, %v4004
  %v4397 = vmul.f32 %v4009, %v4009
  %v4398 = vmul.f32 %v4014, %v4014
  %v4399 = vmul.f32 %v4019, %v4019
  %v4400 = vmul.f32 %v4024, %v4024
  %v4401 = vmul.f32 %v4029, %v4029
  %v4402 = vmul.f32 %v4034, %v4034
  %v4403 = vmul.f32 %v4039, %v4039
  %v4404 = vmul.f32 %v4044, %v4044
  %v4405 = vmul.f32 %v4049, %v4049
  %v4406 = vmul.f32 %v4054, %v4054
  %v4407 = vmul.f32 %v4059, %v4059
  %v4408 = vmul.f32 %v4064, %v4064
  %v4409 = vmul.f32 %v4069, %v4069
  %v4410 = vmul.f32 %v4074, %v4074
  %v4411 = vmul.f32 %v4079, %v4079
  %v4412 = vmul.f32 %v4084, %v4084
  %v4413 = vmul.f32 %v4089, %v4089
  %v4414 = vmul.f32 %v4094, %v4094
  %v4415 = vmul.f32 %v4099, %v4099
  %v4416 = vmul.f32 %v4104, %v4104
  %v4417 = vmul.f32 %v4109, %v4109
  %v4418 = vmul.f32 %v4114, %v4114
  %v4419 = vmul.f32 %v4119, %v4119
  %v4420 = vmul.f32 %v4124, %v4124
  %v4421 = vmul.f32 %v4129, %v4129
  %v4422 = vmul.f32 %v4134, %v4134
  %v4423 = vmul.f32 %v4139, %v4139
  %v4424 = vmul.f32 %v4144, %v4144
  %v4425 = vmul.f32 %v4149, %v4149
  %v4426 = vmul.f32 %v4154, %v4154
  %v4427 = vmul.f32 %v4159, %v4159
  %v4428 = vmul.f32 %v4164, %v4164
  %v4429 = vmul.f32 %v4169, %v4169
  %v4430 = vmul.f32 %v4174, %v4174
  %v4431 = vmul.f32 %v4179, %v4179
  %v4432 = vmul.f32 %v4184, %v4184
  %v4433 = vmul.f32 %v4189, %v4189
  %v4434 = vmul.f32 %v4194, %v4194
  %v4435 = vmul.f32 %v4199, %v4199
  %v4436 = vmul.f32 %v4204, %v4204
  %v4437 = vmul.f32 %v4209, %v4209
  %v4438 = vmul.f32 %v4214, %v4214
  %v4439 = vmul.f32 %v4219, %v4219
  %v4440 = vmul.f32 %v4224, %v4224
  %v4441 = vmul.f32 %v4229, %v4229
  %v4442 = vmul.f32 %v4234, %v4234
  %v4443 = vmul.f32 %v4239, %v4239
  %v4444 = vmul.f32 %v4244, %v4244
  %v4445 = vadd.f32 %v4381, %v4382
  %v4446 = vadd.f32 %v4445, %v4383
  %v4447 = vadd.f32 %v4446, %v4384
  %v4448 = vadd.f32 %v4447, %v4385
  %v4449 = vadd.f32 %v4448, %v4386
  %v4450 = vadd.f32 %v4449, %v4387
  %v4451 = vadd.f32 %v4450, %v4388
  %v4452 = vadd.f32 %v4451, %v4389
  %v4453 = vadd.f32 %v4452, %v4390
  %v4454 = vadd.f32 %v4453, %v4391
  %v4455 = vadd.f32 %v4454, %v4392
  %v4456 = vadd.f32 %v4455, %v4393
  %v4457 = vadd.f32 %v4456, %v4394
  %v4458 = vadd.f32 %v4457, %v4395
  %v4459 = vadd.f32 %v4458, %v4396
  %v4460 = vadd.f32 %v4459, %v4397
  %v4461 = vadd.f32 %v4460, %v4398
  %v4462 = vadd.f32 %v4461, %v4399
  %v4463 = vadd.f32 %v4462, %v4400
  %v4464 = vadd.f32 %v4463, %v4401
  %v4465 = vadd.f32 %v4464, %v4402
  %v4466 = vadd.f32 %v4465, %v4403
  %v4467 = vadd.f32 %v4466, %v4404
  %v4468 = vadd.f32 %v4467, %v4405
  %v4469 = vadd.f32 %v4468, %v4406
  %v4470 = vadd.f32 %v4469, %v4407
  %v4471 = vadd.f32 %v4470, %v4408
  %v4472 = vadd.f32 %v4471, %v4409
  %v4473 = vadd.f32 %v4472, %v4410
  %v4474 = vadd.f32 %v4473, %v4411
  %v4475 = vadd.f32 %v4474, %v4412
  %v4476 = vadd.f32 %v4475, %v4413
  %v4477 = vadd.f32 %v4476, %v4414
  %v4478 = vadd.f32 %v4477, %v4415
  %v4479 = vadd.f32 %v4478, %v4416
  %v4480 = vadd.f32 %v4479, %v4417
  %v4481 = vadd.f32 %v4480, %v4418
  %v4482 = vadd.f32 %v4481, %v4419
  %v4483 = vadd.f32 %v4482, %v4420
  %v4484 = vadd.f32 %v4483, %v4421
  %v4485 = vadd.f32 %v4484, %v4422
  %v4486 = vadd.f32 %v4485, %v4423
  %v4487 = vadd.f32 %v4486, %v4424
  %v4488 = vadd.f32 %v4487, %v4425
  %v4489 = vadd.f32 %v4488, %v4426
  %v4490 = vadd.f32 %v4489, %v4427
  %v4491 = vadd.f32 %v4490, %v4428
  %v4492 = vadd.f32 %v4491, %v4429
  %v4493 = vadd.f32 %v4492, %v4430
  %v4494 = vadd.f32 %v4493, %v4431
  %v4495 = vadd.f32 %v4494, %v4432
  %v4496 = vadd.f32 %v4495, %v4433
  %v4497 = vadd.f32 %v4496, %v4434
  %v4498 = vadd.f32 %v4497, %v4435
  %v4499 = vadd.f32 %v4498, %v4436
  %v4500 = vadd.f32 %v4499, %v4437
  %v4501 = vadd.f32 %v4500, %v4438
  %v4502 = vadd.f32 %v4501, %v4439
  %v4503 = vadd.f32 %v4502, %v4440
  %v4504 = vadd.f32 %v4503, %v4441
  %v4505 = vadd.f32 %v4504, %v4442
  %v4506 = vadd.f32 %v4505, %v4443
  %v4507 = vadd.f32 %v4506, %v4444
  %v4508 = vrot.slane %v4507, 4
  %v4509 = vadd.f32 %v4507, %v4508
  %v4510 = vrot.slane %v4509, 2
  %v4511 = vadd.f32 %v4509, %v4510
  %v4512 = vrot.slane %v4511, 1
  %v4513 = vadd.f32 %v4511, %v4512
  %4514 = vst [vmem:[%s6 + $0x1] sm:$0x1] %v4513
  // Predicated region
  $region22: #{basic_block_forward.4} parent=0 // pred_check
    _
  $region23: #{basic_block_forward.4} parent=0 // pred_check_branch
    %4516 = sbr.rel (0) target = $region25
  $region24: #{basic_block_forward.4} parent=0 // pred_region
    _
  $region25: #{basic_block_forward.4} parent=0 // pred_fallthru
    _
  // Predicated region
  $region26: #{basic_block_forward.4} parent=0 // pred_check
    _
  $region27: #{basic_block_forward.4} parent=0 // pred_check_branch
    %4518 = sbr.rel (0) target = $region29
  $region28: #{basic_block_forward.4} parent=0 // pred_region
    _
  $region29: #{basic_block_forward.4} parent=0 // pred_fallthru
    _
  // Predicated region
  $region30: #{basic_block_forward.4} parent=0 // pred_check
    _
  $region31: #{basic_block_forward.4} parent=0 // pred_check_branch
    %4520 = sbr.rel (0) target = $region33
  $region32: #{basic_block_forward.4} parent=0 // pred_region
    _
  $region33: #{basic_block_forward.4} parent=0 // pred_fallthru
    _
  // Predicated region
  $region34: #{basic_block_forward.4} parent=0 // pred_check
    _
  $region35: #{basic_block_forward.4} parent=0 // pred_check_branch
    %4522 = sbr.rel (0) target = $region37
  $region36: #{basic_block_forward.4} parent=0 // pred_region
    _
  $region37: #{basic_block_forward.4} parent=0 // pred_fallthru
    _

</llo_original>
